<compile_context>
chip_gen: v7x
topology: tpu7x:2x2x1
jax: 0.10.0
libtpu: 0.0.40
codegen_flags: <defaults>
</compile_context>

<pallas_src>
import functools
import math

import numpy as np
import jax
import jax.numpy as jnp
from jax.experimental import pallas as pl
from jax.experimental.pallas import tpu as pltpu

NUM_HEADS = 4


def _round_up(v, m):
    return ((v + m - 1) // m) * m


def _layer_norm(u, g, b, eps=1e-5):
    mu = jnp.mean(u, axis=-1, keepdims=True)
    var = jnp.mean((u - mu) ** 2, axis=-1, keepdims=True)
    return (u - mu) * jax.lax.rsqrt(var + eps) * g + b


# ----------------------------------------------------------------------------
# Pallas kernel: TE masked multi-head cross attention (query length == 1)
# ----------------------------------------------------------------------------
def te_mhca_kernel(zx_ref, jz_ref, jxm_ref,
                   wq_ref, wk_ref, wv_ref, wo_ref, hselm_ref,
                   wt1_ref, wt2e_ref,
                   ln1g_ref, ln1b_ref, ln2g_ref, ln2b_ref,
                   wf1_ref, wf2_ref,
                   out_ref, *, dz, dx):
    f32 = jnp.float32
    bf16 = jnp.bfloat16

    zx = zx_ref[...]                       # [T, d_in] f32  (z0 | xq | pad)
    z0 = zx[:, 0:dz]                       # [T, dz]   query latent
    xq = zx[:, dz:dz + dx]                 # [T, dx]   query positions
    jz = jz_ref[...]                       # [T, K, dz] bf16 neighbour stream
    jxm = jxm_ref[...]                     # [T, K, dx+1] f32 (coords | mask)
    jx = jxm[:, :, 0:dx]                   # [T, K, dx]
    mask3 = jxm[:, :, dx:dx + 1]           # [T, K, 1]   1.0 = attend

    T, K, _ = jz.shape

    # --- pre-norm + Q projection (bf16 MXU, f32 accumulate; scale baked in wq)
    zq_n = _layer_norm(z0, ln1g_ref[...], ln1b_ref[...])
    q = jnp.dot(zq_n.astype(bf16), wq_ref[...], preferred_element_type=f32)   # [T, dz]

    # --- K/V projections directly from the bf16 stream (two dots, no slicing)
    jz_flat = jz.reshape(T * K, dz)
    k = jnp.dot(jz_flat, wk_ref[...], preferred_element_type=f32).reshape(T, K, dz)
    v = jnp.dot(jz_flat, wv_ref[...], preferred_element_type=f32).reshape(T, K, dz)

    # --- translation-equivariant bias MLP (VPU; dx is 1..3, static) ----------
    diff = xq[:, None, :] - jx                                    # [T, K, dx]
    t1 = diff[:, :, 0:1] * wt1_ref[0:1, :]
    for d in range(1, dx):
        t1 = t1 + diff[:, :, d:d + 1] * wt1_ref[d:d + 1, :]
    t1 = jnp.maximum(t1, 0.0)                                     # [T, K, Ht]

    # --- head-expanded scores, dense on the dz lane axis ---------------------
    # hselm is the [dz, dz] block 0/1 selector: s[t,k,d] = <q_h, k_h> for
    # h = head(d) (replicated over that head's Dh lane slots).  The TE bias is
    # expanded the same way via wt2e = wt2 @ sel.T  (host-built).
    prod = (q[:, None, :] * k).reshape(T * K, dz)                 # [TK, dz] f32
    s = jnp.dot(prod.astype(bf16), hselm_ref[...], preferred_element_type=f32)
    s = s + jnp.dot(t1.reshape(T * K, t1.shape[-1]), wt2e_ref[...],
                    preferred_element_type=f32)
    s = s.reshape(T, K, dz)

    # --- masked softmax over the patch axis, all heads at once --------------
    neg = jnp.float32(-1e30)
    s = jnp.where(mask3 > 0, s, neg)
    s = s - jnp.max(s, axis=1, keepdims=True)
    p = jnp.exp(s)
    inv_l = pl.reciprocal(jnp.sum(p, axis=1, keepdims=True), approx=True)
    a_full = p * inv_l                       # [T, K, dz] == per-head weights
                                             # broadcast over Dh lanes

    # --- attention output + residual ----------------------------------------
    attn_out = jnp.sum(a_full * v, axis=1)                              # [T, dz]
    z1 = z0 + jnp.dot(attn_out.astype(bf16), wo_ref[...],
                      preferred_element_type=f32)

    # --- feed-forward block ---------------------------------------------------
    z1n = _layer_norm(z1, ln2g_ref[...], ln2b_ref[...])
    hff = jax.nn.gelu(jnp.dot(z1n.astype(bf16), wf1_ref[...],
                              preferred_element_type=f32), approximate=True)
    z2 = z1 + jnp.dot(hff.astype(bf16), wf2_ref[...], preferred_element_type=f32)

    # --- TE update of grid positions (head-mean attention-weighted displacement)
    # mean over dz lanes == mean over heads (each head replicated Dh times).
    attn_mean = jnp.mean(a_full, axis=-1, keepdims=True)                 # [T, K, 1]
    disp = (jx - xq[:, None, :]) * mask3                                 # [T, K, dx]
    x_new = xq + jnp.sum(attn_mean * disp, axis=1)                       # [T, dx]

    # --- one dense, full-width store of the packed output row ---------------
    d_out = out_ref.shape[-1]
    pad_w = d_out - dz - dx
    pieces = [z2, x_new]
    if pad_w:
        pieces.append(jnp.zeros((T, pad_w), f32))
    out_ref[...] = jnp.concatenate(pieces, axis=-1).astype(out_ref.dtype)


# ----------------------------------------------------------------------------
# Pure-jnp reference of the exact kernel math (debug only, off the hot path)
# ----------------------------------------------------------------------------
def _te_mhca_reference(z0, jz, xq, jx, mask, params):
    f32 = jnp.float32
    (wq, wk, wv, wo, hselm, wt1, wt2e,
     ln1g, ln1b, ln2g, ln2b, wf1, wf2) = [p.astype(f32) for p in params]
    jz = jz.astype(f32)
    q = _layer_norm(z0, ln1g, ln1b) @ wq
    k = jnp.einsum('bkd,de->bke', jz, wk)
    v = jnp.einsum('bkd,de->bke', jz, wv)
    diff = xq[:, None, :] - jx
    t1 = jnp.maximum(jnp.einsum('bkd,dt->bkt', diff, wt1), 0.0)
    s = (jnp.einsum('bkd,de->bke', q[:, None, :] * k, hselm)
         + jnp.einsum('bkt,te->bke', t1, wt2e))
    s = jnp.where(mask[:, :, None] > 0, s, -1e30)
    s = s - s.max(1, keepdims=True)
    p = jnp.exp(s)
    a = p / p.sum(1, keepdims=True)
    z1 = z0 + jnp.sum(a * v, axis=1) @ wo
    hff = jax.nn.gelu(_layer_norm(z1, ln2g, ln2b) @ wf1, approximate=True)
    z2 = z1 + hff @ wf2
    am = a.mean(-1, keepdims=True)
    x_out = xq + jnp.sum(am * (jx - xq[:, None, :]) * mask[:, :, None], axis=1)
    return z2, x_out


# ----------------------------------------------------------------------------
# Generation-aware tile sizing (layout padding accounted for)
# ----------------------------------------------------------------------------
def _vmem_capacity_bytes():
    try:
        return int(pltpu.get_tpu_info().vmem_capacity_bytes)
    except Exception:
        return 64 * 1024 * 1024        # conservative: works on every generation


def _auto_tile(B, K, dz, dxp, ht, d_in, d_out, params, jz_dtype):
    lane = 128
    cap = _vmem_capacity_bytes()
    vmem_limit = min(int(cap * 0.75), 100 * 1024 * 1024)
    budget = max(vmem_limit - (8 << 20), 4 << 20)
    two_core = cap <= (64 << 20) + (1 << 20)     # v7x-like: 64 MiB / TensorCore

    jz_bytes = jnp.dtype(jz_dtype).itemsize
    sub_jz = 8 * (4 // jz_bytes)                 # (8,128) f32 / (16,128) bf16 tiles

    # per-batch-row VMEM bytes after (sublane, lane) padding; x2 = double buffer
    io_row = 2 * (_round_up(d_in, lane) * 4
                  + _round_up(K, sub_jz) * _round_up(dz, lane) * jz_bytes
                  + _round_up(K, 8) * _round_up(dxp, lane) * 4
                  + _round_up(d_out, lane) * 4)
    # rough estimate of live f32 intermediates per row (k, v, prod, s/p/a_full,
    # t1, diff) — deliberately conservative
    live_row = (6 * _round_up(K, 8) * _round_up(dz, lane)
                + _round_up(K, 8) * (_round_up(ht, lane) + lane)) * 4
    # resident weights (double-buffered by the default pipeline)
    # TODO(synk): single-buffer the constant weights via pipeline_mode once
    # buffer_count=1 is accepted for invariant BlockSpecs.
    w_bytes = 0
    for p in params:
        isz = jnp.dtype(p.dtype).itemsize
        sub = 8 * (4 // isz)
        w_bytes += _round_up(p.shape[0], sub) * _round_up(p.shape[1], lane) * isz
    w_bytes *= 2

    tile_b = (budget - w_bytes) // max(io_row + live_row, 1)
    tile_b = max(8, min(2048, int(tile_b)))
    tile_b = min(tile_b, max(8, _round_up(B, 8)))       # don't pad past B
    tile_b = max(8, (tile_b // 8) * 8)

    if two_core:
        # v7x: two TensorCores share the "parallel" grid — force an even number
        # of >= 2 steps; on single-TC chips (v5e/v6e) the tile is not shrunk.
        steps = pl.cdiv(B, tile_b)
        if steps < 2 or steps % 2:
            steps = max(2, steps + (steps % 2))
        tile_b = max(8, _round_up(pl.cdiv(B, steps), 8))
    return tile_b, vmem_limit


# ----------------------------------------------------------------------------
# pallas_call wrapper: packing / tiling / launch
# ----------------------------------------------------------------------------
def te_mhca_pallas(z0, jz, xq, jx, mask, params, *, tile_b=None,
                   vmem_limit_bytes=None):
    B, K, dz = jz.shape
    dx = xq.shape[-1]
    dxp = dx + 1
    ht = params[5].shape[1]                        # wt1: [dx, ht]
    d_in = _round_up(dz + dx, 128)                 # fused (z0 | xq) slab width
    d_out = _round_up(dz + dx, 128)                # packed (z2 | x_new) slab width

    auto_tile, auto_limit = _auto_tile(B, K, dz, dxp, ht, d_in, d_out,
                                       params, jz.dtype)
    if tile_b is None:
        tile_b = auto_tile
    if vmem_limit_bytes is None:
        vmem_limit_bytes = auto_limit

    # --- lane-dense fused inputs ---------------------------------------------
    zx = jnp.concatenate([z0, xq], axis=-1)
    if d_in > dz + dx:
        zx = jnp.pad(zx, ((0, 0), (0, d_in - dz - dx)))
    jxm = jnp.concatenate([jx, mask[..., None]], axis=-1)          # [B, K, dx+1]

    B_pad = _round_up(B, tile_b)
    pad = B_pad - B
    if pad:
        zx = jnp.pad(zx, ((0, pad), (0, 0)))
        jz = jnp.pad(jz, ((0, pad), (0, 0), (0, 0)))
        jxm_pad = jnp.zeros((pad, K, dxp), jxm.dtype).at[:, 0, dx].set(1.0)
        jxm = jnp.concatenate([jxm, jxm_pad], axis=0)

    row2 = lambda i: (i, 0)
    row3 = lambda i: (i, 0, 0)
    w_map = lambda i: (0, 0)

    data_specs = [
        pl.BlockSpec((tile_b, d_in), row2),
        pl.BlockSpec((tile_b, K, dz), row3),
        pl.BlockSpec((tile_b, K, dxp), row3),
    ]
    weight_specs = [pl.BlockSpec(p.shape, w_map) for p in params]

    kernel = functools.partial(te_mhca_kernel, dz=dz, dx=dx)

    packed = pl.pallas_call(
        kernel,
        grid=(B_pad // tile_b,),
        in_specs=data_specs + weight_specs,
        out_specs=pl.BlockSpec((tile_b, d_out), row2),
        out_shape=jax.ShapeDtypeStruct((B_pad, d_out), jnp.float32),
        compiler_params=pltpu.CompilerParams(
            dimension_semantics=("parallel",),
            vmem_limit_bytes=int(vmem_limit_bytes)),
    )(zx, jz, jxm, *params)

    return packed[:B, :dz], packed[:B, dz:dz + dx]


# ----------------------------------------------------------------------------
# Module wrapper (parameter setup + data-dependent glue in plain JAX)
# ----------------------------------------------------------------------------
class PseudoTokenTEGridEncoderThroughTimePallas:
    def __init__(self, *, embed_dim, points_per_unit_dim, dx_total,
                 margin=None, time_dim=0, te_hidden=16, ff_dim=32,
                 num_heads=NUM_HEADS, max_patch_size=None,
                 stream_dtype=jnp.bfloat16, debug=False,
                 key=jax.random.PRNGKey(0)):
        assert embed_dim % num_heads == 0
        # TODO(synk): general time_dim insertion position (only time_dim=0 implemented).
        assert time_dim == 0
        self.embed_dim = embed_dim
        self.num_heads = num_heads
        self.time_dim = time_dim
        self.points_per_unit_dim = tuple(points_per_unit_dim)
        self.margin = (tuple(0.0 for _ in points_per_unit_dim)
                       if margin is None else tuple(margin))
        self.max_patch_size = max_patch_size   # static cap avoids host syncs/recompiles
        self.stream_dtype = stream_dtype
        self.debug = debug

        ks = jax.random.split(key, 10)
        dz = embed_dim
        bf16 = jnp.bfloat16
        dense = lambda k, fi, fo: (jax.random.normal(k, (fi, fo), jnp.float32)
                                   / jnp.sqrt(jnp.float32(fi)))
        self.latent = jax.random.normal(ks[0], (dz,), jnp.float32)

        Dh = dz // num_heads
        wq = dense(ks[1], dz, dz) / math.sqrt(Dh)    # 1/sqrt(Dh) baked into wq
        wk = dense(ks[2], dz, dz)
        wv = dense(ks[3], dz, dz)
        wo = dense(ks[4], dz, dz)
        wt1 = dense(ks[5], dx_total, te_hidden)
        wt2 = dense(ks[6], te_hidden, num_heads)
        ln1g = jnp.ones((1, dz), jnp.float32)
        ln1b = jnp.zeros((1, dz), jnp.float32)
        ln2g = jnp.ones((1, dz), jnp.float32)
        ln2b = jnp.zeros((1, dz), jnp.float32)
        wf1 = dense(ks[7], dz, ff_dim)
        wf2 = dense(ks[8], ff_dim, dz)

        # head block selector (host-built, exact 0/1 so bf16 is lossless):
        head_of = np.repeat(np.arange(num_heads), Dh)                     # [dz]
        sel = (head_of[:, None] == np.arange(num_heads)[None, :]).astype(np.float32)
        hselm = jnp.asarray(sel @ sel.T)                                  # [dz, dz]
        wt2e = wt2 @ jnp.asarray(sel.T)                                   # [ht, dz]

        self.params = [wq.astype(bf16), wk.astype(bf16), wv.astype(bf16),
                       wo.astype(bf16), hselm.astype(bf16),
                       wt1, wt2e,
                       ln1g, ln1b, ln2g, ln2b,
                       wf1.astype(bf16), wf2.astype(bf16)]

    def forward(self, x, z, time_grid):
        m, n, dx_total = x.shape
        dz = z.shape[-1]
        nt = time_grid.shape[1]
        spatial_axes = [i for i in range(dx_total) if i != self.time_dim]

        # --- grid range / construct_grid (linspace meshgrid over spatial dims)
        # (data-dependent grid extents are inherent to the module semantics)
        grid_range = []
        for j, i in enumerate(spatial_axes):
            lo = float(jnp.min(x[:, :, i])) - self.margin[j]
            hi = float(jnp.max(x[:, :, i])) + self.margin[j]
            grid_range.append((lo, hi))
        points_per_dim = [max(1, int((hi - lo) * self.points_per_unit_dim[j]))
                          for j, (lo, hi) in enumerate(grid_range)]
        axes = [jnp.linspace(lo, hi, p) for (lo, hi), p in zip(grid_range, points_per_dim)]
        mesh = jnp.meshgrid(*axes, indexing="ij")
        x_grid_spatial = jnp.stack(mesh, axis=-1)          # (n1,...,nd, d_spatial)
        grid_shape = x_grid_spatial.shape[:-1]

        # --- broadcast through time & insert the time coordinate (time_dim=0)
        x_grid_sp = jnp.broadcast_to(x_grid_spatial, (m, nt) + x_grid_spatial.shape)
        tg = jnp.broadcast_to(time_grid.reshape((m, nt) + (1,) * len(grid_shape)),
                              (m, nt) + grid_shape)
        x_grid = jnp.concatenate([tg[..., None], x_grid_sp], axis=-1)  # [m, nt, n1.., dx]
        z_grid = jnp.broadcast_to(self.latent, (m, nt) + grid_shape + (dz,))

        # --- te_mhca_to_grid glue -------------------------------------------
        s = nt * int(np.prod(grid_shape))
        x_grid_flat = x_grid.reshape(m, s, dx_total)
        z_grid_flat = z_grid.reshape(m, s, dz)

        # nearest gridded neighbour (k=1): L2 argmin over the rectangular grid
        d2 = jnp.sum((x[:, :, None, :] - x_grid_flat[:, None, :, :]) ** 2, axis=-1)
        nearest = jnp.argmin(d2, axis=-1).astype(jnp.int32)            # [m, n]

        # cumulative count of points per grid cell (order of appearance)
        eq = nearest[:, :, None] == nearest[:, None, :]
        tril = jnp.tril(jnp.ones((n, n), bool), k=-1)
        cumcount = jnp.sum(eq & tril[None], axis=-1).astype(jnp.int32)

        if self.max_patch_size is None:
            counts = jnp.sum(nearest[:, :, None] == jnp.arange(s)[None, None, :], axis=1)
            max_patch = int(jnp.max(counts))       # host sync; shape is data-dependent
        else:
            max_patch = int(self.max_patch_size)
        K = max_patch + 1                          # +1: grid token itself (concatenate_x_grid)
        K_pad = max(16, _round_up(K, 16))          # bf16-friendly sublane padding

        # TODO(synk): gather neighbour patches in-kernel via scalar-prefetch /
        # pl.Element row gather instead of materializing joint_* in HBM.
        bidx = jnp.broadcast_to(jnp.arange(m)[:, None], (m, n))
        joint_x = jnp.zeros((m, s, K_pad, dx_total), jnp.float32)
        joint_x = joint_x.at[:, :, 0, :].set(x_grid_flat)
        joint_x = joint_x.at[bidx, nearest, 1 + cumcount].set(x)
        joint_z = jnp.zeros((m, s, K_pad, dz), self.stream_dtype)
        joint_z = joint_z.at[:, :, 0, :].set(z_grid_flat.astype(self.stream_dtype))
        joint_z = joint_z.at[bidx, nearest, 1 + cumcount].set(z.astype(self.stream_dtype))
        att_mask = jnp.zeros((m, s, K_pad), jnp.float32)
        att_mask = att_mask.at[:, :, 0].set(1.0)
        att_mask = att_mask.at[bidx, nearest, 1 + cumcount].set(1.0)

        B = m * s
        z0_flat = z_grid_flat.reshape(B, dz)
        xq_flat = x_grid_flat.reshape(B, dx_total)
        jz = joint_z.reshape(B, K_pad, dz)
        jx = joint_x.reshape(B, K_pad, dx_total)
        mask = att_mask.reshape(B, K_pad)

        z_out, x_out = te_mhca_pallas(z0_flat, jz, xq_flat, jx, mask, self.params)

        if self.debug:   # optional numerical sanity check (off the hot path)
            z_ref, x_ref = _te_mhca_reference(z0_flat, jz, xq_flat, jx, mask, self.params)
            assert jnp.allclose(z_out, z_ref, atol=3e-2, rtol=3e-2)
            assert jnp.allclose(x_out, x_ref, atol=3e-2, rtol=3e-2)

        z_grid_out = z_out.reshape((m, nt) + grid_shape + (dz,))
        x_grid_out = x_out.reshape((m, nt) + grid_shape + (dx_total,))
        # forward returns (x_grid, z_grid)  -> [m, ..., dx], [m, ..., dz]
        return x_grid_out, z_grid_out


# ----------------------------------------------------------------------------
if __name__ == "__main__":
    key = jax.random.PRNGKey(0)
    k1, k2, k3 = jax.random.split(key, 3)

    m, n, dx_total, dz, nt = 2, 16, 2, 16, 4
    # x = [time, spatial]; time in [0,1], spatial in [0,3]
    xt = jax.random.uniform(k1, (m, n, 1), minval=0.0, maxval=1.0)
    xs = jax.random.uniform(k2, (m, n, 1), minval=0.0, maxval=3.0)
    x = jnp.concatenate([xt, xs], axis=-1)
    z = jax.random.normal(k3, (m, n, dz), jnp.float32)
    time_grid = jnp.broadcast_to(jnp.linspace(0.0, 1.0, nt), (m, nt))

    enc = PseudoTokenTEGridEncoderThroughTimePallas(
        embed_dim=dz, points_per_unit_dim=(4,), dx_total=dx_total, time_dim=0,
        key=jax.random.PRNGKey(0))

    x_grid, z_grid = enc.forward(x, z, time_grid)
    jax.block_until_ready((x_grid, z_grid))
    assert x_grid.shape[0] == m and x_grid.shape[-1] == dx_total
    assert z_grid.shape[:-1] == x_grid.shape[:-1] and z_grid.shape[-1] == dz
    assert bool(jnp.all(jnp.isfinite(x_grid))) and bool(jnp.all(jnp.isfinite(z_grid)))
    print("KERNEL_OK")
</pallas_src>

<mosaic_0001>
module attributes {stable_mosaic.version = 11 : i64} {
  func.func @te_mhca_kernel(%arg0: i32, %arg1: memref<48x128xf32, #tpu.memory_space<vmem>>, %arg2: memref<48x16x16xbf16, #tpu.memory_space<vmem>>, %arg3: memref<48x16x3xf32, #tpu.memory_space<vmem>>, %arg4: memref<16x16xbf16, #tpu.memory_space<vmem>>, %arg5: memref<16x16xbf16, #tpu.memory_space<vmem>>, %arg6: memref<16x16xbf16, #tpu.memory_space<vmem>>, %arg7: memref<16x16xbf16, #tpu.memory_space<vmem>>, %arg8: memref<16x16xbf16, #tpu.memory_space<vmem>>, %arg9: memref<2x16xf32, #tpu.memory_space<vmem>>, %arg10: memref<16x16xf32, #tpu.memory_space<vmem>>, %arg11: memref<1x16xf32, #tpu.memory_space<vmem>>, %arg12: memref<1x16xf32, #tpu.memory_space<vmem>>, %arg13: memref<1x16xf32, #tpu.memory_space<vmem>>, %arg14: memref<1x16xf32, #tpu.memory_space<vmem>>, %arg15: memref<16x32xbf16, #tpu.memory_space<vmem>>, %arg16: memref<32x16xbf16, #tpu.memory_space<vmem>>, %arg17: memref<48x128xf32, #tpu.memory_space<vmem>>) attributes {dimension_semantics = [#tpu.dimension_semantics<parallel>], iteration_bounds = array<i64: 2>, scalar_prefetch = 0 : i64, scratch_operands = 0 : i64, tpu.core_type = #tpu.core_type<tc>, window_params = [{transform_indices = @transform_0, window_bounds = array<i64: 48, 128>}, {transform_indices = @transform_1, window_bounds = array<i64: 48, 16, 16>}, {transform_indices = @transform_2, window_bounds = array<i64: 48, 16, 3>}, {pipeline_mode = #tpu.pipeline_mode<synchronous>, transform_indices = @transform_3, window_bounds = array<i64: 16, 16>}, {pipeline_mode = #tpu.pipeline_mode<synchronous>, transform_indices = @transform_4, window_bounds = array<i64: 16, 16>}, {pipeline_mode = #tpu.pipeline_mode<synchronous>, transform_indices = @transform_5, window_bounds = array<i64: 16, 16>}, {pipeline_mode = #tpu.pipeline_mode<synchronous>, transform_indices = @transform_6, window_bounds = array<i64: 16, 16>}, {pipeline_mode = #tpu.pipeline_mode<synchronous>, transform_indices = @transform_7, window_bounds = array<i64: 16, 16>}, {pipeline_mode = #tpu.pipeline_mode<synchronous>, transform_indices = @transform_8, window_bounds = array<i64: 2, 16>}, {pipeline_mode = #tpu.pipeline_mode<synchronous>, transform_indices = @transform_9, window_bounds = array<i64: 16, 16>}, {pipeline_mode = #tpu.pipeline_mode<synchronous>, transform_indices = @transform_10, window_bounds = array<i64: 1, 16>}, {pipeline_mode = #tpu.pipeline_mode<synchronous>, transform_indices = @transform_11, window_bounds = array<i64: 1, 16>}, {pipeline_mode = #tpu.pipeline_mode<synchronous>, transform_indices = @transform_12, window_bounds = array<i64: 1, 16>}, {pipeline_mode = #tpu.pipeline_mode<synchronous>, transform_indices = @transform_13, window_bounds = array<i64: 1, 16>}, {pipeline_mode = #tpu.pipeline_mode<synchronous>, transform_indices = @transform_14, window_bounds = array<i64: 16, 32>}, {pipeline_mode = #tpu.pipeline_mode<synchronous>, transform_indices = @transform_15, window_bounds = array<i64: 32, 16>}, {transform_indices = @transform_16, window_bounds = array<i64: 48, 128>}]} {
    %c0 = arith.constant 0 : index
    %c0_0 = arith.constant 0 : index
    %0 = vector.load %arg1[%c0, %c0_0] : memref<48x128xf32, #tpu.memory_space<vmem>>, vector<48x128xf32>
    %1 = vector.extract_strided_slice %0 {offsets = [0, 0], sizes = [48, 16], strides = [1, 1]} : vector<48x128xf32> to vector<48x16xf32>
    %2 = vector.extract_strided_slice %0 {offsets = [0, 16], sizes = [48, 2], strides = [1, 1]} : vector<48x128xf32> to vector<48x2xf32>
    %c0_1 = arith.constant 0 : index
    %c0_2 = arith.constant 0 : index
    %c0_3 = arith.constant 0 : index
    %3 = vector.load %arg2[%c0_1, %c0_2, %c0_3] : memref<48x16x16xbf16, #tpu.memory_space<vmem>>, vector<48x16x16xbf16>
    %c0_4 = arith.constant 0 : index
    %c0_5 = arith.constant 0 : index
    %c0_6 = arith.constant 0 : index
    %4 = vector.load %arg3[%c0_4, %c0_5, %c0_6] : memref<48x16x3xf32, #tpu.memory_space<vmem>>, vector<48x16x3xf32>
    %5 = vector.extract_strided_slice %4 {offsets = [0, 0, 0], sizes = [48, 16, 2], strides = [1, 1, 1]} : vector<48x16x3xf32> to vector<48x16x2xf32>
    %6 = vector.extract_strided_slice %4 {offsets = [0, 0, 2], sizes = [48, 16, 1], strides = [1, 1, 1]} : vector<48x16x3xf32> to vector<48x16x1xf32>
    %c0_7 = arith.constant 0 : index
    %c0_8 = arith.constant 0 : index
    %7 = vector.load %arg11[%c0_7, %c0_8] : memref<1x16xf32, #tpu.memory_space<vmem>>, vector<1x16xf32>
    %c0_9 = arith.constant 0 : index
    %c0_10 = arith.constant 0 : index
    %8 = vector.load %arg12[%c0_9, %c0_10] : memref<1x16xf32, #tpu.memory_space<vmem>>, vector<1x16xf32>
    %cst = arith.constant dense<0.000000e+00> : vector<48xf32>
    %9 = vector.multi_reduction <add>, %1, %cst [1] : vector<48x16xf32> to vector<48xf32>
    %10 = vector.shape_cast %9 : vector<48xf32> to vector<48x1xf32>
    %cst_11 = arith.constant 1.600000e+01 : f32
    %11 = vector.broadcast %cst_11 : f32 to vector<48x1xf32>
    %12 = arith.divf %10, %11 : vector<48x1xf32>
    %13 = vector.broadcast %12 : vector<48x1xf32> to vector<48x16xf32>
    %14 = arith.subf %1, %13 : vector<48x16xf32>
    %15 = arith.mulf %14, %14 : vector<48x16xf32>
    %cst_12 = arith.constant dense<0.000000e+00> : vector<48xf32>
    %16 = vector.multi_reduction <add>, %15, %cst_12 [1] : vector<48x16xf32> to vector<48xf32>
    %17 = vector.shape_cast %16 : vector<48xf32> to vector<48x1xf32>
    %cst_13 = arith.constant 1.600000e+01 : f32
    %18 = vector.broadcast %cst_13 : f32 to vector<48x1xf32>
    %19 = arith.divf %17, %18 : vector<48x1xf32>
    %20 = vector.broadcast %12 : vector<48x1xf32> to vector<48x16xf32>
    %21 = arith.subf %1, %20 : vector<48x16xf32>
    %cst_14 = arith.constant 9.99999974E-6 : f32
    %22 = vector.broadcast %cst_14 : f32 to vector<48x1xf32>
    %23 = arith.addf %19, %22 : vector<48x1xf32>
    %24 = math.rsqrt %23 : vector<48x1xf32>
    %25 = vector.broadcast %24 : vector<48x1xf32> to vector<48x16xf32>
    %26 = arith.mulf %21, %25 : vector<48x16xf32>
    %27 = vector.broadcast %7 : vector<1x16xf32> to vector<48x16xf32>
    %28 = arith.mulf %26, %27 : vector<48x16xf32>
    %29 = vector.broadcast %8 : vector<1x16xf32> to vector<48x16xf32>
    %30 = arith.addf %28, %29 : vector<48x16xf32>
    %31 = arith.truncf %30 : vector<48x16xf32> to vector<48x16xbf16>
    %c0_15 = arith.constant 0 : index
    %c0_16 = arith.constant 0 : index
    %32 = vector.load %arg4[%c0_15, %c0_16] : memref<16x16xbf16, #tpu.memory_space<vmem>>, vector<16x16xbf16>
    %cst_17 = arith.constant dense<0.000000e+00> : vector<48x16xf32>
    %33 = tpu.matmul %31, %32, %cst_17 {dimension_numbers = #tpu.dot_dimension_numbers<[1], [0], [0], [1], [0, 0, 1, 1], [], []>} : vector<48x16xbf16>, vector<16x16xbf16>, vector<48x16xf32> -> vector<48x16xf32>
    %34 = vector.shape_cast %3 : vector<48x16x16xbf16> to vector<768x16xbf16>
    %c0_18 = arith.constant 0 : index
    %c0_19 = arith.constant 0 : index
    %35 = vector.load %arg5[%c0_18, %c0_19] : memref<16x16xbf16, #tpu.memory_space<vmem>>, vector<16x16xbf16>
    %cst_20 = arith.constant dense<0.000000e+00> : vector<768x16xf32>
    %36 = tpu.matmul %34, %35, %cst_20 {dimension_numbers = #tpu.dot_dimension_numbers<[1], [0], [0], [1], [0, 0, 1, 1], [], []>} : vector<768x16xbf16>, vector<16x16xbf16>, vector<768x16xf32> -> vector<768x16xf32>
    %37 = vector.shape_cast %36 : vector<768x16xf32> to vector<48x16x16xf32>
    %c0_21 = arith.constant 0 : index
    %c0_22 = arith.constant 0 : index
    %38 = vector.load %arg6[%c0_21, %c0_22] : memref<16x16xbf16, #tpu.memory_space<vmem>>, vector<16x16xbf16>
    %cst_23 = arith.constant dense<0.000000e+00> : vector<768x16xf32>
    %39 = tpu.matmul %34, %38, %cst_23 {dimension_numbers = #tpu.dot_dimension_numbers<[1], [0], [0], [1], [0, 0, 1, 1], [], []>} : vector<768x16xbf16>, vector<16x16xbf16>, vector<768x16xf32> -> vector<768x16xf32>
    %40 = vector.shape_cast %39 : vector<768x16xf32> to vector<48x16x16xf32>
    %41 = vector.shape_cast %2 : vector<48x2xf32> to vector<48x1x2xf32>
    %42 = vector.broadcast %41 : vector<48x1x2xf32> to vector<48x16x2xf32>
    %43 = arith.subf %42, %5 : vector<48x16x2xf32>
    %44 = vector.extract_strided_slice %43 {offsets = [0, 0, 0], sizes = [48, 16, 1], strides = [1, 1, 1]} : vector<48x16x2xf32> to vector<48x16x1xf32>
    %c0_24 = arith.constant 0 : index
    %c0_25 = arith.constant 0 : index
    %45 = vector.load %arg9[%c0_24, %c0_25] : memref<2x16xf32, #tpu.memory_space<vmem>>, vector<1x16xf32>
    %46 = vector.shape_cast %45 : vector<1x16xf32> to vector<1x1x16xf32>
    %47 = vector.broadcast %44 : vector<48x16x1xf32> to vector<48x16x16xf32>
    %48 = vector.broadcast %46 : vector<1x1x16xf32> to vector<48x16x16xf32>
    %49 = arith.mulf %47, %48 : vector<48x16x16xf32>
    %50 = vector.extract_strided_slice %43 {offsets = [0, 0, 1], sizes = [48, 16, 1], strides = [1, 1, 1]} : vector<48x16x2xf32> to vector<48x16x1xf32>
    %c1 = arith.constant 1 : index
    %c0_26 = arith.constant 0 : index
    %51 = vector.load %arg9[%c1, %c0_26] : memref<2x16xf32, #tpu.memory_space<vmem>>, vector<1x16xf32>
    %52 = vector.shape_cast %51 : vector<1x16xf32> to vector<1x1x16xf32>
    %53 = vector.broadcast %50 : vector<48x16x1xf32> to vector<48x16x16xf32>
    %54 = vector.broadcast %52 : vector<1x1x16xf32> to vector<48x16x16xf32>
    %55 = arith.mulf %53, %54 : vector<48x16x16xf32>
    %56 = arith.addf %49, %55 : vector<48x16x16xf32>
    %cst_27 = arith.constant 0.000000e+00 : f32
    %57 = vector.broadcast %cst_27 : f32 to vector<48x16x16xf32>
    %58 = arith.maximumf %56, %57 : vector<48x16x16xf32>
    %59 = vector.shape_cast %33 : vector<48x16xf32> to vector<48x1x16xf32>
    %60 = vector.broadcast %59 : vector<48x1x16xf32> to vector<48x16x16xf32>
    %61 = arith.mulf %60, %37 : vector<48x16x16xf32>
    %62 = vector.shape_cast %61 : vector<48x16x16xf32> to vector<768x16xf32>
    %63 = arith.truncf %62 : vector<768x16xf32> to vector<768x16xbf16>
    %c0_28 = arith.constant 0 : index
    %c0_29 = arith.constant 0 : index
    %64 = vector.load %arg8[%c0_28, %c0_29] : memref<16x16xbf16, #tpu.memory_space<vmem>>, vector<16x16xbf16>
    %cst_30 = arith.constant dense<0.000000e+00> : vector<768x16xf32>
    %65 = tpu.matmul %63, %64, %cst_30 {dimension_numbers = #tpu.dot_dimension_numbers<[1], [0], [0], [1], [0, 0, 1, 1], [], []>} : vector<768x16xbf16>, vector<16x16xbf16>, vector<768x16xf32> -> vector<768x16xf32>
    %66 = vector.shape_cast %58 : vector<48x16x16xf32> to vector<768x16xf32>
    %c0_31 = arith.constant 0 : index
    %c0_32 = arith.constant 0 : index
    %67 = vector.load %arg10[%c0_31, %c0_32] : memref<16x16xf32, #tpu.memory_space<vmem>>, vector<16x16xf32>
    %cst_33 = arith.constant dense<0.000000e+00> : vector<768x16xf32>
    %68 = tpu.matmul %66, %67, %cst_33 {dimension_numbers = #tpu.dot_dimension_numbers<[1], [0], [0], [1], [0, 0, 1, 1], [], []>} : vector<768x16xf32>, vector<16x16xf32>, vector<768x16xf32> -> vector<768x16xf32>
    %69 = arith.addf %65, %68 : vector<768x16xf32>
    %70 = vector.shape_cast %69 : vector<768x16xf32> to vector<48x16x16xf32>
    %cst_34 = arith.constant 0.000000e+00 : f32
    %71 = vector.broadcast %cst_34 : f32 to vector<48x16x1xf32>
    %72 = arith.cmpf ogt, %6, %71 : vector<48x16x1xf32>
    %cst_35 = arith.constant -1.000000e+30 : f32
    %73 = vector.shape_cast %72 : vector<48x16x1xi1> to vector<48x16x1xi1>
    %74 = vector.broadcast %73 : vector<48x16x1xi1> to vector<48x16x16xi1>
    %75 = vector.broadcast %cst_35 : f32 to vector<48x16x16xf32>
    %76 = arith.select %74, %70, %75 : vector<48x16x16xi1>, vector<48x16x16xf32>
    %cst_36 = arith.constant dense<0xFF800000> : vector<48x16xf32>
    %77 = vector.multi_reduction <maximumf>, %76, %cst_36 [1] : vector<48x16x16xf32> to vector<48x16xf32>
    %78 = vector.shape_cast %77 : vector<48x16xf32> to vector<48x1x16xf32>
    %79 = vector.broadcast %78 : vector<48x1x16xf32> to vector<48x16x16xf32>
    %80 = arith.subf %76, %79 : vector<48x16x16xf32>
    %81 = math.exp %80 : vector<48x16x16xf32>
    %cst_37 = arith.constant dense<0.000000e+00> : vector<48x16xf32>
    %82 = vector.multi_reduction <add>, %81, %cst_37 [1] : vector<48x16x16xf32> to vector<48x16xf32>
    %83 = vector.shape_cast %82 : vector<48x16xf32> to vector<48x1x16xf32>
    %84 = tpu.reciprocal %83 {approx = true} : vector<48x1x16xf32> -> vector<48x1x16xf32>
    %85 = vector.broadcast %84 : vector<48x1x16xf32> to vector<48x16x16xf32>
    %86 = arith.mulf %81, %85 : vector<48x16x16xf32>
    %87 = arith.mulf %86, %40 : vector<48x16x16xf32>
    %cst_38 = arith.constant dense<0.000000e+00> : vector<48x16xf32>
    %88 = vector.multi_reduction <add>, %87, %cst_38 [1] : vector<48x16x16xf32> to vector<48x16xf32>
    %89 = arith.truncf %88 : vector<48x16xf32> to vector<48x16xbf16>
    %c0_39 = arith.constant 0 : index
    %c0_40 = arith.constant 0 : index
    %90 = vector.load %arg7[%c0_39, %c0_40] : memref<16x16xbf16, #tpu.memory_space<vmem>>, vector<16x16xbf16>
    %cst_41 = arith.constant dense<0.000000e+00> : vector<48x16xf32>
    %91 = tpu.matmul %89, %90, %cst_41 {dimension_numbers = #tpu.dot_dimension_numbers<[1], [0], [0], [1], [0, 0, 1, 1], [], []>} : vector<48x16xbf16>, vector<16x16xbf16>, vector<48x16xf32> -> vector<48x16xf32>
    %92 = arith.addf %1, %91 : vector<48x16xf32>
    %c0_42 = arith.constant 0 : index
    %c0_43 = arith.constant 0 : index
    %93 = vector.load %arg13[%c0_42, %c0_43] : memref<1x16xf32, #tpu.memory_space<vmem>>, vector<1x16xf32>
    %c0_44 = arith.constant 0 : index
    %c0_45 = arith.constant 0 : index
    %94 = vector.load %arg14[%c0_44, %c0_45] : memref<1x16xf32, #tpu.memory_space<vmem>>, vector<1x16xf32>
    %cst_46 = arith.constant dense<0.000000e+00> : vector<48xf32>
    %95 = vector.multi_reduction <add>, %92, %cst_46 [1] : vector<48x16xf32> to vector<48xf32>
    %96 = vector.shape_cast %95 : vector<48xf32> to vector<48x1xf32>
    %cst_47 = arith.constant 1.600000e+01 : f32
    %97 = vector.broadcast %cst_47 : f32 to vector<48x1xf32>
    %98 = arith.divf %96, %97 : vector<48x1xf32>
    %99 = vector.broadcast %98 : vector<48x1xf32> to vector<48x16xf32>
    %100 = arith.subf %92, %99 : vector<48x16xf32>
    %101 = arith.mulf %100, %100 : vector<48x16xf32>
    %cst_48 = arith.constant dense<0.000000e+00> : vector<48xf32>
    %102 = vector.multi_reduction <add>, %101, %cst_48 [1] : vector<48x16xf32> to vector<48xf32>
    %103 = vector.shape_cast %102 : vector<48xf32> to vector<48x1xf32>
    %cst_49 = arith.constant 1.600000e+01 : f32
    %104 = vector.broadcast %cst_49 : f32 to vector<48x1xf32>
    %105 = arith.divf %103, %104 : vector<48x1xf32>
    %106 = vector.broadcast %98 : vector<48x1xf32> to vector<48x16xf32>
    %107 = arith.subf %92, %106 : vector<48x16xf32>
    %cst_50 = arith.constant 9.99999974E-6 : f32
    %108 = vector.broadcast %cst_50 : f32 to vector<48x1xf32>
    %109 = arith.addf %105, %108 : vector<48x1xf32>
    %110 = math.rsqrt %109 : vector<48x1xf32>
    %111 = vector.broadcast %110 : vector<48x1xf32> to vector<48x16xf32>
    %112 = arith.mulf %107, %111 : vector<48x16xf32>
    %113 = vector.broadcast %93 : vector<1x16xf32> to vector<48x16xf32>
    %114 = arith.mulf %112, %113 : vector<48x16xf32>
    %115 = vector.broadcast %94 : vector<1x16xf32> to vector<48x16xf32>
    %116 = arith.addf %114, %115 : vector<48x16xf32>
    %117 = arith.truncf %116 : vector<48x16xf32> to vector<48x16xbf16>
    %c0_51 = arith.constant 0 : index
    %c0_52 = arith.constant 0 : index
    %118 = vector.load %arg15[%c0_51, %c0_52] : memref<16x32xbf16, #tpu.memory_space<vmem>>, vector<16x32xbf16>
    %cst_53 = arith.constant dense<0.000000e+00> : vector<48x32xf32>
    %119 = tpu.matmul %117, %118, %cst_53 {dimension_numbers = #tpu.dot_dimension_numbers<[1], [0], [0], [1], [0, 0, 1, 1], [], []>} : vector<48x16xbf16>, vector<16x32xbf16>, vector<48x32xf32> -> vector<48x32xf32>
    %120 = arith.mulf %119, %119 : vector<48x32xf32>
    %121 = arith.mulf %119, %120 : vector<48x32xf32>
    %cst_54 = arith.constant 4.471500e-02 : f32
    %122 = vector.broadcast %cst_54 : f32 to vector<48x32xf32>
    %123 = arith.mulf %122, %121 : vector<48x32xf32>
    %124 = arith.addf %119, %123 : vector<48x32xf32>
    %cst_55 = arith.constant 0.797884583 : f32
    %125 = vector.broadcast %cst_55 : f32 to vector<48x32xf32>
    %126 = arith.mulf %125, %124 : vector<48x32xf32>
    %127 = math.tanh %126 : vector<48x32xf32>
    %cst_56 = arith.constant 1.000000e+00 : f32
    %128 = vector.broadcast %cst_56 : f32 to vector<48x32xf32>
    %129 = arith.addf %128, %127 : vector<48x32xf32>
    %cst_57 = arith.constant 5.000000e-01 : f32
    %130 = vector.broadcast %cst_57 : f32 to vector<48x32xf32>
    %131 = arith.mulf %130, %129 : vector<48x32xf32>
    %132 = arith.mulf %119, %131 : vector<48x32xf32>
    %133 = arith.truncf %132 : vector<48x32xf32> to vector<48x32xbf16>
    %c0_58 = arith.constant 0 : index
    %c0_59 = arith.constant 0 : index
    %134 = vector.load %arg16[%c0_58, %c0_59] : memref<32x16xbf16, #tpu.memory_space<vmem>>, vector<32x16xbf16>
    %cst_60 = arith.constant dense<0.000000e+00> : vector<48x16xf32>
    %135 = tpu.matmul %133, %134, %cst_60 {dimension_numbers = #tpu.dot_dimension_numbers<[1], [0], [0], [1], [0, 0, 1, 1], [], []>} : vector<48x32xbf16>, vector<32x16xbf16>, vector<48x16xf32> -> vector<48x16xf32>
    %136 = arith.addf %92, %135 : vector<48x16xf32>
    %cst_61 = arith.constant dense<0.000000e+00> : vector<48x16xf32>
    %137 = vector.multi_reduction <add>, %86, %cst_61 [2] : vector<48x16x16xf32> to vector<48x16xf32>
    %138 = vector.shape_cast %137 : vector<48x16xf32> to vector<48x16x1xf32>
    %cst_62 = arith.constant 1.600000e+01 : f32
    %139 = vector.broadcast %cst_62 : f32 to vector<48x16x1xf32>
    %140 = arith.divf %138, %139 : vector<48x16x1xf32>
    %141 = vector.shape_cast %2 : vector<48x2xf32> to vector<48x1x2xf32>
    %142 = vector.broadcast %141 : vector<48x1x2xf32> to vector<48x16x2xf32>
    %143 = arith.subf %5, %142 : vector<48x16x2xf32>
    %144 = vector.broadcast %6 : vector<48x16x1xf32> to vector<48x16x2xf32>
    %145 = arith.mulf %143, %144 : vector<48x16x2xf32>
    %146 = vector.broadcast %140 : vector<48x16x1xf32> to vector<48x16x2xf32>
    %147 = arith.mulf %146, %145 : vector<48x16x2xf32>
    %cst_63 = arith.constant dense<0.000000e+00> : vector<48x2xf32>
    %148 = vector.multi_reduction <add>, %147, %cst_63 [1] : vector<48x16x2xf32> to vector<48x2xf32>
    %149 = arith.addf %2, %148 : vector<48x2xf32>
    %cst_64 = arith.constant 0.000000e+00 : f32
    %150 = vector.broadcast %cst_64 : f32 to vector<48x110xf32>
    %151 = tpu.concatenate %136, %149, %150 in 1 : vector<48x16xf32>, vector<48x2xf32>, vector<48x110xf32> -> vector<48x128xf32>
    %c0_65 = arith.constant 0 : index
    %c0_66 = arith.constant 0 : index
    %152 = vector.load %arg17[%c0_65, %c0_66] : memref<48x128xf32, #tpu.memory_space<vmem>>, vector<48x128xf32>
    tpu.vector_store %arg17[%c0_65, %c0_66], %151 {strides = array<i32>} : memref<48x128xf32, #tpu.memory_space<vmem>>, vector<48x128xf32>,
    return
  }
  func.func @transform_0(%arg0: i32) -> (i32, i32) {
    %c0_i32 = arith.constant 0 : i32
    %c0_i32_0 = arith.constant 0 : i32
    return %arg0, %c0_i32 : i32, i32
  }
  func.func @transform_1(%arg0: i32) -> (i32, i32, i32) {
    %c0_i32 = arith.constant 0 : i32
    %c0_i32_0 = arith.constant 0 : i32
    %c0_i32_1 = arith.constant 0 : i32
    return %arg0, %c0_i32, %c0_i32_0 : i32, i32, i32
  }
  func.func @transform_2(%arg0: i32) -> (i32, i32, i32) {
    %c0_i32 = arith.constant 0 : i32
    %c0_i32_0 = arith.constant 0 : i32
    %c0_i32_1 = arith.constant 0 : i32
    return %arg0, %c0_i32, %c0_i32_0 : i32, i32, i32
  }
  func.func @transform_3(%arg0: i32) -> (i32, i32) {
    %c0_i32 = arith.constant 0 : i32
    %c0_i32_0 = arith.constant 0 : i32
    %c0_i32_1 = arith.constant 0 : i32
    return %c0_i32, %c0_i32_0 : i32, i32
  }
  func.func @transform_4(%arg0: i32) -> (i32, i32) {
    %c0_i32 = arith.constant 0 : i32
    %c0_i32_0 = arith.constant 0 : i32
    %c0_i32_1 = arith.constant 0 : i32
    return %c0_i32, %c0_i32_0 : i32, i32
  }
  func.func @transform_5(%arg0: i32) -> (i32, i32) {
    %c0_i32 = arith.constant 0 : i32
    %c0_i32_0 = arith.constant 0 : i32
    %c0_i32_1 = arith.constant 0 : i32
    return %c0_i32, %c0_i32_0 : i32, i32
  }
  func.func @transform_6(%arg0: i32) -> (i32, i32) {
    %c0_i32 = arith.constant 0 : i32
    %c0_i32_0 = arith.constant 0 : i32
    %c0_i32_1 = arith.constant 0 : i32
    return %c0_i32, %c0_i32_0 : i32, i32
  }
  func.func @transform_7(%arg0: i32) -> (i32, i32) {
    %c0_i32 = arith.constant 0 : i32
    %c0_i32_0 = arith.constant 0 : i32
    %c0_i32_1 = arith.constant 0 : i32
    return %c0_i32, %c0_i32_0 : i32, i32
  }
  func.func @transform_8(%arg0: i32) -> (i32, i32) {
    %c0_i32 = arith.constant 0 : i32
    %c0_i32_0 = arith.constant 0 : i32
    %c0_i32_1 = arith.constant 0 : i32
    return %c0_i32, %c0_i32_0 : i32, i32
  }
  func.func @transform_9(%arg0: i32) -> (i32, i32) {
    %c0_i32 = arith.constant 0 : i32
    %c0_i32_0 = arith.constant 0 : i32
    %c0_i32_1 = arith.constant 0 : i32
    return %c0_i32, %c0_i32_0 : i32, i32
  }
  func.func @transform_10(%arg0: i32) -> (i32, i32) {
    %c0_i32 = arith.constant 0 : i32
    %c0_i32_0 = arith.constant 0 : i32
    %c0_i32_1 = arith.constant 0 : i32
    return %c0_i32, %c0_i32_0 : i32, i32
  }
  func.func @transform_11(%arg0: i32) -> (i32, i32) {
    %c0_i32 = arith.constant 0 : i32
    %c0_i32_0 = arith.constant 0 : i32
    %c0_i32_1 = arith.constant 0 : i32
    return %c0_i32, %c0_i32_0 : i32, i32
  }
  func.func @transform_12(%arg0: i32) -> (i32, i32) {
    %c0_i32 = arith.constant 0 : i32
    %c0_i32_0 = arith.constant 0 : i32
    %c0_i32_1 = arith.constant 0 : i32
    return %c0_i32, %c0_i32_0 : i32, i32
  }
  func.func @transform_13(%arg0: i32) -> (i32, i32) {
    %c0_i32 = arith.constant 0 : i32
    %c0_i32_0 = arith.constant 0 : i32
    %c0_i32_1 = arith.constant 0 : i32
    return %c0_i32, %c0_i32_0 : i32, i32
  }
  func.func @transform_14(%arg0: i32) -> (i32, i32) {
    %c0_i32 = arith.constant 0 : i32
    %c0_i32_0 = arith.constant 0 : i32
    %c0_i32_1 = arith.constant 0 : i32
    return %c0_i32, %c0_i32_0 : i32, i32
  }
  func.func @transform_15(%arg0: i32) -> (i32, i32) {
    %c0_i32 = arith.constant 0 : i32
    %c0_i32_0 = arith.constant 0 : i32
    %c0_i32_1 = arith.constant 0 : i32
    return %c0_i32, %c0_i32_0 : i32, i32
  }
  func.func @transform_16(%arg0: i32) -> (i32, i32) {
    %c0_i32 = arith.constant 0 : i32
    %c0_i32_0 = arith.constant 0 : i32
    return %arg0, %c0_i32 : i32, i32
  }
}

</mosaic_0001>

<llo_original>
// kernel: tpu_custom_call.1
$region0: #{tpu_custom_call.1}
  #allocation0 [shape = 'u32[]', space=smem, size = 0x4, offset = 0x4, fixed_abs, tag = 'smem constant byte address 0x4 - core index']
  #allocation1 [shape = 'u32[144,128]{1,0:T(1,128)}', space=vmem, size = 0x12000, scoped, tag = 'internal scratch']
  %s0 = inlined_call_operand.vmem [shape: f32[96,128], index: 0, kind: input, shape index: {}]
  %s1 = inlined_call_operand.vmem [shape: bf16[96,16,16], index: 1, kind: input, shape index: {}]
  %s2 = inlined_call_operand.vmem [shape: f32[96,16,3], index: 2, kind: input, shape index: {}]
  %s3 = inlined_call_operand.vmem [shape: bf16[16,16], index: 3, kind: input, shape index: {}]
  %s4 = inlined_call_operand.vmem [shape: bf16[16,16], index: 4, kind: input, shape index: {}]
  %s5 = inlined_call_operand.vmem [shape: bf16[16,16], index: 5, kind: input, shape index: {}]
  %s6 = inlined_call_operand.vmem [shape: bf16[16,16], index: 6, kind: input, shape index: {}]
  %s7 = inlined_call_operand.vmem [shape: bf16[16,16], index: 7, kind: input, shape index: {}]
  %s8 = inlined_call_operand.vmem [shape: f32[2,16], index: 8, kind: input, shape index: {}]
  %s9 = inlined_call_operand.vmem [shape: f32[16,16], index: 9, kind: input, shape index: {}]
  %s10 = inlined_call_operand.vmem [shape: f32[1,16], index: 10, kind: input, shape index: {}]
  %s11 = inlined_call_operand.vmem [shape: f32[1,16], index: 11, kind: input, shape index: {}]
  %s12 = inlined_call_operand.vmem [shape: f32[1,16], index: 12, kind: input, shape index: {}]
  %s13 = inlined_call_operand.vmem [shape: f32[1,16], index: 13, kind: input, shape index: {}]
  %s14 = inlined_call_operand.vmem [shape: bf16[16,32], index: 14, kind: input, shape index: {}]
  %s15 = inlined_call_operand.vmem [shape: bf16[32,16], index: 15, kind: input, shape index: {}]
  %s16 = inlined_call_operand.hbm [shape: f32[96,128], index: 16, kind: output, shape index: {}]
  %s17 = sld [smem:[#allocation0]]
  $region97: #{tpu_custom_call.1} parent=0
    _
  %s19 = ssub.s32 1, %s17
  %s20 = scalar_select 0, %s19, %s17
  $region1: #{tpu_custom_call.1} parent=0
    #allocation2 [shape = 'u8[49152]{0}', space=vmem, size = 0xc000, scoped, tag = 'output window, operand 0']
    #allocation3 [shape = 's32[2]{0}', space=sflag, size = 0x8, scoped, tag = 'scoped memory for tpu_custom_call.1']
    %21 = vsyncpa [#allocation3], 0
    %s22 = scalar_lea.sflag [#allocation3], 1
    %23 = vsyncpa %s22, 0
    loop: start=0, step=1, limit=4
    $region2: #{tpu_custom_call.1} parent=1 // loop_pre_header
      _
    $region3: #{tpu_custom_call.1} parent=1 // loop_header
      %s25 = sphi 0, %s29
      %p26 = scmp.ge.s32.totalorder %s25, 4
      %s35 = sphi 0, %s37
      %s38 = sphi 0, %s35
      %s39 = sphi 0, %s38
      %s55 = sphi 0, %s39
      %s61 = sphi 0, %s63
      %s64 = sphi 0, %s61
      %s65 = sphi 0, %s64
      %s81 = sphi 0, %s65
      %s87 = sphi 0, %s89
      %s90 = sphi 0, %s87
      %s91 = sphi 0, %s90
      %s107 = sphi 0, %s91
      %s111 = sphi 0, %s111
      %s113 = sphi 0, %s111
      %s114 = sphi 0, %s113
      %s128 = sphi 0, %s114
      %s132 = sphi 0, %s132
      %s134 = sphi 0, %s132
      %s135 = sphi 0, %s134
      %s149 = sphi 0, %s135
      %s153 = sphi 0, %s153
      %s155 = sphi 0, %s153
      %s156 = sphi 0, %s155
      %s170 = sphi 0, %s156
      %s174 = sphi 0, %s174
      %s176 = sphi 0, %s174
      %s177 = sphi 0, %s176
      %s191 = sphi 0, %s177
      %s195 = sphi 0, %s195
      %s197 = sphi 0, %s195
      %s198 = sphi 0, %s197
      %s212 = sphi 0, %s198
      %s216 = sphi 0, %s216
      %s218 = sphi 0, %s216
      %s219 = sphi 0, %s218
      %s233 = sphi 0, %s219
      %s237 = sphi 0, %s237
      %s239 = sphi 0, %s237
      %s240 = sphi 0, %s239
      %s254 = sphi 0, %s240
      %s258 = sphi 0, %s258
      %s260 = sphi 0, %s258
      %s261 = sphi 0, %s260
      %s275 = sphi 0, %s261
      %s279 = sphi 0, %s279
      %s281 = sphi 0, %s279
      %s282 = sphi 0, %s281
      %s296 = sphi 0, %s282
      %s300 = sphi 0, %s300
      %s302 = sphi 0, %s300
      %s303 = sphi 0, %s302
      %s317 = sphi 0, %s303
      %s321 = sphi 0, %s321
      %s323 = sphi 0, %s321
      %s324 = sphi 0, %s323
      %s338 = sphi 0, %s324
      %s342 = sphi 0, %s342
      %s344 = sphi 0, %s342
      %s345 = sphi 0, %s344
      %s359 = sphi 0, %s345
      %s363 = sphi 0, %s363
      %s365 = sphi 0, %s363
      %s366 = sphi 0, %s365
      %s380 = sphi 0, %s366
      %s386 = sphi 0, %s388
      %s389 = sphi 0, %s386
      %s390 = sphi 0, %s389
      %s406 = sphi 0, %s390
    $region4: #{tpu_custom_call.1} parent=1 // loop_header_branch
      %28 = sbr.rel (%p26) target = $region8
    $region5: #{tpu_custom_call.1} parent=1 // loop_body
      %s30 = ssub.s32 %s25, 1
      %s31 = ssub.s32 %s25, 2
      %s32 = sadd.s32 %s25, 1
      %s33 = ssub.s32 %s25, %s32
      %p34 = scmp.eq.s32.totalorder %s33, 0
      %s36 = sadd.s32 %s35, 1
      %s37 = scalar_select %p34, %s35, %s36
      %p40 = pneg %p34
      %p41 = scmp.eq.s32.totalorder %s25, 1
      %p42 = por %p40, %p41
      %p43 = scmp.ne.s32.totalorder %s35, %s38
      %p44 = scmp.eq.s32.totalorder %s25, 0
      %p45 = por %p43, %p44
      %p46 = scmp.ne.s32.totalorder %s35, %s38
      %p47 = scmp.eq.s32.totalorder %s30, 1
      %p48 = por %p46, %p47
      %p49 = scmp.ne.s32.totalorder %s38, %s39
      %p50 = scmp.eq.s32.totalorder %s30, 0
      %p51 = por %p49, %p50
      %p52 = scmp.ne.s32.totalorder %s38, %s39
      %p53 = scmp.eq.s32.totalorder %s31, 1
      %p54 = por %p52, %p53
      %p56 = scmp.ne.s32.totalorder %s39, %s55
      %p57 = scmp.eq.s32.totalorder %s31, 0
      %p58 = por %p56, %p57
      %s59 = ssub.s32 %s25, %s32
      %p60 = scmp.eq.s32.totalorder %s59, 0
      %s62 = sadd.s32 %s61, 1
      %s63 = scalar_select %p60, %s61, %s62
      %p66 = pneg %p60
      %p67 = scmp.eq.s32.totalorder %s25, 1
      %p68 = por %p66, %p67
      %p69 = scmp.ne.s32.totalorder %s61, %s64
      %p70 = scmp.eq.s32.totalorder %s25, 0
      %p71 = por %p69, %p70
      %p72 = scmp.ne.s32.totalorder %s61, %s64
      %p73 = scmp.eq.s32.totalorder %s30, 1
      %p74 = por %p72, %p73
      %p75 = scmp.ne.s32.totalorder %s64, %s65
      %p76 = scmp.eq.s32.totalorder %s30, 0
      %p77 = por %p75, %p76
      %p78 = scmp.ne.s32.totalorder %s64, %s65
      %p79 = scmp.eq.s32.totalorder %s31, 1
      %p80 = por %p78, %p79
      %p82 = scmp.ne.s32.totalorder %s65, %s81
      %p83 = scmp.eq.s32.totalorder %s31, 0
      %p84 = por %p82, %p83
      %s85 = ssub.s32 %s25, %s32
      %p86 = scmp.eq.s32.totalorder %s85, 0
      %s88 = sadd.s32 %s87, 1
      %s89 = scalar_select %p86, %s87, %s88
      %p92 = pneg %p86
      %p93 = scmp.eq.s32.totalorder %s25, 1
      %p94 = por %p92, %p93
      %p95 = scmp.ne.s32.totalorder %s87, %s90
      %p96 = scmp.eq.s32.totalorder %s25, 0
      %p97 = por %p95, %p96
      %p98 = scmp.ne.s32.totalorder %s87, %s90
      %p99 = scmp.eq.s32.totalorder %s30, 1
      %p100 = por %p98, %p99
      %p101 = scmp.ne.s32.totalorder %s90, %s91
      %p102 = scmp.eq.s32.totalorder %s30, 0
      %p103 = por %p101, %p102
      %p104 = scmp.ne.s32.totalorder %s90, %s91
      %p105 = scmp.eq.s32.totalorder %s31, 1
      %p106 = por %p104, %p105
      %p108 = scmp.ne.s32.totalorder %s91, %s107
      %p109 = scmp.eq.s32.totalorder %s31, 0
      %p110 = por %p108, %p109
      %s112 = sadd.s32 %s111, 1
      %p115 = scmp.eq.s32.totalorder %s25, 1
      %p116 = scmp.ne.s32.totalorder %s111, %s113
      %p117 = scmp.eq.s32.totalorder %s25, 0
      %p118 = por %p116, %p117
      %p119 = scmp.ne.s32.totalorder %s111, %s113
      %p120 = scmp.eq.s32.totalorder %s30, 1
      %p121 = por %p119, %p120
      %p122 = scmp.ne.s32.totalorder %s113, %s114
      %p123 = scmp.eq.s32.totalorder %s30, 0
      %p124 = por %p122, %p123
      %p125 = scmp.ne.s32.totalorder %s113, %s114
      %p126 = scmp.eq.s32.totalorder %s31, 1
      %p127 = por %p125, %p126
      %p129 = scmp.ne.s32.totalorder %s114, %s128
      %p130 = scmp.eq.s32.totalorder %s31, 0
      %p131 = por %p129, %p130
      %s133 = sadd.s32 %s132, 1
      %p136 = scmp.eq.s32.totalorder %s25, 1
      %p137 = scmp.ne.s32.totalorder %s132, %s134
      %p138 = scmp.eq.s32.totalorder %s25, 0
      %p139 = por %p137, %p138
      %p140 = scmp.ne.s32.totalorder %s132, %s134
      %p141 = scmp.eq.s32.totalorder %s30, 1
      %p142 = por %p140, %p141
      %p143 = scmp.ne.s32.totalorder %s134, %s135
      %p144 = scmp.eq.s32.totalorder %s30, 0
      %p145 = por %p143, %p144
      %p146 = scmp.ne.s32.totalorder %s134, %s135
      %p147 = scmp.eq.s32.totalorder %s31, 1
      %p148 = por %p146, %p147
      %p150 = scmp.ne.s32.totalorder %s135, %s149
      %p151 = scmp.eq.s32.totalorder %s31, 0
      %p152 = por %p150, %p151
      %s154 = sadd.s32 %s153, 1
      %p157 = scmp.eq.s32.totalorder %s25, 1
      %p158 = scmp.ne.s32.totalorder %s153, %s155
      %p159 = scmp.eq.s32.totalorder %s25, 0
      %p160 = por %p158, %p159
      %p161 = scmp.ne.s32.totalorder %s153, %s155
      %p162 = scmp.eq.s32.totalorder %s30, 1
      %p163 = por %p161, %p162
      %p164 = scmp.ne.s32.totalorder %s155, %s156
      %p165 = scmp.eq.s32.totalorder %s30, 0
      %p166 = por %p164, %p165
      %p167 = scmp.ne.s32.totalorder %s155, %s156
      %p168 = scmp.eq.s32.totalorder %s31, 1
      %p169 = por %p167, %p168
      %p171 = scmp.ne.s32.totalorder %s156, %s170
      %p172 = scmp.eq.s32.totalorder %s31, 0
      %p173 = por %p171, %p172
      %s175 = sadd.s32 %s174, 1
      %p178 = scmp.eq.s32.totalorder %s25, 1
      %p179 = scmp.ne.s32.totalorder %s174, %s176
      %p180 = scmp.eq.s32.totalorder %s25, 0
      %p181 = por %p179, %p180
      %p182 = scmp.ne.s32.totalorder %s174, %s176
      %p183 = scmp.eq.s32.totalorder %s30, 1
      %p184 = por %p182, %p183
      %p185 = scmp.ne.s32.totalorder %s176, %s177
      %p186 = scmp.eq.s32.totalorder %s30, 0
      %p187 = por %p185, %p186
      %p188 = scmp.ne.s32.totalorder %s176, %s177
      %p189 = scmp.eq.s32.totalorder %s31, 1
      %p190 = por %p188, %p189
      %p192 = scmp.ne.s32.totalorder %s177, %s191
      %p193 = scmp.eq.s32.totalorder %s31, 0
      %p194 = por %p192, %p193
      %s196 = sadd.s32 %s195, 1
      %p199 = scmp.eq.s32.totalorder %s25, 1
      %p200 = scmp.ne.s32.totalorder %s195, %s197
      %p201 = scmp.eq.s32.totalorder %s25, 0
      %p202 = por %p200, %p201
      %p203 = scmp.ne.s32.totalorder %s195, %s197
      %p204 = scmp.eq.s32.totalorder %s30, 1
      %p205 = por %p203, %p204
      %p206 = scmp.ne.s32.totalorder %s197, %s198
      %p207 = scmp.eq.s32.totalorder %s30, 0
      %p208 = por %p206, %p207
      %p209 = scmp.ne.s32.totalorder %s197, %s198
      %p210 = scmp.eq.s32.totalorder %s31, 1
      %p211 = por %p209, %p210
      %p213 = scmp.ne.s32.totalorder %s198, %s212
      %p214 = scmp.eq.s32.totalorder %s31, 0
      %p215 = por %p213, %p214
      %s217 = sadd.s32 %s216, 1
      %p220 = scmp.eq.s32.totalorder %s25, 1
      %p221 = scmp.ne.s32.totalorder %s216, %s218
      %p222 = scmp.eq.s32.totalorder %s25, 0
      %p223 = por %p221, %p222
      %p224 = scmp.ne.s32.totalorder %s216, %s218
      %p225 = scmp.eq.s32.totalorder %s30, 1
      %p226 = por %p224, %p225
      %p227 = scmp.ne.s32.totalorder %s218, %s219
      %p228 = scmp.eq.s32.totalorder %s30, 0
      %p229 = por %p227, %p228
      %p230 = scmp.ne.s32.totalorder %s218, %s219
      %p231 = scmp.eq.s32.totalorder %s31, 1
      %p232 = por %p230, %p231
      %p234 = scmp.ne.s32.totalorder %s219, %s233
      %p235 = scmp.eq.s32.totalorder %s31, 0
      %p236 = por %p234, %p235
      %s238 = sadd.s32 %s237, 1
      %p241 = scmp.eq.s32.totalorder %s25, 1
      %p242 = scmp.ne.s32.totalorder %s237, %s239
      %p243 = scmp.eq.s32.totalorder %s25, 0
      %p244 = por %p242, %p243
      %p245 = scmp.ne.s32.totalorder %s237, %s239
      %p246 = scmp.eq.s32.totalorder %s30, 1
      %p247 = por %p245, %p246
      %p248 = scmp.ne.s32.totalorder %s239, %s240
      %p249 = scmp.eq.s32.totalorder %s30, 0
      %p250 = por %p248, %p249
      %p251 = scmp.ne.s32.totalorder %s239, %s240
      %p252 = scmp.eq.s32.totalorder %s31, 1
      %p253 = por %p251, %p252
      %p255 = scmp.ne.s32.totalorder %s240, %s254
      %p256 = scmp.eq.s32.totalorder %s31, 0
      %p257 = por %p255, %p256
      %s259 = sadd.s32 %s258, 1
      %p262 = scmp.eq.s32.totalorder %s25, 1
      %p263 = scmp.ne.s32.totalorder %s258, %s260
      %p264 = scmp.eq.s32.totalorder %s25, 0
      %p265 = por %p263, %p264
      %p266 = scmp.ne.s32.totalorder %s258, %s260
      %p267 = scmp.eq.s32.totalorder %s30, 1
      %p268 = por %p266, %p267
      %p269 = scmp.ne.s32.totalorder %s260, %s261
      %p270 = scmp.eq.s32.totalorder %s30, 0
      %p271 = por %p269, %p270
      %p272 = scmp.ne.s32.totalorder %s260, %s261
      %p273 = scmp.eq.s32.totalorder %s31, 1
      %p274 = por %p272, %p273
      %p276 = scmp.ne.s32.totalorder %s261, %s275
      %p277 = scmp.eq.s32.totalorder %s31, 0
      %p278 = por %p276, %p277
      %s280 = sadd.s32 %s279, 1
      %p283 = scmp.eq.s32.totalorder %s25, 1
      %p284 = scmp.ne.s32.totalorder %s279, %s281
      %p285 = scmp.eq.s32.totalorder %s25, 0
      %p286 = por %p284, %p285
      %p287 = scmp.ne.s32.totalorder %s279, %s281
      %p288 = scmp.eq.s32.totalorder %s30, 1
      %p289 = por %p287, %p288
      %p290 = scmp.ne.s32.totalorder %s281, %s282
      %p291 = scmp.eq.s32.totalorder %s30, 0
      %p292 = por %p290, %p291
      %p293 = scmp.ne.s32.totalorder %s281, %s282
      %p294 = scmp.eq.s32.totalorder %s31, 1
      %p295 = por %p293, %p294
      %p297 = scmp.ne.s32.totalorder %s282, %s296
      %p298 = scmp.eq.s32.totalorder %s31, 0
      %p299 = por %p297, %p298
      %s301 = sadd.s32 %s300, 1
      %p304 = scmp.eq.s32.totalorder %s25, 1
      %p305 = scmp.ne.s32.totalorder %s300, %s302
      %p306 = scmp.eq.s32.totalorder %s25, 0
      %p307 = por %p305, %p306
      %p308 = scmp.ne.s32.totalorder %s300, %s302
      %p309 = scmp.eq.s32.totalorder %s30, 1
      %p310 = por %p308, %p309
      %p311 = scmp.ne.s32.totalorder %s302, %s303
      %p312 = scmp.eq.s32.totalorder %s30, 0
      %p313 = por %p311, %p312
      %p314 = scmp.ne.s32.totalorder %s302, %s303
      %p315 = scmp.eq.s32.totalorder %s31, 1
      %p316 = por %p314, %p315
      %p318 = scmp.ne.s32.totalorder %s303, %s317
      %p319 = scmp.eq.s32.totalorder %s31, 0
      %p320 = por %p318, %p319
      %s322 = sadd.s32 %s321, 1
      %p325 = scmp.eq.s32.totalorder %s25, 1
      %p326 = scmp.ne.s32.totalorder %s321, %s323
      %p327 = scmp.eq.s32.totalorder %s25, 0
      %p328 = por %p326, %p327
      %p329 = scmp.ne.s32.totalorder %s321, %s323
      %p330 = scmp.eq.s32.totalorder %s30, 1
      %p331 = por %p329, %p330
      %p332 = scmp.ne.s32.totalorder %s323, %s324
      %p333 = scmp.eq.s32.totalorder %s30, 0
      %p334 = por %p332, %p333
      %p335 = scmp.ne.s32.totalorder %s323, %s324
      %p336 = scmp.eq.s32.totalorder %s31, 1
      %p337 = por %p335, %p336
      %p339 = scmp.ne.s32.totalorder %s324, %s338
      %p340 = scmp.eq.s32.totalorder %s31, 0
      %p341 = por %p339, %p340
      %s343 = sadd.s32 %s342, 1
      %p346 = scmp.eq.s32.totalorder %s25, 1
      %p347 = scmp.ne.s32.totalorder %s342, %s344
      %p348 = scmp.eq.s32.totalorder %s25, 0
      %p349 = por %p347, %p348
      %p350 = scmp.ne.s32.totalorder %s342, %s344
      %p351 = scmp.eq.s32.totalorder %s30, 1
      %p352 = por %p350, %p351
      %p353 = scmp.ne.s32.totalorder %s344, %s345
      %p354 = scmp.eq.s32.totalorder %s30, 0
      %p355 = por %p353, %p354
      %p356 = scmp.ne.s32.totalorder %s344, %s345
      %p357 = scmp.eq.s32.totalorder %s31, 1
      %p358 = por %p356, %p357
      %p360 = scmp.ne.s32.totalorder %s345, %s359
      %p361 = scmp.eq.s32.totalorder %s31, 0
      %p362 = por %p360, %p361
      %s364 = sadd.s32 %s363, 1
      %p367 = scmp.eq.s32.totalorder %s25, 1
      %p368 = scmp.ne.s32.totalorder %s363, %s365
      %p369 = scmp.eq.s32.totalorder %s25, 0
      %p370 = por %p368, %p369
      %p371 = scmp.ne.s32.totalorder %s363, %s365
      %p372 = scmp.eq.s32.totalorder %s30, 1
      %p373 = por %p371, %p372
      %p374 = scmp.ne.s32.totalorder %s365, %s366
      %p375 = scmp.eq.s32.totalorder %s30, 0
      %p376 = por %p374, %p375
      %p377 = scmp.ne.s32.totalorder %s365, %s366
      %p378 = scmp.eq.s32.totalorder %s31, 1
      %p379 = por %p377, %p378
      %p381 = scmp.ne.s32.totalorder %s366, %s380
      %p382 = scmp.eq.s32.totalorder %s31, 0
      %p383 = por %p381, %p382
      %s384 = ssub.s32 %s25, %s32
      %p385 = scmp.eq.s32.totalorder %s384, 0
      %s387 = sadd.s32 %s386, 1
      %s388 = scalar_select %p385, %s386, %s387
      %p391 = pneg %p385
      %p392 = scmp.eq.s32.totalorder %s25, 1
      %p393 = por %p391, %p392
      %p394 = scmp.ne.s32.totalorder %s386, %s389
      %p395 = scmp.eq.s32.totalorder %s25, 0
      %p396 = por %p394, %p395
      %p397 = scmp.ne.s32.totalorder %s386, %s389
      %p398 = scmp.eq.s32.totalorder %s30, 1
      %p399 = por %p397, %p398
      %p400 = scmp.ne.s32.totalorder %s389, %s390
      %p401 = scmp.eq.s32.totalorder %s30, 0
      %p402 = por %p400, %p401
      %p403 = scmp.ne.s32.totalorder %s389, %s390
      %p404 = scmp.eq.s32.totalorder %s31, 1
      %p405 = por %p403, %p404
      %p407 = scmp.ne.s32.totalorder %s390, %s406
      %p408 = scmp.eq.s32.totalorder %s31, 0
      %p409 = por %p407, %p408
      %p410 = scmp.le.s32.totalorder 1, %s25
      %p411 = scmp.lt.s32.totalorder %s25, 3
      %p412 = pnand %p410, %p411
      %p413 = pneg %p412
      // Predicated region
      $region9: #{tpu_custom_call.1} parent=5 // pred_check
        _
      $region10: #{tpu_custom_call.1} parent=5 // pred_check_branch
        %415 = sbr.rel (%p412) target = $region12
      $region11: #{tpu_custom_call.1} parent=5 // pred_region
        %s416 = ssub.s32 %s25, 1
        // Predicated region
        $region13: #{tpu_custom_call.1} parent=11 // pred_check
          %p417 = pneg %p124
        $region14: #{tpu_custom_call.1} parent=11 // pred_check_branch
          %419 = sbr.rel (%p417) target = $region16
        $region15: #{tpu_custom_call.1} parent=11 // pred_region
          _
        $region16: #{tpu_custom_call.1} parent=11 // pred_fallthru
          _
        // Predicated region
        $region17: #{tpu_custom_call.1} parent=11 // pred_check
          %p420 = pneg %p145
        $region18: #{tpu_custom_call.1} parent=11 // pred_check_branch
          %422 = sbr.rel (%p420) target = $region20
        $region19: #{tpu_custom_call.1} parent=11 // pred_region
          _
        $region20: #{tpu_custom_call.1} parent=11 // pred_fallthru
          _
        // Predicated region
        $region21: #{tpu_custom_call.1} parent=11 // pred_check
          %p423 = pneg %p166
        $region22: #{tpu_custom_call.1} parent=11 // pred_check_branch
          %425 = sbr.rel (%p423) target = $region24
        $region23: #{tpu_custom_call.1} parent=11 // pred_region
          _
        $region24: #{tpu_custom_call.1} parent=11 // pred_fallthru
          _
        // Predicated region
        $region25: #{tpu_custom_call.1} parent=11 // pred_check
          %p426 = pneg %p187
        $region26: #{tpu_custom_call.1} parent=11 // pred_check_branch
          %428 = sbr.rel (%p426) target = $region28
        $region27: #{tpu_custom_call.1} parent=11 // pred_region
          _
        $region28: #{tpu_custom_call.1} parent=11 // pred_fallthru
          _
        // Predicated region
        $region29: #{tpu_custom_call.1} parent=11 // pred_check
          %p429 = pneg %p208
        $region30: #{tpu_custom_call.1} parent=11 // pred_check_branch
          %431 = sbr.rel (%p429) target = $region32
        $region31: #{tpu_custom_call.1} parent=11 // pred_region
          _
        $region32: #{tpu_custom_call.1} parent=11 // pred_fallthru
          _
        // Predicated region
        $region33: #{tpu_custom_call.1} parent=11 // pred_check
          %p432 = pneg %p229
        $region34: #{tpu_custom_call.1} parent=11 // pred_check_branch
          %434 = sbr.rel (%p432) target = $region36
        $region35: #{tpu_custom_call.1} parent=11 // pred_region
          _
        $region36: #{tpu_custom_call.1} parent=11 // pred_fallthru
          _
        // Predicated region
        $region37: #{tpu_custom_call.1} parent=11 // pred_check
          %p435 = pneg %p250
        $region38: #{tpu_custom_call.1} parent=11 // pred_check_branch
          %437 = sbr.rel (%p435) target = $region40
        $region39: #{tpu_custom_call.1} parent=11 // pred_region
          _
        $region40: #{tpu_custom_call.1} parent=11 // pred_fallthru
          _
        // Predicated region
        $region41: #{tpu_custom_call.1} parent=11 // pred_check
          %p438 = pneg %p271
        $region42: #{tpu_custom_call.1} parent=11 // pred_check_branch
          %440 = sbr.rel (%p438) target = $region44
        $region43: #{tpu_custom_call.1} parent=11 // pred_region
          _
        $region44: #{tpu_custom_call.1} parent=11 // pred_fallthru
          _
        // Predicated region
        $region45: #{tpu_custom_call.1} parent=11 // pred_check
          %p441 = pneg %p292
        $region46: #{tpu_custom_call.1} parent=11 // pred_check_branch
          %443 = sbr.rel (%p441) target = $region48
        $region47: #{tpu_custom_call.1} parent=11 // pred_region
          _
        $region48: #{tpu_custom_call.1} parent=11 // pred_fallthru
          _
        // Predicated region
        $region49: #{tpu_custom_call.1} parent=11 // pred_check
          %p444 = pneg %p313
        $region50: #{tpu_custom_call.1} parent=11 // pred_check_branch
          %446 = sbr.rel (%p444) target = $region52
        $region51: #{tpu_custom_call.1} parent=11 // pred_region
          _
        $region52: #{tpu_custom_call.1} parent=11 // pred_fallthru
          _
        // Predicated region
        $region53: #{tpu_custom_call.1} parent=11 // pred_check
          %p447 = pneg %p334
        $region54: #{tpu_custom_call.1} parent=11 // pred_check_branch
          %449 = sbr.rel (%p447) target = $region56
        $region55: #{tpu_custom_call.1} parent=11 // pred_region
          _
        $region56: #{tpu_custom_call.1} parent=11 // pred_fallthru
          _
        // Predicated region
        $region57: #{tpu_custom_call.1} parent=11 // pred_check
          %p450 = pneg %p355
        $region58: #{tpu_custom_call.1} parent=11 // pred_check_branch
          %452 = sbr.rel (%p450) target = $region60
        $region59: #{tpu_custom_call.1} parent=11 // pred_region
          _
        $region60: #{tpu_custom_call.1} parent=11 // pred_fallthru
          _
        // Predicated region
        $region61: #{tpu_custom_call.1} parent=11 // pred_check
          %p453 = pneg %p376
        $region62: #{tpu_custom_call.1} parent=11 // pred_check_branch
          %455 = sbr.rel (%p453) target = $region64
        $region63: #{tpu_custom_call.1} parent=11 // pred_region
          _
        $region64: #{tpu_custom_call.1} parent=11 // pred_fallthru
          _
      $region12: #{tpu_custom_call.1} parent=5 // pred_fallthru
        _
      %p456 = scmp.lt.s32.totalorder %s25, 2
      // Predicated region
      $region65: #{tpu_custom_call.1} parent=5 // pred_check
        %p457 = pneg %p456
      $region66: #{tpu_custom_call.1} parent=5 // pred_check_branch
        %459 = sbr.rel (%p457) target = $region68
      $region67: #{tpu_custom_call.1} parent=5 // pred_region
        // Predicated region
        $region69: #{tpu_custom_call.1} parent=67 // pred_check
          %p460 = pneg %p45
        $region70: #{tpu_custom_call.1} parent=67 // pred_check_branch
          %462 = sbr.rel (%p460) target = $region72
        $region71: #{tpu_custom_call.1} parent=67 // pred_region
          %s463 = smul.u32 6, %s25
          %p464 = scmp.lt.s32.totalorder %s463, 11
          %s465 = scalar_select %p464, %s463, 11
          %s466 = smul.addr %s465, 8
          %s467 = scalar_lea.vmem %s0, %s466
          %s468 = smul.u32 6, %s25
        $region72: #{tpu_custom_call.1} parent=67 // pred_fallthru
          _
        // Predicated region
        $region73: #{tpu_custom_call.1} parent=67 // pred_check
          %p469 = pneg %p71
        $region74: #{tpu_custom_call.1} parent=67 // pred_check_branch
          %471 = sbr.rel (%p469) target = $region76
        $region75: #{tpu_custom_call.1} parent=67 // pred_region
          %s472 = smul.u32 48, %s25
          %p473 = scmp.lt.s32.totalorder %s472, 95
          %s474 = scalar_select %p473, %s472, 95
          %s475 = smul.addr %s474, 2
          %s476 = smul.addr %s475, 4
          %s477 = scalar_lea.vmem %s1, %s476
          %s478 = smul.u32 48, %s25
        $region76: #{tpu_custom_call.1} parent=67 // pred_fallthru
          _
        // Predicated region
        $region77: #{tpu_custom_call.1} parent=67 // pred_check
          %p479 = pneg %p97
        $region78: #{tpu_custom_call.1} parent=67 // pred_check_branch
          %481 = sbr.rel (%p479) target = $region80
        $region79: #{tpu_custom_call.1} parent=67 // pred_region
          %s482 = smul.u32 48, %s25
          %p483 = scmp.lt.s32.totalorder %s482, 95
          %s484 = scalar_select %p483, %s482, 95
          %s485 = smul.addr %s484, 2
          %s486 = smul.addr %s485, 8
          %s487 = scalar_lea.vmem %s2, %s486
          %s488 = smul.u32 48, %s25
        $region80: #{tpu_custom_call.1} parent=67 // pred_fallthru
          _
      $region68: #{tpu_custom_call.1} parent=5 // pred_fallthru
        _
      %p489 = scmp.le.s32.totalorder 1, %s25
      %p490 = scmp.lt.s32.totalorder %s25, 3
      %p491 = pnand %p489, %p490
      %p492 = pneg %p491
      // Predicated region
      $region81: #{tpu_custom_call.1} parent=5 // pred_check
        _
      $region82: #{tpu_custom_call.1} parent=5 // pred_check_branch
        %494 = sbr.rel (%p491) target = $region84
      $region83: #{tpu_custom_call.1} parent=5 // pred_region
        %s495 = ssub.s32 %s25, 1
        %s496 = smul.u32 6, %s30
        %p497 = scmp.lt.s32.totalorder %s496, 11
        %s498 = scalar_select %p497, %s496, 11
        %s499 = smul.addr %s498, 8
        %s500 = scalar_lea.vmem %s0, %s499
        %p501 = pneg %p51
        %p502 = pneg %p48
        %s503 = smul.u32 48, %s30
        %p504 = scmp.lt.s32.totalorder %s503, 95
        %s505 = scalar_select %p504, %s503, 95
        %s506 = smul.addr %s505, 2
        %s507 = smul.addr %s506, 4
        %s508 = scalar_lea.vmem %s1, %s507
        %p509 = pneg %p77
        %p510 = pneg %p74
        %s511 = smul.u32 48, %s30
        %p512 = scmp.lt.s32.totalorder %s511, 95
        %s513 = scalar_select %p512, %s511, 95
        %s514 = smul.addr %s513, 2
        %s515 = smul.addr %s514, 8
        %s516 = scalar_lea.vmem %s2, %s515
        %p517 = pneg %p103
        %p518 = pneg %p100
        %p519 = pneg %p124
        %p520 = pneg %p121
        %p521 = pneg %p145
        %p522 = pneg %p142
        %p523 = pneg %p166
        %p524 = pneg %p163
        %p525 = pneg %p187
        %p526 = pneg %p184
        %p527 = pneg %p208
        %p528 = pneg %p205
        %p529 = pneg %p229
        %p530 = pneg %p226
        %p531 = pneg %p250
        %p532 = pneg %p247
        %p533 = pneg %p271
        %p534 = pneg %p268
        %p535 = pneg %p292
        %p536 = pneg %p289
        %p537 = pneg %p313
        %p538 = pneg %p310
        %p539 = pneg %p334
        %p540 = pneg %p331
        %p541 = pneg %p355
        %p542 = pneg %p352
        %p543 = pneg %p376
        %p544 = pneg %p373
        %p545 = pneg %p402
        %p546 = pneg %p399
        %s547 = sand.u32 %s389, 1
        %s548 = scalar_lea.sflag [#allocation3], %s547
        %s549 = sand.u32 %s389, 1
        %s550 = smul.addr %s549, 48
        %s551 = scalar_lea.vmem [#allocation2], %s550
        %s552 = smul.u32 6, %s30
        %p553 = scmp.lt.s32.totalorder %s552, 11
        %s554 = scalar_select %p553, %s552, 11
        %s555 = smul.addr %s554, 8
        %s556 = scalar_lea.vmem %s0, %s555
        %s557 = smul.u32 6, %s30
        %s558 = smul.u32 48, %s30
        %p559 = scmp.lt.s32.totalorder %s558, 95
        %s560 = scalar_select %p559, %s558, 95
        %s561 = smul.addr %s560, 2
        %s562 = smul.addr %s561, 4
        %s563 = scalar_lea.vmem %s1, %s562
        %s564 = smul.u32 48, %s30
        %s565 = smul.u32 48, %s30
        %p566 = scmp.lt.s32.totalorder %s565, 95
        %s567 = scalar_select %p566, %s565, 95
        %s568 = smul.addr %s567, 2
        %s569 = smul.addr %s568, 8
        %s570 = scalar_lea.vmem %s2, %s569
        %s571 = smul.u32 48, %s30
        %s572 = smul.u32 6, %s30
        %v574 = vld [vmem:[%s556] sm:$0xff]
        %v575 = vld [vmem:[%s556 + $0x8] sm:$0xff]
        %v576 = vld [vmem:[%s556 + $0x10] sm:$0xff]
        %v577 = vld [vmem:[%s556 + $0x18] sm:$0xff]
        %v578 = vld [vmem:[%s556 + $0x20] sm:$0xff]
        %v579 = vld [vmem:[%s556 + $0x28] sm:$0xff]
        %v580 = vld [vmem:[%s563] sm:$0xf]
        %v581 = vld [vmem:[%s563 + $0x4] sm:$0xf]
        %v582 = vld [vmem:[%s563 + $0x8] sm:$0xf]
        %v583 = vld [vmem:[%s563 + $0xc] sm:$0xf]
        %v584 = vld [vmem:[%s563 + $0x10] sm:$0xf]
        %v585 = vld [vmem:[%s563 + $0x14] sm:$0xf]
        %v586 = vld [vmem:[%s563 + $0x18] sm:$0xf]
        %v587 = vld [vmem:[%s563 + $0x1c] sm:$0xf]
        %v588 = vld [vmem:[%s563 + $0x20] sm:$0xf]
        %v589 = vld [vmem:[%s563 + $0x24] sm:$0xf]
        %v590 = vld [vmem:[%s563 + $0x28] sm:$0xf]
        %v591 = vld [vmem:[%s563 + $0x2c] sm:$0xf]
        %v592 = vld [vmem:[%s563 + $0x30] sm:$0xf]
        %v593 = vld [vmem:[%s563 + $0x34] sm:$0xf]
        %v594 = vld [vmem:[%s563 + $0x38] sm:$0xf]
        %v595 = vld [vmem:[%s563 + $0x3c] sm:$0xf]
        %v596 = vld [vmem:[%s563 + $0x40] sm:$0xf]
        %v597 = vld [vmem:[%s563 + $0x44] sm:$0xf]
        %v598 = vld [vmem:[%s563 + $0x48] sm:$0xf]
        %v599 = vld [vmem:[%s563 + $0x4c] sm:$0xf]
        %v600 = vld [vmem:[%s563 + $0x50] sm:$0xf]
        %v601 = vld [vmem:[%s563 + $0x54] sm:$0xf]
        %v602 = vld [vmem:[%s563 + $0x58] sm:$0xf]
        %v603 = vld [vmem:[%s563 + $0x5c] sm:$0xf]
        %v604 = vld [vmem:[%s563 + $0x60] sm:$0xf]
        %v605 = vld [vmem:[%s563 + $0x64] sm:$0xf]
        %v606 = vld [vmem:[%s563 + $0x68] sm:$0xf]
        %v607 = vld [vmem:[%s563 + $0x6c] sm:$0xf]
        %v608 = vld [vmem:[%s563 + $0x70] sm:$0xf]
        %v609 = vld [vmem:[%s563 + $0x74] sm:$0xf]
        %v610 = vld [vmem:[%s563 + $0x78] sm:$0xf]
        %v611 = vld [vmem:[%s563 + $0x7c] sm:$0xf]
        %v612 = vld [vmem:[%s563 + $0x80] sm:$0xf]
        %v613 = vld [vmem:[%s563 + $0x84] sm:$0xf]
        %v614 = vld [vmem:[%s563 + $0x88] sm:$0xf]
        %v615 = vld [vmem:[%s563 + $0x8c] sm:$0xf]
        %v616 = vld [vmem:[%s563 + $0x90] sm:$0xf]
        %v617 = vld [vmem:[%s563 + $0x94] sm:$0xf]
        %v618 = vld [vmem:[%s563 + $0x98] sm:$0xf]
        %v619 = vld [vmem:[%s563 + $0x9c] sm:$0xf]
        %v620 = vld [vmem:[%s563 + $0xa0] sm:$0xf]
        %v621 = vld [vmem:[%s563 + $0xa4] sm:$0xf]
        %v622 = vld [vmem:[%s563 + $0xa8] sm:$0xf]
        %v623 = vld [vmem:[%s563 + $0xac] sm:$0xf]
        %v624 = vld [vmem:[%s563 + $0xb0] sm:$0xf]
        %v625 = vld [vmem:[%s563 + $0xb4] sm:$0xf]
        %v626 = vld [vmem:[%s563 + $0xb8] sm:$0xf]
        %v627 = vld [vmem:[%s563 + $0xbc] sm:$0xf]
        %v628 = vld [vmem:[%s563 + $0xc0] sm:$0xf]
        %v629 = vld [vmem:[%s563 + $0xc4] sm:$0xf]
        %v630 = vld [vmem:[%s563 + $0xc8] sm:$0xf]
        %v631 = vld [vmem:[%s563 + $0xcc] sm:$0xf]
        %v632 = vld [vmem:[%s563 + $0xd0] sm:$0xf]
        %v633 = vld [vmem:[%s563 + $0xd4] sm:$0xf]
        %v634 = vld [vmem:[%s563 + $0xd8] sm:$0xf]
        %v635 = vld [vmem:[%s563 + $0xdc] sm:$0xf]
        %v636 = vld [vmem:[%s563 + $0xe0] sm:$0xf]
        %v637 = vld [vmem:[%s563 + $0xe4] sm:$0xf]
        %v638 = vld [vmem:[%s563 + $0xe8] sm:$0xf]
        %v639 = vld [vmem:[%s563 + $0xec] sm:$0xf]
        %v640 = vld [vmem:[%s563 + $0xf0] sm:$0xf]
        %v641 = vld [vmem:[%s563 + $0xf4] sm:$0xf]
        %v642 = vld [vmem:[%s563 + $0xf8] sm:$0xf]
        %v643 = vld [vmem:[%s563 + $0xfc] sm:$0xf]
        %v644 = vld [vmem:[%s563 + $0x100] sm:$0xf]
        %v645 = vld [vmem:[%s563 + $0x104] sm:$0xf]
        %v646 = vld [vmem:[%s563 + $0x108] sm:$0xf]
        %v647 = vld [vmem:[%s563 + $0x10c] sm:$0xf]
        %v648 = vld [vmem:[%s563 + $0x110] sm:$0xf]
        %v649 = vld [vmem:[%s563 + $0x114] sm:$0xf]
        %v650 = vld [vmem:[%s563 + $0x118] sm:$0xf]
        %v651 = vld [vmem:[%s563 + $0x11c] sm:$0xf]
        %v652 = vld [vmem:[%s563 + $0x120] sm:$0xf]
        %v653 = vld [vmem:[%s563 + $0x124] sm:$0xf]
        %v654 = vld [vmem:[%s563 + $0x128] sm:$0xf]
        %v655 = vld [vmem:[%s563 + $0x12c] sm:$0xf]
        %v656 = vld [vmem:[%s563 + $0x130] sm:$0xf]
        %v657 = vld [vmem:[%s563 + $0x134] sm:$0xf]
        %v658 = vld [vmem:[%s563 + $0x138] sm:$0xf]
        %v659 = vld [vmem:[%s563 + $0x13c] sm:$0xf]
        %v660 = vld [vmem:[%s563 + $0x140] sm:$0xf]
        %v661 = vld [vmem:[%s563 + $0x144] sm:$0xf]
        %v662 = vld [vmem:[%s563 + $0x148] sm:$0xf]
        %v663 = vld [vmem:[%s563 + $0x14c] sm:$0xf]
        %v664 = vld [vmem:[%s563 + $0x150] sm:$0xf]
        %v665 = vld [vmem:[%s563 + $0x154] sm:$0xf]
        %v666 = vld [vmem:[%s563 + $0x158] sm:$0xf]
        %v667 = vld [vmem:[%s563 + $0x15c] sm:$0xf]
        %v668 = vld [vmem:[%s563 + $0x160] sm:$0xf]
        %v669 = vld [vmem:[%s563 + $0x164] sm:$0xf]
        %v670 = vld [vmem:[%s563 + $0x168] sm:$0xf]
        %v671 = vld [vmem:[%s563 + $0x16c] sm:$0xf]
        %v672 = vld [vmem:[%s563 + $0x170] sm:$0xf]
        %v673 = vld [vmem:[%s563 + $0x174] sm:$0xf]
        %v674 = vld [vmem:[%s563 + $0x178] sm:$0xf]
        %v675 = vld [vmem:[%s563 + $0x17c] sm:$0xf]
        %v676 = vld [vmem:[%s570] sm:$0xff]
        %v677 = vld [vmem:[%s570 + $0x8] sm:$0xff]
        %v678 = vld [vmem:[%s570 + $0x10] sm:$0xff]
        %v679 = vld [vmem:[%s570 + $0x18] sm:$0xff]
        %v680 = vld [vmem:[%s570 + $0x20] sm:$0xff]
        %v681 = vld [vmem:[%s570 + $0x28] sm:$0xff]
        %v682 = vld [vmem:[%s570 + $0x30] sm:$0xff]
        %v683 = vld [vmem:[%s570 + $0x38] sm:$0xff]
        %v684 = vld [vmem:[%s570 + $0x40] sm:$0xff]
        %v685 = vld [vmem:[%s570 + $0x48] sm:$0xff]
        %v686 = vld [vmem:[%s570 + $0x50] sm:$0xff]
        %v687 = vld [vmem:[%s570 + $0x58] sm:$0xff]
        %v688 = vld [vmem:[%s570 + $0x60] sm:$0xff]
        %v689 = vld [vmem:[%s570 + $0x68] sm:$0xff]
        %v690 = vld [vmem:[%s570 + $0x70] sm:$0xff]
        %v691 = vld [vmem:[%s570 + $0x78] sm:$0xff]
        %v692 = vld [vmem:[%s570 + $0x80] sm:$0xff]
        %v693 = vld [vmem:[%s570 + $0x88] sm:$0xff]
        %v694 = vld [vmem:[%s570 + $0x90] sm:$0xff]
        %v695 = vld [vmem:[%s570 + $0x98] sm:$0xff]
        %v696 = vld [vmem:[%s570 + $0xa0] sm:$0xff]
        %v697 = vld [vmem:[%s570 + $0xa8] sm:$0xff]
        %v698 = vld [vmem:[%s570 + $0xb0] sm:$0xff]
        %v699 = vld [vmem:[%s570 + $0xb8] sm:$0xff]
        %v700 = vld [vmem:[%s570 + $0xc0] sm:$0xff]
        %v701 = vld [vmem:[%s570 + $0xc8] sm:$0xff]
        %v702 = vld [vmem:[%s570 + $0xd0] sm:$0xff]
        %v703 = vld [vmem:[%s570 + $0xd8] sm:$0xff]
        %v704 = vld [vmem:[%s570 + $0xe0] sm:$0xff]
        %v705 = vld [vmem:[%s570 + $0xe8] sm:$0xff]
        %v706 = vld [vmem:[%s570 + $0xf0] sm:$0xff]
        %v707 = vld [vmem:[%s570 + $0xf8] sm:$0xff]
        %v708 = vld [vmem:[%s570 + $0x100] sm:$0xff]
        %v709 = vld [vmem:[%s570 + $0x108] sm:$0xff]
        %v710 = vld [vmem:[%s570 + $0x110] sm:$0xff]
        %v711 = vld [vmem:[%s570 + $0x118] sm:$0xff]
        %v712 = vld [vmem:[%s570 + $0x120] sm:$0xff]
        %v713 = vld [vmem:[%s570 + $0x128] sm:$0xff]
        %v714 = vld [vmem:[%s570 + $0x130] sm:$0xff]
        %v715 = vld [vmem:[%s570 + $0x138] sm:$0xff]
        %v716 = vld [vmem:[%s570 + $0x140] sm:$0xff]
        %v717 = vld [vmem:[%s570 + $0x148] sm:$0xff]
        %v718 = vld [vmem:[%s570 + $0x150] sm:$0xff]
        %v719 = vld [vmem:[%s570 + $0x158] sm:$0xff]
        %v720 = vld [vmem:[%s570 + $0x160] sm:$0xff]
        %v721 = vld [vmem:[%s570 + $0x168] sm:$0xff]
        %v722 = vld [vmem:[%s570 + $0x170] sm:$0xff]
        %v723 = vld [vmem:[%s570 + $0x178] sm:$0xff]
        %v724 = vld [vmem:[%s570 + $0x180] sm:$0xff]
        %v725 = vld [vmem:[%s570 + $0x188] sm:$0xff]
        %v726 = vld [vmem:[%s570 + $0x190] sm:$0xff]
        %v727 = vld [vmem:[%s570 + $0x198] sm:$0xff]
        %v728 = vld [vmem:[%s570 + $0x1a0] sm:$0xff]
        %v729 = vld [vmem:[%s570 + $0x1a8] sm:$0xff]
        %v730 = vld [vmem:[%s570 + $0x1b0] sm:$0xff]
        %v731 = vld [vmem:[%s570 + $0x1b8] sm:$0xff]
        %v732 = vld [vmem:[%s570 + $0x1c0] sm:$0xff]
        %v733 = vld [vmem:[%s570 + $0x1c8] sm:$0xff]
        %v734 = vld [vmem:[%s570 + $0x1d0] sm:$0xff]
        %v735 = vld [vmem:[%s570 + $0x1d8] sm:$0xff]
        %v736 = vld [vmem:[%s570 + $0x1e0] sm:$0xff]
        %v737 = vld [vmem:[%s570 + $0x1e8] sm:$0xff]
        %v738 = vld [vmem:[%s570 + $0x1f0] sm:$0xff]
        %v739 = vld [vmem:[%s570 + $0x1f8] sm:$0xff]
        %v740 = vld [vmem:[%s570 + $0x200] sm:$0xff]
        %v741 = vld [vmem:[%s570 + $0x208] sm:$0xff]
        %v742 = vld [vmem:[%s570 + $0x210] sm:$0xff]
        %v743 = vld [vmem:[%s570 + $0x218] sm:$0xff]
        %v744 = vld [vmem:[%s570 + $0x220] sm:$0xff]
        %v745 = vld [vmem:[%s570 + $0x228] sm:$0xff]
        %v746 = vld [vmem:[%s570 + $0x230] sm:$0xff]
        %v747 = vld [vmem:[%s570 + $0x238] sm:$0xff]
        %v748 = vld [vmem:[%s570 + $0x240] sm:$0xff]
        %v749 = vld [vmem:[%s570 + $0x248] sm:$0xff]
        %v750 = vld [vmem:[%s570 + $0x250] sm:$0xff]
        %v751 = vld [vmem:[%s570 + $0x258] sm:$0xff]
        %v752 = vld [vmem:[%s570 + $0x260] sm:$0xff]
        %v753 = vld [vmem:[%s570 + $0x268] sm:$0xff]
        %v754 = vld [vmem:[%s570 + $0x270] sm:$0xff]
        %v755 = vld [vmem:[%s570 + $0x278] sm:$0xff]
        %v756 = vld [vmem:[%s570 + $0x280] sm:$0xff]
        %v757 = vld [vmem:[%s570 + $0x288] sm:$0xff]
        %v758 = vld [vmem:[%s570 + $0x290] sm:$0xff]
        %v759 = vld [vmem:[%s570 + $0x298] sm:$0xff]
        %v760 = vld [vmem:[%s570 + $0x2a0] sm:$0xff]
        %v761 = vld [vmem:[%s570 + $0x2a8] sm:$0xff]
        %v762 = vld [vmem:[%s570 + $0x2b0] sm:$0xff]
        %v763 = vld [vmem:[%s570 + $0x2b8] sm:$0xff]
        %v764 = vld [vmem:[%s570 + $0x2c0] sm:$0xff]
        %v765 = vld [vmem:[%s570 + $0x2c8] sm:$0xff]
        %v766 = vld [vmem:[%s570 + $0x2d0] sm:$0xff]
        %v767 = vld [vmem:[%s570 + $0x2d8] sm:$0xff]
        %v768 = vld [vmem:[%s570 + $0x2e0] sm:$0xff]
        %v769 = vld [vmem:[%s570 + $0x2e8] sm:$0xff]
        %v770 = vld [vmem:[%s570 + $0x2f0] sm:$0xff]
        %v771 = vld [vmem:[%s570 + $0x2f8] sm:$0xff]
        %v772 = vld [vmem:[%s10] sm:$0x1]
        %v773 = vld [vmem:[%s11] sm:$0x1]
        %vm774 = vcmask 130048
        %v775 = vsel %vm774, %v574, 0.0
        %776 = vadd.xlane.f32.xlu0 %v775
        %v777 = vpop.xlane.xlu0 %776
        %v778 = vsel %vm774, %v575, 0.0
        %779 = vadd.xlane.f32.xlu0 %v778
        %v780 = vpop.xlane.xlu0 %779
        %v781 = vsel %vm774, %v576, 0.0
        %782 = vadd.xlane.f32.xlu0 %v781
        %v783 = vpop.xlane.xlu0 %782
        %v784 = vsel %vm774, %v577, 0.0
        %785 = vadd.xlane.f32.xlu0 %v784
        %v786 = vpop.xlane.xlu0 %785
        %v787 = vsel %vm774, %v578, 0.0
        %788 = vadd.xlane.f32.xlu0 %v787
        %v789 = vpop.xlane.xlu0 %788
        %v790 = vsel %vm774, %v579, 0.0
        %791 = vadd.xlane.f32.xlu0 %v790
        %v792 = vpop.xlane.xlu0 %791
        %v793 = vrcp.pop 16.0
        %v794 = vmul.f32 %v777, %v793
        %v795 = vmul.f32 %v780, %v793
        %v796 = vmul.f32 %v783, %v793
        %v797 = vmul.f32 %v786, %v793
        %v798 = vmul.f32 %v789, %v793
        %v799 = vmul.f32 %v792, %v793
        %v800 = vsub.f32 %v574, %v794
        %v801 = vsub.f32 %v575, %v795
        %v802 = vsub.f32 %v576, %v796
        %v803 = vsub.f32 %v577, %v797
        %v804 = vsub.f32 %v578, %v798
        %v805 = vsub.f32 %v579, %v799
        %v806 = vmul.f32 %v800, %v800
        %v807 = vmul.f32 %v801, %v801
        %v808 = vmul.f32 %v802, %v802
        %v809 = vmul.f32 %v803, %v803
        %v810 = vmul.f32 %v804, %v804
        %v811 = vmul.f32 %v805, %v805
        %v812 = vsel %vm774, %v806, 0.0
        %813 = vadd.xlane.f32.xlu0 %v812
        %v814 = vpop.xlane.xlu0 %813
        %v815 = vsel %vm774, %v807, 0.0
        %816 = vadd.xlane.f32.xlu0 %v815
        %v817 = vpop.xlane.xlu0 %816
        %v818 = vsel %vm774, %v808, 0.0
        %819 = vadd.xlane.f32.xlu0 %v818
        %v820 = vpop.xlane.xlu0 %819
        %v821 = vsel %vm774, %v809, 0.0
        %822 = vadd.xlane.f32.xlu0 %v821
        %v823 = vpop.xlane.xlu0 %822
        %v824 = vsel %vm774, %v810, 0.0
        %825 = vadd.xlane.f32.xlu0 %v824
        %v826 = vpop.xlane.xlu0 %825
        %v827 = vsel %vm774, %v811, 0.0
        %828 = vadd.xlane.f32.xlu0 %v827
        %v829 = vpop.xlane.xlu0 %828
        %v830 = vmul.f32 %v814, %v793
        %v831 = vmul.f32 %v817, %v793
        %v832 = vmul.f32 %v820, %v793
        %v833 = vmul.f32 %v823, %v793
        %v834 = vmul.f32 %v826, %v793
        %v835 = vmul.f32 %v829, %v793
        %v836 = vadd.f32 %v830, 1e-05
        %v837 = vadd.f32 %v831, 1e-05
        %v838 = vadd.f32 %v832, 1e-05
        %v839 = vadd.f32 %v833, 1e-05
        %v840 = vadd.f32 %v834, 1e-05
        %v841 = vadd.f32 %v835, 1e-05
        %v842 = vrsqrt.pop %v836
        %v843 = vrsqrt.pop %v837
        %v844 = vrsqrt.pop %v838
        %v845 = vrsqrt.pop %v839
        %v846 = vrsqrt.pop %v840
        %v847 = vrsqrt.pop %v841
        %v848 = vmul.f32 %v800, %v842
        %v849 = vmul.f32 %v801, %v843
        %v850 = vmul.f32 %v802, %v844
        %v851 = vmul.f32 %v803, %v845
        %v852 = vmul.f32 %v804, %v846
        %v853 = vmul.f32 %v805, %v847
        %v855 = vlaneseq
        %v856 = vshrl.u32 %v855, 7
        %v857 = vsub.s32 0, %v856
        %v858 = vrot.slane %v772, %v857
        %v860 = vmul.f32 %v848, %v858
        %v861 = vmul.f32 %v849, %v858
        %v862 = vmul.f32 %v850, %v858
        %v863 = vmul.f32 %v851, %v858
        %v864 = vmul.f32 %v852, %v858
        %v865 = vmul.f32 %v853, %v858
        %v867 = vlaneseq
        %v868 = vshrl.u32 %v867, 7
        %v869 = vsub.s32 0, %v868
        %v870 = vrot.slane %v773, %v869
        %v872 = vadd.f32 %v860, %v870
        %v873 = vadd.f32 %v861, %v870
        %v874 = vadd.f32 %v862, %v870
        %v875 = vadd.f32 %v863, %v870
        %v876 = vadd.f32 %v864, %v870
        %v877 = vadd.f32 %v865, %v870
        %v878 = vpack.c.bf16 %v873, %v872
        %v879 = vpack.c.bf16 %v875, %v874
        %v880 = vpack.c.bf16 %v877, %v876
        %v881 = vld [vmem:[%s3] sm:$0xf]
        %v882 = vld [vmem:[%s3 + $0x4] sm:$0xf]
        %v885 = vunpack.c.l.b16 %v881
        %v886 = vunpack.c.l.b16 %v882
        %v887 = vpack.c.b16 %v886, %v885
        %v890 = vsel %vm774, %v878, 0
        %v893 = vsel %vm774, %v879, 0
        %v896 = vsel %vm774, %v880, 0
        %898 = vmatprep.subr.bf16.mxu0 0
        %899 = vmatpush1.bf16.msra.mxu0 %v887
        %900 = vmatprep.subr.bf16.mxu0 0
        %901 = vmatpush1.bf16.msra.mxu0 0
        %902 = vmatprep.subr.bf16.mxu0 0
        %903 = vmatpush1.bf16.msra.mxu0 0
        %904 = vmatprep.subr.bf16.mxu0 0
        %905 = vmatpush1.bf16.msra.mxu0 0
        %906 = vmatprep.subr.bf16.mxu0 0
        %907 = vmatpush1.bf16.msra.mxu0 0
        %908 = vmatprep.subr.bf16.mxu0 0
        %909 = vmatpush1.bf16.msra.mxu0 0
        %910 = vmatprep.subr.bf16.mxu0 0
        %911 = vmatpush1.bf16.msra.mxu0 0
        %912 = vmatprep.subr.bf16.mxu0 0
        %913 = vmatpush1.bf16.msra.mxu0 0
        %914 = vmatprep.subr.bf16.mxu0 0
        %915 = vmatpush1.bf16.msra.mxu0 0
        %916 = vmatprep.subr.bf16.mxu0 0
        %917 = vmatpush1.bf16.msra.mxu0 0
        %918 = vmatprep.subr.bf16.mxu0 0
        %919 = vmatpush1.bf16.msra.mxu0 0
        %920 = vmatprep.subr.bf16.mxu0 0
        %921 = vmatpush1.bf16.msra.mxu0 0
        %922 = vmatprep.subr.bf16.mxu0 0
        %923 = vmatpush1.bf16.msra.mxu0 0
        %924 = vmatprep.subr.bf16.mxu0 0
        %925 = vmatpush1.bf16.msra.mxu0 0
        %926 = vmatprep.subr.bf16.mxu0 0
        %927 = vmatpush1.bf16.msra.mxu0 0
        %928 = vmatprep.subr.bf16.mxu0 0
        %929 = vmatpush1.bf16.msra.mxu0 0
        %930 = vmatprep.mubr.bf16.mxu0 0
        %931 = vmatmul.mubr.bf16.gmra.mrb[0].mxu0 %v890
        %v932 = vpop.f32.mrb[0].mxu0
        %v933 = vadd.f32 0.0, %v932
        %v934 = vpop.f32.mrb[0].mxu0
        %v935 = vpop.f32.mrb[0].mxu0
        %v936 = vadd.f32 0.0, %v935
        %v937 = vpop.f32.mrb[0].mxu0
        %938 = vmatprep.mubr.bf16.mxu0 0
        %939 = vmatmul.mubr.bf16.gmra.mrb[0].mxu0 %v893
        %v940 = vpop.f32.mrb[0].mxu0
        %v941 = vadd.f32 0.0, %v940
        %v942 = vpop.f32.mrb[0].mxu0
        %v943 = vpop.f32.mrb[0].mxu0
        %v944 = vadd.f32 0.0, %v943
        %v945 = vpop.f32.mrb[0].mxu0
        %946 = vmatprep.mubr.bf16.mxu0 0
        %947 = vmatmul.mubr.bf16.gmra.mrb[0].mxu0 %v896
        %v948 = vpop.f32.mrb[0].mxu0
        %v949 = vadd.f32 0.0, %v948
        %v950 = vpop.f32.mrb[0].mxu0
        %v951 = vpop.f32.mrb[0].mxu0
        %v952 = vadd.f32 0.0, %v951
        %v953 = vpop.f32.mrb[0].mxu0
        %954 = vdwg.mxu0
        %v955 = vld [vmem:[%s4] sm:$0xf]
        %v956 = vld [vmem:[%s4 + $0x4] sm:$0xf]
        %v1053 = vunpack.c.l.b16 %v580
        %v1054 = vunpack.c.l.b16 %v581
        %v1055 = vunpack.c.l.b16 %v582
        %v1056 = vunpack.c.l.b16 %v583
        %v1057 = vunpack.c.l.b16 %v584
        %v1058 = vunpack.c.l.b16 %v585
        %v1059 = vunpack.c.l.b16 %v586
        %v1060 = vunpack.c.l.b16 %v587
        %v1061 = vunpack.c.l.b16 %v588
        %v1062 = vunpack.c.l.b16 %v589
        %v1063 = vunpack.c.l.b16 %v590
        %v1064 = vunpack.c.l.b16 %v591
        %v1065 = vunpack.c.l.b16 %v592
        %v1066 = vunpack.c.l.b16 %v593
        %v1067 = vunpack.c.l.b16 %v594
        %v1068 = vunpack.c.l.b16 %v595
        %v1069 = vunpack.c.l.b16 %v596
        %v1070 = vunpack.c.l.b16 %v597
        %v1071 = vunpack.c.l.b16 %v598
        %v1072 = vunpack.c.l.b16 %v599
        %v1073 = vunpack.c.l.b16 %v600
        %v1074 = vunpack.c.l.b16 %v601
        %v1075 = vunpack.c.l.b16 %v602
        %v1076 = vunpack.c.l.b16 %v603
        %v1077 = vunpack.c.l.b16 %v604
        %v1078 = vunpack.c.l.b16 %v605
        %v1079 = vunpack.c.l.b16 %v606
        %v1080 = vunpack.c.l.b16 %v607
        %v1081 = vunpack.c.l.b16 %v608
        %v1082 = vunpack.c.l.b16 %v609
        %v1083 = vunpack.c.l.b16 %v610
        %v1084 = vunpack.c.l.b16 %v611
        %v1085 = vunpack.c.l.b16 %v612
        %v1086 = vunpack.c.l.b16 %v613
        %v1087 = vunpack.c.l.b16 %v614
        %v1088 = vunpack.c.l.b16 %v615
        %v1089 = vunpack.c.l.b16 %v616
        %v1090 = vunpack.c.l.b16 %v617
        %v1091 = vunpack.c.l.b16 %v618
        %v1092 = vunpack.c.l.b16 %v619
        %v1093 = vunpack.c.l.b16 %v620
        %v1094 = vunpack.c.l.b16 %v621
        %v1095 = vunpack.c.l.b16 %v622
        %v1096 = vunpack.c.l.b16 %v623
        %v1097 = vunpack.c.l.b16 %v624
        %v1098 = vunpack.c.l.b16 %v625
        %v1099 = vunpack.c.l.b16 %v626
        %v1100 = vunpack.c.l.b16 %v627
        %v1101 = vunpack.c.l.b16 %v628
        %v1102 = vunpack.c.l.b16 %v629
        %v1103 = vunpack.c.l.b16 %v630
        %v1104 = vunpack.c.l.b16 %v631
        %v1105 = vunpack.c.l.b16 %v632
        %v1106 = vunpack.c.l.b16 %v633
        %v1107 = vunpack.c.l.b16 %v634
        %v1108 = vunpack.c.l.b16 %v635
        %v1109 = vunpack.c.l.b16 %v636
        %v1110 = vunpack.c.l.b16 %v637
        %v1111 = vunpack.c.l.b16 %v638
        %v1112 = vunpack.c.l.b16 %v639
        %v1113 = vunpack.c.l.b16 %v640
        %v1114 = vunpack.c.l.b16 %v641
        %v1115 = vunpack.c.l.b16 %v642
        %v1116 = vunpack.c.l.b16 %v643
        %v1117 = vunpack.c.l.b16 %v644
        %v1118 = vunpack.c.l.b16 %v645
        %v1119 = vunpack.c.l.b16 %v646
        %v1120 = vunpack.c.l.b16 %v647
        %v1121 = vunpack.c.l.b16 %v648
        %v1122 = vunpack.c.l.b16 %v649
        %v1123 = vunpack.c.l.b16 %v650
        %v1124 = vunpack.c.l.b16 %v651
        %v1125 = vunpack.c.l.b16 %v652
        %v1126 = vunpack.c.l.b16 %v653
        %v1127 = vunpack.c.l.b16 %v654
        %v1128 = vunpack.c.l.b16 %v655
        %v1129 = vunpack.c.l.b16 %v656
        %v1130 = vunpack.c.l.b16 %v657
        %v1131 = vunpack.c.l.b16 %v658
        %v1132 = vunpack.c.l.b16 %v659
        %v1133 = vunpack.c.l.b16 %v660
        %v1134 = vunpack.c.l.b16 %v661
        %v1135 = vunpack.c.l.b16 %v662
        %v1136 = vunpack.c.l.b16 %v663
        %v1137 = vunpack.c.l.b16 %v664
        %v1138 = vunpack.c.l.b16 %v665
        %v1139 = vunpack.c.l.b16 %v666
        %v1140 = vunpack.c.l.b16 %v667
        %v1141 = vunpack.c.l.b16 %v668
        %v1142 = vunpack.c.l.b16 %v669
        %v1143 = vunpack.c.l.b16 %v670
        %v1144 = vunpack.c.l.b16 %v671
        %v1145 = vunpack.c.l.b16 %v672
        %v1146 = vunpack.c.l.b16 %v673
        %v1147 = vunpack.c.l.b16 %v674
        %v1148 = vunpack.c.l.b16 %v675
        %v1149 = vpack.c.b16 %v1054, %v1053
        %v1150 = vpack.c.b16 %v1056, %v1055
        %v1151 = vpack.c.b16 %v1058, %v1057
        %v1152 = vpack.c.b16 %v1060, %v1059
        %v1153 = vpack.c.b16 %v1062, %v1061
        %v1154 = vpack.c.b16 %v1064, %v1063
        %v1155 = vpack.c.b16 %v1066, %v1065
        %v1156 = vpack.c.b16 %v1068, %v1067
        %v1157 = vpack.c.b16 %v1070, %v1069
        %v1158 = vpack.c.b16 %v1072, %v1071
        %v1159 = vpack.c.b16 %v1074, %v1073
        %v1160 = vpack.c.b16 %v1076, %v1075
        %v1161 = vpack.c.b16 %v1078, %v1077
        %v1162 = vpack.c.b16 %v1080, %v1079
        %v1163 = vpack.c.b16 %v1082, %v1081
        %v1164 = vpack.c.b16 %v1084, %v1083
        %v1165 = vpack.c.b16 %v1086, %v1085
        %v1166 = vpack.c.b16 %v1088, %v1087
        %v1167 = vpack.c.b16 %v1090, %v1089
        %v1168 = vpack.c.b16 %v1092, %v1091
        %v1169 = vpack.c.b16 %v1094, %v1093
        %v1170 = vpack.c.b16 %v1096, %v1095
        %v1171 = vpack.c.b16 %v1098, %v1097
        %v1172 = vpack.c.b16 %v1100, %v1099
        %v1173 = vpack.c.b16 %v1102, %v1101
        %v1174 = vpack.c.b16 %v1104, %v1103
        %v1175 = vpack.c.b16 %v1106, %v1105
        %v1176 = vpack.c.b16 %v1108, %v1107
        %v1177 = vpack.c.b16 %v1110, %v1109
        %v1178 = vpack.c.b16 %v1112, %v1111
        %v1179 = vpack.c.b16 %v1114, %v1113
        %v1180 = vpack.c.b16 %v1116, %v1115
        %v1181 = vpack.c.b16 %v1118, %v1117
        %v1182 = vpack.c.b16 %v1120, %v1119
        %v1183 = vpack.c.b16 %v1122, %v1121
        %v1184 = vpack.c.b16 %v1124, %v1123
        %v1185 = vpack.c.b16 %v1126, %v1125
        %v1186 = vpack.c.b16 %v1128, %v1127
        %v1187 = vpack.c.b16 %v1130, %v1129
        %v1188 = vpack.c.b16 %v1132, %v1131
        %v1189 = vpack.c.b16 %v1134, %v1133
        %v1190 = vpack.c.b16 %v1136, %v1135
        %v1191 = vpack.c.b16 %v1138, %v1137
        %v1192 = vpack.c.b16 %v1140, %v1139
        %v1193 = vpack.c.b16 %v1142, %v1141
        %v1194 = vpack.c.b16 %v1144, %v1143
        %v1195 = vpack.c.b16 %v1146, %v1145
        %v1196 = vpack.c.b16 %v1148, %v1147
        %v1199 = vunpack.c.l.b16 %v955
        %v1200 = vunpack.c.l.b16 %v956
        %v1201 = vpack.c.b16 %v1200, %v1199
        %v1204 = vsel %vm774, %v1149, 0
        %v1207 = vsel %vm774, %v1150, 0
        %v1210 = vsel %vm774, %v1151, 0
        %v1213 = vsel %vm774, %v1152, 0
        %v1216 = vsel %vm774, %v1153, 0
        %v1219 = vsel %vm774, %v1154, 0
        %v1222 = vsel %vm774, %v1155, 0
        %v1225 = vsel %vm774, %v1156, 0
        %v1228 = vsel %vm774, %v1157, 0
        %v1231 = vsel %vm774, %v1158, 0
        %v1234 = vsel %vm774, %v1159, 0
        %v1237 = vsel %vm774, %v1160, 0
        %v1240 = vsel %vm774, %v1161, 0
        %v1243 = vsel %vm774, %v1162, 0
        %v1246 = vsel %vm774, %v1163, 0
        %v1249 = vsel %vm774, %v1164, 0
        %v1252 = vsel %vm774, %v1165, 0
        %v1255 = vsel %vm774, %v1166, 0
        %v1258 = vsel %vm774, %v1167, 0
        %v1261 = vsel %vm774, %v1168, 0
        %v1264 = vsel %vm774, %v1169, 0
        %v1267 = vsel %vm774, %v1170, 0
        %v1270 = vsel %vm774, %v1171, 0
        %v1273 = vsel %vm774, %v1172, 0
        %v1276 = vsel %vm774, %v1173, 0
        %v1279 = vsel %vm774, %v1174, 0
        %v1282 = vsel %vm774, %v1175, 0
        %v1285 = vsel %vm774, %v1176, 0
        %v1288 = vsel %vm774, %v1177, 0
        %v1291 = vsel %vm774, %v1178, 0
        %v1294 = vsel %vm774, %v1179, 0
        %v1297 = vsel %vm774, %v1180, 0
        %v1300 = vsel %vm774, %v1181, 0
        %v1303 = vsel %vm774, %v1182, 0
        %v1306 = vsel %vm774, %v1183, 0
        %v1309 = vsel %vm774, %v1184, 0
        %v1312 = vsel %vm774, %v1185, 0
        %v1315 = vsel %vm774, %v1186, 0
        %v1318 = vsel %vm774, %v1187, 0
        %v1321 = vsel %vm774, %v1188, 0
        %v1324 = vsel %vm774, %v1189, 0
        %v1327 = vsel %vm774, %v1190, 0
        %v1330 = vsel %vm774, %v1191, 0
        %v1333 = vsel %vm774, %v1192, 0
        %v1336 = vsel %vm774, %v1193, 0
        %v1339 = vsel %vm774, %v1194, 0
        %v1342 = vsel %vm774, %v1195, 0
        %v1345 = vsel %vm774, %v1196, 0
        %1347 = vmatprep.subr.bf16.mxu0 0
        %1348 = vmatpush1.bf16.msra.mxu0 %v1201
        %1349 = vmatprep.subr.bf16.mxu0 0
        %1350 = vmatpush1.bf16.msra.mxu0 0
        %1351 = vmatprep.subr.bf16.mxu0 0
        %1352 = vmatpush1.bf16.msra.mxu0 0
        %1353 = vmatprep.subr.bf16.mxu0 0
        %1354 = vmatpush1.bf16.msra.mxu0 0
        %1355 = vmatprep.subr.bf16.mxu0 0
        %1356 = vmatpush1.bf16.msra.mxu0 0
        %1357 = vmatprep.subr.bf16.mxu0 0
        %1358 = vmatpush1.bf16.msra.mxu0 0
        %1359 = vmatprep.subr.bf16.mxu0 0
        %1360 = vmatpush1.bf16.msra.mxu0 0
        %1361 = vmatprep.subr.bf16.mxu0 0
        %1362 = vmatpush1.bf16.msra.mxu0 0
        %1363 = vmatprep.subr.bf16.mxu0 0
        %1364 = vmatpush1.bf16.msra.mxu0 0
        %1365 = vmatprep.subr.bf16.mxu0 0
        %1366 = vmatpush1.bf16.msra.mxu0 0
        %1367 = vmatprep.subr.bf16.mxu0 0
        %1368 = vmatpush1.bf16.msra.mxu0 0
        %1369 = vmatprep.subr.bf16.mxu0 0
        %1370 = vmatpush1.bf16.msra.mxu0 0
        %1371 = vmatprep.subr.bf16.mxu0 0
        %1372 = vmatpush1.bf16.msra.mxu0 0
        %1373 = vmatprep.subr.bf16.mxu0 0
        %1374 = vmatpush1.bf16.msra.mxu0 0
        %1375 = vmatprep.subr.bf16.mxu0 0
        %1376 = vmatpush1.bf16.msra.mxu0 0
        %1377 = vmatprep.subr.bf16.mxu0 0
        %1378 = vmatpush1.bf16.msra.mxu0 0
        %1379 = vmatprep.mubr.bf16.mxu0 0
        %1380 = vmatmul.mubr.bf16.gmra.mrb[0].mxu0 %v1204
        %v1381 = vpop.f32.mrb[0].mxu0
        %v1382 = vadd.f32 0.0, %v1381
        %v1383 = vpop.f32.mrb[0].mxu0
        %v1384 = vpop.f32.mrb[0].mxu0
        %v1385 = vadd.f32 0.0, %v1384
        %v1386 = vpop.f32.mrb[0].mxu0
        %1387 = vmatprep.mubr.bf16.mxu0 0
        %1388 = vmatmul.mubr.bf16.gmra.mrb[0].mxu0 %v1207
        %v1389 = vpop.f32.mrb[0].mxu0
        %v1390 = vadd.f32 0.0, %v1389
        %v1391 = vpop.f32.mrb[0].mxu0
        %v1392 = vpop.f32.mrb[0].mxu0
        %v1393 = vadd.f32 0.0, %v1392
        %v1394 = vpop.f32.mrb[0].mxu0
        %1395 = vmatprep.mubr.bf16.mxu0 0
        %1396 = vmatmul.mubr.bf16.gmra.mrb[0].mxu0 %v1210
        %v1397 = vpop.f32.mrb[0].mxu0
        %v1398 = vadd.f32 0.0, %v1397
        %v1399 = vpop.f32.mrb[0].mxu0
        %v1400 = vpop.f32.mrb[0].mxu0
        %v1401 = vadd.f32 0.0, %v1400
        %v1402 = vpop.f32.mrb[0].mxu0
        %1403 = vmatprep.mubr.bf16.mxu0 0
        %1404 = vmatmul.mubr.bf16.gmra.mrb[0].mxu0 %v1213
        %v1405 = vpop.f32.mrb[0].mxu0
        %v1406 = vadd.f32 0.0, %v1405
        %v1407 = vpop.f32.mrb[0].mxu0
        %v1408 = vpop.f32.mrb[0].mxu0
        %v1409 = vadd.f32 0.0, %v1408
        %v1410 = vpop.f32.mrb[0].mxu0
        %1411 = vmatprep.mubr.bf16.mxu0 0
        %1412 = vmatmul.mubr.bf16.gmra.mrb[0].mxu0 %v1216
        %v1413 = vpop.f32.mrb[0].mxu0
        %v1414 = vadd.f32 0.0, %v1413
        %v1415 = vpop.f32.mrb[0].mxu0
        %v1416 = vpop.f32.mrb[0].mxu0
        %v1417 = vadd.f32 0.0, %v1416
        %v1418 = vpop.f32.mrb[0].mxu0
        %1419 = vmatprep.mubr.bf16.mxu0 0
        %1420 = vmatmul.mubr.bf16.gmra.mrb[0].mxu0 %v1219
        %v1421 = vpop.f32.mrb[0].mxu0
        %v1422 = vadd.f32 0.0, %v1421
        %v1423 = vpop.f32.mrb[0].mxu0
        %v1424 = vpop.f32.mrb[0].mxu0
        %v1425 = vadd.f32 0.0, %v1424
        %v1426 = vpop.f32.mrb[0].mxu0
        %1427 = vmatprep.mubr.bf16.mxu0 0
        %1428 = vmatmul.mubr.bf16.gmra.mrb[0].mxu0 %v1222
        %v1429 = vpop.f32.mrb[0].mxu0
        %v1430 = vadd.f32 0.0, %v1429
        %v1431 = vpop.f32.mrb[0].mxu0
        %v1432 = vpop.f32.mrb[0].mxu0
        %v1433 = vadd.f32 0.0, %v1432
        %v1434 = vpop.f32.mrb[0].mxu0
        %1435 = vmatprep.mubr.bf16.mxu0 0
        %1436 = vmatmul.mubr.bf16.gmra.mrb[0].mxu0 %v1225
        %v1437 = vpop.f32.mrb[0].mxu0
        %v1438 = vadd.f32 0.0, %v1437
        %v1439 = vpop.f32.mrb[0].mxu0
        %v1440 = vpop.f32.mrb[0].mxu0
        %v1441 = vadd.f32 0.0, %v1440
        %v1442 = vpop.f32.mrb[0].mxu0
        %1443 = vmatprep.mubr.bf16.mxu0 0
        %1444 = vmatmul.mubr.bf16.gmra.mrb[0].mxu0 %v1228
        %v1445 = vpop.f32.mrb[0].mxu0
        %v1446 = vadd.f32 0.0, %v1445
        %v1447 = vpop.f32.mrb[0].mxu0
        %v1448 = vpop.f32.mrb[0].mxu0
        %v1449 = vadd.f32 0.0, %v1448
        %v1450 = vpop.f32.mrb[0].mxu0
        %1451 = vmatprep.mubr.bf16.mxu0 0
        %1452 = vmatmul.mubr.bf16.gmra.mrb[0].mxu0 %v1231
        %v1453 = vpop.f32.mrb[0].mxu0
        %v1454 = vadd.f32 0.0, %v1453
        %v1455 = vpop.f32.mrb[0].mxu0
        %v1456 = vpop.f32.mrb[0].mxu0
        %v1457 = vadd.f32 0.0, %v1456
        %v1458 = vpop.f32.mrb[0].mxu0
        %1459 = vmatprep.mubr.bf16.mxu0 0
        %1460 = vmatmul.mubr.bf16.gmra.mrb[0].mxu0 %v1234
        %v1461 = vpop.f32.mrb[0].mxu0
        %v1462 = vadd.f32 0.0, %v1461
        %v1463 = vpop.f32.mrb[0].mxu0
        %v1464 = vpop.f32.mrb[0].mxu0
        %v1465 = vadd.f32 0.0, %v1464
        %v1466 = vpop.f32.mrb[0].mxu0
        %1467 = vmatprep.mubr.bf16.mxu0 0
        %1468 = vmatmul.mubr.bf16.gmra.mrb[0].mxu0 %v1237
        %v1469 = vpop.f32.mrb[0].mxu0
        %v1470 = vadd.f32 0.0, %v1469
        %v1471 = vpop.f32.mrb[0].mxu0
        %v1472 = vpop.f32.mrb[0].mxu0
        %v1473 = vadd.f32 0.0, %v1472
        %v1474 = vpop.f32.mrb[0].mxu0
        %1475 = vmatprep.mubr.bf16.mxu0 0
        %1476 = vmatmul.mubr.bf16.gmra.mrb[0].mxu0 %v1240
        %v1477 = vpop.f32.mrb[0].mxu0
        %v1478 = vadd.f32 0.0, %v1477
        %v1479 = vpop.f32.mrb[0].mxu0
        %v1480 = vpop.f32.mrb[0].mxu0
        %v1481 = vadd.f32 0.0, %v1480
        %v1482 = vpop.f32.mrb[0].mxu0
        %1483 = vmatprep.mubr.bf16.mxu0 0
        %1484 = vmatmul.mubr.bf16.gmra.mrb[0].mxu0 %v1243
        %v1485 = vpop.f32.mrb[0].mxu0
        %v1486 = vadd.f32 0.0, %v1485
        %v1487 = vpop.f32.mrb[0].mxu0
        %v1488 = vpop.f32.mrb[0].mxu0
        %v1489 = vadd.f32 0.0, %v1488
        %v1490 = vpop.f32.mrb[0].mxu0
        %1491 = vmatprep.mubr.bf16.mxu0 0
        %1492 = vmatmul.mubr.bf16.gmra.mrb[0].mxu0 %v1246
        %v1493 = vpop.f32.mrb[0].mxu0
        %v1494 = vadd.f32 0.0, %v1493
        %v1495 = vpop.f32.mrb[0].mxu0
        %v1496 = vpop.f32.mrb[0].mxu0
        %v1497 = vadd.f32 0.0, %v1496
        %v1498 = vpop.f32.mrb[0].mxu0
        %1499 = vmatprep.mubr.bf16.mxu0 0
        %1500 = vmatmul.mubr.bf16.gmra.mrb[0].mxu0 %v1249
        %v1501 = vpop.f32.mrb[0].mxu0
        %v1502 = vadd.f32 0.0, %v1501
        %v1503 = vpop.f32.mrb[0].mxu0
        %v1504 = vpop.f32.mrb[0].mxu0
        %v1505 = vadd.f32 0.0, %v1504
        %v1506 = vpop.f32.mrb[0].mxu0
        %1507 = vmatprep.mubr.bf16.mxu0 0
        %1508 = vmatmul.mubr.bf16.gmra.mrb[0].mxu0 %v1252
        %v1509 = vpop.f32.mrb[0].mxu0
        %v1510 = vadd.f32 0.0, %v1509
        %v1511 = vpop.f32.mrb[0].mxu0
        %v1512 = vpop.f32.mrb[0].mxu0
        %v1513 = vadd.f32 0.0, %v1512
        %v1514 = vpop.f32.mrb[0].mxu0
        %1515 = vmatprep.mubr.bf16.mxu0 0
        %1516 = vmatmul.mubr.bf16.gmra.mrb[0].mxu0 %v1255
        %v1517 = vpop.f32.mrb[0].mxu0
        %v1518 = vadd.f32 0.0, %v1517
        %v1519 = vpop.f32.mrb[0].mxu0
        %v1520 = vpop.f32.mrb[0].mxu0
        %v1521 = vadd.f32 0.0, %v1520
        %v1522 = vpop.f32.mrb[0].mxu0
        %1523 = vmatprep.mubr.bf16.mxu0 0
        %1524 = vmatmul.mubr.bf16.gmra.mrb[0].mxu0 %v1258
        %v1525 = vpop.f32.mrb[0].mxu0
        %v1526 = vadd.f32 0.0, %v1525
        %v1527 = vpop.f32.mrb[0].mxu0
        %v1528 = vpop.f32.mrb[0].mxu0
        %v1529 = vadd.f32 0.0, %v1528
        %v1530 = vpop.f32.mrb[0].mxu0
        %1531 = vmatprep.mubr.bf16.mxu0 0
        %1532 = vmatmul.mubr.bf16.gmra.mrb[0].mxu0 %v1261
        %v1533 = vpop.f32.mrb[0].mxu0
        %v1534 = vadd.f32 0.0, %v1533
        %v1535 = vpop.f32.mrb[0].mxu0
        %v1536 = vpop.f32.mrb[0].mxu0
        %v1537 = vadd.f32 0.0, %v1536
        %v1538 = vpop.f32.mrb[0].mxu0
        %1539 = vmatprep.mubr.bf16.mxu0 0
        %1540 = vmatmul.mubr.bf16.gmra.mrb[0].mxu0 %v1264
        %v1541 = vpop.f32.mrb[0].mxu0
        %v1542 = vadd.f32 0.0, %v1541
        %v1543 = vpop.f32.mrb[0].mxu0
        %v1544 = vpop.f32.mrb[0].mxu0
        %v1545 = vadd.f32 0.0, %v1544
        %v1546 = vpop.f32.mrb[0].mxu0
        %1547 = vmatprep.mubr.bf16.mxu0 0
        %1548 = vmatmul.mubr.bf16.gmra.mrb[0].mxu0 %v1267
        %v1549 = vpop.f32.mrb[0].mxu0
        %v1550 = vadd.f32 0.0, %v1549
        %v1551 = vpop.f32.mrb[0].mxu0
        %v1552 = vpop.f32.mrb[0].mxu0
        %v1553 = vadd.f32 0.0, %v1552
        %v1554 = vpop.f32.mrb[0].mxu0
        %1555 = vmatprep.mubr.bf16.mxu0 0
        %1556 = vmatmul.mubr.bf16.gmra.mrb[0].mxu0 %v1270
        %v1557 = vpop.f32.mrb[0].mxu0
        %v1558 = vadd.f32 0.0, %v1557
        %v1559 = vpop.f32.mrb[0].mxu0
        %v1560 = vpop.f32.mrb[0].mxu0
        %v1561 = vadd.f32 0.0, %v1560
        %v1562 = vpop.f32.mrb[0].mxu0
        %1563 = vmatprep.mubr.bf16.mxu0 0
        %1564 = vmatmul.mubr.bf16.gmra.mrb[0].mxu0 %v1273
        %v1565 = vpop.f32.mrb[0].mxu0
        %v1566 = vadd.f32 0.0, %v1565
        %v1567 = vpop.f32.mrb[0].mxu0
        %v1568 = vpop.f32.mrb[0].mxu0
        %v1569 = vadd.f32 0.0, %v1568
        %v1570 = vpop.f32.mrb[0].mxu0
        %1571 = vmatprep.mubr.bf16.mxu0 0
        %1572 = vmatmul.mubr.bf16.gmra.mrb[0].mxu0 %v1276
        %v1573 = vpop.f32.mrb[0].mxu0
        %v1574 = vadd.f32 0.0, %v1573
        %v1575 = vpop.f32.mrb[0].mxu0
        %v1576 = vpop.f32.mrb[0].mxu0
        %v1577 = vadd.f32 0.0, %v1576
        %v1578 = vpop.f32.mrb[0].mxu0
        %1579 = vmatprep.mubr.bf16.mxu0 0
        %1580 = vmatmul.mubr.bf16.gmra.mrb[0].mxu0 %v1279
        %v1581 = vpop.f32.mrb[0].mxu0
        %v1582 = vadd.f32 0.0, %v1581
        %v1583 = vpop.f32.mrb[0].mxu0
        %v1584 = vpop.f32.mrb[0].mxu0
        %v1585 = vadd.f32 0.0, %v1584
        %v1586 = vpop.f32.mrb[0].mxu0
        %1587 = vmatprep.mubr.bf16.mxu0 0
        %1588 = vmatmul.mubr.bf16.gmra.mrb[0].mxu0 %v1282
        %v1589 = vpop.f32.mrb[0].mxu0
        %v1590 = vadd.f32 0.0, %v1589
        %v1591 = vpop.f32.mrb[0].mxu0
        %v1592 = vpop.f32.mrb[0].mxu0
        %v1593 = vadd.f32 0.0, %v1592
        %v1594 = vpop.f32.mrb[0].mxu0
        %1595 = vmatprep.mubr.bf16.mxu0 0
        %1596 = vmatmul.mubr.bf16.gmra.mrb[0].mxu0 %v1285
        %v1597 = vpop.f32.mrb[0].mxu0
        %v1598 = vadd.f32 0.0, %v1597
        %v1599 = vpop.f32.mrb[0].mxu0
        %v1600 = vpop.f32.mrb[0].mxu0
        %v1601 = vadd.f32 0.0, %v1600
        %v1602 = vpop.f32.mrb[0].mxu0
        %1603 = vmatprep.mubr.bf16.mxu0 0
        %1604 = vmatmul.mubr.bf16.gmra.mrb[0].mxu0 %v1288
        %v1605 = vpop.f32.mrb[0].mxu0
        %v1606 = vadd.f32 0.0, %v1605
        %v1607 = vpop.f32.mrb[0].mxu0
        %v1608 = vpop.f32.mrb[0].mxu0
        %v1609 = vadd.f32 0.0, %v1608
        %v1610 = vpop.f32.mrb[0].mxu0
        %1611 = vmatprep.mubr.bf16.mxu0 0
        %1612 = vmatmul.mubr.bf16.gmra.mrb[0].mxu0 %v1291
        %v1613 = vpop.f32.mrb[0].mxu0
        %v1614 = vadd.f32 0.0, %v1613
        %v1615 = vpop.f32.mrb[0].mxu0
        %v1616 = vpop.f32.mrb[0].mxu0
        %v1617 = vadd.f32 0.0, %v1616
        %v1618 = vpop.f32.mrb[0].mxu0
        %1619 = vmatprep.mubr.bf16.mxu0 0
        %1620 = vmatmul.mubr.bf16.gmra.mrb[0].mxu0 %v1294
        %v1621 = vpop.f32.mrb[0].mxu0
        %v1622 = vadd.f32 0.0, %v1621
        %v1623 = vpop.f32.mrb[0].mxu0
        %v1624 = vpop.f32.mrb[0].mxu0
        %v1625 = vadd.f32 0.0, %v1624
        %v1626 = vpop.f32.mrb[0].mxu0
        %1627 = vmatprep.mubr.bf16.mxu0 0
        %1628 = vmatmul.mubr.bf16.gmra.mrb[0].mxu0 %v1297
        %v1629 = vpop.f32.mrb[0].mxu0
        %v1630 = vadd.f32 0.0, %v1629
        %v1631 = vpop.f32.mrb[0].mxu0
        %v1632 = vpop.f32.mrb[0].mxu0
        %v1633 = vadd.f32 0.0, %v1632
        %v1634 = vpop.f32.mrb[0].mxu0
        %1635 = vmatprep.mubr.bf16.mxu0 0
        %1636 = vmatmul.mubr.bf16.gmra.mrb[0].mxu0 %v1300
        %v1637 = vpop.f32.mrb[0].mxu0
        %v1638 = vadd.f32 0.0, %v1637
        %v1639 = vpop.f32.mrb[0].mxu0
        %v1640 = vpop.f32.mrb[0].mxu0
        %v1641 = vadd.f32 0.0, %v1640
        %v1642 = vpop.f32.mrb[0].mxu0
        %1643 = vmatprep.mubr.bf16.mxu0 0
        %1644 = vmatmul.mubr.bf16.gmra.mrb[0].mxu0 %v1303
        %v1645 = vpop.f32.mrb[0].mxu0
        %v1646 = vadd.f32 0.0, %v1645
        %v1647 = vpop.f32.mrb[0].mxu0
        %v1648 = vpop.f32.mrb[0].mxu0
        %v1649 = vadd.f32 0.0, %v1648
        %v1650 = vpop.f32.mrb[0].mxu0
        %1651 = vmatprep.mubr.bf16.mxu0 0
        %1652 = vmatmul.mubr.bf16.gmra.mrb[0].mxu0 %v1306
        %v1653 = vpop.f32.mrb[0].mxu0
        %v1654 = vadd.f32 0.0, %v1653
        %v1655 = vpop.f32.mrb[0].mxu0
        %v1656 = vpop.f32.mrb[0].mxu0
        %v1657 = vadd.f32 0.0, %v1656
        %v1658 = vpop.f32.mrb[0].mxu0
        %1659 = vmatprep.mubr.bf16.mxu0 0
        %1660 = vmatmul.mubr.bf16.gmra.mrb[0].mxu0 %v1309
        %v1661 = vpop.f32.mrb[0].mxu0
        %v1662 = vadd.f32 0.0, %v1661
        %v1663 = vpop.f32.mrb[0].mxu0
        %v1664 = vpop.f32.mrb[0].mxu0
        %v1665 = vadd.f32 0.0, %v1664
        %v1666 = vpop.f32.mrb[0].mxu0
        %1667 = vmatprep.mubr.bf16.mxu0 0
        %1668 = vmatmul.mubr.bf16.gmra.mrb[0].mxu0 %v1312
        %v1669 = vpop.f32.mrb[0].mxu0
        %v1670 = vadd.f32 0.0, %v1669
        %v1671 = vpop.f32.mrb[0].mxu0
        %v1672 = vpop.f32.mrb[0].mxu0
        %v1673 = vadd.f32 0.0, %v1672
        %v1674 = vpop.f32.mrb[0].mxu0
        %1675 = vmatprep.mubr.bf16.mxu0 0
        %1676 = vmatmul.mubr.bf16.gmra.mrb[0].mxu0 %v1315
        %v1677 = vpop.f32.mrb[0].mxu0
        %v1678 = vadd.f32 0.0, %v1677
        %v1679 = vpop.f32.mrb[0].mxu0
        %v1680 = vpop.f32.mrb[0].mxu0
        %v1681 = vadd.f32 0.0, %v1680
        %v1682 = vpop.f32.mrb[0].mxu0
        %1683 = vmatprep.mubr.bf16.mxu0 0
        %1684 = vmatmul.mubr.bf16.gmra.mrb[0].mxu0 %v1318
        %v1685 = vpop.f32.mrb[0].mxu0
        %v1686 = vadd.f32 0.0, %v1685
        %v1687 = vpop.f32.mrb[0].mxu0
        %v1688 = vpop.f32.mrb[0].mxu0
        %v1689 = vadd.f32 0.0, %v1688
        %v1690 = vpop.f32.mrb[0].mxu0
        %1691 = vmatprep.mubr.bf16.mxu0 0
        %1692 = vmatmul.mubr.bf16.gmra.mrb[0].mxu0 %v1321
        %v1693 = vpop.f32.mrb[0].mxu0
        %v1694 = vadd.f32 0.0, %v1693
        %v1695 = vpop.f32.mrb[0].mxu0
        %v1696 = vpop.f32.mrb[0].mxu0
        %v1697 = vadd.f32 0.0, %v1696
        %v1698 = vpop.f32.mrb[0].mxu0
        %1699 = vmatprep.mubr.bf16.mxu0 0
        %1700 = vmatmul.mubr.bf16.gmra.mrb[0].mxu0 %v1324
        %v1701 = vpop.f32.mrb[0].mxu0
        %v1702 = vadd.f32 0.0, %v1701
        %v1703 = vpop.f32.mrb[0].mxu0
        %v1704 = vpop.f32.mrb[0].mxu0
        %v1705 = vadd.f32 0.0, %v1704
        %v1706 = vpop.f32.mrb[0].mxu0
        %1707 = vmatprep.mubr.bf16.mxu0 0
        %1708 = vmatmul.mubr.bf16.gmra.mrb[0].mxu0 %v1327
        %v1709 = vpop.f32.mrb[0].mxu0
        %v1710 = vadd.f32 0.0, %v1709
        %v1711 = vpop.f32.mrb[0].mxu0
        %v1712 = vpop.f32.mrb[0].mxu0
        %v1713 = vadd.f32 0.0, %v1712
        %v1714 = vpop.f32.mrb[0].mxu0
        %1715 = vmatprep.mubr.bf16.mxu0 0
        %1716 = vmatmul.mubr.bf16.gmra.mrb[0].mxu0 %v1330
        %v1717 = vpop.f32.mrb[0].mxu0
        %v1718 = vadd.f32 0.0, %v1717
        %v1719 = vpop.f32.mrb[0].mxu0
        %v1720 = vpop.f32.mrb[0].mxu0
        %v1721 = vadd.f32 0.0, %v1720
        %v1722 = vpop.f32.mrb[0].mxu0
        %1723 = vmatprep.mubr.bf16.mxu0 0
        %1724 = vmatmul.mubr.bf16.gmra.mrb[0].mxu0 %v1333
        %v1725 = vpop.f32.mrb[0].mxu0
        %v1726 = vadd.f32 0.0, %v1725
        %v1727 = vpop.f32.mrb[0].mxu0
        %v1728 = vpop.f32.mrb[0].mxu0
        %v1729 = vadd.f32 0.0, %v1728
        %v1730 = vpop.f32.mrb[0].mxu0
        %1731 = vmatprep.mubr.bf16.mxu0 0
        %1732 = vmatmul.mubr.bf16.gmra.mrb[0].mxu0 %v1336
        %v1733 = vpop.f32.mrb[0].mxu0
        %v1734 = vadd.f32 0.0, %v1733
        %v1735 = vpop.f32.mrb[0].mxu0
        %v1736 = vpop.f32.mrb[0].mxu0
        %v1737 = vadd.f32 0.0, %v1736
        %v1738 = vpop.f32.mrb[0].mxu0
        %1739 = vmatprep.mubr.bf16.mxu0 0
        %1740 = vmatmul.mubr.bf16.gmra.mrb[0].mxu0 %v1339
        %v1741 = vpop.f32.mrb[0].mxu0
        %v1742 = vadd.f32 0.0, %v1741
        %v1743 = vpop.f32.mrb[0].mxu0
        %v1744 = vpop.f32.mrb[0].mxu0
        %v1745 = vadd.f32 0.0, %v1744
        %v1746 = vpop.f32.mrb[0].mxu0
        %1747 = vmatprep.mubr.bf16.mxu0 0
        %1748 = vmatmul.mubr.bf16.gmra.mrb[0].mxu0 %v1342
        %v1749 = vpop.f32.mrb[0].mxu0
        %v1750 = vadd.f32 0.0, %v1749
        %v1751 = vpop.f32.mrb[0].mxu0
        %v1752 = vpop.f32.mrb[0].mxu0
        %v1753 = vadd.f32 0.0, %v1752
        %v1754 = vpop.f32.mrb[0].mxu0
        %1755 = vmatprep.mubr.bf16.mxu0 0
        %1756 = vmatmul.mubr.bf16.gmra.mrb[0].mxu0 %v1345
        %v1757 = vpop.f32.mrb[0].mxu0
        %v1758 = vadd.f32 0.0, %v1757
        %v1759 = vpop.f32.mrb[0].mxu0
        %v1760 = vpop.f32.mrb[0].mxu0
        %v1761 = vadd.f32 0.0, %v1760
        %v1762 = vpop.f32.mrb[0].mxu0
        %1763 = vdwg.mxu0
        %v1764 = vld [vmem:[%s5] sm:$0xf]
        %v1765 = vld [vmem:[%s5 + $0x4] sm:$0xf]
        %v1768 = vunpack.c.l.b16 %v1764
        %v1769 = vunpack.c.l.b16 %v1765
        %v1770 = vpack.c.b16 %v1769, %v1768
        %1772 = vmatprep.subr.bf16.mxu0 0
        %1773 = vmatpush1.bf16.msra.mxu0 %v1770
        %1774 = vmatprep.subr.bf16.mxu0 0
        %1775 = vmatpush1.bf16.msra.mxu0 0
        %1776 = vmatprep.subr.bf16.mxu0 0
        %1777 = vmatpush1.bf16.msra.mxu0 0
        %1778 = vmatprep.subr.bf16.mxu0 0
        %1779 = vmatpush1.bf16.msra.mxu0 0
        %1780 = vmatprep.subr.bf16.mxu0 0
        %1781 = vmatpush1.bf16.msra.mxu0 0
        %1782 = vmatprep.subr.bf16.mxu0 0
        %1783 = vmatpush1.bf16.msra.mxu0 0
        %1784 = vmatprep.subr.bf16.mxu0 0
        %1785 = vmatpush1.bf16.msra.mxu0 0
        %1786 = vmatprep.subr.bf16.mxu0 0
        %1787 = vmatpush1.bf16.msra.mxu0 0
        %1788 = vmatprep.subr.bf16.mxu0 0
        %1789 = vmatpush1.bf16.msra.mxu0 0
        %1790 = vmatprep.subr.bf16.mxu0 0
        %1791 = vmatpush1.bf16.msra.mxu0 0
        %1792 = vmatprep.subr.bf16.mxu0 0
        %1793 = vmatpush1.bf16.msra.mxu0 0
        %1794 = vmatprep.subr.bf16.mxu0 0
        %1795 = vmatpush1.bf16.msra.mxu0 0
        %1796 = vmatprep.subr.bf16.mxu0 0
        %1797 = vmatpush1.bf16.msra.mxu0 0
        %1798 = vmatprep.subr.bf16.mxu0 0
        %1799 = vmatpush1.bf16.msra.mxu0 0
        %1800 = vmatprep.subr.bf16.mxu0 0
        %1801 = vmatpush1.bf16.msra.mxu0 0
        %1802 = vmatprep.subr.bf16.mxu0 0
        %1803 = vmatpush1.bf16.msra.mxu0 0
        %1804 = vmatprep.mubr.bf16.mxu0 0
        %1805 = vmatmul.mubr.bf16.gmra.mrb[0].mxu0 %v1204
        %v1806 = vpop.f32.mrb[0].mxu0
        %v1807 = vadd.f32 0.0, %v1806
        %v1808 = vpop.f32.mrb[0].mxu0
        %v1809 = vpop.f32.mrb[0].mxu0
        %v1810 = vadd.f32 0.0, %v1809
        %v1811 = vpop.f32.mrb[0].mxu0
        %1812 = vmatprep.mubr.bf16.mxu0 0
        %1813 = vmatmul.mubr.bf16.gmra.mrb[0].mxu0 %v1207
        %v1814 = vpop.f32.mrb[0].mxu0
        %v1815 = vadd.f32 0.0, %v1814
        %v1816 = vpop.f32.mrb[0].mxu0
        %v1817 = vpop.f32.mrb[0].mxu0
        %v1818 = vadd.f32 0.0, %v1817
        %v1819 = vpop.f32.mrb[0].mxu0
        %1820 = vmatprep.mubr.bf16.mxu0 0
        %1821 = vmatmul.mubr.bf16.gmra.mrb[0].mxu0 %v1210
        %v1822 = vpop.f32.mrb[0].mxu0
        %v1823 = vadd.f32 0.0, %v1822
        %v1824 = vpop.f32.mrb[0].mxu0
        %v1825 = vpop.f32.mrb[0].mxu0
        %v1826 = vadd.f32 0.0, %v1825
        %v1827 = vpop.f32.mrb[0].mxu0
        %1828 = vmatprep.mubr.bf16.mxu0 0
        %1829 = vmatmul.mubr.bf16.gmra.mrb[0].mxu0 %v1213
        %v1830 = vpop.f32.mrb[0].mxu0
        %v1831 = vadd.f32 0.0, %v1830
        %v1832 = vpop.f32.mrb[0].mxu0
        %v1833 = vpop.f32.mrb[0].mxu0
        %v1834 = vadd.f32 0.0, %v1833
        %v1835 = vpop.f32.mrb[0].mxu0
        %1836 = vmatprep.mubr.bf16.mxu0 0
        %1837 = vmatmul.mubr.bf16.gmra.mrb[0].mxu0 %v1216
        %v1838 = vpop.f32.mrb[0].mxu0
        %v1839 = vadd.f32 0.0, %v1838
        %v1840 = vpop.f32.mrb[0].mxu0
        %v1841 = vpop.f32.mrb[0].mxu0
        %v1842 = vadd.f32 0.0, %v1841
        %v1843 = vpop.f32.mrb[0].mxu0
        %1844 = vmatprep.mubr.bf16.mxu0 0
        %1845 = vmatmul.mubr.bf16.gmra.mrb[0].mxu0 %v1219
        %v1846 = vpop.f32.mrb[0].mxu0
        %v1847 = vadd.f32 0.0, %v1846
        %v1848 = vpop.f32.mrb[0].mxu0
        %v1849 = vpop.f32.mrb[0].mxu0
        %v1850 = vadd.f32 0.0, %v1849
        %v1851 = vpop.f32.mrb[0].mxu0
        %1852 = vmatprep.mubr.bf16.mxu0 0
        %1853 = vmatmul.mubr.bf16.gmra.mrb[0].mxu0 %v1222
        %v1854 = vpop.f32.mrb[0].mxu0
        %v1855 = vadd.f32 0.0, %v1854
        %v1856 = vpop.f32.mrb[0].mxu0
        %v1857 = vpop.f32.mrb[0].mxu0
        %v1858 = vadd.f32 0.0, %v1857
        %v1859 = vpop.f32.mrb[0].mxu0
        %1860 = vmatprep.mubr.bf16.mxu0 0
        %1861 = vmatmul.mubr.bf16.gmra.mrb[0].mxu0 %v1225
        %v1862 = vpop.f32.mrb[0].mxu0
        %v1863 = vadd.f32 0.0, %v1862
        %v1864 = vpop.f32.mrb[0].mxu0
        %v1865 = vpop.f32.mrb[0].mxu0
        %v1866 = vadd.f32 0.0, %v1865
        %v1867 = vpop.f32.mrb[0].mxu0
        %1868 = vmatprep.mubr.bf16.mxu0 0
        %1869 = vmatmul.mubr.bf16.gmra.mrb[0].mxu0 %v1228
        %v1870 = vpop.f32.mrb[0].mxu0
        %v1871 = vadd.f32 0.0, %v1870
        %v1872 = vpop.f32.mrb[0].mxu0
        %v1873 = vpop.f32.mrb[0].mxu0
        %v1874 = vadd.f32 0.0, %v1873
        %v1875 = vpop.f32.mrb[0].mxu0
        %1876 = vmatprep.mubr.bf16.mxu0 0
        %1877 = vmatmul.mubr.bf16.gmra.mrb[0].mxu0 %v1231
        %v1878 = vpop.f32.mrb[0].mxu0
        %v1879 = vadd.f32 0.0, %v1878
        %v1880 = vpop.f32.mrb[0].mxu0
        %v1881 = vpop.f32.mrb[0].mxu0
        %v1882 = vadd.f32 0.0, %v1881
        %v1883 = vpop.f32.mrb[0].mxu0
        %1884 = vmatprep.mubr.bf16.mxu0 0
        %1885 = vmatmul.mubr.bf16.gmra.mrb[0].mxu0 %v1234
        %v1886 = vpop.f32.mrb[0].mxu0
        %v1887 = vadd.f32 0.0, %v1886
        %v1888 = vpop.f32.mrb[0].mxu0
        %v1889 = vpop.f32.mrb[0].mxu0
        %v1890 = vadd.f32 0.0, %v1889
        %v1891 = vpop.f32.mrb[0].mxu0
        %1892 = vmatprep.mubr.bf16.mxu0 0
        %1893 = vmatmul.mubr.bf16.gmra.mrb[0].mxu0 %v1237
        %v1894 = vpop.f32.mrb[0].mxu0
        %v1895 = vadd.f32 0.0, %v1894
        %v1896 = vpop.f32.mrb[0].mxu0
        %v1897 = vpop.f32.mrb[0].mxu0
        %v1898 = vadd.f32 0.0, %v1897
        %v1899 = vpop.f32.mrb[0].mxu0
        %1900 = vmatprep.mubr.bf16.mxu0 0
        %1901 = vmatmul.mubr.bf16.gmra.mrb[0].mxu0 %v1240
        %v1902 = vpop.f32.mrb[0].mxu0
        %v1903 = vadd.f32 0.0, %v1902
        %v1904 = vpop.f32.mrb[0].mxu0
        %v1905 = vpop.f32.mrb[0].mxu0
        %v1906 = vadd.f32 0.0, %v1905
        %v1907 = vpop.f32.mrb[0].mxu0
        %1908 = vmatprep.mubr.bf16.mxu0 0
        %1909 = vmatmul.mubr.bf16.gmra.mrb[0].mxu0 %v1243
        %v1910 = vpop.f32.mrb[0].mxu0
        %v1911 = vadd.f32 0.0, %v1910
        %v1912 = vpop.f32.mrb[0].mxu0
        %v1913 = vpop.f32.mrb[0].mxu0
        %v1914 = vadd.f32 0.0, %v1913
        %v1915 = vpop.f32.mrb[0].mxu0
        %1916 = vmatprep.mubr.bf16.mxu0 0
        %1917 = vmatmul.mubr.bf16.gmra.mrb[0].mxu0 %v1246
        %v1918 = vpop.f32.mrb[0].mxu0
        %v1919 = vadd.f32 0.0, %v1918
        %v1920 = vpop.f32.mrb[0].mxu0
        %v1921 = vpop.f32.mrb[0].mxu0
        %v1922 = vadd.f32 0.0, %v1921
        %v1923 = vpop.f32.mrb[0].mxu0
        %1924 = vmatprep.mubr.bf16.mxu0 0
        %1925 = vmatmul.mubr.bf16.gmra.mrb[0].mxu0 %v1249
        %v1926 = vpop.f32.mrb[0].mxu0
        %v1927 = vadd.f32 0.0, %v1926
        %v1928 = vpop.f32.mrb[0].mxu0
        %v1929 = vpop.f32.mrb[0].mxu0
        %v1930 = vadd.f32 0.0, %v1929
        %v1931 = vpop.f32.mrb[0].mxu0
        %1932 = vmatprep.mubr.bf16.mxu0 0
        %1933 = vmatmul.mubr.bf16.gmra.mrb[0].mxu0 %v1252
        %v1934 = vpop.f32.mrb[0].mxu0
        %v1935 = vadd.f32 0.0, %v1934
        %v1936 = vpop.f32.mrb[0].mxu0
        %v1937 = vpop.f32.mrb[0].mxu0
        %v1938 = vadd.f32 0.0, %v1937
        %v1939 = vpop.f32.mrb[0].mxu0
        %1940 = vmatprep.mubr.bf16.mxu0 0
        %1941 = vmatmul.mubr.bf16.gmra.mrb[0].mxu0 %v1255
        %v1942 = vpop.f32.mrb[0].mxu0
        %v1943 = vadd.f32 0.0, %v1942
        %v1944 = vpop.f32.mrb[0].mxu0
        %v1945 = vpop.f32.mrb[0].mxu0
        %v1946 = vadd.f32 0.0, %v1945
        %v1947 = vpop.f32.mrb[0].mxu0
        %1948 = vmatprep.mubr.bf16.mxu0 0
        %1949 = vmatmul.mubr.bf16.gmra.mrb[0].mxu0 %v1258
        %v1950 = vpop.f32.mrb[0].mxu0
        %v1951 = vadd.f32 0.0, %v1950
        %v1952 = vpop.f32.mrb[0].mxu0
        %v1953 = vpop.f32.mrb[0].mxu0
        %v1954 = vadd.f32 0.0, %v1953
        %v1955 = vpop.f32.mrb[0].mxu0
        %1956 = vmatprep.mubr.bf16.mxu0 0
        %1957 = vmatmul.mubr.bf16.gmra.mrb[0].mxu0 %v1261
        %v1958 = vpop.f32.mrb[0].mxu0
        %v1959 = vadd.f32 0.0, %v1958
        %v1960 = vpop.f32.mrb[0].mxu0
        %v1961 = vpop.f32.mrb[0].mxu0
        %v1962 = vadd.f32 0.0, %v1961
        %v1963 = vpop.f32.mrb[0].mxu0
        %1964 = vmatprep.mubr.bf16.mxu0 0
        %1965 = vmatmul.mubr.bf16.gmra.mrb[0].mxu0 %v1264
        %v1966 = vpop.f32.mrb[0].mxu0
        %v1967 = vadd.f32 0.0, %v1966
        %v1968 = vpop.f32.mrb[0].mxu0
        %v1969 = vpop.f32.mrb[0].mxu0
        %v1970 = vadd.f32 0.0, %v1969
        %v1971 = vpop.f32.mrb[0].mxu0
        %1972 = vmatprep.mubr.bf16.mxu0 0
        %1973 = vmatmul.mubr.bf16.gmra.mrb[0].mxu0 %v1267
        %v1974 = vpop.f32.mrb[0].mxu0
        %v1975 = vadd.f32 0.0, %v1974
        %v1976 = vpop.f32.mrb[0].mxu0
        %v1977 = vpop.f32.mrb[0].mxu0
        %v1978 = vadd.f32 0.0, %v1977
        %v1979 = vpop.f32.mrb[0].mxu0
        %1980 = vmatprep.mubr.bf16.mxu0 0
        %1981 = vmatmul.mubr.bf16.gmra.mrb[0].mxu0 %v1270
        %v1982 = vpop.f32.mrb[0].mxu0
        %v1983 = vadd.f32 0.0, %v1982
        %v1984 = vpop.f32.mrb[0].mxu0
        %v1985 = vpop.f32.mrb[0].mxu0
        %v1986 = vadd.f32 0.0, %v1985
        %v1987 = vpop.f32.mrb[0].mxu0
        %1988 = vmatprep.mubr.bf16.mxu0 0
        %1989 = vmatmul.mubr.bf16.gmra.mrb[0].mxu0 %v1273
        %v1990 = vpop.f32.mrb[0].mxu0
        %v1991 = vadd.f32 0.0, %v1990
        %v1992 = vpop.f32.mrb[0].mxu0
        %v1993 = vpop.f32.mrb[0].mxu0
        %v1994 = vadd.f32 0.0, %v1993
        %v1995 = vpop.f32.mrb[0].mxu0
        %1996 = vmatprep.mubr.bf16.mxu0 0
        %1997 = vmatmul.mubr.bf16.gmra.mrb[0].mxu0 %v1276
        %v1998 = vpop.f32.mrb[0].mxu0
        %v1999 = vadd.f32 0.0, %v1998
        %v2000 = vpop.f32.mrb[0].mxu0
        %v2001 = vpop.f32.mrb[0].mxu0
        %v2002 = vadd.f32 0.0, %v2001
        %v2003 = vpop.f32.mrb[0].mxu0
        %2004 = vmatprep.mubr.bf16.mxu0 0
        %2005 = vmatmul.mubr.bf16.gmra.mrb[0].mxu0 %v1279
        %v2006 = vpop.f32.mrb[0].mxu0
        %v2007 = vadd.f32 0.0, %v2006
        %v2008 = vpop.f32.mrb[0].mxu0
        %v2009 = vpop.f32.mrb[0].mxu0
        %v2010 = vadd.f32 0.0, %v2009
        %v2011 = vpop.f32.mrb[0].mxu0
        %2012 = vmatprep.mubr.bf16.mxu0 0
        %2013 = vmatmul.mubr.bf16.gmra.mrb[0].mxu0 %v1282
        %v2014 = vpop.f32.mrb[0].mxu0
        %v2015 = vadd.f32 0.0, %v2014
        %v2016 = vpop.f32.mrb[0].mxu0
        %v2017 = vpop.f32.mrb[0].mxu0
        %v2018 = vadd.f32 0.0, %v2017
        %v2019 = vpop.f32.mrb[0].mxu0
        %2020 = vmatprep.mubr.bf16.mxu0 0
        %2021 = vmatmul.mubr.bf16.gmra.mrb[0].mxu0 %v1285
        %v2022 = vpop.f32.mrb[0].mxu0
        %v2023 = vadd.f32 0.0, %v2022
        %v2024 = vpop.f32.mrb[0].mxu0
        %v2025 = vpop.f32.mrb[0].mxu0
        %v2026 = vadd.f32 0.0, %v2025
        %v2027 = vpop.f32.mrb[0].mxu0
        %2028 = vmatprep.mubr.bf16.mxu0 0
        %2029 = vmatmul.mubr.bf16.gmra.mrb[0].mxu0 %v1288
        %v2030 = vpop.f32.mrb[0].mxu0
        %v2031 = vadd.f32 0.0, %v2030
        %v2032 = vpop.f32.mrb[0].mxu0
        %v2033 = vpop.f32.mrb[0].mxu0
        %v2034 = vadd.f32 0.0, %v2033
        %v2035 = vpop.f32.mrb[0].mxu0
        %2036 = vmatprep.mubr.bf16.mxu0 0
        %2037 = vmatmul.mubr.bf16.gmra.mrb[0].mxu0 %v1291
        %v2038 = vpop.f32.mrb[0].mxu0
        %v2039 = vadd.f32 0.0, %v2038
        %v2040 = vpop.f32.mrb[0].mxu0
        %v2041 = vpop.f32.mrb[0].mxu0
        %v2042 = vadd.f32 0.0, %v2041
        %v2043 = vpop.f32.mrb[0].mxu0
        %2044 = vmatprep.mubr.bf16.mxu0 0
        %2045 = vmatmul.mubr.bf16.gmra.mrb[0].mxu0 %v1294
        %v2046 = vpop.f32.mrb[0].mxu0
        %v2047 = vadd.f32 0.0, %v2046
        %v2048 = vpop.f32.mrb[0].mxu0
        %v2049 = vpop.f32.mrb[0].mxu0
        %v2050 = vadd.f32 0.0, %v2049
        %v2051 = vpop.f32.mrb[0].mxu0
        %2052 = vmatprep.mubr.bf16.mxu0 0
        %2053 = vmatmul.mubr.bf16.gmra.mrb[0].mxu0 %v1297
        %v2054 = vpop.f32.mrb[0].mxu0
        %v2055 = vadd.f32 0.0, %v2054
        %v2056 = vpop.f32.mrb[0].mxu0
        %v2057 = vpop.f32.mrb[0].mxu0
        %v2058 = vadd.f32 0.0, %v2057
        %v2059 = vpop.f32.mrb[0].mxu0
        %2060 = vmatprep.mubr.bf16.mxu0 0
        %2061 = vmatmul.mubr.bf16.gmra.mrb[0].mxu0 %v1300
        %v2062 = vpop.f32.mrb[0].mxu0
        %v2063 = vadd.f32 0.0, %v2062
        %v2064 = vpop.f32.mrb[0].mxu0
        %v2065 = vpop.f32.mrb[0].mxu0
        %v2066 = vadd.f32 0.0, %v2065
        %v2067 = vpop.f32.mrb[0].mxu0
        %2068 = vmatprep.mubr.bf16.mxu0 0
        %2069 = vmatmul.mubr.bf16.gmra.mrb[0].mxu0 %v1303
        %v2070 = vpop.f32.mrb[0].mxu0
        %v2071 = vadd.f32 0.0, %v2070
        %v2072 = vpop.f32.mrb[0].mxu0
        %v2073 = vpop.f32.mrb[0].mxu0
        %v2074 = vadd.f32 0.0, %v2073
        %v2075 = vpop.f32.mrb[0].mxu0
        %2076 = vmatprep.mubr.bf16.mxu0 0
        %2077 = vmatmul.mubr.bf16.gmra.mrb[0].mxu0 %v1306
        %v2078 = vpop.f32.mrb[0].mxu0
        %v2079 = vadd.f32 0.0, %v2078
        %v2080 = vpop.f32.mrb[0].mxu0
        %v2081 = vpop.f32.mrb[0].mxu0
        %v2082 = vadd.f32 0.0, %v2081
        %v2083 = vpop.f32.mrb[0].mxu0
        %2084 = vmatprep.mubr.bf16.mxu0 0
        %2085 = vmatmul.mubr.bf16.gmra.mrb[0].mxu0 %v1309
        %v2086 = vpop.f32.mrb[0].mxu0
        %v2087 = vadd.f32 0.0, %v2086
        %v2088 = vpop.f32.mrb[0].mxu0
        %v2089 = vpop.f32.mrb[0].mxu0
        %v2090 = vadd.f32 0.0, %v2089
        %v2091 = vpop.f32.mrb[0].mxu0
        %2092 = vmatprep.mubr.bf16.mxu0 0
        %2093 = vmatmul.mubr.bf16.gmra.mrb[0].mxu0 %v1312
        %v2094 = vpop.f32.mrb[0].mxu0
        %v2095 = vadd.f32 0.0, %v2094
        %v2096 = vpop.f32.mrb[0].mxu0
        %v2097 = vpop.f32.mrb[0].mxu0
        %v2098 = vadd.f32 0.0, %v2097
        %v2099 = vpop.f32.mrb[0].mxu0
        %2100 = vmatprep.mubr.bf16.mxu0 0
        %2101 = vmatmul.mubr.bf16.gmra.mrb[0].mxu0 %v1315
        %v2102 = vpop.f32.mrb[0].mxu0
        %v2103 = vadd.f32 0.0, %v2102
        %v2104 = vpop.f32.mrb[0].mxu0
        %v2105 = vpop.f32.mrb[0].mxu0
        %v2106 = vadd.f32 0.0, %v2105
        %v2107 = vpop.f32.mrb[0].mxu0
        %2108 = vmatprep.mubr.bf16.mxu0 0
        %2109 = vmatmul.mubr.bf16.gmra.mrb[0].mxu0 %v1318
        %v2110 = vpop.f32.mrb[0].mxu0
        %v2111 = vadd.f32 0.0, %v2110
        %v2112 = vpop.f32.mrb[0].mxu0
        %v2113 = vpop.f32.mrb[0].mxu0
        %v2114 = vadd.f32 0.0, %v2113
        %v2115 = vpop.f32.mrb[0].mxu0
        %2116 = vmatprep.mubr.bf16.mxu0 0
        %2117 = vmatmul.mubr.bf16.gmra.mrb[0].mxu0 %v1321
        %v2118 = vpop.f32.mrb[0].mxu0
        %v2119 = vadd.f32 0.0, %v2118
        %v2120 = vpop.f32.mrb[0].mxu0
        %v2121 = vpop.f32.mrb[0].mxu0
        %v2122 = vadd.f32 0.0, %v2121
        %v2123 = vpop.f32.mrb[0].mxu0
        %2124 = vmatprep.mubr.bf16.mxu0 0
        %2125 = vmatmul.mubr.bf16.gmra.mrb[0].mxu0 %v1324
        %v2126 = vpop.f32.mrb[0].mxu0
        %v2127 = vadd.f32 0.0, %v2126
        %v2128 = vpop.f32.mrb[0].mxu0
        %v2129 = vpop.f32.mrb[0].mxu0
        %v2130 = vadd.f32 0.0, %v2129
        %v2131 = vpop.f32.mrb[0].mxu0
        %2132 = vmatprep.mubr.bf16.mxu0 0
        %2133 = vmatmul.mubr.bf16.gmra.mrb[0].mxu0 %v1327
        %v2134 = vpop.f32.mrb[0].mxu0
        %v2135 = vadd.f32 0.0, %v2134
        %v2136 = vpop.f32.mrb[0].mxu0
        %v2137 = vpop.f32.mrb[0].mxu0
        %v2138 = vadd.f32 0.0, %v2137
        %v2139 = vpop.f32.mrb[0].mxu0
        %2140 = vmatprep.mubr.bf16.mxu0 0
        %2141 = vmatmul.mubr.bf16.gmra.mrb[0].mxu0 %v1330
        %v2142 = vpop.f32.mrb[0].mxu0
        %v2143 = vadd.f32 0.0, %v2142
        %v2144 = vpop.f32.mrb[0].mxu0
        %v2145 = vpop.f32.mrb[0].mxu0
        %v2146 = vadd.f32 0.0, %v2145
        %v2147 = vpop.f32.mrb[0].mxu0
        %2148 = vmatprep.mubr.bf16.mxu0 0
        %2149 = vmatmul.mubr.bf16.gmra.mrb[0].mxu0 %v1333
        %v2150 = vpop.f32.mrb[0].mxu0
        %v2151 = vadd.f32 0.0, %v2150
        %v2152 = vpop.f32.mrb[0].mxu0
        %v2153 = vpop.f32.mrb[0].mxu0
        %v2154 = vadd.f32 0.0, %v2153
        %v2155 = vpop.f32.mrb[0].mxu0
        %2156 = vmatprep.mubr.bf16.mxu0 0
        %2157 = vmatmul.mubr.bf16.gmra.mrb[0].mxu0 %v1336
        %v2158 = vpop.f32.mrb[0].mxu0
        %v2159 = vadd.f32 0.0, %v2158
        %v2160 = vpop.f32.mrb[0].mxu0
        %v2161 = vpop.f32.mrb[0].mxu0
        %v2162 = vadd.f32 0.0, %v2161
        %v2163 = vpop.f32.mrb[0].mxu0
        %2164 = vmatprep.mubr.bf16.mxu0 0
        %2165 = vmatmul.mubr.bf16.gmra.mrb[0].mxu0 %v1339
        %v2166 = vpop.f32.mrb[0].mxu0
        %v2167 = vadd.f32 0.0, %v2166
        %v2168 = vpop.f32.mrb[0].mxu0
        %v2169 = vpop.f32.mrb[0].mxu0
        %v2170 = vadd.f32 0.0, %v2169
        %v2171 = vpop.f32.mrb[0].mxu0
        %2172 = vmatprep.mubr.bf16.mxu0 0
        %2173 = vmatmul.mubr.bf16.gmra.mrb[0].mxu0 %v1342
        %v2174 = vpop.f32.mrb[0].mxu0
        %v2175 = vadd.f32 0.0, %v2174
        %v2176 = vpop.f32.mrb[0].mxu0
        %v2177 = vpop.f32.mrb[0].mxu0
        %v2178 = vadd.f32 0.0, %v2177
        %v2179 = vpop.f32.mrb[0].mxu0
        %2180 = vmatprep.mubr.bf16.mxu0 0
        %2181 = vmatmul.mubr.bf16.gmra.mrb[0].mxu0 %v1345
        %v2182 = vpop.f32.mrb[0].mxu0
        %v2183 = vadd.f32 0.0, %v2182
        %v2184 = vpop.f32.mrb[0].mxu0
        %v2185 = vpop.f32.mrb[0].mxu0
        %v2186 = vadd.f32 0.0, %v2185
        %v2187 = vpop.f32.mrb[0].mxu0
        %2188 = vdwg.mxu0
        %v2195 = vcombine.high %v574, %v574
        %v2197 = vunpack.c.l.s4 1966171168
        %v2198 = vunpack.c.0.s8 %v2197
        %v2199 = vlaneseq
        %v2200 = vshrl.u32 %v2199, 7
        %v2201 = vsub.s32 %v2198, %v2200
        %v2202 = vrot.slane %v574, %v2201
        %v2204 = vunpack.c.l.s4 1966171168
        %v2205 = vunpack.c.0.s8 %v2204
        %v2206 = vlaneseq
        %v2207 = vshrl.u32 %v2206, 7
        %v2208 = vsub.s32 %v2205, %v2207
        %v2209 = vrot.slane %v2195, %v2208
        %v2210 = vcombine.high %v2202, %v2202
        %v2211 = vcombine.high %v2209, %v2209
        %v2213 = vunpack.c.l.s4 1966171168
        %v2214 = vunpack.c.0.s8 %v2213
        %v2215 = vlaneseq
        %v2216 = vshrl.u32 %v2215, 7
        %v2217 = vsub.s32 %v2214, %v2216
        %v2218 = vrot.slane %v2202, %v2217
        %v2220 = vunpack.c.l.s4 1966171168
        %v2221 = vunpack.c.0.s8 %v2220
        %v2222 = vlaneseq
        %v2223 = vshrl.u32 %v2222, 7
        %v2224 = vsub.s32 %v2221, %v2223
        %v2225 = vrot.slane %v2209, %v2224
        %v2227 = vunpack.c.l.s4 1966171168
        %v2228 = vunpack.c.0.s8 %v2227
        %v2229 = vlaneseq
        %v2230 = vshrl.u32 %v2229, 7
        %v2231 = vsub.s32 %v2228, %v2230
        %v2232 = vrot.slane %v2210, %v2231
        %v2234 = vunpack.c.l.s4 1966171168
        %v2235 = vunpack.c.0.s8 %v2234
        %v2236 = vlaneseq
        %v2237 = vshrl.u32 %v2236, 7
        %v2238 = vsub.s32 %v2235, %v2237
        %v2239 = vrot.slane %v2211, %v2238
        %v2240 = vcombine.high %v2218, %v2218
        %v2241 = vcombine.high %v2225, %v2225
        %v2242 = vcombine.high %v2232, %v2232
        %v2243 = vcombine.high %v2239, %v2239
        %v2244 = vcombine.high %v575, %v575
        %v2246 = vunpack.c.l.s4 1966171168
        %v2247 = vunpack.c.0.s8 %v2246
        %v2248 = vlaneseq
        %v2249 = vshrl.u32 %v2248, 7
        %v2250 = vsub.s32 %v2247, %v2249
        %v2251 = vrot.slane %v575, %v2250
        %v2253 = vunpack.c.l.s4 1966171168
        %v2254 = vunpack.c.0.s8 %v2253
        %v2255 = vlaneseq
        %v2256 = vshrl.u32 %v2255, 7
        %v2257 = vsub.s32 %v2254, %v2256
        %v2258 = vrot.slane %v2244, %v2257
        %v2259 = vcombine.high %v2251, %v2251
        %v2260 = vcombine.high %v2258, %v2258
        %v2262 = vunpack.c.l.s4 1966171168
        %v2263 = vunpack.c.0.s8 %v2262
        %v2264 = vlaneseq
        %v2265 = vshrl.u32 %v2264, 7
        %v2266 = vsub.s32 %v2263, %v2265
        %v2267 = vrot.slane %v2251, %v2266
        %v2269 = vunpack.c.l.s4 1966171168
        %v2270 = vunpack.c.0.s8 %v2269
        %v2271 = vlaneseq
        %v2272 = vshrl.u32 %v2271, 7
        %v2273 = vsub.s32 %v2270, %v2272
        %v2274 = vrot.slane %v2258, %v2273
        %v2276 = vunpack.c.l.s4 1966171168
        %v2277 = vunpack.c.0.s8 %v2276
        %v2278 = vlaneseq
        %v2279 = vshrl.u32 %v2278, 7
        %v2280 = vsub.s32 %v2277, %v2279
        %v2281 = vrot.slane %v2259, %v2280
        %v2283 = vunpack.c.l.s4 1966171168
        %v2284 = vunpack.c.0.s8 %v2283
        %v2285 = vlaneseq
        %v2286 = vshrl.u32 %v2285, 7
        %v2287 = vsub.s32 %v2284, %v2286
        %v2288 = vrot.slane %v2260, %v2287
        %v2289 = vcombine.high %v2267, %v2267
        %v2290 = vcombine.high %v2274, %v2274
        %v2291 = vcombine.high %v2281, %v2281
        %v2292 = vcombine.high %v2288, %v2288
        %v2293 = vcombine.high %v576, %v576
        %v2295 = vunpack.c.l.s4 1966171168
        %v2296 = vunpack.c.0.s8 %v2295
        %v2297 = vlaneseq
        %v2298 = vshrl.u32 %v2297, 7
        %v2299 = vsub.s32 %v2296, %v2298
        %v2300 = vrot.slane %v576, %v2299
        %v2302 = vunpack.c.l.s4 1966171168
        %v2303 = vunpack.c.0.s8 %v2302
        %v2304 = vlaneseq
        %v2305 = vshrl.u32 %v2304, 7
        %v2306 = vsub.s32 %v2303, %v2305
        %v2307 = vrot.slane %v2293, %v2306
        %v2308 = vcombine.high %v2300, %v2300
        %v2309 = vcombine.high %v2307, %v2307
        %v2311 = vunpack.c.l.s4 1966171168
        %v2312 = vunpack.c.0.s8 %v2311
        %v2313 = vlaneseq
        %v2314 = vshrl.u32 %v2313, 7
        %v2315 = vsub.s32 %v2312, %v2314
        %v2316 = vrot.slane %v2300, %v2315
        %v2318 = vunpack.c.l.s4 1966171168
        %v2319 = vunpack.c.0.s8 %v2318
        %v2320 = vlaneseq
        %v2321 = vshrl.u32 %v2320, 7
        %v2322 = vsub.s32 %v2319, %v2321
        %v2323 = vrot.slane %v2307, %v2322
        %v2325 = vunpack.c.l.s4 1966171168
        %v2326 = vunpack.c.0.s8 %v2325
        %v2327 = vlaneseq
        %v2328 = vshrl.u32 %v2327, 7
        %v2329 = vsub.s32 %v2326, %v2328
        %v2330 = vrot.slane %v2308, %v2329
        %v2332 = vunpack.c.l.s4 1966171168
        %v2333 = vunpack.c.0.s8 %v2332
        %v2334 = vlaneseq
        %v2335 = vshrl.u32 %v2334, 7
        %v2336 = vsub.s32 %v2333, %v2335
        %v2337 = vrot.slane %v2309, %v2336
        %v2338 = vcombine.high %v2316, %v2316
        %v2339 = vcombine.high %v2323, %v2323
        %v2340 = vcombine.high %v2330, %v2330
        %v2341 = vcombine.high %v2337, %v2337
        %v2342 = vcombine.high %v577, %v577
        %v2344 = vunpack.c.l.s4 1966171168
        %v2345 = vunpack.c.0.s8 %v2344
        %v2346 = vlaneseq
        %v2347 = vshrl.u32 %v2346, 7
        %v2348 = vsub.s32 %v2345, %v2347
        %v2349 = vrot.slane %v577, %v2348
        %v2351 = vunpack.c.l.s4 1966171168
        %v2352 = vunpack.c.0.s8 %v2351
        %v2353 = vlaneseq
        %v2354 = vshrl.u32 %v2353, 7
        %v2355 = vsub.s32 %v2352, %v2354
        %v2356 = vrot.slane %v2342, %v2355
        %v2357 = vcombine.high %v2349, %v2349
        %v2358 = vcombine.high %v2356, %v2356
        %v2360 = vunpack.c.l.s4 1966171168
        %v2361 = vunpack.c.0.s8 %v2360
        %v2362 = vlaneseq
        %v2363 = vshrl.u32 %v2362, 7
        %v2364 = vsub.s32 %v2361, %v2363
        %v2365 = vrot.slane %v2349, %v2364
        %v2367 = vunpack.c.l.s4 1966171168
        %v2368 = vunpack.c.0.s8 %v2367
        %v2369 = vlaneseq
        %v2370 = vshrl.u32 %v2369, 7
        %v2371 = vsub.s32 %v2368, %v2370
        %v2372 = vrot.slane %v2356, %v2371
        %v2374 = vunpack.c.l.s4 1966171168
        %v2375 = vunpack.c.0.s8 %v2374
        %v2376 = vlaneseq
        %v2377 = vshrl.u32 %v2376, 7
        %v2378 = vsub.s32 %v2375, %v2377
        %v2379 = vrot.slane %v2357, %v2378
        %v2381 = vunpack.c.l.s4 1966171168
        %v2382 = vunpack.c.0.s8 %v2381
        %v2383 = vlaneseq
        %v2384 = vshrl.u32 %v2383, 7
        %v2385 = vsub.s32 %v2382, %v2384
        %v2386 = vrot.slane %v2358, %v2385
        %v2387 = vcombine.high %v2365, %v2365
        %v2388 = vcombine.high %v2372, %v2372
        %v2389 = vcombine.high %v2379, %v2379
        %v2390 = vcombine.high %v2386, %v2386
        %v2391 = vcombine.high %v578, %v578
        %v2393 = vunpack.c.l.s4 1966171168
        %v2394 = vunpack.c.0.s8 %v2393
        %v2395 = vlaneseq
        %v2396 = vshrl.u32 %v2395, 7
        %v2397 = vsub.s32 %v2394, %v2396
        %v2398 = vrot.slane %v578, %v2397
        %v2400 = vunpack.c.l.s4 1966171168
        %v2401 = vunpack.c.0.s8 %v2400
        %v2402 = vlaneseq
        %v2403 = vshrl.u32 %v2402, 7
        %v2404 = vsub.s32 %v2401, %v2403
        %v2405 = vrot.slane %v2391, %v2404
        %v2406 = vcombine.high %v2398, %v2398
        %v2407 = vcombine.high %v2405, %v2405
        %v2409 = vunpack.c.l.s4 1966171168
        %v2410 = vunpack.c.0.s8 %v2409
        %v2411 = vlaneseq
        %v2412 = vshrl.u32 %v2411, 7
        %v2413 = vsub.s32 %v2410, %v2412
        %v2414 = vrot.slane %v2398, %v2413
        %v2416 = vunpack.c.l.s4 1966171168
        %v2417 = vunpack.c.0.s8 %v2416
        %v2418 = vlaneseq
        %v2419 = vshrl.u32 %v2418, 7
        %v2420 = vsub.s32 %v2417, %v2419
        %v2421 = vrot.slane %v2405, %v2420
        %v2423 = vunpack.c.l.s4 1966171168
        %v2424 = vunpack.c.0.s8 %v2423
        %v2425 = vlaneseq
        %v2426 = vshrl.u32 %v2425, 7
        %v2427 = vsub.s32 %v2424, %v2426
        %v2428 = vrot.slane %v2406, %v2427
        %v2430 = vunpack.c.l.s4 1966171168
        %v2431 = vunpack.c.0.s8 %v2430
        %v2432 = vlaneseq
        %v2433 = vshrl.u32 %v2432, 7
        %v2434 = vsub.s32 %v2431, %v2433
        %v2435 = vrot.slane %v2407, %v2434
        %v2436 = vcombine.high %v2414, %v2414
        %v2437 = vcombine.high %v2421, %v2421
        %v2438 = vcombine.high %v2428, %v2428
        %v2439 = vcombine.high %v2435, %v2435
        %v2440 = vcombine.high %v579, %v579
        %v2442 = vunpack.c.l.s4 1966171168
        %v2443 = vunpack.c.0.s8 %v2442
        %v2444 = vlaneseq
        %v2445 = vshrl.u32 %v2444, 7
        %v2446 = vsub.s32 %v2443, %v2445
        %v2447 = vrot.slane %v579, %v2446
        %v2449 = vunpack.c.l.s4 1966171168
        %v2450 = vunpack.c.0.s8 %v2449
        %v2451 = vlaneseq
        %v2452 = vshrl.u32 %v2451, 7
        %v2453 = vsub.s32 %v2450, %v2452
        %v2454 = vrot.slane %v2440, %v2453
        %v2455 = vcombine.high %v2447, %v2447
        %v2456 = vcombine.high %v2454, %v2454
        %v2458 = vunpack.c.l.s4 1966171168
        %v2459 = vunpack.c.0.s8 %v2458
        %v2460 = vlaneseq
        %v2461 = vshrl.u32 %v2460, 7
        %v2462 = vsub.s32 %v2459, %v2461
        %v2463 = vrot.slane %v2447, %v2462
        %v2465 = vunpack.c.l.s4 1966171168
        %v2466 = vunpack.c.0.s8 %v2465
        %v2467 = vlaneseq
        %v2468 = vshrl.u32 %v2467, 7
        %v2469 = vsub.s32 %v2466, %v2468
        %v2470 = vrot.slane %v2454, %v2469
        %v2472 = vunpack.c.l.s4 1966171168
        %v2473 = vunpack.c.0.s8 %v2472
        %v2474 = vlaneseq
        %v2475 = vshrl.u32 %v2474, 7
        %v2476 = vsub.s32 %v2473, %v2475
        %v2477 = vrot.slane %v2455, %v2476
        %v2479 = vunpack.c.l.s4 1966171168
        %v2480 = vunpack.c.0.s8 %v2479
        %v2481 = vlaneseq
        %v2482 = vshrl.u32 %v2481, 7
        %v2483 = vsub.s32 %v2480, %v2482
        %v2484 = vrot.slane %v2456, %v2483
        %v2485 = vcombine.high %v2463, %v2463
        %v2486 = vcombine.high %v2470, %v2470
        %v2487 = vcombine.high %v2477, %v2477
        %v2488 = vcombine.high %v2484, %v2484
        %v2489 = vlaneseq
        %v2490 = vshrl.u32 %v2489, 7
        %v2491 = vsub.s32 0, %v2490
        %v2492 = vrot.slane %v2218, %v2491
        %v2493 = vlaneseq
        %v2494 = vshrl.u32 %v2493, 7
        %v2495 = vsub.s32 0, %v2494
        %v2496 = vrot.slane %v2232, %v2495
        %v2497 = vlaneseq
        %v2498 = vshrl.u32 %v2497, 7
        %v2499 = vsub.s32 0, %v2498
        %v2500 = vrot.slane %v2240, %v2499
        %v2501 = vlaneseq
        %v2502 = vshrl.u32 %v2501, 7
        %v2503 = vsub.s32 0, %v2502
        %v2504 = vrot.slane %v2242, %v2503
        %v2505 = vlaneseq
        %v2506 = vshrl.u32 %v2505, 7
        %v2507 = vsub.s32 0, %v2506
        %v2508 = vrot.slane %v2225, %v2507
        %v2509 = vlaneseq
        %v2510 = vshrl.u32 %v2509, 7
        %v2511 = vsub.s32 0, %v2510
        %v2512 = vrot.slane %v2239, %v2511
        %v2513 = vlaneseq
        %v2514 = vshrl.u32 %v2513, 7
        %v2515 = vsub.s32 0, %v2514
        %v2516 = vrot.slane %v2241, %v2515
        %v2517 = vlaneseq
        %v2518 = vshrl.u32 %v2517, 7
        %v2519 = vsub.s32 0, %v2518
        %v2520 = vrot.slane %v2243, %v2519
        %v2521 = vlaneseq
        %v2522 = vshrl.u32 %v2521, 7
        %v2523 = vsub.s32 0, %v2522
        %v2524 = vrot.slane %v2267, %v2523
        %v2525 = vlaneseq
        %v2526 = vshrl.u32 %v2525, 7
        %v2527 = vsub.s32 0, %v2526
        %v2528 = vrot.slane %v2281, %v2527
        %v2529 = vlaneseq
        %v2530 = vshrl.u32 %v2529, 7
        %v2531 = vsub.s32 0, %v2530
        %v2532 = vrot.slane %v2289, %v2531
        %v2533 = vlaneseq
        %v2534 = vshrl.u32 %v2533, 7
        %v2535 = vsub.s32 0, %v2534
        %v2536 = vrot.slane %v2291, %v2535
        %v2537 = vlaneseq
        %v2538 = vshrl.u32 %v2537, 7
        %v2539 = vsub.s32 0, %v2538
        %v2540 = vrot.slane %v2274, %v2539
        %v2541 = vlaneseq
        %v2542 = vshrl.u32 %v2541, 7
        %v2543 = vsub.s32 0, %v2542
        %v2544 = vrot.slane %v2288, %v2543
        %v2545 = vlaneseq
        %v2546 = vshrl.u32 %v2545, 7
        %v2547 = vsub.s32 0, %v2546
        %v2548 = vrot.slane %v2290, %v2547
        %v2549 = vlaneseq
        %v2550 = vshrl.u32 %v2549, 7
        %v2551 = vsub.s32 0, %v2550
        %v2552 = vrot.slane %v2292, %v2551
        %v2553 = vlaneseq
        %v2554 = vshrl.u32 %v2553, 7
        %v2555 = vsub.s32 0, %v2554
        %v2556 = vrot.slane %v2316, %v2555
        %v2557 = vlaneseq
        %v2558 = vshrl.u32 %v2557, 7
        %v2559 = vsub.s32 0, %v2558
        %v2560 = vrot.slane %v2330, %v2559
        %v2561 = vlaneseq
        %v2562 = vshrl.u32 %v2561, 7
        %v2563 = vsub.s32 0, %v2562
        %v2564 = vrot.slane %v2338, %v2563
        %v2565 = vlaneseq
        %v2566 = vshrl.u32 %v2565, 7
        %v2567 = vsub.s32 0, %v2566
        %v2568 = vrot.slane %v2340, %v2567
        %v2569 = vlaneseq
        %v2570 = vshrl.u32 %v2569, 7
        %v2571 = vsub.s32 0, %v2570
        %v2572 = vrot.slane %v2323, %v2571
        %v2573 = vlaneseq
        %v2574 = vshrl.u32 %v2573, 7
        %v2575 = vsub.s32 0, %v2574
        %v2576 = vrot.slane %v2337, %v2575
        %v2577 = vlaneseq
        %v2578 = vshrl.u32 %v2577, 7
        %v2579 = vsub.s32 0, %v2578
        %v2580 = vrot.slane %v2339, %v2579
        %v2581 = vlaneseq
        %v2582 = vshrl.u32 %v2581, 7
        %v2583 = vsub.s32 0, %v2582
        %v2584 = vrot.slane %v2341, %v2583
        %v2585 = vlaneseq
        %v2586 = vshrl.u32 %v2585, 7
        %v2587 = vsub.s32 0, %v2586
        %v2588 = vrot.slane %v2365, %v2587
        %v2589 = vlaneseq
        %v2590 = vshrl.u32 %v2589, 7
        %v2591 = vsub.s32 0, %v2590
        %v2592 = vrot.slane %v2379, %v2591
        %v2593 = vlaneseq
        %v2594 = vshrl.u32 %v2593, 7
        %v2595 = vsub.s32 0, %v2594
        %v2596 = vrot.slane %v2387, %v2595
        %v2597 = vlaneseq
        %v2598 = vshrl.u32 %v2597, 7
        %v2599 = vsub.s32 0, %v2598
        %v2600 = vrot.slane %v2389, %v2599
        %v2601 = vlaneseq
        %v2602 = vshrl.u32 %v2601, 7
        %v2603 = vsub.s32 0, %v2602
        %v2604 = vrot.slane %v2372, %v2603
        %v2605 = vlaneseq
        %v2606 = vshrl.u32 %v2605, 7
        %v2607 = vsub.s32 0, %v2606
        %v2608 = vrot.slane %v2386, %v2607
        %v2609 = vlaneseq
        %v2610 = vshrl.u32 %v2609, 7
        %v2611 = vsub.s32 0, %v2610
        %v2612 = vrot.slane %v2388, %v2611
        %v2613 = vlaneseq
        %v2614 = vshrl.u32 %v2613, 7
        %v2615 = vsub.s32 0, %v2614
        %v2616 = vrot.slane %v2390, %v2615
        %v2617 = vlaneseq
        %v2618 = vshrl.u32 %v2617, 7
        %v2619 = vsub.s32 0, %v2618
        %v2620 = vrot.slane %v2414, %v2619
        %v2621 = vlaneseq
        %v2622 = vshrl.u32 %v2621, 7
        %v2623 = vsub.s32 0, %v2622
        %v2624 = vrot.slane %v2428, %v2623
        %v2625 = vlaneseq
        %v2626 = vshrl.u32 %v2625, 7
        %v2627 = vsub.s32 0, %v2626
        %v2628 = vrot.slane %v2436, %v2627
        %v2629 = vlaneseq
        %v2630 = vshrl.u32 %v2629, 7
        %v2631 = vsub.s32 0, %v2630
        %v2632 = vrot.slane %v2438, %v2631
        %v2633 = vlaneseq
        %v2634 = vshrl.u32 %v2633, 7
        %v2635 = vsub.s32 0, %v2634
        %v2636 = vrot.slane %v2421, %v2635
        %v2637 = vlaneseq
        %v2638 = vshrl.u32 %v2637, 7
        %v2639 = vsub.s32 0, %v2638
        %v2640 = vrot.slane %v2435, %v2639
        %v2641 = vlaneseq
        %v2642 = vshrl.u32 %v2641, 7
        %v2643 = vsub.s32 0, %v2642
        %v2644 = vrot.slane %v2437, %v2643
        %v2645 = vlaneseq
        %v2646 = vshrl.u32 %v2645, 7
        %v2647 = vsub.s32 0, %v2646
        %v2648 = vrot.slane %v2439, %v2647
        %v2649 = vlaneseq
        %v2650 = vshrl.u32 %v2649, 7
        %v2651 = vsub.s32 0, %v2650
        %v2652 = vrot.slane %v2463, %v2651
        %v2653 = vlaneseq
        %v2654 = vshrl.u32 %v2653, 7
        %v2655 = vsub.s32 0, %v2654
        %v2656 = vrot.slane %v2477, %v2655
        %v2657 = vlaneseq
        %v2658 = vshrl.u32 %v2657, 7
        %v2659 = vsub.s32 0, %v2658
        %v2660 = vrot.slane %v2485, %v2659
        %v2661 = vlaneseq
        %v2662 = vshrl.u32 %v2661, 7
        %v2663 = vsub.s32 0, %v2662
        %v2664 = vrot.slane %v2487, %v2663
        %v2665 = vlaneseq
        %v2666 = vshrl.u32 %v2665, 7
        %v2667 = vsub.s32 0, %v2666
        %v2668 = vrot.slane %v2470, %v2667
        %v2669 = vlaneseq
        %v2670 = vshrl.u32 %v2669, 7
        %v2671 = vsub.s32 0, %v2670
        %v2672 = vrot.slane %v2484, %v2671
        %v2673 = vlaneseq
        %v2674 = vshrl.u32 %v2673, 7
        %v2675 = vsub.s32 0, %v2674
        %v2676 = vrot.slane %v2486, %v2675
        %v2677 = vlaneseq
        %v2678 = vshrl.u32 %v2677, 7
        %v2679 = vsub.s32 0, %v2678
        %v2680 = vrot.slane %v2488, %v2679
        %2825 = vrot.lane.b32.xlu0 %v676, 16
        %v2826 = vpop.permute.xlu0 %2825
        %2827 = vrot.lane.b32.xlu0 %v677, 16
        %v2828 = vpop.permute.xlu0 %2827
        %2829 = vrot.lane.b32.xlu0 %v678, 16
        %v2830 = vpop.permute.xlu0 %2829
        %2831 = vrot.lane.b32.xlu0 %v679, 16
        %v2832 = vpop.permute.xlu0 %2831
        %2833 = vrot.lane.b32.xlu0 %v680, 16
        %v2834 = vpop.permute.xlu0 %2833
        %2835 = vrot.lane.b32.xlu0 %v681, 16
        %v2836 = vpop.permute.xlu0 %2835
        %2837 = vrot.lane.b32.xlu0 %v682, 16
        %v2838 = vpop.permute.xlu0 %2837
        %2839 = vrot.lane.b32.xlu0 %v683, 16
        %v2840 = vpop.permute.xlu0 %2839
        %2841 = vrot.lane.b32.xlu0 %v684, 16
        %v2842 = vpop.permute.xlu0 %2841
        %2843 = vrot.lane.b32.xlu0 %v685, 16
        %v2844 = vpop.permute.xlu0 %2843
        %2845 = vrot.lane.b32.xlu0 %v686, 16
        %v2846 = vpop.permute.xlu0 %2845
        %2847 = vrot.lane.b32.xlu0 %v687, 16
        %v2848 = vpop.permute.xlu0 %2847
        %2849 = vrot.lane.b32.xlu0 %v688, 16
        %v2850 = vpop.permute.xlu0 %2849
        %2851 = vrot.lane.b32.xlu0 %v689, 16
        %v2852 = vpop.permute.xlu0 %2851
        %2853 = vrot.lane.b32.xlu0 %v690, 16
        %v2854 = vpop.permute.xlu0 %2853
        %2855 = vrot.lane.b32.xlu0 %v691, 16
        %v2856 = vpop.permute.xlu0 %2855
        %2857 = vrot.lane.b32.xlu0 %v692, 16
        %v2858 = vpop.permute.xlu0 %2857
        %2859 = vrot.lane.b32.xlu0 %v693, 16
        %v2860 = vpop.permute.xlu0 %2859
        %2861 = vrot.lane.b32.xlu0 %v694, 16
        %v2862 = vpop.permute.xlu0 %2861
        %2863 = vrot.lane.b32.xlu0 %v695, 16
        %v2864 = vpop.permute.xlu0 %2863
        %2865 = vrot.lane.b32.xlu0 %v696, 16
        %v2866 = vpop.permute.xlu0 %2865
        %2867 = vrot.lane.b32.xlu0 %v697, 16
        %v2868 = vpop.permute.xlu0 %2867
        %2869 = vrot.lane.b32.xlu0 %v698, 16
        %v2870 = vpop.permute.xlu0 %2869
        %2871 = vrot.lane.b32.xlu0 %v699, 16
        %v2872 = vpop.permute.xlu0 %2871
        %2873 = vrot.lane.b32.xlu0 %v700, 16
        %v2874 = vpop.permute.xlu0 %2873
        %2875 = vrot.lane.b32.xlu0 %v701, 16
        %v2876 = vpop.permute.xlu0 %2875
        %2877 = vrot.lane.b32.xlu0 %v702, 16
        %v2878 = vpop.permute.xlu0 %2877
        %2879 = vrot.lane.b32.xlu0 %v703, 16
        %v2880 = vpop.permute.xlu0 %2879
        %2881 = vrot.lane.b32.xlu0 %v704, 16
        %v2882 = vpop.permute.xlu0 %2881
        %2883 = vrot.lane.b32.xlu0 %v705, 16
        %v2884 = vpop.permute.xlu0 %2883
        %2885 = vrot.lane.b32.xlu0 %v706, 16
        %v2886 = vpop.permute.xlu0 %2885
        %2887 = vrot.lane.b32.xlu0 %v707, 16
        %v2888 = vpop.permute.xlu0 %2887
        %2889 = vrot.lane.b32.xlu0 %v708, 16
        %v2890 = vpop.permute.xlu0 %2889
        %2891 = vrot.lane.b32.xlu0 %v709, 16
        %v2892 = vpop.permute.xlu0 %2891
        %2893 = vrot.lane.b32.xlu0 %v710, 16
        %v2894 = vpop.permute.xlu0 %2893
        %2895 = vrot.lane.b32.xlu0 %v711, 16
        %v2896 = vpop.permute.xlu0 %2895
        %2897 = vrot.lane.b32.xlu0 %v712, 16
        %v2898 = vpop.permute.xlu0 %2897
        %2899 = vrot.lane.b32.xlu0 %v713, 16
        %v2900 = vpop.permute.xlu0 %2899
        %2901 = vrot.lane.b32.xlu0 %v714, 16
        %v2902 = vpop.permute.xlu0 %2901
        %2903 = vrot.lane.b32.xlu0 %v715, 16
        %v2904 = vpop.permute.xlu0 %2903
        %2905 = vrot.lane.b32.xlu0 %v716, 16
        %v2906 = vpop.permute.xlu0 %2905
        %2907 = vrot.lane.b32.xlu0 %v717, 16
        %v2908 = vpop.permute.xlu0 %2907
        %2909 = vrot.lane.b32.xlu0 %v718, 16
        %v2910 = vpop.permute.xlu0 %2909
        %2911 = vrot.lane.b32.xlu0 %v719, 16
        %v2912 = vpop.permute.xlu0 %2911
        %2913 = vrot.lane.b32.xlu0 %v720, 16
        %v2914 = vpop.permute.xlu0 %2913
        %2915 = vrot.lane.b32.xlu0 %v721, 16
        %v2916 = vpop.permute.xlu0 %2915
        %2917 = vrot.lane.b32.xlu0 %v722, 16
        %v2918 = vpop.permute.xlu0 %2917
        %2919 = vrot.lane.b32.xlu0 %v723, 16
        %v2920 = vpop.permute.xlu0 %2919
        %2921 = vrot.lane.b32.xlu0 %v724, 16
        %v2922 = vpop.permute.xlu0 %2921
        %2923 = vrot.lane.b32.xlu0 %v725, 16
        %v2924 = vpop.permute.xlu0 %2923
        %2925 = vrot.lane.b32.xlu0 %v726, 16
        %v2926 = vpop.permute.xlu0 %2925
        %2927 = vrot.lane.b32.xlu0 %v727, 16
        %v2928 = vpop.permute.xlu0 %2927
        %2929 = vrot.lane.b32.xlu0 %v728, 16
        %v2930 = vpop.permute.xlu0 %2929
        %2931 = vrot.lane.b32.xlu0 %v729, 16
        %v2932 = vpop.permute.xlu0 %2931
        %2933 = vrot.lane.b32.xlu0 %v730, 16
        %v2934 = vpop.permute.xlu0 %2933
        %2935 = vrot.lane.b32.xlu0 %v731, 16
        %v2936 = vpop.permute.xlu0 %2935
        %2937 = vrot.lane.b32.xlu0 %v732, 16
        %v2938 = vpop.permute.xlu0 %2937
        %2939 = vrot.lane.b32.xlu0 %v733, 16
        %v2940 = vpop.permute.xlu0 %2939
        %2941 = vrot.lane.b32.xlu0 %v734, 16
        %v2942 = vpop.permute.xlu0 %2941
        %2943 = vrot.lane.b32.xlu0 %v735, 16
        %v2944 = vpop.permute.xlu0 %2943
        %2945 = vrot.lane.b32.xlu0 %v736, 16
        %v2946 = vpop.permute.xlu0 %2945
        %2947 = vrot.lane.b32.xlu0 %v737, 16
        %v2948 = vpop.permute.xlu0 %2947
        %2949 = vrot.lane.b32.xlu0 %v738, 16
        %v2950 = vpop.permute.xlu0 %2949
        %2951 = vrot.lane.b32.xlu0 %v739, 16
        %v2952 = vpop.permute.xlu0 %2951
        %2953 = vrot.lane.b32.xlu0 %v740, 16
        %v2954 = vpop.permute.xlu0 %2953
        %2955 = vrot.lane.b32.xlu0 %v741, 16
        %v2956 = vpop.permute.xlu0 %2955
        %2957 = vrot.lane.b32.xlu0 %v742, 16
        %v2958 = vpop.permute.xlu0 %2957
        %2959 = vrot.lane.b32.xlu0 %v743, 16
        %v2960 = vpop.permute.xlu0 %2959
        %2961 = vrot.lane.b32.xlu0 %v744, 16
        %v2962 = vpop.permute.xlu0 %2961
        %2963 = vrot.lane.b32.xlu0 %v745, 16
        %v2964 = vpop.permute.xlu0 %2963
        %2965 = vrot.lane.b32.xlu0 %v746, 16
        %v2966 = vpop.permute.xlu0 %2965
        %2967 = vrot.lane.b32.xlu0 %v747, 16
        %v2968 = vpop.permute.xlu0 %2967
        %2969 = vrot.lane.b32.xlu0 %v748, 16
        %v2970 = vpop.permute.xlu0 %2969
        %2971 = vrot.lane.b32.xlu0 %v749, 16
        %v2972 = vpop.permute.xlu0 %2971
        %2973 = vrot.lane.b32.xlu0 %v750, 16
        %v2974 = vpop.permute.xlu0 %2973
        %2975 = vrot.lane.b32.xlu0 %v751, 16
        %v2976 = vpop.permute.xlu0 %2975
        %2977 = vrot.lane.b32.xlu0 %v752, 16
        %v2978 = vpop.permute.xlu0 %2977
        %2979 = vrot.lane.b32.xlu0 %v753, 16
        %v2980 = vpop.permute.xlu0 %2979
        %2981 = vrot.lane.b32.xlu0 %v754, 16
        %v2982 = vpop.permute.xlu0 %2981
        %2983 = vrot.lane.b32.xlu0 %v755, 16
        %v2984 = vpop.permute.xlu0 %2983
        %2985 = vrot.lane.b32.xlu0 %v756, 16
        %v2986 = vpop.permute.xlu0 %2985
        %2987 = vrot.lane.b32.xlu0 %v757, 16
        %v2988 = vpop.permute.xlu0 %2987
        %2989 = vrot.lane.b32.xlu0 %v758, 16
        %v2990 = vpop.permute.xlu0 %2989
        %2991 = vrot.lane.b32.xlu0 %v759, 16
        %v2992 = vpop.permute.xlu0 %2991
        %2993 = vrot.lane.b32.xlu0 %v760, 16
        %v2994 = vpop.permute.xlu0 %2993
        %2995 = vrot.lane.b32.xlu0 %v761, 16
        %v2996 = vpop.permute.xlu0 %2995
        %2997 = vrot.lane.b32.xlu0 %v762, 16
        %v2998 = vpop.permute.xlu0 %2997
        %2999 = vrot.lane.b32.xlu0 %v763, 16
        %v3000 = vpop.permute.xlu0 %2999
        %3001 = vrot.lane.b32.xlu0 %v764, 16
        %v3002 = vpop.permute.xlu0 %3001
        %3003 = vrot.lane.b32.xlu0 %v765, 16
        %v3004 = vpop.permute.xlu0 %3003
        %3005 = vrot.lane.b32.xlu0 %v766, 16
        %v3006 = vpop.permute.xlu0 %3005
        %3007 = vrot.lane.b32.xlu0 %v767, 16
        %v3008 = vpop.permute.xlu0 %3007
        %3009 = vrot.lane.b32.xlu0 %v768, 16
        %v3010 = vpop.permute.xlu0 %3009
        %3011 = vrot.lane.b32.xlu0 %v769, 16
        %v3012 = vpop.permute.xlu0 %3011
        %3013 = vrot.lane.b32.xlu0 %v770, 16
        %v3014 = vpop.permute.xlu0 %3013
        %3015 = vrot.lane.b32.xlu0 %v771, 16
        %v3016 = vpop.permute.xlu0 %3015
        %v3113 = vsub.f32 %v2492, %v2826
        %v3114 = vsub.f32 %v2492, %v2828
        %v3115 = vsub.f32 %v2496, %v2830
        %v3116 = vsub.f32 %v2496, %v2832
        %v3117 = vsub.f32 %v2500, %v2834
        %v3118 = vsub.f32 %v2500, %v2836
        %v3119 = vsub.f32 %v2504, %v2838
        %v3120 = vsub.f32 %v2504, %v2840
        %v3121 = vsub.f32 %v2508, %v2842
        %v3122 = vsub.f32 %v2508, %v2844
        %v3123 = vsub.f32 %v2512, %v2846
        %v3124 = vsub.f32 %v2512, %v2848
        %v3125 = vsub.f32 %v2516, %v2850
        %v3126 = vsub.f32 %v2516, %v2852
        %v3127 = vsub.f32 %v2520, %v2854
        %v3128 = vsub.f32 %v2520, %v2856
        %v3129 = vsub.f32 %v2524, %v2858
        %v3130 = vsub.f32 %v2524, %v2860
        %v3131 = vsub.f32 %v2528, %v2862
        %v3132 = vsub.f32 %v2528, %v2864
        %v3133 = vsub.f32 %v2532, %v2866
        %v3134 = vsub.f32 %v2532, %v2868
        %v3135 = vsub.f32 %v2536, %v2870
        %v3136 = vsub.f32 %v2536, %v2872
        %v3137 = vsub.f32 %v2540, %v2874
        %v3138 = vsub.f32 %v2540, %v2876
        %v3139 = vsub.f32 %v2544, %v2878
        %v3140 = vsub.f32 %v2544, %v2880
        %v3141 = vsub.f32 %v2548, %v2882
        %v3142 = vsub.f32 %v2548, %v2884
        %v3143 = vsub.f32 %v2552, %v2886
        %v3144 = vsub.f32 %v2552, %v2888
        %v3145 = vsub.f32 %v2556, %v2890
        %v3146 = vsub.f32 %v2556, %v2892
        %v3147 = vsub.f32 %v2560, %v2894
        %v3148 = vsub.f32 %v2560, %v2896
        %v3149 = vsub.f32 %v2564, %v2898
        %v3150 = vsub.f32 %v2564, %v2900
        %v3151 = vsub.f32 %v2568, %v2902
        %v3152 = vsub.f32 %v2568, %v2904
        %v3153 = vsub.f32 %v2572, %v2906
        %v3154 = vsub.f32 %v2572, %v2908
        %v3155 = vsub.f32 %v2576, %v2910
        %v3156 = vsub.f32 %v2576, %v2912
        %v3157 = vsub.f32 %v2580, %v2914
        %v3158 = vsub.f32 %v2580, %v2916
        %v3159 = vsub.f32 %v2584, %v2918
        %v3160 = vsub.f32 %v2584, %v2920
        %v3161 = vsub.f32 %v2588, %v2922
        %v3162 = vsub.f32 %v2588, %v2924
        %v3163 = vsub.f32 %v2592, %v2926
        %v3164 = vsub.f32 %v2592, %v2928
        %v3165 = vsub.f32 %v2596, %v2930
        %v3166 = vsub.f32 %v2596, %v2932
        %v3167 = vsub.f32 %v2600, %v2934
        %v3168 = vsub.f32 %v2600, %v2936
        %v3169 = vsub.f32 %v2604, %v2938
        %v3170 = vsub.f32 %v2604, %v2940
        %v3171 = vsub.f32 %v2608, %v2942
        %v3172 = vsub.f32 %v2608, %v2944
        %v3173 = vsub.f32 %v2612, %v2946
        %v3174 = vsub.f32 %v2612, %v2948
        %v3175 = vsub.f32 %v2616, %v2950
        %v3176 = vsub.f32 %v2616, %v2952
        %v3177 = vsub.f32 %v2620, %v2954
        %v3178 = vsub.f32 %v2620, %v2956
        %v3179 = vsub.f32 %v2624, %v2958
        %v3180 = vsub.f32 %v2624, %v2960
        %v3181 = vsub.f32 %v2628, %v2962
        %v3182 = vsub.f32 %v2628, %v2964
        %v3183 = vsub.f32 %v2632, %v2966
        %v3184 = vsub.f32 %v2632, %v2968
        %v3185 = vsub.f32 %v2636, %v2970
        %v3186 = vsub.f32 %v2636, %v2972
        %v3187 = vsub.f32 %v2640, %v2974
        %v3188 = vsub.f32 %v2640, %v2976
        %v3189 = vsub.f32 %v2644, %v2978
        %v3190 = vsub.f32 %v2644, %v2980
        %v3191 = vsub.f32 %v2648, %v2982
        %v3192 = vsub.f32 %v2648, %v2984
        %v3193 = vsub.f32 %v2652, %v2986
        %v3194 = vsub.f32 %v2652, %v2988
        %v3195 = vsub.f32 %v2656, %v2990
        %v3196 = vsub.f32 %v2656, %v2992
        %v3197 = vsub.f32 %v2660, %v2994
        %v3198 = vsub.f32 %v2660, %v2996
        %v3199 = vsub.f32 %v2664, %v2998
        %v3200 = vsub.f32 %v2664, %v3000
        %v3201 = vsub.f32 %v2668, %v3002
        %v3202 = vsub.f32 %v2668, %v3004
        %v3203 = vsub.f32 %v2672, %v3006
        %v3204 = vsub.f32 %v2672, %v3008
        %v3205 = vsub.f32 %v2676, %v3010
        %v3206 = vsub.f32 %v2676, %v3012
        %v3207 = vsub.f32 %v2680, %v3014
        %v3208 = vsub.f32 %v2680, %v3016
        %v3209 = vld [vmem:[%s8] sm:$0x1]
        %3211 = vset.pattern.permute.xlu0 16
        %3212 = vperm.xlu0 %3211, %v3113
        %v3213 = vpop.permute.xlu0 %3212
        %3216 = vset.pattern.permute.xlu0 16
        %3217 = vperm.xlu0 %3216, %v3114
        %v3218 = vpop.permute.xlu0 %3217
        %3221 = vset.pattern.permute.xlu0 16
        %3222 = vperm.xlu0 %3221, %v3115
        %v3223 = vpop.permute.xlu0 %3222
        %3226 = vset.pattern.permute.xlu0 16
        %3227 = vperm.xlu0 %3226, %v3116
        %v3228 = vpop.permute.xlu0 %3227
        %3231 = vset.pattern.permute.xlu0 16
        %3232 = vperm.xlu0 %3231, %v3117
        %v3233 = vpop.permute.xlu0 %3232
        %3236 = vset.pattern.permute.xlu0 16
        %3237 = vperm.xlu0 %3236, %v3118
        %v3238 = vpop.permute.xlu0 %3237
        %3241 = vset.pattern.permute.xlu0 16
        %3242 = vperm.xlu0 %3241, %v3119
        %v3243 = vpop.permute.xlu0 %3242
        %3246 = vset.pattern.permute.xlu0 16
        %3247 = vperm.xlu0 %3246, %v3120
        %v3248 = vpop.permute.xlu0 %3247
        %3251 = vset.pattern.permute.xlu0 16
        %3252 = vperm.xlu0 %3251, %v3121
        %v3253 = vpop.permute.xlu0 %3252
        %3256 = vset.pattern.permute.xlu0 16
        %3257 = vperm.xlu0 %3256, %v3122
        %v3258 = vpop.permute.xlu0 %3257
        %3261 = vset.pattern.permute.xlu0 16
        %3262 = vperm.xlu0 %3261, %v3123
        %v3263 = vpop.permute.xlu0 %3262
        %3266 = vset.pattern.permute.xlu0 16
        %3267 = vperm.xlu0 %3266, %v3124
        %v3268 = vpop.permute.xlu0 %3267
        %3271 = vset.pattern.permute.xlu0 16
        %3272 = vperm.xlu0 %3271, %v3125
        %v3273 = vpop.permute.xlu0 %3272
        %3276 = vset.pattern.permute.xlu0 16
        %3277 = vperm.xlu0 %3276, %v3126
        %v3278 = vpop.permute.xlu0 %3277
        %3281 = vset.pattern.permute.xlu0 16
        %3282 = vperm.xlu0 %3281, %v3127
        %v3283 = vpop.permute.xlu0 %3282
        %3286 = vset.pattern.permute.xlu0 16
        %3287 = vperm.xlu0 %3286, %v3128
        %v3288 = vpop.permute.xlu0 %3287
        %3291 = vset.pattern.permute.xlu0 16
        %3292 = vperm.xlu0 %3291, %v3129
        %v3293 = vpop.permute.xlu0 %3292
        %3296 = vset.pattern.permute.xlu0 16
        %3297 = vperm.xlu0 %3296, %v3130
        %v3298 = vpop.permute.xlu0 %3297
        %3301 = vset.pattern.permute.xlu0 16
        %3302 = vperm.xlu0 %3301, %v3131
        %v3303 = vpop.permute.xlu0 %3302
        %3306 = vset.pattern.permute.xlu0 16
        %3307 = vperm.xlu0 %3306, %v3132
        %v3308 = vpop.permute.xlu0 %3307
        %3311 = vset.pattern.permute.xlu0 16
        %3312 = vperm.xlu0 %3311, %v3133
        %v3313 = vpop.permute.xlu0 %3312
        %3316 = vset.pattern.permute.xlu0 16
        %3317 = vperm.xlu0 %3316, %v3134
        %v3318 = vpop.permute.xlu0 %3317
        %3321 = vset.pattern.permute.xlu0 16
        %3322 = vperm.xlu0 %3321, %v3135
        %v3323 = vpop.permute.xlu0 %3322
        %3326 = vset.pattern.permute.xlu0 16
        %3327 = vperm.xlu0 %3326, %v3136
        %v3328 = vpop.permute.xlu0 %3327
        %3331 = vset.pattern.permute.xlu0 16
        %3332 = vperm.xlu0 %3331, %v3137
        %v3333 = vpop.permute.xlu0 %3332
        %3336 = vset.pattern.permute.xlu0 16
        %3337 = vperm.xlu0 %3336, %v3138
        %v3338 = vpop.permute.xlu0 %3337
        %3341 = vset.pattern.permute.xlu0 16
        %3342 = vperm.xlu0 %3341, %v3139
        %v3343 = vpop.permute.xlu0 %3342
        %3346 = vset.pattern.permute.xlu0 16
        %3347 = vperm.xlu0 %3346, %v3140
        %v3348 = vpop.permute.xlu0 %3347
        %3351 = vset.pattern.permute.xlu0 16
        %3352 = vperm.xlu0 %3351, %v3141
        %v3353 = vpop.permute.xlu0 %3352
        %3356 = vset.pattern.permute.xlu0 16
        %3357 = vperm.xlu0 %3356, %v3142
        %v3358 = vpop.permute.xlu0 %3357
        %3361 = vset.pattern.permute.xlu0 16
        %3362 = vperm.xlu0 %3361, %v3143
        %v3363 = vpop.permute.xlu0 %3362
        %3366 = vset.pattern.permute.xlu0 16
        %3367 = vperm.xlu0 %3366, %v3144
        %v3368 = vpop.permute.xlu0 %3367
        %3371 = vset.pattern.permute.xlu0 16
        %3372 = vperm.xlu0 %3371, %v3145
        %v3373 = vpop.permute.xlu0 %3372
        %3376 = vset.pattern.permute.xlu0 16
        %3377 = vperm.xlu0 %3376, %v3146
        %v3378 = vpop.permute.xlu0 %3377
        %3381 = vset.pattern.permute.xlu0 16
        %3382 = vperm.xlu0 %3381, %v3147
        %v3383 = vpop.permute.xlu0 %3382
        %3386 = vset.pattern.permute.xlu0 16
        %3387 = vperm.xlu0 %3386, %v3148
        %v3388 = vpop.permute.xlu0 %3387
        %3391 = vset.pattern.permute.xlu0 16
        %3392 = vperm.xlu0 %3391, %v3149
        %v3393 = vpop.permute.xlu0 %3392
        %3396 = vset.pattern.permute.xlu0 16
        %3397 = vperm.xlu0 %3396, %v3150
        %v3398 = vpop.permute.xlu0 %3397
        %3401 = vset.pattern.permute.xlu0 16
        %3402 = vperm.xlu0 %3401, %v3151
        %v3403 = vpop.permute.xlu0 %3402
        %3406 = vset.pattern.permute.xlu0 16
        %3407 = vperm.xlu0 %3406, %v3152
        %v3408 = vpop.permute.xlu0 %3407
        %3411 = vset.pattern.permute.xlu0 16
        %3412 = vperm.xlu0 %3411, %v3153
        %v3413 = vpop.permute.xlu0 %3412
        %3416 = vset.pattern.permute.xlu0 16
        %3417 = vperm.xlu0 %3416, %v3154
        %v3418 = vpop.permute.xlu0 %3417
        %3421 = vset.pattern.permute.xlu0 16
        %3422 = vperm.xlu0 %3421, %v3155
        %v3423 = vpop.permute.xlu0 %3422
        %3426 = vset.pattern.permute.xlu0 16
        %3427 = vperm.xlu0 %3426, %v3156
        %v3428 = vpop.permute.xlu0 %3427
        %3431 = vset.pattern.permute.xlu0 16
        %3432 = vperm.xlu0 %3431, %v3157
        %v3433 = vpop.permute.xlu0 %3432
        %3436 = vset.pattern.permute.xlu0 16
        %3437 = vperm.xlu0 %3436, %v3158
        %v3438 = vpop.permute.xlu0 %3437
        %3441 = vset.pattern.permute.xlu0 16
        %3442 = vperm.xlu0 %3441, %v3159
        %v3443 = vpop.permute.xlu0 %3442
        %3446 = vset.pattern.permute.xlu0 16
        %3447 = vperm.xlu0 %3446, %v3160
        %v3448 = vpop.permute.xlu0 %3447
        %3451 = vset.pattern.permute.xlu0 16
        %3452 = vperm.xlu0 %3451, %v3161
        %v3453 = vpop.permute.xlu0 %3452
        %3456 = vset.pattern.permute.xlu0 16
        %3457 = vperm.xlu0 %3456, %v3162
        %v3458 = vpop.permute.xlu0 %3457
        %3461 = vset.pattern.permute.xlu0 16
        %3462 = vperm.xlu0 %3461, %v3163
        %v3463 = vpop.permute.xlu0 %3462
        %3466 = vset.pattern.permute.xlu0 16
        %3467 = vperm.xlu0 %3466, %v3164
        %v3468 = vpop.permute.xlu0 %3467
        %3471 = vset.pattern.permute.xlu0 16
        %3472 = vperm.xlu0 %3471, %v3165
        %v3473 = vpop.permute.xlu0 %3472
        %3476 = vset.pattern.permute.xlu0 16
        %3477 = vperm.xlu0 %3476, %v3166
        %v3478 = vpop.permute.xlu0 %3477
        %3481 = vset.pattern.permute.xlu0 16
        %3482 = vperm.xlu0 %3481, %v3167
        %v3483 = vpop.permute.xlu0 %3482
        %3486 = vset.pattern.permute.xlu0 16
        %3487 = vperm.xlu0 %3486, %v3168
        %v3488 = vpop.permute.xlu0 %3487
        %3491 = vset.pattern.permute.xlu0 16
        %3492 = vperm.xlu0 %3491, %v3169
        %v3493 = vpop.permute.xlu0 %3492
        %3496 = vset.pattern.permute.xlu0 16
        %3497 = vperm.xlu0 %3496, %v3170
        %v3498 = vpop.permute.xlu0 %3497
        %3501 = vset.pattern.permute.xlu0 16
        %3502 = vperm.xlu0 %3501, %v3171
        %v3503 = vpop.permute.xlu0 %3502
        %3506 = vset.pattern.permute.xlu0 16
        %3507 = vperm.xlu0 %3506, %v3172
        %v3508 = vpop.permute.xlu0 %3507
        %3511 = vset.pattern.permute.xlu0 16
        %3512 = vperm.xlu0 %3511, %v3173
        %v3513 = vpop.permute.xlu0 %3512
        %3516 = vset.pattern.permute.xlu0 16
        %3517 = vperm.xlu0 %3516, %v3174
        %v3518 = vpop.permute.xlu0 %3517
        %3521 = vset.pattern.permute.xlu0 16
        %3522 = vperm.xlu0 %3521, %v3175
        %v3523 = vpop.permute.xlu0 %3522
        %3526 = vset.pattern.permute.xlu0 16
        %3527 = vperm.xlu0 %3526, %v3176
        %v3528 = vpop.permute.xlu0 %3527
        %3531 = vset.pattern.permute.xlu0 16
        %3532 = vperm.xlu0 %3531, %v3177
        %v3533 = vpop.permute.xlu0 %3532
        %3536 = vset.pattern.permute.xlu0 16
        %3537 = vperm.xlu0 %3536, %v3178
        %v3538 = vpop.permute.xlu0 %3537
        %3541 = vset.pattern.permute.xlu0 16
        %3542 = vperm.xlu0 %3541, %v3179
        %v3543 = vpop.permute.xlu0 %3542
        %3546 = vset.pattern.permute.xlu0 16
        %3547 = vperm.xlu0 %3546, %v3180
        %v3548 = vpop.permute.xlu0 %3547
        %3551 = vset.pattern.permute.xlu0 16
        %3552 = vperm.xlu0 %3551, %v3181
        %v3553 = vpop.permute.xlu0 %3552
        %3556 = vset.pattern.permute.xlu0 16
        %3557 = vperm.xlu0 %3556, %v3182
        %v3558 = vpop.permute.xlu0 %3557
        %3561 = vset.pattern.permute.xlu0 16
        %3562 = vperm.xlu0 %3561, %v3183
        %v3563 = vpop.permute.xlu0 %3562
        %3566 = vset.pattern.permute.xlu0 16
        %3567 = vperm.xlu0 %3566, %v3184
        %v3568 = vpop.permute.xlu0 %3567
        %3571 = vset.pattern.permute.xlu0 16
        %3572 = vperm.xlu0 %3571, %v3185
        %v3573 = vpop.permute.xlu0 %3572
        %3576 = vset.pattern.permute.xlu0 16
        %3577 = vperm.xlu0 %3576, %v3186
        %v3578 = vpop.permute.xlu0 %3577
        %3581 = vset.pattern.permute.xlu0 16
        %3582 = vperm.xlu0 %3581, %v3187
        %v3583 = vpop.permute.xlu0 %3582
        %3586 = vset.pattern.permute.xlu0 16
        %3587 = vperm.xlu0 %3586, %v3188
        %v3588 = vpop.permute.xlu0 %3587
        %3591 = vset.pattern.permute.xlu0 16
        %3592 = vperm.xlu0 %3591, %v3189
        %v3593 = vpop.permute.xlu0 %3592
        %3596 = vset.pattern.permute.xlu0 16
        %3597 = vperm.xlu0 %3596, %v3190
        %v3598 = vpop.permute.xlu0 %3597
        %3601 = vset.pattern.permute.xlu0 16
        %3602 = vperm.xlu0 %3601, %v3191
        %v3603 = vpop.permute.xlu0 %3602
        %3606 = vset.pattern.permute.xlu0 16
        %3607 = vperm.xlu0 %3606, %v3192
        %v3608 = vpop.permute.xlu0 %3607
        %3611 = vset.pattern.permute.xlu0 16
        %3612 = vperm.xlu0 %3611, %v3193
        %v3613 = vpop.permute.xlu0 %3612
        %3616 = vset.pattern.permute.xlu0 16
        %3617 = vperm.xlu0 %3616, %v3194
        %v3618 = vpop.permute.xlu0 %3617
        %3621 = vset.pattern.permute.xlu0 16
        %3622 = vperm.xlu0 %3621, %v3195
        %v3623 = vpop.permute.xlu0 %3622
        %3626 = vset.pattern.permute.xlu0 16
        %3627 = vperm.xlu0 %3626, %v3196
        %v3628 = vpop.permute.xlu0 %3627
        %3631 = vset.pattern.permute.xlu0 16
        %3632 = vperm.xlu0 %3631, %v3197
        %v3633 = vpop.permute.xlu0 %3632
        %3636 = vset.pattern.permute.xlu0 16
        %3637 = vperm.xlu0 %3636, %v3198
        %v3638 = vpop.permute.xlu0 %3637
        %3641 = vset.pattern.permute.xlu0 16
        %3642 = vperm.xlu0 %3641, %v3199
        %v3643 = vpop.permute.xlu0 %3642
        %3646 = vset.pattern.permute.xlu0 16
        %3647 = vperm.xlu0 %3646, %v3200
        %v3648 = vpop.permute.xlu0 %3647
        %3651 = vset.pattern.permute.xlu0 16
        %3652 = vperm.xlu0 %3651, %v3201
        %v3653 = vpop.permute.xlu0 %3652
        %3656 = vset.pattern.permute.xlu0 16
        %3657 = vperm.xlu0 %3656, %v3202
        %v3658 = vpop.permute.xlu0 %3657
        %3661 = vset.pattern.permute.xlu0 16
        %3662 = vperm.xlu0 %3661, %v3203
        %v3663 = vpop.permute.xlu0 %3662
        %3666 = vset.pattern.permute.xlu0 16
        %3667 = vperm.xlu0 %3666, %v3204
        %v3668 = vpop.permute.xlu0 %3667
        %3671 = vset.pattern.permute.xlu0 16
        %3672 = vperm.xlu0 %3671, %v3205
        %v3673 = vpop.permute.xlu0 %3672
        %3676 = vset.pattern.permute.xlu0 16
        %3677 = vperm.xlu0 %3676, %v3206
        %v3678 = vpop.permute.xlu0 %3677
        %3681 = vset.pattern.permute.xlu0 16
        %3682 = vperm.xlu0 %3681, %v3207
        %v3683 = vpop.permute.xlu0 %3682
        %3686 = vset.pattern.permute.xlu0 16
        %3687 = vperm.xlu0 %3686, %v3208
        %v3688 = vpop.permute.xlu0 %3687
        %v3690 = vlaneseq
        %v3691 = vshrl.u32 %v3690, 7
        %v3692 = vsub.s32 0, %v3691
        %v3693 = vrot.slane %v3209, %v3692
        %v3694 = vmul.f32 %v3213, %v3693
        %v3695 = vmul.f32 %v3218, %v3693
        %v3696 = vmul.f32 %v3223, %v3693
        %v3697 = vmul.f32 %v3228, %v3693
        %v3698 = vmul.f32 %v3233, %v3693
        %v3699 = vmul.f32 %v3238, %v3693
        %v3700 = vmul.f32 %v3243, %v3693
        %v3701 = vmul.f32 %v3248, %v3693
        %v3702 = vmul.f32 %v3253, %v3693
        %v3703 = vmul.f32 %v3258, %v3693
        %v3704 = vmul.f32 %v3263, %v3693
        %v3705 = vmul.f32 %v3268, %v3693
        %v3706 = vmul.f32 %v3273, %v3693
        %v3707 = vmul.f32 %v3278, %v3693
        %v3708 = vmul.f32 %v3283, %v3693
        %v3709 = vmul.f32 %v3288, %v3693
        %v3710 = vmul.f32 %v3293, %v3693
        %v3711 = vmul.f32 %v3298, %v3693
        %v3712 = vmul.f32 %v3303, %v3693
        %v3713 = vmul.f32 %v3308, %v3693
        %v3714 = vmul.f32 %v3313, %v3693
        %v3715 = vmul.f32 %v3318, %v3693
        %v3716 = vmul.f32 %v3323, %v3693
        %v3717 = vmul.f32 %v3328, %v3693
        %v3718 = vmul.f32 %v3333, %v3693
        %v3719 = vmul.f32 %v3338, %v3693
        %v3720 = vmul.f32 %v3343, %v3693
        %v3721 = vmul.f32 %v3348, %v3693
        %v3722 = vmul.f32 %v3353, %v3693
        %v3723 = vmul.f32 %v3358, %v3693
        %v3724 = vmul.f32 %v3363, %v3693
        %v3725 = vmul.f32 %v3368, %v3693
        %v3726 = vmul.f32 %v3373, %v3693
        %v3727 = vmul.f32 %v3378, %v3693
        %v3728 = vmul.f32 %v3383, %v3693
        %v3729 = vmul.f32 %v3388, %v3693
        %v3730 = vmul.f32 %v3393, %v3693
        %v3731 = vmul.f32 %v3398, %v3693
        %v3732 = vmul.f32 %v3403, %v3693
        %v3733 = vmul.f32 %v3408, %v3693
        %v3734 = vmul.f32 %v3413, %v3693
        %v3735 = vmul.f32 %v3418, %v3693
        %v3736 = vmul.f32 %v3423, %v3693
        %v3737 = vmul.f32 %v3428, %v3693
        %v3738 = vmul.f32 %v3433, %v3693
        %v3739 = vmul.f32 %v3438, %v3693
        %v3740 = vmul.f32 %v3443, %v3693
        %v3741 = vmul.f32 %v3448, %v3693
        %v3742 = vmul.f32 %v3453, %v3693
        %v3743 = vmul.f32 %v3458, %v3693
        %v3744 = vmul.f32 %v3463, %v3693
        %v3745 = vmul.f32 %v3468, %v3693
        %v3746 = vmul.f32 %v3473, %v3693
        %v3747 = vmul.f32 %v3478, %v3693
        %v3748 = vmul.f32 %v3483, %v3693
        %v3749 = vmul.f32 %v3488, %v3693
        %v3750 = vmul.f32 %v3493, %v3693
        %v3751 = vmul.f32 %v3498, %v3693
        %v3752 = vmul.f32 %v3503, %v3693
        %v3753 = vmul.f32 %v3508, %v3693
        %v3754 = vmul.f32 %v3513, %v3693
        %v3755 = vmul.f32 %v3518, %v3693
        %v3756 = vmul.f32 %v3523, %v3693
        %v3757 = vmul.f32 %v3528, %v3693
        %v3758 = vmul.f32 %v3533, %v3693
        %v3759 = vmul.f32 %v3538, %v3693
        %v3760 = vmul.f32 %v3543, %v3693
        %v3761 = vmul.f32 %v3548, %v3693
        %v3762 = vmul.f32 %v3553, %v3693
        %v3763 = vmul.f32 %v3558, %v3693
        %v3764 = vmul.f32 %v3563, %v3693
        %v3765 = vmul.f32 %v3568, %v3693
        %v3766 = vmul.f32 %v3573, %v3693
        %v3767 = vmul.f32 %v3578, %v3693
        %v3768 = vmul.f32 %v3583, %v3693
        %v3769 = vmul.f32 %v3588, %v3693
        %v3770 = vmul.f32 %v3593, %v3693
        %v3771 = vmul.f32 %v3598, %v3693
        %v3772 = vmul.f32 %v3603, %v3693
        %v3773 = vmul.f32 %v3608, %v3693
        %v3774 = vmul.f32 %v3613, %v3693
        %v3775 = vmul.f32 %v3618, %v3693
        %v3776 = vmul.f32 %v3623, %v3693
        %v3777 = vmul.f32 %v3628, %v3693
        %v3778 = vmul.f32 %v3633, %v3693
        %v3779 = vmul.f32 %v3638, %v3693
        %v3780 = vmul.f32 %v3643, %v3693
        %v3781 = vmul.f32 %v3648, %v3693
        %v3782 = vmul.f32 %v3653, %v3693
        %v3783 = vmul.f32 %v3658, %v3693
        %v3784 = vmul.f32 %v3663, %v3693
        %v3785 = vmul.f32 %v3668, %v3693
        %v3786 = vmul.f32 %v3673, %v3693
        %v3787 = vmul.f32 %v3678, %v3693
        %v3788 = vmul.f32 %v3683, %v3693
        %v3789 = vmul.f32 %v3688, %v3693
        %v3790 = vld [vmem:[%s8 + $0x1] sm:$0x1]
        %3791 = vset.pattern.permute.xlu0 17
        %3792 = vperm.xlu0 %3791, %v3113
        %v3793 = vpop.permute.xlu0 %3792
        %3795 = vset.pattern.permute.xlu0 17
        %3796 = vperm.xlu0 %3795, %v3114
        %v3797 = vpop.permute.xlu0 %3796
        %3799 = vset.pattern.permute.xlu0 17
        %3800 = vperm.xlu0 %3799, %v3115
        %v3801 = vpop.permute.xlu0 %3800
        %3803 = vset.pattern.permute.xlu0 17
        %3804 = vperm.xlu0 %3803, %v3116
        %v3805 = vpop.permute.xlu0 %3804
        %3807 = vset.pattern.permute.xlu0 17
        %3808 = vperm.xlu0 %3807, %v3117
        %v3809 = vpop.permute.xlu0 %3808
        %3811 = vset.pattern.permute.xlu0 17
        %3812 = vperm.xlu0 %3811, %v3118
        %v3813 = vpop.permute.xlu0 %3812
        %3815 = vset.pattern.permute.xlu0 17
        %3816 = vperm.xlu0 %3815, %v3119
        %v3817 = vpop.permute.xlu0 %3816
        %3819 = vset.pattern.permute.xlu0 17
        %3820 = vperm.xlu0 %3819, %v3120
        %v3821 = vpop.permute.xlu0 %3820
        %3823 = vset.pattern.permute.xlu0 17
        %3824 = vperm.xlu0 %3823, %v3121
        %v3825 = vpop.permute.xlu0 %3824
        %3827 = vset.pattern.permute.xlu0 17
        %3828 = vperm.xlu0 %3827, %v3122
        %v3829 = vpop.permute.xlu0 %3828
        %3831 = vset.pattern.permute.xlu0 17
        %3832 = vperm.xlu0 %3831, %v3123
        %v3833 = vpop.permute.xlu0 %3832
        %3835 = vset.pattern.permute.xlu0 17
        %3836 = vperm.xlu0 %3835, %v3124
        %v3837 = vpop.permute.xlu0 %3836
        %3839 = vset.pattern.permute.xlu0 17
        %3840 = vperm.xlu0 %3839, %v3125
        %v3841 = vpop.permute.xlu0 %3840
        %3843 = vset.pattern.permute.xlu0 17
        %3844 = vperm.xlu0 %3843, %v3126
        %v3845 = vpop.permute.xlu0 %3844
        %3847 = vset.pattern.permute.xlu0 17
        %3848 = vperm.xlu0 %3847, %v3127
        %v3849 = vpop.permute.xlu0 %3848
        %3851 = vset.pattern.permute.xlu0 17
        %3852 = vperm.xlu0 %3851, %v3128
        %v3853 = vpop.permute.xlu0 %3852
        %3855 = vset.pattern.permute.xlu0 17
        %3856 = vperm.xlu0 %3855, %v3129
        %v3857 = vpop.permute.xlu0 %3856
        %3859 = vset.pattern.permute.xlu0 17
        %3860 = vperm.xlu0 %3859, %v3130
        %v3861 = vpop.permute.xlu0 %3860
        %3863 = vset.pattern.permute.xlu0 17
        %3864 = vperm.xlu0 %3863, %v3131
        %v3865 = vpop.permute.xlu0 %3864
        %3867 = vset.pattern.permute.xlu0 17
        %3868 = vperm.xlu0 %3867, %v3132
        %v3869 = vpop.permute.xlu0 %3868
        %3871 = vset.pattern.permute.xlu0 17
        %3872 = vperm.xlu0 %3871, %v3133
        %v3873 = vpop.permute.xlu0 %3872
        %3875 = vset.pattern.permute.xlu0 17
        %3876 = vperm.xlu0 %3875, %v3134
        %v3877 = vpop.permute.xlu0 %3876
        %3879 = vset.pattern.permute.xlu0 17
        %3880 = vperm.xlu0 %3879, %v3135
        %v3881 = vpop.permute.xlu0 %3880
        %3883 = vset.pattern.permute.xlu0 17
        %3884 = vperm.xlu0 %3883, %v3136
        %v3885 = vpop.permute.xlu0 %3884
        %3887 = vset.pattern.permute.xlu0 17
        %3888 = vperm.xlu0 %3887, %v3137
        %v3889 = vpop.permute.xlu0 %3888
        %3891 = vset.pattern.permute.xlu0 17
        %3892 = vperm.xlu0 %3891, %v3138
        %v3893 = vpop.permute.xlu0 %3892
        %3895 = vset.pattern.permute.xlu0 17
        %3896 = vperm.xlu0 %3895, %v3139
        %v3897 = vpop.permute.xlu0 %3896
        %3899 = vset.pattern.permute.xlu0 17
        %3900 = vperm.xlu0 %3899, %v3140
        %v3901 = vpop.permute.xlu0 %3900
        %3903 = vset.pattern.permute.xlu0 17
        %3904 = vperm.xlu0 %3903, %v3141
        %v3905 = vpop.permute.xlu0 %3904
        %3907 = vset.pattern.permute.xlu0 17
        %3908 = vperm.xlu0 %3907, %v3142
        %v3909 = vpop.permute.xlu0 %3908
        %3911 = vset.pattern.permute.xlu0 17
        %3912 = vperm.xlu0 %3911, %v3143
        %v3913 = vpop.permute.xlu0 %3912
        %3915 = vset.pattern.permute.xlu0 17
        %3916 = vperm.xlu0 %3915, %v3144
        %v3917 = vpop.permute.xlu0 %3916
        %3919 = vset.pattern.permute.xlu0 17
        %3920 = vperm.xlu0 %3919, %v3145
        %v3921 = vpop.permute.xlu0 %3920
        %3923 = vset.pattern.permute.xlu0 17
        %3924 = vperm.xlu0 %3923, %v3146
        %v3925 = vpop.permute.xlu0 %3924
        %3927 = vset.pattern.permute.xlu0 17
        %3928 = vperm.xlu0 %3927, %v3147
        %v3929 = vpop.permute.xlu0 %3928
        %3931 = vset.pattern.permute.xlu0 17
        %3932 = vperm.xlu0 %3931, %v3148
        %v3933 = vpop.permute.xlu0 %3932
        %3935 = vset.pattern.permute.xlu0 17
        %3936 = vperm.xlu0 %3935, %v3149
        %v3937 = vpop.permute.xlu0 %3936
        %3939 = vset.pattern.permute.xlu0 17
        %3940 = vperm.xlu0 %3939, %v3150
        %v3941 = vpop.permute.xlu0 %3940
        %3943 = vset.pattern.permute.xlu0 17
        %3944 = vperm.xlu0 %3943, %v3151
        %v3945 = vpop.permute.xlu0 %3944
        %3947 = vset.pattern.permute.xlu0 17
        %3948 = vperm.xlu0 %3947, %v3152
        %v3949 = vpop.permute.xlu0 %3948
        %3951 = vset.pattern.permute.xlu0 17
        %3952 = vperm.xlu0 %3951, %v3153
        %v3953 = vpop.permute.xlu0 %3952
        %3955 = vset.pattern.permute.xlu0 17
        %3956 = vperm.xlu0 %3955, %v3154
        %v3957 = vpop.permute.xlu0 %3956
        %3959 = vset.pattern.permute.xlu0 17
        %3960 = vperm.xlu0 %3959, %v3155
        %v3961 = vpop.permute.xlu0 %3960
        %3963 = vset.pattern.permute.xlu0 17
        %3964 = vperm.xlu0 %3963, %v3156
        %v3965 = vpop.permute.xlu0 %3964
        %3967 = vset.pattern.permute.xlu0 17
        %3968 = vperm.xlu0 %3967, %v3157
        %v3969 = vpop.permute.xlu0 %3968
        %3971 = vset.pattern.permute.xlu0 17
        %3972 = vperm.xlu0 %3971, %v3158
        %v3973 = vpop.permute.xlu0 %3972
        %3975 = vset.pattern.permute.xlu0 17
        %3976 = vperm.xlu0 %3975, %v3159
        %v3977 = vpop.permute.xlu0 %3976
        %3979 = vset.pattern.permute.xlu0 17
        %3980 = vperm.xlu0 %3979, %v3160
        %v3981 = vpop.permute.xlu0 %3980
        %3983 = vset.pattern.permute.xlu0 17
        %3984 = vperm.xlu0 %3983, %v3161
        %v3985 = vpop.permute.xlu0 %3984
        %3987 = vset.pattern.permute.xlu0 17
        %3988 = vperm.xlu0 %3987, %v3162
        %v3989 = vpop.permute.xlu0 %3988
        %3991 = vset.pattern.permute.xlu0 17
        %3992 = vperm.xlu0 %3991, %v3163
        %v3993 = vpop.permute.xlu0 %3992
        %3995 = vset.pattern.permute.xlu0 17
        %3996 = vperm.xlu0 %3995, %v3164
        %v3997 = vpop.permute.xlu0 %3996
        %3999 = vset.pattern.permute.xlu0 17
        %4000 = vperm.xlu0 %3999, %v3165
        %v4001 = vpop.permute.xlu0 %4000
        %4003 = vset.pattern.permute.xlu0 17
        %4004 = vperm.xlu0 %4003, %v3166
        %v4005 = vpop.permute.xlu0 %4004
        %4007 = vset.pattern.permute.xlu0 17
        %4008 = vperm.xlu0 %4007, %v3167
        %v4009 = vpop.permute.xlu0 %4008
        %4011 = vset.pattern.permute.xlu0 17
        %4012 = vperm.xlu0 %4011, %v3168
        %v4013 = vpop.permute.xlu0 %4012
        %4015 = vset.pattern.permute.xlu0 17
        %4016 = vperm.xlu0 %4015, %v3169
        %v4017 = vpop.permute.xlu0 %4016
        %4019 = vset.pattern.permute.xlu0 17
        %4020 = vperm.xlu0 %4019, %v3170
        %v4021 = vpop.permute.xlu0 %4020
        %4023 = vset.pattern.permute.xlu0 17
        %4024 = vperm.xlu0 %4023, %v3171
        %v4025 = vpop.permute.xlu0 %4024
        %4027 = vset.pattern.permute.xlu0 17
        %4028 = vperm.xlu0 %4027, %v3172
        %v4029 = vpop.permute.xlu0 %4028
        %4031 = vset.pattern.permute.xlu0 17
        %4032 = vperm.xlu0 %4031, %v3173
        %v4033 = vpop.permute.xlu0 %4032
        %4035 = vset.pattern.permute.xlu0 17
        %4036 = vperm.xlu0 %4035, %v3174
        %v4037 = vpop.permute.xlu0 %4036
        %4039 = vset.pattern.permute.xlu0 17
        %4040 = vperm.xlu0 %4039, %v3175
        %v4041 = vpop.permute.xlu0 %4040
        %4043 = vset.pattern.permute.xlu0 17
        %4044 = vperm.xlu0 %4043, %v3176
        %v4045 = vpop.permute.xlu0 %4044
        %4047 = vset.pattern.permute.xlu0 17
        %4048 = vperm.xlu0 %4047, %v3177
        %v4049 = vpop.permute.xlu0 %4048
        %4051 = vset.pattern.permute.xlu0 17
        %4052 = vperm.xlu0 %4051, %v3178
        %v4053 = vpop.permute.xlu0 %4052
        %4055 = vset.pattern.permute.xlu0 17
        %4056 = vperm.xlu0 %4055, %v3179
        %v4057 = vpop.permute.xlu0 %4056
        %4059 = vset.pattern.permute.xlu0 17
        %4060 = vperm.xlu0 %4059, %v3180
        %v4061 = vpop.permute.xlu0 %4060
        %4063 = vset.pattern.permute.xlu0 17
        %4064 = vperm.xlu0 %4063, %v3181
        %v4065 = vpop.permute.xlu0 %4064
        %4067 = vset.pattern.permute.xlu0 17
        %4068 = vperm.xlu0 %4067, %v3182
        %v4069 = vpop.permute.xlu0 %4068
        %4071 = vset.pattern.permute.xlu0 17
        %4072 = vperm.xlu0 %4071, %v3183
        %v4073 = vpop.permute.xlu0 %4072
        %4075 = vset.pattern.permute.xlu0 17
        %4076 = vperm.xlu0 %4075, %v3184
        %v4077 = vpop.permute.xlu0 %4076
        %4079 = vset.pattern.permute.xlu0 17
        %4080 = vperm.xlu0 %4079, %v3185
        %v4081 = vpop.permute.xlu0 %4080
        %4083 = vset.pattern.permute.xlu0 17
        %4084 = vperm.xlu0 %4083, %v3186
        %v4085 = vpop.permute.xlu0 %4084
        %4087 = vset.pattern.permute.xlu0 17
        %4088 = vperm.xlu0 %4087, %v3187
        %v4089 = vpop.permute.xlu0 %4088
        %4091 = vset.pattern.permute.xlu0 17
        %4092 = vperm.xlu0 %4091, %v3188
        %v4093 = vpop.permute.xlu0 %4092
        %4095 = vset.pattern.permute.xlu0 17
        %4096 = vperm.xlu0 %4095, %v3189
        %v4097 = vpop.permute.xlu0 %4096
        %4099 = vset.pattern.permute.xlu0 17
        %4100 = vperm.xlu0 %4099, %v3190
        %v4101 = vpop.permute.xlu0 %4100
        %4103 = vset.pattern.permute.xlu0 17
        %4104 = vperm.xlu0 %4103, %v3191
        %v4105 = vpop.permute.xlu0 %4104
        %4107 = vset.pattern.permute.xlu0 17
        %4108 = vperm.xlu0 %4107, %v3192
        %v4109 = vpop.permute.xlu0 %4108
        %4111 = vset.pattern.permute.xlu0 17
        %4112 = vperm.xlu0 %4111, %v3193
        %v4113 = vpop.permute.xlu0 %4112
        %4115 = vset.pattern.permute.xlu0 17
        %4116 = vperm.xlu0 %4115, %v3194
        %v4117 = vpop.permute.xlu0 %4116
        %4119 = vset.pattern.permute.xlu0 17
        %4120 = vperm.xlu0 %4119, %v3195
        %v4121 = vpop.permute.xlu0 %4120
        %4123 = vset.pattern.permute.xlu0 17
        %4124 = vperm.xlu0 %4123, %v3196
        %v4125 = vpop.permute.xlu0 %4124
        %4127 = vset.pattern.permute.xlu0 17
        %4128 = vperm.xlu0 %4127, %v3197
        %v4129 = vpop.permute.xlu0 %4128
        %4131 = vset.pattern.permute.xlu0 17
        %4132 = vperm.xlu0 %4131, %v3198
        %v4133 = vpop.permute.xlu0 %4132
        %4135 = vset.pattern.permute.xlu0 17
        %4136 = vperm.xlu0 %4135, %v3199
        %v4137 = vpop.permute.xlu0 %4136
        %4139 = vset.pattern.permute.xlu0 17
        %4140 = vperm.xlu0 %4139, %v3200
        %v4141 = vpop.permute.xlu0 %4140
        %4143 = vset.pattern.permute.xlu0 17
        %4144 = vperm.xlu0 %4143, %v3201
        %v4145 = vpop.permute.xlu0 %4144
        %4147 = vset.pattern.permute.xlu0 17
        %4148 = vperm.xlu0 %4147, %v3202
        %v4149 = vpop.permute.xlu0 %4148
        %4151 = vset.pattern.permute.xlu0 17
        %4152 = vperm.xlu0 %4151, %v3203
        %v4153 = vpop.permute.xlu0 %4152
        %4155 = vset.pattern.permute.xlu0 17
        %4156 = vperm.xlu0 %4155, %v3204
        %v4157 = vpop.permute.xlu0 %4156
        %4159 = vset.pattern.permute.xlu0 17
        %4160 = vperm.xlu0 %4159, %v3205
        %v4161 = vpop.permute.xlu0 %4160
        %4163 = vset.pattern.permute.xlu0 17
        %4164 = vperm.xlu0 %4163, %v3206
        %v4165 = vpop.permute.xlu0 %4164
        %4167 = vset.pattern.permute.xlu0 17
        %4168 = vperm.xlu0 %4167, %v3207
        %v4169 = vpop.permute.xlu0 %4168
        %4171 = vset.pattern.permute.xlu0 17
        %4172 = vperm.xlu0 %4171, %v3208
        %v4173 = vpop.permute.xlu0 %4172
        %v4175 = vlaneseq
        %v4176 = vshrl.u32 %v4175, 7
        %v4177 = vsub.s32 0, %v4176
        %v4178 = vrot.slane %v3790, %v4177
        %v4179 = vmul.f32 %v3793, %v4178
        %v4180 = vmul.f32 %v3797, %v4178
        %v4181 = vmul.f32 %v3801, %v4178
        %v4182 = vmul.f32 %v3805, %v4178
        %v4183 = vmul.f32 %v3809, %v4178
        %v4184 = vmul.f32 %v3813, %v4178
        %v4185 = vmul.f32 %v3817, %v4178
        %v4186 = vmul.f32 %v3821, %v4178
        %v4187 = vmul.f32 %v3825, %v4178
        %v4188 = vmul.f32 %v3829, %v4178
        %v4189 = vmul.f32 %v3833, %v4178
        %v4190 = vmul.f32 %v3837, %v4178
        %v4191 = vmul.f32 %v3841, %v4178
        %v4192 = vmul.f32 %v3845, %v4178
        %v4193 = vmul.f32 %v3849, %v4178
        %v4194 = vmul.f32 %v3853, %v4178
        %v4195 = vmul.f32 %v3857, %v4178
        %v4196 = vmul.f32 %v3861, %v4178
        %v4197 = vmul.f32 %v3865, %v4178
        %v4198 = vmul.f32 %v3869, %v4178
        %v4199 = vmul.f32 %v3873, %v4178
        %v4200 = vmul.f32 %v3877, %v4178
        %v4201 = vmul.f32 %v3881, %v4178
        %v4202 = vmul.f32 %v3885, %v4178
        %v4203 = vmul.f32 %v3889, %v4178
        %v4204 = vmul.f32 %v3893, %v4178
        %v4205 = vmul.f32 %v3897, %v4178
        %v4206 = vmul.f32 %v3901, %v4178
        %v4207 = vmul.f32 %v3905, %v4178
        %v4208 = vmul.f32 %v3909, %v4178
        %v4209 = vmul.f32 %v3913, %v4178
        %v4210 = vmul.f32 %v3917, %v4178
        %v4211 = vmul.f32 %v3921, %v4178
        %v4212 = vmul.f32 %v3925, %v4178
        %v4213 = vmul.f32 %v3929, %v4178
        %v4214 = vmul.f32 %v3933, %v4178
        %v4215 = vmul.f32 %v3937, %v4178
        %v4216 = vmul.f32 %v3941, %v4178
        %v4217 = vmul.f32 %v3945, %v4178
        %v4218 = vmul.f32 %v3949, %v4178
        %v4219 = vmul.f32 %v3953, %v4178
        %v4220 = vmul.f32 %v3957, %v4178
        %v4221 = vmul.f32 %v3961, %v4178
        %v4222 = vmul.f32 %v3965, %v4178
        %v4223 = vmul.f32 %v3969, %v4178
        %v4224 = vmul.f32 %v3973, %v4178
        %v4225 = vmul.f32 %v3977, %v4178
        %v4226 = vmul.f32 %v3981, %v4178
        %v4227 = vmul.f32 %v3985, %v4178
        %v4228 = vmul.f32 %v3989, %v4178
        %v4229 = vmul.f32 %v3993, %v4178
        %v4230 = vmul.f32 %v3997, %v4178
        %v4231 = vmul.f32 %v4001, %v4178
        %v4232 = vmul.f32 %v4005, %v4178
        %v4233 = vmul.f32 %v4009, %v4178
        %v4234 = vmul.f32 %v4013, %v4178
        %v4235 = vmul.f32 %v4017, %v4178
        %v4236 = vmul.f32 %v4021, %v4178
        %v4237 = vmul.f32 %v4025, %v4178
        %v4238 = vmul.f32 %v4029, %v4178
        %v4239 = vmul.f32 %v4033, %v4178
        %v4240 = vmul.f32 %v4037, %v4178
        %v4241 = vmul.f32 %v4041, %v4178
        %v4242 = vmul.f32 %v4045, %v4178
        %v4243 = vmul.f32 %v4049, %v4178
        %v4244 = vmul.f32 %v4053, %v4178
        %v4245 = vmul.f32 %v4057, %v4178
        %v4246 = vmul.f32 %v4061, %v4178
        %v4247 = vmul.f32 %v4065, %v4178
        %v4248 = vmul.f32 %v4069, %v4178
        %v4249 = vmul.f32 %v4073, %v4178
        %v4250 = vmul.f32 %v4077, %v4178
        %v4251 = vmul.f32 %v4081, %v4178
        %v4252 = vmul.f32 %v4085, %v4178
        %v4253 = vmul.f32 %v4089, %v4178
        %v4254 = vmul.f32 %v4093, %v4178
        %v4255 = vmul.f32 %v4097, %v4178
        %v4256 = vmul.f32 %v4101, %v4178
        %v4257 = vmul.f32 %v4105, %v4178
        %v4258 = vmul.f32 %v4109, %v4178
        %v4259 = vmul.f32 %v4113, %v4178
        %v4260 = vmul.f32 %v4117, %v4178
        %v4261 = vmul.f32 %v4121, %v4178
        %v4262 = vmul.f32 %v4125, %v4178
        %v4263 = vmul.f32 %v4129, %v4178
        %v4264 = vmul.f32 %v4133, %v4178
        %v4265 = vmul.f32 %v4137, %v4178
        %v4266 = vmul.f32 %v4141, %v4178
        %v4267 = vmul.f32 %v4145, %v4178
        %v4268 = vmul.f32 %v4149, %v4178
        %v4269 = vmul.f32 %v4153, %v4178
        %v4270 = vmul.f32 %v4157, %v4178
        %v4271 = vmul.f32 %v4161, %v4178
        %v4272 = vmul.f32 %v4165, %v4178
        %v4273 = vmul.f32 %v4169, %v4178
        %v4274 = vmul.f32 %v4173, %v4178
        %v4275 = vadd.f32 %v3694, %v4179
        %v4276 = vadd.f32 %v3695, %v4180
        %v4277 = vadd.f32 %v3696, %v4181
        %v4278 = vadd.f32 %v3697, %v4182
        %v4279 = vadd.f32 %v3698, %v4183
        %v4280 = vadd.f32 %v3699, %v4184
        %v4281 = vadd.f32 %v3700, %v4185
        %v4282 = vadd.f32 %v3701, %v4186
        %v4283 = vadd.f32 %v3702, %v4187
        %v4284 = vadd.f32 %v3703, %v4188
        %v4285 = vadd.f32 %v3704, %v4189
        %v4286 = vadd.f32 %v3705, %v4190
        %v4287 = vadd.f32 %v3706, %v4191
        %v4288 = vadd.f32 %v3707, %v4192
        %v4289 = vadd.f32 %v3708, %v4193
        %v4290 = vadd.f32 %v3709, %v4194
        %v4291 = vadd.f32 %v3710, %v4195
        %v4292 = vadd.f32 %v3711, %v4196
        %v4293 = vadd.f32 %v3712, %v4197
        %v4294 = vadd.f32 %v3713, %v4198
        %v4295 = vadd.f32 %v3714, %v4199
        %v4296 = vadd.f32 %v3715, %v4200
        %v4297 = vadd.f32 %v3716, %v4201
        %v4298 = vadd.f32 %v3717, %v4202
        %v4299 = vadd.f32 %v3718, %v4203
        %v4300 = vadd.f32 %v3719, %v4204
        %v4301 = vadd.f32 %v3720, %v4205
        %v4302 = vadd.f32 %v3721, %v4206
        %v4303 = vadd.f32 %v3722, %v4207
        %v4304 = vadd.f32 %v3723, %v4208
        %v4305 = vadd.f32 %v3724, %v4209
        %v4306 = vadd.f32 %v3725, %v4210
        %v4307 = vadd.f32 %v3726, %v4211
        %v4308 = vadd.f32 %v3727, %v4212
        %v4309 = vadd.f32 %v3728, %v4213
        %v4310 = vadd.f32 %v3729, %v4214
        %v4311 = vadd.f32 %v3730, %v4215
        %v4312 = vadd.f32 %v3731, %v4216
        %v4313 = vadd.f32 %v3732, %v4217
        %v4314 = vadd.f32 %v3733, %v4218
        %v4315 = vadd.f32 %v3734, %v4219
        %v4316 = vadd.f32 %v3735, %v4220
        %v4317 = vadd.f32 %v3736, %v4221
        %v4318 = vadd.f32 %v3737, %v4222
        %v4319 = vadd.f32 %v3738, %v4223
        %v4320 = vadd.f32 %v3739, %v4224
        %v4321 = vadd.f32 %v3740, %v4225
        %v4322 = vadd.f32 %v3741, %v4226
        %v4323 = vadd.f32 %v3742, %v4227
        %v4324 = vadd.f32 %v3743, %v4228
        %v4325 = vadd.f32 %v3744, %v4229
        %v4326 = vadd.f32 %v3745, %v4230
        %v4327 = vadd.f32 %v3746, %v4231
        %v4328 = vadd.f32 %v3747, %v4232
        %v4329 = vadd.f32 %v3748, %v4233
        %v4330 = vadd.f32 %v3749, %v4234
        %v4331 = vadd.f32 %v3750, %v4235
        %v4332 = vadd.f32 %v3751, %v4236
        %v4333 = vadd.f32 %v3752, %v4237
        %v4334 = vadd.f32 %v3753, %v4238
        %v4335 = vadd.f32 %v3754, %v4239
        %v4336 = vadd.f32 %v3755, %v4240
        %v4337 = vadd.f32 %v3756, %v4241
        %v4338 = vadd.f32 %v3757, %v4242
        %v4339 = vadd.f32 %v3758, %v4243
        %v4340 = vadd.f32 %v3759, %v4244
        %v4341 = vadd.f32 %v3760, %v4245
        %v4342 = vadd.f32 %v3761, %v4246
        %v4343 = vadd.f32 %v3762, %v4247
        %v4344 = vadd.f32 %v3763, %v4248
        %v4345 = vadd.f32 %v3764, %v4249
        %v4346 = vadd.f32 %v3765, %v4250
        %v4347 = vadd.f32 %v3766, %v4251
        %v4348 = vadd.f32 %v3767, %v4252
        %v4349 = vadd.f32 %v3768, %v4253
        %v4350 = vadd.f32 %v3769, %v4254
        %v4351 = vadd.f32 %v3770, %v4255
        %v4352 = vadd.f32 %v3771, %v4256
        %v4353 = vadd.f32 %v3772, %v4257
        %v4354 = vadd.f32 %v3773, %v4258
        %v4355 = vadd.f32 %v3774, %v4259
        %v4356 = vadd.f32 %v3775, %v4260
        %v4357 = vadd.f32 %v3776, %v4261
        %v4358 = vadd.f32 %v3777, %v4262
        %v4359 = vadd.f32 %v3778, %v4263
        %v4360 = vadd.f32 %v3779, %v4264
        %v4361 = vadd.f32 %v3780, %v4265
        %v4362 = vadd.f32 %v3781, %v4266
        %v4363 = vadd.f32 %v3782, %v4267
        %v4364 = vadd.f32 %v3783, %v4268
        %v4365 = vadd.f32 %v3784, %v4269
        %v4366 = vadd.f32 %v3785, %v4270
        %v4367 = vadd.f32 %v3786, %v4271
        %v4368 = vadd.f32 %v3787, %v4272
        %v4369 = vadd.f32 %v3788, %v4273
        %v4370 = vadd.f32 %v3789, %v4274
        %v4371 = vmax.f32 %v4275, 0.0
        %v4372 = vmax.f32 %v4276, 0.0
        %v4373 = vmax.f32 %v4277, 0.0
        %v4374 = vmax.f32 %v4278, 0.0
        %v4375 = vmax.f32 %v4279, 0.0
        %v4376 = vmax.f32 %v4280, 0.0
        %v4377 = vmax.f32 %v4281, 0.0
        %v4378 = vmax.f32 %v4282, 0.0
        %v4379 = vmax.f32 %v4283, 0.0
        %v4380 = vmax.f32 %v4284, 0.0
        %v4381 = vmax.f32 %v4285, 0.0
        %v4382 = vmax.f32 %v4286, 0.0
        %v4383 = vmax.f32 %v4287, 0.0
        %v4384 = vmax.f32 %v4288, 0.0
        %v4385 = vmax.f32 %v4289, 0.0
        %v4386 = vmax.f32 %v4290, 0.0
        %v4387 = vmax.f32 %v4291, 0.0
        %v4388 = vmax.f32 %v4292, 0.0
        %v4389 = vmax.f32 %v4293, 0.0
        %v4390 = vmax.f32 %v4294, 0.0
        %v4391 = vmax.f32 %v4295, 0.0
        %v4392 = vmax.f32 %v4296, 0.0
        %v4393 = vmax.f32 %v4297, 0.0
        %v4394 = vmax.f32 %v4298, 0.0
        %v4395 = vmax.f32 %v4299, 0.0
        %v4396 = vmax.f32 %v4300, 0.0
        %v4397 = vmax.f32 %v4301, 0.0
        %v4398 = vmax.f32 %v4302, 0.0
        %v4399 = vmax.f32 %v4303, 0.0
        %v4400 = vmax.f32 %v4304, 0.0
        %v4401 = vmax.f32 %v4305, 0.0
        %v4402 = vmax.f32 %v4306, 0.0
        %v4403 = vmax.f32 %v4307, 0.0
        %v4404 = vmax.f32 %v4308, 0.0
        %v4405 = vmax.f32 %v4309, 0.0
        %v4406 = vmax.f32 %v4310, 0.0
        %v4407 = vmax.f32 %v4311, 0.0
        %v4408 = vmax.f32 %v4312, 0.0
        %v4409 = vmax.f32 %v4313, 0.0
        %v4410 = vmax.f32 %v4314, 0.0
        %v4411 = vmax.f32 %v4315, 0.0
        %v4412 = vmax.f32 %v4316, 0.0
        %v4413 = vmax.f32 %v4317, 0.0
        %v4414 = vmax.f32 %v4318, 0.0
        %v4415 = vmax.f32 %v4319, 0.0
        %v4416 = vmax.f32 %v4320, 0.0
        %v4417 = vmax.f32 %v4321, 0.0
        %v4418 = vmax.f32 %v4322, 0.0
        %v4419 = vmax.f32 %v4323, 0.0
        %v4420 = vmax.f32 %v4324, 0.0
        %v4421 = vmax.f32 %v4325, 0.0
        %v4422 = vmax.f32 %v4326, 0.0
        %v4423 = vmax.f32 %v4327, 0.0
        %v4424 = vmax.f32 %v4328, 0.0
        %v4425 = vmax.f32 %v4329, 0.0
        %v4426 = vmax.f32 %v4330, 0.0
        %v4427 = vmax.f32 %v4331, 0.0
        %v4428 = vmax.f32 %v4332, 0.0
        %v4429 = vmax.f32 %v4333, 0.0
        %v4430 = vmax.f32 %v4334, 0.0
        %v4431 = vmax.f32 %v4335, 0.0
        %v4432 = vmax.f32 %v4336, 0.0
        %v4433 = vmax.f32 %v4337, 0.0
        %v4434 = vmax.f32 %v4338, 0.0
        %v4435 = vmax.f32 %v4339, 0.0
        %v4436 = vmax.f32 %v4340, 0.0
        %v4437 = vmax.f32 %v4341, 0.0
        %v4438 = vmax.f32 %v4342, 0.0
        %v4439 = vmax.f32 %v4343, 0.0
        %v4440 = vmax.f32 %v4344, 0.0
        %v4441 = vmax.f32 %v4345, 0.0
        %v4442 = vmax.f32 %v4346, 0.0
        %v4443 = vmax.f32 %v4347, 0.0
        %v4444 = vmax.f32 %v4348, 0.0
        %v4445 = vmax.f32 %v4349, 0.0
        %v4446 = vmax.f32 %v4350, 0.0
        %v4447 = vmax.f32 %v4351, 0.0
        %v4448 = vmax.f32 %v4352, 0.0
        %v4449 = vmax.f32 %v4353, 0.0
        %v4450 = vmax.f32 %v4354, 0.0
        %v4451 = vmax.f32 %v4355, 0.0
        %v4452 = vmax.f32 %v4356, 0.0
        %v4453 = vmax.f32 %v4357, 0.0
        %v4454 = vmax.f32 %v4358, 0.0
        %v4455 = vmax.f32 %v4359, 0.0
        %v4456 = vmax.f32 %v4360, 0.0
        %v4457 = vmax.f32 %v4361, 0.0
        %v4458 = vmax.f32 %v4362, 0.0
        %v4459 = vmax.f32 %v4363, 0.0
        %v4460 = vmax.f32 %v4364, 0.0
        %v4461 = vmax.f32 %v4365, 0.0
        %v4462 = vmax.f32 %v4366, 0.0
        %v4463 = vmax.f32 %v4367, 0.0
        %v4464 = vmax.f32 %v4368, 0.0
        %v4465 = vmax.f32 %v4369, 0.0
        %v4466 = vmax.f32 %v4370, 0.0
        %v4473 = vcombine.high %v933, %v933
        %v4475 = vunpack.c.l.s4 1966171168
        %v4476 = vunpack.c.0.s8 %v4475
        %v4477 = vlaneseq
        %v4478 = vshrl.u32 %v4477, 7
        %v4479 = vsub.s32 %v4476, %v4478
        %v4480 = vrot.slane %v933, %v4479
        %v4482 = vunpack.c.l.s4 1966171168
        %v4483 = vunpack.c.0.s8 %v4482
        %v4484 = vlaneseq
        %v4485 = vshrl.u32 %v4484, 7
        %v4486 = vsub.s32 %v4483, %v4485
        %v4487 = vrot.slane %v4473, %v4486
        %v4488 = vcombine.high %v4480, %v4480
        %v4489 = vcombine.high %v4487, %v4487
        %v4491 = vunpack.c.l.s4 1966171168
        %v4492 = vunpack.c.0.s8 %v4491
        %v4493 = vlaneseq
        %v4494 = vshrl.u32 %v4493, 7
        %v4495 = vsub.s32 %v4492, %v4494
        %v4496 = vrot.slane %v4480, %v4495
        %v4498 = vunpack.c.l.s4 1966171168
        %v4499 = vunpack.c.0.s8 %v4498
        %v4500 = vlaneseq
        %v4501 = vshrl.u32 %v4500, 7
        %v4502 = vsub.s32 %v4499, %v4501
        %v4503 = vrot.slane %v4487, %v4502
        %v4505 = vunpack.c.l.s4 1966171168
        %v4506 = vunpack.c.0.s8 %v4505
        %v4507 = vlaneseq
        %v4508 = vshrl.u32 %v4507, 7
        %v4509 = vsub.s32 %v4506, %v4508
        %v4510 = vrot.slane %v4488, %v4509
        %v4512 = vunpack.c.l.s4 1966171168
        %v4513 = vunpack.c.0.s8 %v4512
        %v4514 = vlaneseq
        %v4515 = vshrl.u32 %v4514, 7
        %v4516 = vsub.s32 %v4513, %v4515
        %v4517 = vrot.slane %v4489, %v4516
        %v4518 = vcombine.high %v4496, %v4496
        %v4519 = vcombine.high %v4503, %v4503
        %v4520 = vcombine.high %v4510, %v4510
        %v4521 = vcombine.high %v4517, %v4517
        %v4522 = vcombine.high %v936, %v936
        %v4524 = vunpack.c.l.s4 1966171168
        %v4525 = vunpack.c.0.s8 %v4524
        %v4526 = vlaneseq
        %v4527 = vshrl.u32 %v4526, 7
        %v4528 = vsub.s32 %v4525, %v4527
        %v4529 = vrot.slane %v936, %v4528
        %v4531 = vunpack.c.l.s4 1966171168
        %v4532 = vunpack.c.0.s8 %v4531
        %v4533 = vlaneseq
        %v4534 = vshrl.u32 %v4533, 7
        %v4535 = vsub.s32 %v4532, %v4534
        %v4536 = vrot.slane %v4522, %v4535
        %v4537 = vcombine.high %v4529, %v4529
        %v4538 = vcombine.high %v4536, %v4536
        %v4540 = vunpack.c.l.s4 1966171168
        %v4541 = vunpack.c.0.s8 %v4540
        %v4542 = vlaneseq
        %v4543 = vshrl.u32 %v4542, 7
        %v4544 = vsub.s32 %v4541, %v4543
        %v4545 = vrot.slane %v4529, %v4544
        %v4547 = vunpack.c.l.s4 1966171168
        %v4548 = vunpack.c.0.s8 %v4547
        %v4549 = vlaneseq
        %v4550 = vshrl.u32 %v4549, 7
        %v4551 = vsub.s32 %v4548, %v4550
        %v4552 = vrot.slane %v4536, %v4551
        %v4554 = vunpack.c.l.s4 1966171168
        %v4555 = vunpack.c.0.s8 %v4554
        %v4556 = vlaneseq
        %v4557 = vshrl.u32 %v4556, 7
        %v4558 = vsub.s32 %v4555, %v4557
        %v4559 = vrot.slane %v4537, %v4558
        %v4561 = vunpack.c.l.s4 1966171168
        %v4562 = vunpack.c.0.s8 %v4561
        %v4563 = vlaneseq
        %v4564 = vshrl.u32 %v4563, 7
        %v4565 = vsub.s32 %v4562, %v4564
        %v4566 = vrot.slane %v4538, %v4565
        %v4567 = vcombine.high %v4545, %v4545
        %v4568 = vcombine.high %v4552, %v4552
        %v4569 = vcombine.high %v4559, %v4559
        %v4570 = vcombine.high %v4566, %v4566
        %v4571 = vcombine.high %v941, %v941
        %v4573 = vunpack.c.l.s4 1966171168
        %v4574 = vunpack.c.0.s8 %v4573
        %v4575 = vlaneseq
        %v4576 = vshrl.u32 %v4575, 7
        %v4577 = vsub.s32 %v4574, %v4576
        %v4578 = vrot.slane %v941, %v4577
        %v4580 = vunpack.c.l.s4 1966171168
        %v4581 = vunpack.c.0.s8 %v4580
        %v4582 = vlaneseq
        %v4583 = vshrl.u32 %v4582, 7
        %v4584 = vsub.s32 %v4581, %v4583
        %v4585 = vrot.slane %v4571, %v4584
        %v4586 = vcombine.high %v4578, %v4578
        %v4587 = vcombine.high %v4585, %v4585
        %v4589 = vunpack.c.l.s4 1966171168
        %v4590 = vunpack.c.0.s8 %v4589
        %v4591 = vlaneseq
        %v4592 = vshrl.u32 %v4591, 7
        %v4593 = vsub.s32 %v4590, %v4592
        %v4594 = vrot.slane %v4578, %v4593
        %v4596 = vunpack.c.l.s4 1966171168
        %v4597 = vunpack.c.0.s8 %v4596
        %v4598 = vlaneseq
        %v4599 = vshrl.u32 %v4598, 7
        %v4600 = vsub.s32 %v4597, %v4599
        %v4601 = vrot.slane %v4585, %v4600
        %v4603 = vunpack.c.l.s4 1966171168
        %v4604 = vunpack.c.0.s8 %v4603
        %v4605 = vlaneseq
        %v4606 = vshrl.u32 %v4605, 7
        %v4607 = vsub.s32 %v4604, %v4606
        %v4608 = vrot.slane %v4586, %v4607
        %v4610 = vunpack.c.l.s4 1966171168
        %v4611 = vunpack.c.0.s8 %v4610
        %v4612 = vlaneseq
        %v4613 = vshrl.u32 %v4612, 7
        %v4614 = vsub.s32 %v4611, %v4613
        %v4615 = vrot.slane %v4587, %v4614
        %v4616 = vcombine.high %v4594, %v4594
        %v4617 = vcombine.high %v4601, %v4601
        %v4618 = vcombine.high %v4608, %v4608
        %v4619 = vcombine.high %v4615, %v4615
        %v4620 = vcombine.high %v944, %v944
        %v4622 = vunpack.c.l.s4 1966171168
        %v4623 = vunpack.c.0.s8 %v4622
        %v4624 = vlaneseq
        %v4625 = vshrl.u32 %v4624, 7
        %v4626 = vsub.s32 %v4623, %v4625
        %v4627 = vrot.slane %v944, %v4626
        %v4629 = vunpack.c.l.s4 1966171168
        %v4630 = vunpack.c.0.s8 %v4629
        %v4631 = vlaneseq
        %v4632 = vshrl.u32 %v4631, 7
        %v4633 = vsub.s32 %v4630, %v4632
        %v4634 = vrot.slane %v4620, %v4633
        %v4635 = vcombine.high %v4627, %v4627
        %v4636 = vcombine.high %v4634, %v4634
        %v4638 = vunpack.c.l.s4 1966171168
        %v4639 = vunpack.c.0.s8 %v4638
        %v4640 = vlaneseq
        %v4641 = vshrl.u32 %v4640, 7
        %v4642 = vsub.s32 %v4639, %v4641
        %v4643 = vrot.slane %v4627, %v4642
        %v4645 = vunpack.c.l.s4 1966171168
        %v4646 = vunpack.c.0.s8 %v4645
        %v4647 = vlaneseq
        %v4648 = vshrl.u32 %v4647, 7
        %v4649 = vsub.s32 %v4646, %v4648
        %v4650 = vrot.slane %v4634, %v4649
        %v4652 = vunpack.c.l.s4 1966171168
        %v4653 = vunpack.c.0.s8 %v4652
        %v4654 = vlaneseq
        %v4655 = vshrl.u32 %v4654, 7
        %v4656 = vsub.s32 %v4653, %v4655
        %v4657 = vrot.slane %v4635, %v4656
        %v4659 = vunpack.c.l.s4 1966171168
        %v4660 = vunpack.c.0.s8 %v4659
        %v4661 = vlaneseq
        %v4662 = vshrl.u32 %v4661, 7
        %v4663 = vsub.s32 %v4660, %v4662
        %v4664 = vrot.slane %v4636, %v4663
        %v4665 = vcombine.high %v4643, %v4643
        %v4666 = vcombine.high %v4650, %v4650
        %v4667 = vcombine.high %v4657, %v4657
        %v4668 = vcombine.high %v4664, %v4664
        %v4669 = vcombine.high %v949, %v949
        %v4671 = vunpack.c.l.s4 1966171168
        %v4672 = vunpack.c.0.s8 %v4671
        %v4673 = vlaneseq
        %v4674 = vshrl.u32 %v4673, 7
        %v4675 = vsub.s32 %v4672, %v4674
        %v4676 = vrot.slane %v949, %v4675
        %v4678 = vunpack.c.l.s4 1966171168
        %v4679 = vunpack.c.0.s8 %v4678
        %v4680 = vlaneseq
        %v4681 = vshrl.u32 %v4680, 7
        %v4682 = vsub.s32 %v4679, %v4681
        %v4683 = vrot.slane %v4669, %v4682
        %v4684 = vcombine.high %v4676, %v4676
        %v4685 = vcombine.high %v4683, %v4683
        %v4687 = vunpack.c.l.s4 1966171168
        %v4688 = vunpack.c.0.s8 %v4687
        %v4689 = vlaneseq
        %v4690 = vshrl.u32 %v4689, 7
        %v4691 = vsub.s32 %v4688, %v4690
        %v4692 = vrot.slane %v4676, %v4691
        %v4694 = vunpack.c.l.s4 1966171168
        %v4695 = vunpack.c.0.s8 %v4694
        %v4696 = vlaneseq
        %v4697 = vshrl.u32 %v4696, 7
        %v4698 = vsub.s32 %v4695, %v4697
        %v4699 = vrot.slane %v4683, %v4698
        %v4701 = vunpack.c.l.s4 1966171168
        %v4702 = vunpack.c.0.s8 %v4701
        %v4703 = vlaneseq
        %v4704 = vshrl.u32 %v4703, 7
        %v4705 = vsub.s32 %v4702, %v4704
        %v4706 = vrot.slane %v4684, %v4705
        %v4708 = vunpack.c.l.s4 1966171168
        %v4709 = vunpack.c.0.s8 %v4708
        %v4710 = vlaneseq
        %v4711 = vshrl.u32 %v4710, 7
        %v4712 = vsub.s32 %v4709, %v4711
        %v4713 = vrot.slane %v4685, %v4712
        %v4714 = vcombine.high %v4692, %v4692
        %v4715 = vcombine.high %v4699, %v4699
        %v4716 = vcombine.high %v4706, %v4706
        %v4717 = vcombine.high %v4713, %v4713
        %v4718 = vcombine.high %v952, %v952
        %v4720 = vunpack.c.l.s4 1966171168
        %v4721 = vunpack.c.0.s8 %v4720
        %v4722 = vlaneseq
        %v4723 = vshrl.u32 %v4722, 7
        %v4724 = vsub.s32 %v4721, %v4723
        %v4725 = vrot.slane %v952, %v4724
        %v4727 = vunpack.c.l.s4 1966171168
        %v4728 = vunpack.c.0.s8 %v4727
        %v4729 = vlaneseq
        %v4730 = vshrl.u32 %v4729, 7
        %v4731 = vsub.s32 %v4728, %v4730
        %v4732 = vrot.slane %v4718, %v4731
        %v4733 = vcombine.high %v4725, %v4725
        %v4734 = vcombine.high %v4732, %v4732
        %v4736 = vunpack.c.l.s4 1966171168
        %v4737 = vunpack.c.0.s8 %v4736
        %v4738 = vlaneseq
        %v4739 = vshrl.u32 %v4738, 7
        %v4740 = vsub.s32 %v4737, %v4739
        %v4741 = vrot.slane %v4725, %v4740
        %v4743 = vunpack.c.l.s4 1966171168
        %v4744 = vunpack.c.0.s8 %v4743
        %v4745 = vlaneseq
        %v4746 = vshrl.u32 %v4745, 7
        %v4747 = vsub.s32 %v4744, %v4746
        %v4748 = vrot.slane %v4732, %v4747
        %v4750 = vunpack.c.l.s4 1966171168
        %v4751 = vunpack.c.0.s8 %v4750
        %v4752 = vlaneseq
        %v4753 = vshrl.u32 %v4752, 7
        %v4754 = vsub.s32 %v4751, %v4753
        %v4755 = vrot.slane %v4733, %v4754
        %v4757 = vunpack.c.l.s4 1966171168
        %v4758 = vunpack.c.0.s8 %v4757
        %v4759 = vlaneseq
        %v4760 = vshrl.u32 %v4759, 7
        %v4761 = vsub.s32 %v4758, %v4760
        %v4762 = vrot.slane %v4734, %v4761
        %v4763 = vcombine.high %v4741, %v4741
        %v4764 = vcombine.high %v4748, %v4748
        %v4765 = vcombine.high %v4755, %v4755
        %v4766 = vcombine.high %v4762, %v4762
        %v4767 = vlaneseq
        %v4768 = vshrl.u32 %v4767, 7
        %v4769 = vsub.s32 0, %v4768
        %v4770 = vrot.slane %v4496, %v4769
        %v4771 = vlaneseq
        %v4772 = vshrl.u32 %v4771, 7
        %v4773 = vsub.s32 0, %v4772
        %v4774 = vrot.slane %v4510, %v4773
        %v4775 = vlaneseq
        %v4776 = vshrl.u32 %v4775, 7
        %v4777 = vsub.s32 0, %v4776
        %v4778 = vrot.slane %v4518, %v4777
        %v4779 = vlaneseq
        %v4780 = vshrl.u32 %v4779, 7
        %v4781 = vsub.s32 0, %v4780
        %v4782 = vrot.slane %v4520, %v4781
        %v4783 = vlaneseq
        %v4784 = vshrl.u32 %v4783, 7
        %v4785 = vsub.s32 0, %v4784
        %v4786 = vrot.slane %v4503, %v4785
        %v4787 = vlaneseq
        %v4788 = vshrl.u32 %v4787, 7
        %v4789 = vsub.s32 0, %v4788
        %v4790 = vrot.slane %v4517, %v4789
        %v4791 = vlaneseq
        %v4792 = vshrl.u32 %v4791, 7
        %v4793 = vsub.s32 0, %v4792
        %v4794 = vrot.slane %v4519, %v4793
        %v4795 = vlaneseq
        %v4796 = vshrl.u32 %v4795, 7
        %v4797 = vsub.s32 0, %v4796
        %v4798 = vrot.slane %v4521, %v4797
        %v4799 = vlaneseq
        %v4800 = vshrl.u32 %v4799, 7
        %v4801 = vsub.s32 0, %v4800
        %v4802 = vrot.slane %v4545, %v4801
        %v4803 = vlaneseq
        %v4804 = vshrl.u32 %v4803, 7
        %v4805 = vsub.s32 0, %v4804
        %v4806 = vrot.slane %v4559, %v4805
        %v4807 = vlaneseq
        %v4808 = vshrl.u32 %v4807, 7
        %v4809 = vsub.s32 0, %v4808
        %v4810 = vrot.slane %v4567, %v4809
        %v4811 = vlaneseq
        %v4812 = vshrl.u32 %v4811, 7
        %v4813 = vsub.s32 0, %v4812
        %v4814 = vrot.slane %v4569, %v4813
        %v4815 = vlaneseq
        %v4816 = vshrl.u32 %v4815, 7
        %v4817 = vsub.s32 0, %v4816
        %v4818 = vrot.slane %v4552, %v4817
        %v4819 = vlaneseq
        %v4820 = vshrl.u32 %v4819, 7
        %v4821 = vsub.s32 0, %v4820
        %v4822 = vrot.slane %v4566, %v4821
        %v4823 = vlaneseq
        %v4824 = vshrl.u32 %v4823, 7
        %v4825 = vsub.s32 0, %v4824
        %v4826 = vrot.slane %v4568, %v4825
        %v4827 = vlaneseq
        %v4828 = vshrl.u32 %v4827, 7
        %v4829 = vsub.s32 0, %v4828
        %v4830 = vrot.slane %v4570, %v4829
        %v4831 = vlaneseq
        %v4832 = vshrl.u32 %v4831, 7
        %v4833 = vsub.s32 0, %v4832
        %v4834 = vrot.slane %v4594, %v4833
        %v4835 = vlaneseq
        %v4836 = vshrl.u32 %v4835, 7
        %v4837 = vsub.s32 0, %v4836
        %v4838 = vrot.slane %v4608, %v4837
        %v4839 = vlaneseq
        %v4840 = vshrl.u32 %v4839, 7
        %v4841 = vsub.s32 0, %v4840
        %v4842 = vrot.slane %v4616, %v4841
        %v4843 = vlaneseq
        %v4844 = vshrl.u32 %v4843, 7
        %v4845 = vsub.s32 0, %v4844
        %v4846 = vrot.slane %v4618, %v4845
        %v4847 = vlaneseq
        %v4848 = vshrl.u32 %v4847, 7
        %v4849 = vsub.s32 0, %v4848
        %v4850 = vrot.slane %v4601, %v4849
        %v4851 = vlaneseq
        %v4852 = vshrl.u32 %v4851, 7
        %v4853 = vsub.s32 0, %v4852
        %v4854 = vrot.slane %v4615, %v4853
        %v4855 = vlaneseq
        %v4856 = vshrl.u32 %v4855, 7
        %v4857 = vsub.s32 0, %v4856
        %v4858 = vrot.slane %v4617, %v4857
        %v4859 = vlaneseq
        %v4860 = vshrl.u32 %v4859, 7
        %v4861 = vsub.s32 0, %v4860
        %v4862 = vrot.slane %v4619, %v4861
        %v4863 = vlaneseq
        %v4864 = vshrl.u32 %v4863, 7
        %v4865 = vsub.s32 0, %v4864
        %v4866 = vrot.slane %v4643, %v4865
        %v4867 = vlaneseq
        %v4868 = vshrl.u32 %v4867, 7
        %v4869 = vsub.s32 0, %v4868
        %v4870 = vrot.slane %v4657, %v4869
        %v4871 = vlaneseq
        %v4872 = vshrl.u32 %v4871, 7
        %v4873 = vsub.s32 0, %v4872
        %v4874 = vrot.slane %v4665, %v4873
        %v4875 = vlaneseq
        %v4876 = vshrl.u32 %v4875, 7
        %v4877 = vsub.s32 0, %v4876
        %v4878 = vrot.slane %v4667, %v4877
        %v4879 = vlaneseq
        %v4880 = vshrl.u32 %v4879, 7
        %v4881 = vsub.s32 0, %v4880
        %v4882 = vrot.slane %v4650, %v4881
        %v4883 = vlaneseq
        %v4884 = vshrl.u32 %v4883, 7
        %v4885 = vsub.s32 0, %v4884
        %v4886 = vrot.slane %v4664, %v4885
        %v4887 = vlaneseq
        %v4888 = vshrl.u32 %v4887, 7
        %v4889 = vsub.s32 0, %v4888
        %v4890 = vrot.slane %v4666, %v4889
        %v4891 = vlaneseq
        %v4892 = vshrl.u32 %v4891, 7
        %v4893 = vsub.s32 0, %v4892
        %v4894 = vrot.slane %v4668, %v4893
        %v4895 = vlaneseq
        %v4896 = vshrl.u32 %v4895, 7
        %v4897 = vsub.s32 0, %v4896
        %v4898 = vrot.slane %v4692, %v4897
        %v4899 = vlaneseq
        %v4900 = vshrl.u32 %v4899, 7
        %v4901 = vsub.s32 0, %v4900
        %v4902 = vrot.slane %v4706, %v4901
        %v4903 = vlaneseq
        %v4904 = vshrl.u32 %v4903, 7
        %v4905 = vsub.s32 0, %v4904
        %v4906 = vrot.slane %v4714, %v4905
        %v4907 = vlaneseq
        %v4908 = vshrl.u32 %v4907, 7
        %v4909 = vsub.s32 0, %v4908
        %v4910 = vrot.slane %v4716, %v4909
        %v4911 = vlaneseq
        %v4912 = vshrl.u32 %v4911, 7
        %v4913 = vsub.s32 0, %v4912
        %v4914 = vrot.slane %v4699, %v4913
        %v4915 = vlaneseq
        %v4916 = vshrl.u32 %v4915, 7
        %v4917 = vsub.s32 0, %v4916
        %v4918 = vrot.slane %v4713, %v4917
        %v4919 = vlaneseq
        %v4920 = vshrl.u32 %v4919, 7
        %v4921 = vsub.s32 0, %v4920
        %v4922 = vrot.slane %v4715, %v4921
        %v4923 = vlaneseq
        %v4924 = vshrl.u32 %v4923, 7
        %v4925 = vsub.s32 0, %v4924
        %v4926 = vrot.slane %v4717, %v4925
        %v4927 = vlaneseq
        %v4928 = vshrl.u32 %v4927, 7
        %v4929 = vsub.s32 0, %v4928
        %v4930 = vrot.slane %v4741, %v4929
        %v4931 = vlaneseq
        %v4932 = vshrl.u32 %v4931, 7
        %v4933 = vsub.s32 0, %v4932
        %v4934 = vrot.slane %v4755, %v4933
        %v4935 = vlaneseq
        %v4936 = vshrl.u32 %v4935, 7
        %v4937 = vsub.s32 0, %v4936
        %v4938 = vrot.slane %v4763, %v4937
        %v4939 = vlaneseq
        %v4940 = vshrl.u32 %v4939, 7
        %v4941 = vsub.s32 0, %v4940
        %v4942 = vrot.slane %v4765, %v4941
        %v4943 = vlaneseq
        %v4944 = vshrl.u32 %v4943, 7
        %v4945 = vsub.s32 0, %v4944
        %v4946 = vrot.slane %v4748, %v4945
        %v4947 = vlaneseq
        %v4948 = vshrl.u32 %v4947, 7
        %v4949 = vsub.s32 0, %v4948
        %v4950 = vrot.slane %v4762, %v4949
        %v4951 = vlaneseq
        %v4952 = vshrl.u32 %v4951, 7
        %v4953 = vsub.s32 0, %v4952
        %v4954 = vrot.slane %v4764, %v4953
        %v4955 = vlaneseq
        %v4956 = vshrl.u32 %v4955, 7
        %v4957 = vsub.s32 0, %v4956
        %v4958 = vrot.slane %v4766, %v4957
        %v5007 = vmul.f32 %v4770, %v1382
        %v5008 = vmul.f32 %v4770, %v1385
        %v5009 = vmul.f32 %v4774, %v1390
        %v5010 = vmul.f32 %v4774, %v1393
        %v5011 = vmul.f32 %v4778, %v1398
        %v5012 = vmul.f32 %v4778, %v1401
        %v5013 = vmul.f32 %v4782, %v1406
        %v5014 = vmul.f32 %v4782, %v1409
        %v5015 = vmul.f32 %v4786, %v1414
        %v5016 = vmul.f32 %v4786, %v1417
        %v5017 = vmul.f32 %v4790, %v1422
        %v5018 = vmul.f32 %v4790, %v1425
        %v5019 = vmul.f32 %v4794, %v1430
        %v5020 = vmul.f32 %v4794, %v1433
        %v5021 = vmul.f32 %v4798, %v1438
        %v5022 = vmul.f32 %v4798, %v1441
        %v5023 = vmul.f32 %v4802, %v1446
        %v5024 = vmul.f32 %v4802, %v1449
        %v5025 = vmul.f32 %v4806, %v1454
        %v5026 = vmul.f32 %v4806, %v1457
        %v5027 = vmul.f32 %v4810, %v1462
        %v5028 = vmul.f32 %v4810, %v1465
        %v5029 = vmul.f32 %v4814, %v1470
        %v5030 = vmul.f32 %v4814, %v1473
        %v5031 = vmul.f32 %v4818, %v1478
        %v5032 = vmul.f32 %v4818, %v1481
        %v5033 = vmul.f32 %v4822, %v1486
        %v5034 = vmul.f32 %v4822, %v1489
        %v5035 = vmul.f32 %v4826, %v1494
        %v5036 = vmul.f32 %v4826, %v1497
        %v5037 = vmul.f32 %v4830, %v1502
        %v5038 = vmul.f32 %v4830, %v1505
        %v5039 = vmul.f32 %v4834, %v1510
        %v5040 = vmul.f32 %v4834, %v1513
        %v5041 = vmul.f32 %v4838, %v1518
        %v5042 = vmul.f32 %v4838, %v1521
        %v5043 = vmul.f32 %v4842, %v1526
        %v5044 = vmul.f32 %v4842, %v1529
        %v5045 = vmul.f32 %v4846, %v1534
        %v5046 = vmul.f32 %v4846, %v1537
        %v5047 = vmul.f32 %v4850, %v1542
        %v5048 = vmul.f32 %v4850, %v1545
        %v5049 = vmul.f32 %v4854, %v1550
        %v5050 = vmul.f32 %v4854, %v1553
        %v5051 = vmul.f32 %v4858, %v1558
        %v5052 = vmul.f32 %v4858, %v1561
        %v5053 = vmul.f32 %v4862, %v1566
        %v5054 = vmul.f32 %v4862, %v1569
        %v5055 = vmul.f32 %v4866, %v1574
        %v5056 = vmul.f32 %v4866, %v1577
        %v5057 = vmul.f32 %v4870, %v1582
        %v5058 = vmul.f32 %v4870, %v1585
        %v5059 = vmul.f32 %v4874, %v1590
        %v5060 = vmul.f32 %v4874, %v1593
        %v5061 = vmul.f32 %v4878, %v1598
        %v5062 = vmul.f32 %v4878, %v1601
        %v5063 = vmul.f32 %v4882, %v1606
        %v5064 = vmul.f32 %v4882, %v1609
        %v5065 = vmul.f32 %v4886, %v1614
        %v5066 = vmul.f32 %v4886, %v1617
        %v5067 = vmul.f32 %v4890, %v1622
        %v5068 = vmul.f32 %v4890, %v1625
        %v5069 = vmul.f32 %v4894, %v1630
        %v5070 = vmul.f32 %v4894, %v1633
        %v5071 = vmul.f32 %v4898, %v1638
        %v5072 = vmul.f32 %v4898, %v1641
        %v5073 = vmul.f32 %v4902, %v1646
        %v5074 = vmul.f32 %v4902, %v1649
        %v5075 = vmul.f32 %v4906, %v1654
        %v5076 = vmul.f32 %v4906, %v1657
        %v5077 = vmul.f32 %v4910, %v1662
        %v5078 = vmul.f32 %v4910, %v1665
        %v5079 = vmul.f32 %v4914, %v1670
        %v5080 = vmul.f32 %v4914, %v1673
        %v5081 = vmul.f32 %v4918, %v1678
        %v5082 = vmul.f32 %v4918, %v1681
        %v5083 = vmul.f32 %v4922, %v1686
        %v5084 = vmul.f32 %v4922, %v1689
        %v5085 = vmul.f32 %v4926, %v1694
        %v5086 = vmul.f32 %v4926, %v1697
        %v5087 = vmul.f32 %v4930, %v1702
        %v5088 = vmul.f32 %v4930, %v1705
        %v5089 = vmul.f32 %v4934, %v1710
        %v5090 = vmul.f32 %v4934, %v1713
        %v5091 = vmul.f32 %v4938, %v1718
        %v5092 = vmul.f32 %v4938, %v1721
        %v5093 = vmul.f32 %v4942, %v1726
        %v5094 = vmul.f32 %v4942, %v1729
        %v5095 = vmul.f32 %v4946, %v1734
        %v5096 = vmul.f32 %v4946, %v1737
        %v5097 = vmul.f32 %v4950, %v1742
        %v5098 = vmul.f32 %v4950, %v1745
        %v5099 = vmul.f32 %v4954, %v1750
        %v5100 = vmul.f32 %v4954, %v1753
        %v5101 = vmul.f32 %v4958, %v1758
        %v5102 = vmul.f32 %v4958, %v1761
        %v5103 = vpack.c.bf16 %v5008, %v5007
        %v5104 = vpack.c.bf16 %v5010, %v5009
        %v5105 = vpack.c.bf16 %v5012, %v5011
        %v5106 = vpack.c.bf16 %v5014, %v5013
        %v5107 = vpack.c.bf16 %v5016, %v5015
        %v5108 = vpack.c.bf16 %v5018, %v5017
        %v5109 = vpack.c.bf16 %v5020, %v5019
        %v5110 = vpack.c.bf16 %v5022, %v5021
        %v5111 = vpack.c.bf16 %v5024, %v5023
        %v5112 = vpack.c.bf16 %v5026, %v5025
        %v5113 = vpack.c.bf16 %v5028, %v5027
        %v5114 = vpack.c.bf16 %v5030, %v5029
        %v5115 = vpack.c.bf16 %v5032, %v5031
        %v5116 = vpack.c.bf16 %v5034, %v5033
        %v5117 = vpack.c.bf16 %v5036, %v5035
        %v5118 = vpack.c.bf16 %v5038, %v5037
        %v5119 = vpack.c.bf16 %v5040, %v5039
        %v5120 = vpack.c.bf16 %v5042, %v5041
        %v5121 = vpack.c.bf16 %v5044, %v5043
        %v5122 = vpack.c.bf16 %v5046, %v5045
        %v5123 = vpack.c.bf16 %v5048, %v5047
        %v5124 = vpack.c.bf16 %v5050, %v5049
        %v5125 = vpack.c.bf16 %v5052, %v5051
        %v5126 = vpack.c.bf16 %v5054, %v5053
        %v5127 = vpack.c.bf16 %v5056, %v5055
        %v5128 = vpack.c.bf16 %v5058, %v5057
        %v5129 = vpack.c.bf16 %v5060, %v5059
        %v5130 = vpack.c.bf16 %v5062, %v5061
        %v5131 = vpack.c.bf16 %v5064, %v5063
        %v5132 = vpack.c.bf16 %v5066, %v5065
        %v5133 = vpack.c.bf16 %v5068, %v5067
        %v5134 = vpack.c.bf16 %v5070, %v5069
        %v5135 = vpack.c.bf16 %v5072, %v5071
        %v5136 = vpack.c.bf16 %v5074, %v5073
        %v5137 = vpack.c.bf16 %v5076, %v5075
        %v5138 = vpack.c.bf16 %v5078, %v5077
        %v5139 = vpack.c.bf16 %v5080, %v5079
        %v5140 = vpack.c.bf16 %v5082, %v5081
        %v5141 = vpack.c.bf16 %v5084, %v5083
        %v5142 = vpack.c.bf16 %v5086, %v5085
        %v5143 = vpack.c.bf16 %v5088, %v5087
        %v5144 = vpack.c.bf16 %v5090, %v5089
        %v5145 = vpack.c.bf16 %v5092, %v5091
        %v5146 = vpack.c.bf16 %v5094, %v5093
        %v5147 = vpack.c.bf16 %v5096, %v5095
        %v5148 = vpack.c.bf16 %v5098, %v5097
        %v5149 = vpack.c.bf16 %v5100, %v5099
        %v5150 = vpack.c.bf16 %v5102, %v5101
        %v5151 = vld [vmem:[%s7] sm:$0xf]
        %v5152 = vld [vmem:[%s7 + $0x4] sm:$0xf]
        %v5153 = vld [vmem:[%s9] sm:$0xff]
        %v5154 = vld [vmem:[%s9 + $0x8] sm:$0xff]
        %v5156 = vsel %vm774, %v4371, 0
        %v5159 = vsel %vm774, %v4372, 0
        %v5162 = vsel %vm774, %v4373, 0
        %v5165 = vsel %vm774, %v4374, 0
        %v5168 = vsel %vm774, %v4375, 0
        %v5171 = vsel %vm774, %v4376, 0
        %v5174 = vsel %vm774, %v4377, 0
        %v5177 = vsel %vm774, %v4378, 0
        %v5180 = vsel %vm774, %v4379, 0
        %v5183 = vsel %vm774, %v4380, 0
        %v5186 = vsel %vm774, %v4381, 0
        %v5189 = vsel %vm774, %v4382, 0
        %v5192 = vsel %vm774, %v4383, 0
        %v5195 = vsel %vm774, %v4384, 0
        %v5198 = vsel %vm774, %v4385, 0
        %v5201 = vsel %vm774, %v4386, 0
        %v5204 = vsel %vm774, %v4387, 0
        %v5207 = vsel %vm774, %v4388, 0
        %v5210 = vsel %vm774, %v4389, 0
        %v5213 = vsel %vm774, %v4390, 0
        %v5216 = vsel %vm774, %v4391, 0
        %v5219 = vsel %vm774, %v4392, 0
        %v5222 = vsel %vm774, %v4393, 0
        %v5225 = vsel %vm774, %v4394, 0
        %v5228 = vsel %vm774, %v4395, 0
        %v5231 = vsel %vm774, %v4396, 0
        %v5234 = vsel %vm774, %v4397, 0
        %v5237 = vsel %vm774, %v4398, 0
        %v5240 = vsel %vm774, %v4399, 0
        %v5243 = vsel %vm774, %v4400, 0
        %v5246 = vsel %vm774, %v4401, 0
        %v5249 = vsel %vm774, %v4402, 0
        %v5252 = vsel %vm774, %v4403, 0
        %v5255 = vsel %vm774, %v4404, 0
        %v5258 = vsel %vm774, %v4405, 0
        %v5261 = vsel %vm774, %v4406, 0
        %v5264 = vsel %vm774, %v4407, 0
        %v5267 = vsel %vm774, %v4408, 0
        %v5270 = vsel %vm774, %v4409, 0
        %v5273 = vsel %vm774, %v4410, 0
        %v5276 = vsel %vm774, %v4411, 0
        %v5279 = vsel %vm774, %v4412, 0
        %v5282 = vsel %vm774, %v4413, 0
        %v5285 = vsel %vm774, %v4414, 0
        %v5288 = vsel %vm774, %v4415, 0
        %v5291 = vsel %vm774, %v4416, 0
        %v5294 = vsel %vm774, %v4417, 0
        %v5297 = vsel %vm774, %v4418, 0
        %v5300 = vsel %vm774, %v4419, 0
        %v5303 = vsel %vm774, %v4420, 0
        %v5306 = vsel %vm774, %v4421, 0
        %v5309 = vsel %vm774, %v4422, 0
        %v5312 = vsel %vm774, %v4423, 0
        %v5315 = vsel %vm774, %v4424, 0
        %v5318 = vsel %vm774, %v4425, 0
        %v5321 = vsel %vm774, %v4426, 0
        %v5324 = vsel %vm774, %v4427, 0
        %v5327 = vsel %vm774, %v4428, 0
        %v5330 = vsel %vm774, %v4429, 0
        %v5333 = vsel %vm774, %v4430, 0
        %v5336 = vsel %vm774, %v4431, 0
        %v5339 = vsel %vm774, %v4432, 0
        %v5342 = vsel %vm774, %v4433, 0
        %v5345 = vsel %vm774, %v4434, 0
        %v5348 = vsel %vm774, %v4435, 0
        %v5351 = vsel %vm774, %v4436, 0
        %v5354 = vsel %vm774, %v4437, 0
        %v5357 = vsel %vm774, %v4438, 0
        %v5360 = vsel %vm774, %v4439, 0
        %v5363 = vsel %vm774, %v4440, 0
        %v5366 = vsel %vm774, %v4441, 0
        %v5369 = vsel %vm774, %v4442, 0
        %v5372 = vsel %vm774, %v4443, 0
        %v5375 = vsel %vm774, %v4444, 0
        %v5378 = vsel %vm774, %v4445, 0
        %v5381 = vsel %vm774, %v4446, 0
        %v5384 = vsel %vm774, %v4447, 0
        %v5387 = vsel %vm774, %v4448, 0
        %v5390 = vsel %vm774, %v4449, 0
        %v5393 = vsel %vm774, %v4450, 0
        %v5396 = vsel %vm774, %v4451, 0
        %v5399 = vsel %vm774, %v4452, 0
        %v5402 = vsel %vm774, %v4453, 0
        %v5405 = vsel %vm774, %v4454, 0
        %v5408 = vsel %vm774, %v4455, 0
        %v5411 = vsel %vm774, %v4456, 0
        %v5414 = vsel %vm774, %v4457, 0
        %v5417 = vsel %vm774, %v4458, 0
        %v5420 = vsel %vm774, %v4459, 0
        %v5423 = vsel %vm774, %v4460, 0
        %v5426 = vsel %vm774, %v4461, 0
        %v5429 = vsel %vm774, %v4462, 0
        %v5432 = vsel %vm774, %v4463, 0
        %v5435 = vsel %vm774, %v4464, 0
        %v5438 = vsel %vm774, %v4465, 0
        %v5441 = vsel %vm774, %v4466, 0
        %5443 = vmatprep.subr.mxu0 0.0
        %5444 = vmatpush1.msra.mxu0 %v5153
        %5445 = vmatprep.subr.mxu0 0.0
        %5446 = vmatpush1.msra.mxu0 %v5154
        %5447 = vmatprep.subr.mxu0 0.0
        %5448 = vmatpush1.msra.mxu0 0.0
        %5449 = vmatprep.subr.mxu0 0.0
        %5450 = vmatpush1.msra.mxu0 0.0
        %5451 = vmatprep.subr.mxu0 0.0
        %5452 = vmatpush1.msra.mxu0 0.0
        %5453 = vmatprep.subr.mxu0 0.0
        %5454 = vmatpush1.msra.mxu0 0.0
        %5455 = vmatprep.subr.mxu0 0.0
        %5456 = vmatpush1.msra.mxu0 0.0
        %5457 = vmatprep.subr.mxu0 0.0
        %5458 = vmatpush1.msra.mxu0 0.0
        %5459 = vmatprep.subr.mxu0 0.0
        %5460 = vmatpush1.msra.mxu0 0.0
        %5461 = vmatprep.subr.mxu0 0.0
        %5462 = vmatpush1.msra.mxu0 0.0
        %5463 = vmatprep.subr.mxu0 0.0
        %5464 = vmatpush1.msra.mxu0 0.0
        %5465 = vmatprep.subr.mxu0 0.0
        %5466 = vmatpush1.msra.mxu0 0.0
        %5467 = vmatprep.subr.mxu0 0.0
        %5468 = vmatpush1.msra.mxu0 0.0
        %5469 = vmatprep.subr.mxu0 0.0
        %5470 = vmatpush1.msra.mxu0 0.0
        %5471 = vmatprep.subr.mxu0 0.0
        %5472 = vmatpush1.msra.mxu0 0.0
        %5473 = vmatprep.subr.mxu0 0.0
        %5474 = vmatpush1.msra.mxu0 0.0
        %5475 = vmatprep.subr.mxu0 0.0
        %5476 = vmatpush1.msra.mxu0 0.0
        %5477 = vmatprep.subr.mxu0 0.0
        %5478 = vmatpush1.msra.mxu0 0.0
        %5479 = vmatprep.subr.mxu0 0.0
        %5480 = vmatpush1.msra.mxu0 0.0
        %5481 = vmatprep.subr.mxu0 0.0
        %5482 = vmatpush1.msra.mxu0 0.0
        %5483 = vmatprep.subr.mxu0 0.0
        %5484 = vmatpush1.msra.mxu0 0.0
        %5485 = vmatprep.subr.mxu0 0.0
        %5486 = vmatpush1.msra.mxu0 0.0
        %5487 = vmatprep.subr.mxu0 0.0
        %5488 = vmatpush1.msra.mxu0 0.0
        %5489 = vmatprep.subr.mxu0 0.0
        %5490 = vmatpush1.msra.mxu0 0.0
        %5491 = vmatprep.subr.mxu0 0.0
        %5492 = vmatpush1.msra.mxu0 0.0
        %5493 = vmatprep.subr.mxu0 0.0
        %5494 = vmatpush1.msra.mxu0 0.0
        %5495 = vmatprep.subr.mxu0 0.0
        %5496 = vmatpush1.msra.mxu0 0.0
        %5497 = vmatprep.subr.mxu0 0.0
        %5498 = vmatpush1.msra.mxu0 0.0
        %5499 = vmatprep.subr.mxu0 0.0
        %5500 = vmatpush1.msra.mxu0 0.0
        %5501 = vmatprep.subr.mxu0 0.0
        %5502 = vmatpush1.msra.mxu0 0.0
        %5503 = vmatprep.subr.mxu0 0.0
        %5504 = vmatpush1.msra.mxu0 0.0
        %5505 = vmatprep.subr.mxu0 0.0
        %5506 = vmatpush1.msra.mxu0 0.0
        %5507 = vmatprep.mubr.f32.mxu0 0.0
        %5508 = vmatmul.mubr.f32.gmra.mrb[0].mxu0 %v5156
        %v5509 = vpop.f32.mrb[0].mxu0
        %v5510 = vadd.f32 0.0, %v5509
        %v5511 = vpop.f32.mrb[0].mxu0
        %5512 = vmatprep.mubr.f32.mxu0 0.0
        %5513 = vmatmul.mubr.f32.gmra.mrb[0].mxu0 %v5159
        %v5514 = vpop.f32.mrb[0].mxu0
        %v5515 = vadd.f32 0.0, %v5514
        %v5516 = vpop.f32.mrb[0].mxu0
        %5517 = vmatprep.mubr.f32.mxu0 0.0
        %5518 = vmatmul.mubr.f32.gmra.mrb[0].mxu0 %v5162
        %v5519 = vpop.f32.mrb[0].mxu0
        %v5520 = vadd.f32 0.0, %v5519
        %v5521 = vpop.f32.mrb[0].mxu0
        %5522 = vmatprep.mubr.f32.mxu0 0.0
        %5523 = vmatmul.mubr.f32.gmra.mrb[0].mxu0 %v5165
        %v5524 = vpop.f32.mrb[0].mxu0
        %v5525 = vadd.f32 0.0, %v5524
        %v5526 = vpop.f32.mrb[0].mxu0
        %5527 = vmatprep.mubr.f32.mxu0 0.0
        %5528 = vmatmul.mubr.f32.gmra.mrb[0].mxu0 %v5168
        %v5529 = vpop.f32.mrb[0].mxu0
        %v5530 = vadd.f32 0.0, %v5529
        %v5531 = vpop.f32.mrb[0].mxu0
        %5532 = vmatprep.mubr.f32.mxu0 0.0
        %5533 = vmatmul.mubr.f32.gmra.mrb[0].mxu0 %v5171
        %v5534 = vpop.f32.mrb[0].mxu0
        %v5535 = vadd.f32 0.0, %v5534
        %v5536 = vpop.f32.mrb[0].mxu0
        %5537 = vmatprep.mubr.f32.mxu0 0.0
        %5538 = vmatmul.mubr.f32.gmra.mrb[0].mxu0 %v5174
        %v5539 = vpop.f32.mrb[0].mxu0
        %v5540 = vadd.f32 0.0, %v5539
        %v5541 = vpop.f32.mrb[0].mxu0
        %5542 = vmatprep.mubr.f32.mxu0 0.0
        %5543 = vmatmul.mubr.f32.gmra.mrb[0].mxu0 %v5177
        %v5544 = vpop.f32.mrb[0].mxu0
        %v5545 = vadd.f32 0.0, %v5544
        %v5546 = vpop.f32.mrb[0].mxu0
        %5547 = vmatprep.mubr.f32.mxu0 0.0
        %5548 = vmatmul.mubr.f32.gmra.mrb[0].mxu0 %v5180
        %v5549 = vpop.f32.mrb[0].mxu0
        %v5550 = vadd.f32 0.0, %v5549
        %v5551 = vpop.f32.mrb[0].mxu0
        %5552 = vmatprep.mubr.f32.mxu0 0.0
        %5553 = vmatmul.mubr.f32.gmra.mrb[0].mxu0 %v5183
        %v5554 = vpop.f32.mrb[0].mxu0
        %v5555 = vadd.f32 0.0, %v5554
        %v5556 = vpop.f32.mrb[0].mxu0
        %5557 = vmatprep.mubr.f32.mxu0 0.0
        %5558 = vmatmul.mubr.f32.gmra.mrb[0].mxu0 %v5186
        %v5559 = vpop.f32.mrb[0].mxu0
        %v5560 = vadd.f32 0.0, %v5559
        %v5561 = vpop.f32.mrb[0].mxu0
        %5562 = vmatprep.mubr.f32.mxu0 0.0
        %5563 = vmatmul.mubr.f32.gmra.mrb[0].mxu0 %v5189
        %v5564 = vpop.f32.mrb[0].mxu0
        %v5565 = vadd.f32 0.0, %v5564
        %v5566 = vpop.f32.mrb[0].mxu0
        %5567 = vmatprep.mubr.f32.mxu0 0.0
        %5568 = vmatmul.mubr.f32.gmra.mrb[0].mxu0 %v5192
        %v5569 = vpop.f32.mrb[0].mxu0
        %v5570 = vadd.f32 0.0, %v5569
        %v5571 = vpop.f32.mrb[0].mxu0
        %5572 = vmatprep.mubr.f32.mxu0 0.0
        %5573 = vmatmul.mubr.f32.gmra.mrb[0].mxu0 %v5195
        %v5574 = vpop.f32.mrb[0].mxu0
        %v5575 = vadd.f32 0.0, %v5574
        %v5576 = vpop.f32.mrb[0].mxu0
        %5577 = vmatprep.mubr.f32.mxu0 0.0
        %5578 = vmatmul.mubr.f32.gmra.mrb[0].mxu0 %v5198
        %v5579 = vpop.f32.mrb[0].mxu0
        %v5580 = vadd.f32 0.0, %v5579
        %v5581 = vpop.f32.mrb[0].mxu0
        %5582 = vmatprep.mubr.f32.mxu0 0.0
        %5583 = vmatmul.mubr.f32.gmra.mrb[0].mxu0 %v5201
        %v5584 = vpop.f32.mrb[0].mxu0
        %v5585 = vadd.f32 0.0, %v5584
        %v5586 = vpop.f32.mrb[0].mxu0
        %5587 = vmatprep.mubr.f32.mxu0 0.0
        %5588 = vmatmul.mubr.f32.gmra.mrb[0].mxu0 %v5204
        %v5589 = vpop.f32.mrb[0].mxu0
        %v5590 = vadd.f32 0.0, %v5589
        %v5591 = vpop.f32.mrb[0].mxu0
        %5592 = vmatprep.mubr.f32.mxu0 0.0
        %5593 = vmatmul.mubr.f32.gmra.mrb[0].mxu0 %v5207
        %v5594 = vpop.f32.mrb[0].mxu0
        %v5595 = vadd.f32 0.0, %v5594
        %v5596 = vpop.f32.mrb[0].mxu0
        %5597 = vmatprep.mubr.f32.mxu0 0.0
        %5598 = vmatmul.mubr.f32.gmra.mrb[0].mxu0 %v5210
        %v5599 = vpop.f32.mrb[0].mxu0
        %v5600 = vadd.f32 0.0, %v5599
        %v5601 = vpop.f32.mrb[0].mxu0
        %5602 = vmatprep.mubr.f32.mxu0 0.0
        %5603 = vmatmul.mubr.f32.gmra.mrb[0].mxu0 %v5213
        %v5604 = vpop.f32.mrb[0].mxu0
        %v5605 = vadd.f32 0.0, %v5604
        %v5606 = vpop.f32.mrb[0].mxu0
        %5607 = vmatprep.mubr.f32.mxu0 0.0
        %5608 = vmatmul.mubr.f32.gmra.mrb[0].mxu0 %v5216
        %v5609 = vpop.f32.mrb[0].mxu0
        %v5610 = vadd.f32 0.0, %v5609
        %v5611 = vpop.f32.mrb[0].mxu0
        %5612 = vmatprep.mubr.f32.mxu0 0.0
        %5613 = vmatmul.mubr.f32.gmra.mrb[0].mxu0 %v5219
        %v5614 = vpop.f32.mrb[0].mxu0
        %v5615 = vadd.f32 0.0, %v5614
        %v5616 = vpop.f32.mrb[0].mxu0
        %5617 = vmatprep.mubr.f32.mxu0 0.0
        %5618 = vmatmul.mubr.f32.gmra.mrb[0].mxu0 %v5222
        %v5619 = vpop.f32.mrb[0].mxu0
        %v5620 = vadd.f32 0.0, %v5619
        %v5621 = vpop.f32.mrb[0].mxu0
        %5622 = vmatprep.mubr.f32.mxu0 0.0
        %5623 = vmatmul.mubr.f32.gmra.mrb[0].mxu0 %v5225
        %v5624 = vpop.f32.mrb[0].mxu0
        %v5625 = vadd.f32 0.0, %v5624
        %v5626 = vpop.f32.mrb[0].mxu0
        %5627 = vmatprep.mubr.f32.mxu0 0.0
        %5628 = vmatmul.mubr.f32.gmra.mrb[0].mxu0 %v5228
        %v5629 = vpop.f32.mrb[0].mxu0
        %v5630 = vadd.f32 0.0, %v5629
        %v5631 = vpop.f32.mrb[0].mxu0
        %5632 = vmatprep.mubr.f32.mxu0 0.0
        %5633 = vmatmul.mubr.f32.gmra.mrb[0].mxu0 %v5231
        %v5634 = vpop.f32.mrb[0].mxu0
        %v5635 = vadd.f32 0.0, %v5634
        %v5636 = vpop.f32.mrb[0].mxu0
        %5637 = vmatprep.mubr.f32.mxu0 0.0
        %5638 = vmatmul.mubr.f32.gmra.mrb[0].mxu0 %v5234
        %v5639 = vpop.f32.mrb[0].mxu0
        %v5640 = vadd.f32 0.0, %v5639
        %v5641 = vpop.f32.mrb[0].mxu0
        %5642 = vmatprep.mubr.f32.mxu0 0.0
        %5643 = vmatmul.mubr.f32.gmra.mrb[0].mxu0 %v5237
        %v5644 = vpop.f32.mrb[0].mxu0
        %v5645 = vadd.f32 0.0, %v5644
        %v5646 = vpop.f32.mrb[0].mxu0
        %5647 = vmatprep.mubr.f32.mxu0 0.0
        %5648 = vmatmul.mubr.f32.gmra.mrb[0].mxu0 %v5240
        %v5649 = vpop.f32.mrb[0].mxu0
        %v5650 = vadd.f32 0.0, %v5649
        %v5651 = vpop.f32.mrb[0].mxu0
        %5652 = vmatprep.mubr.f32.mxu0 0.0
        %5653 = vmatmul.mubr.f32.gmra.mrb[0].mxu0 %v5243
        %v5654 = vpop.f32.mrb[0].mxu0
        %v5655 = vadd.f32 0.0, %v5654
        %v5656 = vpop.f32.mrb[0].mxu0
        %5657 = vmatprep.mubr.f32.mxu0 0.0
        %5658 = vmatmul.mubr.f32.gmra.mrb[0].mxu0 %v5246
        %v5659 = vpop.f32.mrb[0].mxu0
        %v5660 = vadd.f32 0.0, %v5659
        %v5661 = vpop.f32.mrb[0].mxu0
        %5662 = vmatprep.mubr.f32.mxu0 0.0
        %5663 = vmatmul.mubr.f32.gmra.mrb[0].mxu0 %v5249
        %v5664 = vpop.f32.mrb[0].mxu0
        %v5665 = vadd.f32 0.0, %v5664
        %v5666 = vpop.f32.mrb[0].mxu0
        %5667 = vmatprep.mubr.f32.mxu0 0.0
        %5668 = vmatmul.mubr.f32.gmra.mrb[0].mxu0 %v5252
        %v5669 = vpop.f32.mrb[0].mxu0
        %v5670 = vadd.f32 0.0, %v5669
        %v5671 = vpop.f32.mrb[0].mxu0
        %5672 = vmatprep.mubr.f32.mxu0 0.0
        %5673 = vmatmul.mubr.f32.gmra.mrb[0].mxu0 %v5255
        %v5674 = vpop.f32.mrb[0].mxu0
        %v5675 = vadd.f32 0.0, %v5674
        %v5676 = vpop.f32.mrb[0].mxu0
        %5677 = vmatprep.mubr.f32.mxu0 0.0
        %5678 = vmatmul.mubr.f32.gmra.mrb[0].mxu0 %v5258
        %v5679 = vpop.f32.mrb[0].mxu0
        %v5680 = vadd.f32 0.0, %v5679
        %v5681 = vpop.f32.mrb[0].mxu0
        %5682 = vmatprep.mubr.f32.mxu0 0.0
        %5683 = vmatmul.mubr.f32.gmra.mrb[0].mxu0 %v5261
        %v5684 = vpop.f32.mrb[0].mxu0
        %v5685 = vadd.f32 0.0, %v5684
        %v5686 = vpop.f32.mrb[0].mxu0
        %5687 = vmatprep.mubr.f32.mxu0 0.0
        %5688 = vmatmul.mubr.f32.gmra.mrb[0].mxu0 %v5264
        %v5689 = vpop.f32.mrb[0].mxu0
        %v5690 = vadd.f32 0.0, %v5689
        %v5691 = vpop.f32.mrb[0].mxu0
        %5692 = vmatprep.mubr.f32.mxu0 0.0
        %5693 = vmatmul.mubr.f32.gmra.mrb[0].mxu0 %v5267
        %v5694 = vpop.f32.mrb[0].mxu0
        %v5695 = vadd.f32 0.0, %v5694
        %v5696 = vpop.f32.mrb[0].mxu0
        %5697 = vmatprep.mubr.f32.mxu0 0.0
        %5698 = vmatmul.mubr.f32.gmra.mrb[0].mxu0 %v5270
        %v5699 = vpop.f32.mrb[0].mxu0
        %v5700 = vadd.f32 0.0, %v5699
        %v5701 = vpop.f32.mrb[0].mxu0
        %5702 = vmatprep.mubr.f32.mxu0 0.0
        %5703 = vmatmul.mubr.f32.gmra.mrb[0].mxu0 %v5273
        %v5704 = vpop.f32.mrb[0].mxu0
        %v5705 = vadd.f32 0.0, %v5704
        %v5706 = vpop.f32.mrb[0].mxu0
        %5707 = vmatprep.mubr.f32.mxu0 0.0
        %5708 = vmatmul.mubr.f32.gmra.mrb[0].mxu0 %v5276
        %v5709 = vpop.f32.mrb[0].mxu0
        %v5710 = vadd.f32 0.0, %v5709
        %v5711 = vpop.f32.mrb[0].mxu0
        %5712 = vmatprep.mubr.f32.mxu0 0.0
        %5713 = vmatmul.mubr.f32.gmra.mrb[0].mxu0 %v5279
        %v5714 = vpop.f32.mrb[0].mxu0
        %v5715 = vadd.f32 0.0, %v5714
        %v5716 = vpop.f32.mrb[0].mxu0
        %5717 = vmatprep.mubr.f32.mxu0 0.0
        %5718 = vmatmul.mubr.f32.gmra.mrb[0].mxu0 %v5282
        %v5719 = vpop.f32.mrb[0].mxu0
        %v5720 = vadd.f32 0.0, %v5719
        %v5721 = vpop.f32.mrb[0].mxu0
        %5722 = vmatprep.mubr.f32.mxu0 0.0
        %5723 = vmatmul.mubr.f32.gmra.mrb[0].mxu0 %v5285
        %v5724 = vpop.f32.mrb[0].mxu0
        %v5725 = vadd.f32 0.0, %v5724
        %v5726 = vpop.f32.mrb[0].mxu0
        %5727 = vmatprep.mubr.f32.mxu0 0.0
        %5728 = vmatmul.mubr.f32.gmra.mrb[0].mxu0 %v5288
        %v5729 = vpop.f32.mrb[0].mxu0
        %v5730 = vadd.f32 0.0, %v5729
        %v5731 = vpop.f32.mrb[0].mxu0
        %5732 = vmatprep.mubr.f32.mxu0 0.0
        %5733 = vmatmul.mubr.f32.gmra.mrb[0].mxu0 %v5291
        %v5734 = vpop.f32.mrb[0].mxu0
        %v5735 = vadd.f32 0.0, %v5734
        %v5736 = vpop.f32.mrb[0].mxu0
        %5737 = vmatprep.mubr.f32.mxu0 0.0
        %5738 = vmatmul.mubr.f32.gmra.mrb[0].mxu0 %v5294
        %v5739 = vpop.f32.mrb[0].mxu0
        %v5740 = vadd.f32 0.0, %v5739
        %v5741 = vpop.f32.mrb[0].mxu0
        %5742 = vmatprep.mubr.f32.mxu0 0.0
        %5743 = vmatmul.mubr.f32.gmra.mrb[0].mxu0 %v5297
        %v5744 = vpop.f32.mrb[0].mxu0
        %v5745 = vadd.f32 0.0, %v5744
        %v5746 = vpop.f32.mrb[0].mxu0
        %5747 = vmatprep.mubr.f32.mxu0 0.0
        %5748 = vmatmul.mubr.f32.gmra.mrb[0].mxu0 %v5300
        %v5749 = vpop.f32.mrb[0].mxu0
        %v5750 = vadd.f32 0.0, %v5749
        %v5751 = vpop.f32.mrb[0].mxu0
        %5752 = vmatprep.mubr.f32.mxu0 0.0
        %5753 = vmatmul.mubr.f32.gmra.mrb[0].mxu0 %v5303
        %v5754 = vpop.f32.mrb[0].mxu0
        %v5755 = vadd.f32 0.0, %v5754
        %v5756 = vpop.f32.mrb[0].mxu0
        %5757 = vmatprep.mubr.f32.mxu0 0.0
        %5758 = vmatmul.mubr.f32.gmra.mrb[0].mxu0 %v5306
        %v5759 = vpop.f32.mrb[0].mxu0
        %v5760 = vadd.f32 0.0, %v5759
        %v5761 = vpop.f32.mrb[0].mxu0
        %5762 = vmatprep.mubr.f32.mxu0 0.0
        %5763 = vmatmul.mubr.f32.gmra.mrb[0].mxu0 %v5309
        %v5764 = vpop.f32.mrb[0].mxu0
        %v5765 = vadd.f32 0.0, %v5764
        %v5766 = vpop.f32.mrb[0].mxu0
        %5767 = vmatprep.mubr.f32.mxu0 0.0
        %5768 = vmatmul.mubr.f32.gmra.mrb[0].mxu0 %v5312
        %v5769 = vpop.f32.mrb[0].mxu0
        %v5770 = vadd.f32 0.0, %v5769
        %v5771 = vpop.f32.mrb[0].mxu0
        %5772 = vmatprep.mubr.f32.mxu0 0.0
        %5773 = vmatmul.mubr.f32.gmra.mrb[0].mxu0 %v5315
        %v5774 = vpop.f32.mrb[0].mxu0
        %v5775 = vadd.f32 0.0, %v5774
        %v5776 = vpop.f32.mrb[0].mxu0
        %5777 = vmatprep.mubr.f32.mxu0 0.0
        %5778 = vmatmul.mubr.f32.gmra.mrb[0].mxu0 %v5318
        %v5779 = vpop.f32.mrb[0].mxu0
        %v5780 = vadd.f32 0.0, %v5779
        %v5781 = vpop.f32.mrb[0].mxu0
        %5782 = vmatprep.mubr.f32.mxu0 0.0
        %5783 = vmatmul.mubr.f32.gmra.mrb[0].mxu0 %v5321
        %v5784 = vpop.f32.mrb[0].mxu0
        %v5785 = vadd.f32 0.0, %v5784
        %v5786 = vpop.f32.mrb[0].mxu0
        %5787 = vmatprep.mubr.f32.mxu0 0.0
        %5788 = vmatmul.mubr.f32.gmra.mrb[0].mxu0 %v5324
        %v5789 = vpop.f32.mrb[0].mxu0
        %v5790 = vadd.f32 0.0, %v5789
        %v5791 = vpop.f32.mrb[0].mxu0
        %5792 = vmatprep.mubr.f32.mxu0 0.0
        %5793 = vmatmul.mubr.f32.gmra.mrb[0].mxu0 %v5327
        %v5794 = vpop.f32.mrb[0].mxu0
        %v5795 = vadd.f32 0.0, %v5794
        %v5796 = vpop.f32.mrb[0].mxu0
        %5797 = vmatprep.mubr.f32.mxu0 0.0
        %5798 = vmatmul.mubr.f32.gmra.mrb[0].mxu0 %v5330
        %v5799 = vpop.f32.mrb[0].mxu0
        %v5800 = vadd.f32 0.0, %v5799
        %v5801 = vpop.f32.mrb[0].mxu0
        %5802 = vmatprep.mubr.f32.mxu0 0.0
        %5803 = vmatmul.mubr.f32.gmra.mrb[0].mxu0 %v5333
        %v5804 = vpop.f32.mrb[0].mxu0
        %v5805 = vadd.f32 0.0, %v5804
        %v5806 = vpop.f32.mrb[0].mxu0
        %5807 = vmatprep.mubr.f32.mxu0 0.0
        %5808 = vmatmul.mubr.f32.gmra.mrb[0].mxu0 %v5336
        %v5809 = vpop.f32.mrb[0].mxu0
        %v5810 = vadd.f32 0.0, %v5809
        %v5811 = vpop.f32.mrb[0].mxu0
        %5812 = vmatprep.mubr.f32.mxu0 0.0
        %5813 = vmatmul.mubr.f32.gmra.mrb[0].mxu0 %v5339
        %v5814 = vpop.f32.mrb[0].mxu0
        %v5815 = vadd.f32 0.0, %v5814
        %v5816 = vpop.f32.mrb[0].mxu0
        %5817 = vmatprep.mubr.f32.mxu0 0.0
        %5818 = vmatmul.mubr.f32.gmra.mrb[0].mxu0 %v5342
        %v5819 = vpop.f32.mrb[0].mxu0
        %v5820 = vadd.f32 0.0, %v5819
        %v5821 = vpop.f32.mrb[0].mxu0
        %5822 = vmatprep.mubr.f32.mxu0 0.0
        %5823 = vmatmul.mubr.f32.gmra.mrb[0].mxu0 %v5345
        %v5824 = vpop.f32.mrb[0].mxu0
        %v5825 = vadd.f32 0.0, %v5824
        %v5826 = vpop.f32.mrb[0].mxu0
        %5827 = vmatprep.mubr.f32.mxu0 0.0
        %5828 = vmatmul.mubr.f32.gmra.mrb[0].mxu0 %v5348
        %v5829 = vpop.f32.mrb[0].mxu0
        %v5830 = vadd.f32 0.0, %v5829
        %v5831 = vpop.f32.mrb[0].mxu0
        %5832 = vmatprep.mubr.f32.mxu0 0.0
        %5833 = vmatmul.mubr.f32.gmra.mrb[0].mxu0 %v5351
        %v5834 = vpop.f32.mrb[0].mxu0
        %v5835 = vadd.f32 0.0, %v5834
        %v5836 = vpop.f32.mrb[0].mxu0
        %5837 = vmatprep.mubr.f32.mxu0 0.0
        %5838 = vmatmul.mubr.f32.gmra.mrb[0].mxu0 %v5354
        %v5839 = vpop.f32.mrb[0].mxu0
        %v5840 = vadd.f32 0.0, %v5839
        %v5841 = vpop.f32.mrb[0].mxu0
        %5842 = vmatprep.mubr.f32.mxu0 0.0
        %5843 = vmatmul.mubr.f32.gmra.mrb[0].mxu0 %v5357
        %v5844 = vpop.f32.mrb[0].mxu0
        %v5845 = vadd.f32 0.0, %v5844
        %v5846 = vpop.f32.mrb[0].mxu0
        %5847 = vmatprep.mubr.f32.mxu0 0.0
        %5848 = vmatmul.mubr.f32.gmra.mrb[0].mxu0 %v5360
        %v5849 = vpop.f32.mrb[0].mxu0
        %v5850 = vadd.f32 0.0, %v5849
        %v5851 = vpop.f32.mrb[0].mxu0
        %5852 = vmatprep.mubr.f32.mxu0 0.0
        %5853 = vmatmul.mubr.f32.gmra.mrb[0].mxu0 %v5363
        %v5854 = vpop.f32.mrb[0].mxu0
        %v5855 = vadd.f32 0.0, %v5854
        %v5856 = vpop.f32.mrb[0].mxu0
        %5857 = vmatprep.mubr.f32.mxu0 0.0
        %5858 = vmatmul.mubr.f32.gmra.mrb[0].mxu0 %v5366
        %v5859 = vpop.f32.mrb[0].mxu0
        %v5860 = vadd.f32 0.0, %v5859
        %v5861 = vpop.f32.mrb[0].mxu0
        %5862 = vmatprep.mubr.f32.mxu0 0.0
        %5863 = vmatmul.mubr.f32.gmra.mrb[0].mxu0 %v5369
        %v5864 = vpop.f32.mrb[0].mxu0
        %v5865 = vadd.f32 0.0, %v5864
        %v5866 = vpop.f32.mrb[0].mxu0
        %5867 = vmatprep.mubr.f32.mxu0 0.0
        %5868 = vmatmul.mubr.f32.gmra.mrb[0].mxu0 %v5372
        %v5869 = vpop.f32.mrb[0].mxu0
        %v5870 = vadd.f32 0.0, %v5869
        %v5871 = vpop.f32.mrb[0].mxu0
        %5872 = vmatprep.mubr.f32.mxu0 0.0
        %5873 = vmatmul.mubr.f32.gmra.mrb[0].mxu0 %v5375
        %v5874 = vpop.f32.mrb[0].mxu0
        %v5875 = vadd.f32 0.0, %v5874
        %v5876 = vpop.f32.mrb[0].mxu0
        %5877 = vmatprep.mubr.f32.mxu0 0.0
        %5878 = vmatmul.mubr.f32.gmra.mrb[0].mxu0 %v5378
        %v5879 = vpop.f32.mrb[0].mxu0
        %v5880 = vadd.f32 0.0, %v5879
        %v5881 = vpop.f32.mrb[0].mxu0
        %5882 = vmatprep.mubr.f32.mxu0 0.0
        %5883 = vmatmul.mubr.f32.gmra.mrb[0].mxu0 %v5381
        %v5884 = vpop.f32.mrb[0].mxu0
        %v5885 = vadd.f32 0.0, %v5884
        %v5886 = vpop.f32.mrb[0].mxu0
        %5887 = vmatprep.mubr.f32.mxu0 0.0
        %5888 = vmatmul.mubr.f32.gmra.mrb[0].mxu0 %v5384
        %v5889 = vpop.f32.mrb[0].mxu0
        %v5890 = vadd.f32 0.0, %v5889
        %v5891 = vpop.f32.mrb[0].mxu0
        %5892 = vmatprep.mubr.f32.mxu0 0.0
        %5893 = vmatmul.mubr.f32.gmra.mrb[0].mxu0 %v5387
        %v5894 = vpop.f32.mrb[0].mxu0
        %v5895 = vadd.f32 0.0, %v5894
        %v5896 = vpop.f32.mrb[0].mxu0
        %5897 = vmatprep.mubr.f32.mxu0 0.0
        %5898 = vmatmul.mubr.f32.gmra.mrb[0].mxu0 %v5390
        %v5899 = vpop.f32.mrb[0].mxu0
        %v5900 = vadd.f32 0.0, %v5899
        %v5901 = vpop.f32.mrb[0].mxu0
        %5902 = vmatprep.mubr.f32.mxu0 0.0
        %5903 = vmatmul.mubr.f32.gmra.mrb[0].mxu0 %v5393
        %v5904 = vpop.f32.mrb[0].mxu0
        %v5905 = vadd.f32 0.0, %v5904
        %v5906 = vpop.f32.mrb[0].mxu0
        %5907 = vmatprep.mubr.f32.mxu0 0.0
        %5908 = vmatmul.mubr.f32.gmra.mrb[0].mxu0 %v5396
        %v5909 = vpop.f32.mrb[0].mxu0
        %v5910 = vadd.f32 0.0, %v5909
        %v5911 = vpop.f32.mrb[0].mxu0
        %5912 = vmatprep.mubr.f32.mxu0 0.0
        %5913 = vmatmul.mubr.f32.gmra.mrb[0].mxu0 %v5399
        %v5914 = vpop.f32.mrb[0].mxu0
        %v5915 = vadd.f32 0.0, %v5914
        %v5916 = vpop.f32.mrb[0].mxu0
        %5917 = vmatprep.mubr.f32.mxu0 0.0
        %5918 = vmatmul.mubr.f32.gmra.mrb[0].mxu0 %v5402
        %v5919 = vpop.f32.mrb[0].mxu0
        %v5920 = vadd.f32 0.0, %v5919
        %v5921 = vpop.f32.mrb[0].mxu0
        %5922 = vmatprep.mubr.f32.mxu0 0.0
        %5923 = vmatmul.mubr.f32.gmra.mrb[0].mxu0 %v5405
        %v5924 = vpop.f32.mrb[0].mxu0
        %v5925 = vadd.f32 0.0, %v5924
        %v5926 = vpop.f32.mrb[0].mxu0
        %5927 = vmatprep.mubr.f32.mxu0 0.0
        %5928 = vmatmul.mubr.f32.gmra.mrb[0].mxu0 %v5408
        %v5929 = vpop.f32.mrb[0].mxu0
        %v5930 = vadd.f32 0.0, %v5929
        %v5931 = vpop.f32.mrb[0].mxu0
        %5932 = vmatprep.mubr.f32.mxu0 0.0
        %5933 = vmatmul.mubr.f32.gmra.mrb[0].mxu0 %v5411
        %v5934 = vpop.f32.mrb[0].mxu0
        %v5935 = vadd.f32 0.0, %v5934
        %v5936 = vpop.f32.mrb[0].mxu0
        %5937 = vmatprep.mubr.f32.mxu0 0.0
        %5938 = vmatmul.mubr.f32.gmra.mrb[0].mxu0 %v5414
        %v5939 = vpop.f32.mrb[0].mxu0
        %v5940 = vadd.f32 0.0, %v5939
        %v5941 = vpop.f32.mrb[0].mxu0
        %5942 = vmatprep.mubr.f32.mxu0 0.0
        %5943 = vmatmul.mubr.f32.gmra.mrb[0].mxu0 %v5417
        %v5944 = vpop.f32.mrb[0].mxu0
        %v5945 = vadd.f32 0.0, %v5944
        %v5946 = vpop.f32.mrb[0].mxu0
        %5947 = vmatprep.mubr.f32.mxu0 0.0
        %5948 = vmatmul.mubr.f32.gmra.mrb[0].mxu0 %v5420
        %v5949 = vpop.f32.mrb[0].mxu0
        %v5950 = vadd.f32 0.0, %v5949
        %v5951 = vpop.f32.mrb[0].mxu0
        %5952 = vmatprep.mubr.f32.mxu0 0.0
        %5953 = vmatmul.mubr.f32.gmra.mrb[0].mxu0 %v5423
        %v5954 = vpop.f32.mrb[0].mxu0
        %v5955 = vadd.f32 0.0, %v5954
        %v5956 = vpop.f32.mrb[0].mxu0
        %5957 = vmatprep.mubr.f32.mxu0 0.0
        %5958 = vmatmul.mubr.f32.gmra.mrb[0].mxu0 %v5426
        %v5959 = vpop.f32.mrb[0].mxu0
        %v5960 = vadd.f32 0.0, %v5959
        %v5961 = vpop.f32.mrb[0].mxu0
        %5962 = vmatprep.mubr.f32.mxu0 0.0
        %5963 = vmatmul.mubr.f32.gmra.mrb[0].mxu0 %v5429
        %v5964 = vpop.f32.mrb[0].mxu0
        %v5965 = vadd.f32 0.0, %v5964
        %v5966 = vpop.f32.mrb[0].mxu0
        %5967 = vmatprep.mubr.f32.mxu0 0.0
        %5968 = vmatmul.mubr.f32.gmra.mrb[0].mxu0 %v5432
        %v5969 = vpop.f32.mrb[0].mxu0
        %v5970 = vadd.f32 0.0, %v5969
        %v5971 = vpop.f32.mrb[0].mxu0
        %5972 = vmatprep.mubr.f32.mxu0 0.0
        %5973 = vmatmul.mubr.f32.gmra.mrb[0].mxu0 %v5435
        %v5974 = vpop.f32.mrb[0].mxu0
        %v5975 = vadd.f32 0.0, %v5974
        %v5976 = vpop.f32.mrb[0].mxu0
        %5977 = vmatprep.mubr.f32.mxu0 0.0
        %5978 = vmatmul.mubr.f32.gmra.mrb[0].mxu0 %v5438
        %v5979 = vpop.f32.mrb[0].mxu0
        %v5980 = vadd.f32 0.0, %v5979
        %v5981 = vpop.f32.mrb[0].mxu0
        %5982 = vmatprep.mubr.f32.mxu0 0.0
        %5983 = vmatmul.mubr.f32.gmra.mrb[0].mxu0 %v5441
        %v5984 = vpop.f32.mrb[0].mxu0
        %v5985 = vadd.f32 0.0, %v5984
        %v5986 = vpop.f32.mrb[0].mxu0
        %5987 = vdwg.mxu0
        %v5990 = vunpack.c.l.b16 %v5151
        %v5991 = vunpack.c.l.b16 %v5152
        %v5992 = vpack.c.b16 %v5991, %v5990
        %v5995 = vsel %vm774, %v5103, 0
        %v5998 = vsel %vm774, %v5104, 0
        %v6001 = vsel %vm774, %v5105, 0
        %v6004 = vsel %vm774, %v5106, 0
        %v6007 = vsel %vm774, %v5107, 0
        %v6010 = vsel %vm774, %v5108, 0
        %v6013 = vsel %vm774, %v5109, 0
        %v6016 = vsel %vm774, %v5110, 0
        %v6019 = vsel %vm774, %v5111, 0
        %v6022 = vsel %vm774, %v5112, 0
        %v6025 = vsel %vm774, %v5113, 0
        %v6028 = vsel %vm774, %v5114, 0
        %v6031 = vsel %vm774, %v5115, 0
        %v6034 = vsel %vm774, %v5116, 0
        %v6037 = vsel %vm774, %v5117, 0
        %v6040 = vsel %vm774, %v5118, 0
        %v6043 = vsel %vm774, %v5119, 0
        %v6046 = vsel %vm774, %v5120, 0
        %v6049 = vsel %vm774, %v5121, 0
        %v6052 = vsel %vm774, %v5122, 0
        %v6055 = vsel %vm774, %v5123, 0
        %v6058 = vsel %vm774, %v5124, 0
        %v6061 = vsel %vm774, %v5125, 0
        %v6064 = vsel %vm774, %v5126, 0
        %v6067 = vsel %vm774, %v5127, 0
        %v6070 = vsel %vm774, %v5128, 0
        %v6073 = vsel %vm774, %v5129, 0
        %v6076 = vsel %vm774, %v5130, 0
        %v6079 = vsel %vm774, %v5131, 0
        %v6082 = vsel %vm774, %v5132, 0
        %v6085 = vsel %vm774, %v5133, 0
        %v6088 = vsel %vm774, %v5134, 0
        %v6091 = vsel %vm774, %v5135, 0
        %v6094 = vsel %vm774, %v5136, 0
        %v6097 = vsel %vm774, %v5137, 0
        %v6100 = vsel %vm774, %v5138, 0
        %v6103 = vsel %vm774, %v5139, 0
        %v6106 = vsel %vm774, %v5140, 0
        %v6109 = vsel %vm774, %v5141, 0
        %v6112 = vsel %vm774, %v5142, 0
        %v6115 = vsel %vm774, %v5143, 0
        %v6118 = vsel %vm774, %v5144, 0
        %v6121 = vsel %vm774, %v5145, 0
        %v6124 = vsel %vm774, %v5146, 0
        %v6127 = vsel %vm774, %v5147, 0
        %v6130 = vsel %vm774, %v5148, 0
        %v6133 = vsel %vm774, %v5149, 0
        %v6136 = vsel %vm774, %v5150, 0
        %6138 = vmatprep.subr.bf16.mxu0 0
        %6139 = vmatpush1.bf16.msra.mxu0 %v5992
        %6140 = vmatprep.subr.bf16.mxu0 0
        %6141 = vmatpush1.bf16.msra.mxu0 0
        %6142 = vmatprep.subr.bf16.mxu0 0
        %6143 = vmatpush1.bf16.msra.mxu0 0
        %6144 = vmatprep.subr.bf16.mxu0 0
        %6145 = vmatpush1.bf16.msra.mxu0 0
        %6146 = vmatprep.subr.bf16.mxu0 0
        %6147 = vmatpush1.bf16.msra.mxu0 0
        %6148 = vmatprep.subr.bf16.mxu0 0
        %6149 = vmatpush1.bf16.msra.mxu0 0
        %6150 = vmatprep.subr.bf16.mxu0 0
        %6151 = vmatpush1.bf16.msra.mxu0 0
        %6152 = vmatprep.subr.bf16.mxu0 0
        %6153 = vmatpush1.bf16.msra.mxu0 0
        %6154 = vmatprep.subr.bf16.mxu0 0
        %6155 = vmatpush1.bf16.msra.mxu0 0
        %6156 = vmatprep.subr.bf16.mxu0 0
        %6157 = vmatpush1.bf16.msra.mxu0 0
        %6158 = vmatprep.subr.bf16.mxu0 0
        %6159 = vmatpush1.bf16.msra.mxu0 0
        %6160 = vmatprep.subr.bf16.mxu0 0
        %6161 = vmatpush1.bf16.msra.mxu0 0
        %6162 = vmatprep.subr.bf16.mxu0 0
        %6163 = vmatpush1.bf16.msra.mxu0 0
        %6164 = vmatprep.subr.bf16.mxu0 0
        %6165 = vmatpush1.bf16.msra.mxu0 0
        %6166 = vmatprep.subr.bf16.mxu0 0
        %6167 = vmatpush1.bf16.msra.mxu0 0
        %6168 = vmatprep.subr.bf16.mxu0 0
        %6169 = vmatpush1.bf16.msra.mxu0 0
        %6170 = vmatprep.mubr.bf16.mxu0 0
        %6171 = vmatmul.mubr.bf16.gmra.mrb[0].mxu0 %v5995
        %v6172 = vpop.f32.mrb[0].mxu0
        %v6173 = vadd.f32 %v5510, %v6172
        %v6174 = vpop.f32.mrb[0].mxu0
        %v6175 = vpop.f32.mrb[0].mxu0
        %v6176 = vadd.f32 %v5515, %v6175
        %v6177 = vpop.f32.mrb[0].mxu0
        %6178 = vmatprep.mubr.bf16.mxu0 0
        %6179 = vmatmul.mubr.bf16.gmra.mrb[0].mxu0 %v5998
        %v6180 = vpop.f32.mrb[0].mxu0
        %v6181 = vadd.f32 %v5520, %v6180
        %v6182 = vpop.f32.mrb[0].mxu0
        %v6183 = vpop.f32.mrb[0].mxu0
        %v6184 = vadd.f32 %v5525, %v6183
        %v6185 = vpop.f32.mrb[0].mxu0
        %6186 = vmatprep.mubr.bf16.mxu0 0
        %6187 = vmatmul.mubr.bf16.gmra.mrb[0].mxu0 %v6001
        %v6188 = vpop.f32.mrb[0].mxu0
        %v6189 = vadd.f32 %v5530, %v6188
        %v6190 = vpop.f32.mrb[0].mxu0
        %v6191 = vpop.f32.mrb[0].mxu0
        %v6192 = vadd.f32 %v5535, %v6191
        %v6193 = vpop.f32.mrb[0].mxu0
        %6194 = vmatprep.mubr.bf16.mxu0 0
        %6195 = vmatmul.mubr.bf16.gmra.mrb[0].mxu0 %v6004
        %v6196 = vpop.f32.mrb[0].mxu0
        %v6197 = vadd.f32 %v5540, %v6196
        %v6198 = vpop.f32.mrb[0].mxu0
        %v6199 = vpop.f32.mrb[0].mxu0
        %v6200 = vadd.f32 %v5545, %v6199
        %v6201 = vpop.f32.mrb[0].mxu0
        %6202 = vmatprep.mubr.bf16.mxu0 0
        %6203 = vmatmul.mubr.bf16.gmra.mrb[0].mxu0 %v6007
        %v6204 = vpop.f32.mrb[0].mxu0
        %v6205 = vadd.f32 %v5550, %v6204
        %v6206 = vpop.f32.mrb[0].mxu0
        %v6207 = vpop.f32.mrb[0].mxu0
        %v6208 = vadd.f32 %v5555, %v6207
        %v6209 = vpop.f32.mrb[0].mxu0
        %6210 = vmatprep.mubr.bf16.mxu0 0
        %6211 = vmatmul.mubr.bf16.gmra.mrb[0].mxu0 %v6010
        %v6212 = vpop.f32.mrb[0].mxu0
        %v6213 = vadd.f32 %v5560, %v6212
        %v6214 = vpop.f32.mrb[0].mxu0
        %v6215 = vpop.f32.mrb[0].mxu0
        %v6216 = vadd.f32 %v5565, %v6215
        %v6217 = vpop.f32.mrb[0].mxu0
        %6218 = vmatprep.mubr.bf16.mxu0 0
        %6219 = vmatmul.mubr.bf16.gmra.mrb[0].mxu0 %v6013
        %v6220 = vpop.f32.mrb[0].mxu0
        %v6221 = vadd.f32 %v5570, %v6220
        %v6222 = vpop.f32.mrb[0].mxu0
        %v6223 = vpop.f32.mrb[0].mxu0
        %v6224 = vadd.f32 %v5575, %v6223
        %v6225 = vpop.f32.mrb[0].mxu0
        %6226 = vmatprep.mubr.bf16.mxu0 0
        %6227 = vmatmul.mubr.bf16.gmra.mrb[0].mxu0 %v6016
        %v6228 = vpop.f32.mrb[0].mxu0
        %v6229 = vadd.f32 %v5580, %v6228
        %v6230 = vpop.f32.mrb[0].mxu0
        %v6231 = vpop.f32.mrb[0].mxu0
        %v6232 = vadd.f32 %v5585, %v6231
        %v6233 = vpop.f32.mrb[0].mxu0
        %6234 = vmatprep.mubr.bf16.mxu0 0
        %6235 = vmatmul.mubr.bf16.gmra.mrb[0].mxu0 %v6019
        %v6236 = vpop.f32.mrb[0].mxu0
        %v6237 = vadd.f32 %v5590, %v6236
        %v6238 = vpop.f32.mrb[0].mxu0
        %v6239 = vpop.f32.mrb[0].mxu0
        %v6240 = vadd.f32 %v5595, %v6239
        %v6241 = vpop.f32.mrb[0].mxu0
        %6242 = vmatprep.mubr.bf16.mxu0 0
        %6243 = vmatmul.mubr.bf16.gmra.mrb[0].mxu0 %v6022
        %v6244 = vpop.f32.mrb[0].mxu0
        %v6245 = vadd.f32 %v5600, %v6244
        %v6246 = vpop.f32.mrb[0].mxu0
        %v6247 = vpop.f32.mrb[0].mxu0
        %v6248 = vadd.f32 %v5605, %v6247
        %v6249 = vpop.f32.mrb[0].mxu0
        %6250 = vmatprep.mubr.bf16.mxu0 0
        %6251 = vmatmul.mubr.bf16.gmra.mrb[0].mxu0 %v6025
        %v6252 = vpop.f32.mrb[0].mxu0
        %v6253 = vadd.f32 %v5610, %v6252
        %v6254 = vpop.f32.mrb[0].mxu0
        %v6255 = vpop.f32.mrb[0].mxu0
        %v6256 = vadd.f32 %v5615, %v6255
        %v6257 = vpop.f32.mrb[0].mxu0
        %6258 = vmatprep.mubr.bf16.mxu0 0
        %6259 = vmatmul.mubr.bf16.gmra.mrb[0].mxu0 %v6028
        %v6260 = vpop.f32.mrb[0].mxu0
        %v6261 = vadd.f32 %v5620, %v6260
        %v6262 = vpop.f32.mrb[0].mxu0
        %v6263 = vpop.f32.mrb[0].mxu0
        %v6264 = vadd.f32 %v5625, %v6263
        %v6265 = vpop.f32.mrb[0].mxu0
        %6266 = vmatprep.mubr.bf16.mxu0 0
        %6267 = vmatmul.mubr.bf16.gmra.mrb[0].mxu0 %v6031
        %v6268 = vpop.f32.mrb[0].mxu0
        %v6269 = vadd.f32 %v5630, %v6268
        %v6270 = vpop.f32.mrb[0].mxu0
        %v6271 = vpop.f32.mrb[0].mxu0
        %v6272 = vadd.f32 %v5635, %v6271
        %v6273 = vpop.f32.mrb[0].mxu0
        %6274 = vmatprep.mubr.bf16.mxu0 0
        %6275 = vmatmul.mubr.bf16.gmra.mrb[0].mxu0 %v6034
        %v6276 = vpop.f32.mrb[0].mxu0
        %v6277 = vadd.f32 %v5640, %v6276
        %v6278 = vpop.f32.mrb[0].mxu0
        %v6279 = vpop.f32.mrb[0].mxu0
        %v6280 = vadd.f32 %v5645, %v6279
        %v6281 = vpop.f32.mrb[0].mxu0
        %6282 = vmatprep.mubr.bf16.mxu0 0
        %6283 = vmatmul.mubr.bf16.gmra.mrb[0].mxu0 %v6037
        %v6284 = vpop.f32.mrb[0].mxu0
        %v6285 = vadd.f32 %v5650, %v6284
        %v6286 = vpop.f32.mrb[0].mxu0
        %v6287 = vpop.f32.mrb[0].mxu0
        %v6288 = vadd.f32 %v5655, %v6287
        %v6289 = vpop.f32.mrb[0].mxu0
        %6290 = vmatprep.mubr.bf16.mxu0 0
        %6291 = vmatmul.mubr.bf16.gmra.mrb[0].mxu0 %v6040
        %v6292 = vpop.f32.mrb[0].mxu0
        %v6293 = vadd.f32 %v5660, %v6292
        %v6294 = vpop.f32.mrb[0].mxu0
        %v6295 = vpop.f32.mrb[0].mxu0
        %v6296 = vadd.f32 %v5665, %v6295
        %v6297 = vpop.f32.mrb[0].mxu0
        %6298 = vmatprep.mubr.bf16.mxu0 0
        %6299 = vmatmul.mubr.bf16.gmra.mrb[0].mxu0 %v6043
        %v6300 = vpop.f32.mrb[0].mxu0
        %v6301 = vadd.f32 %v5670, %v6300
        %v6302 = vpop.f32.mrb[0].mxu0
        %v6303 = vpop.f32.mrb[0].mxu0
        %v6304 = vadd.f32 %v5675, %v6303
        %v6305 = vpop.f32.mrb[0].mxu0
        %6306 = vmatprep.mubr.bf16.mxu0 0
        %6307 = vmatmul.mubr.bf16.gmra.mrb[0].mxu0 %v6046
        %v6308 = vpop.f32.mrb[0].mxu0
        %v6309 = vadd.f32 %v5680, %v6308
        %v6310 = vpop.f32.mrb[0].mxu0
        %v6311 = vpop.f32.mrb[0].mxu0
        %v6312 = vadd.f32 %v5685, %v6311
        %v6313 = vpop.f32.mrb[0].mxu0
        %6314 = vmatprep.mubr.bf16.mxu0 0
        %6315 = vmatmul.mubr.bf16.gmra.mrb[0].mxu0 %v6049
        %v6316 = vpop.f32.mrb[0].mxu0
        %v6317 = vadd.f32 %v5690, %v6316
        %v6318 = vpop.f32.mrb[0].mxu0
        %v6319 = vpop.f32.mrb[0].mxu0
        %v6320 = vadd.f32 %v5695, %v6319
        %v6321 = vpop.f32.mrb[0].mxu0
        %6322 = vmatprep.mubr.bf16.mxu0 0
        %6323 = vmatmul.mubr.bf16.gmra.mrb[0].mxu0 %v6052
        %v6324 = vpop.f32.mrb[0].mxu0
        %v6325 = vadd.f32 %v5700, %v6324
        %v6326 = vpop.f32.mrb[0].mxu0
        %v6327 = vpop.f32.mrb[0].mxu0
        %v6328 = vadd.f32 %v5705, %v6327
        %v6329 = vpop.f32.mrb[0].mxu0
        %6330 = vmatprep.mubr.bf16.mxu0 0
        %6331 = vmatmul.mubr.bf16.gmra.mrb[0].mxu0 %v6055
        %v6332 = vpop.f32.mrb[0].mxu0
        %v6333 = vadd.f32 %v5710, %v6332
        %v6334 = vpop.f32.mrb[0].mxu0
        %v6335 = vpop.f32.mrb[0].mxu0
        %v6336 = vadd.f32 %v5715, %v6335
        %v6337 = vpop.f32.mrb[0].mxu0
        %6338 = vmatprep.mubr.bf16.mxu0 0
        %6339 = vmatmul.mubr.bf16.gmra.mrb[0].mxu0 %v6058
        %v6340 = vpop.f32.mrb[0].mxu0
        %v6341 = vadd.f32 %v5720, %v6340
        %v6342 = vpop.f32.mrb[0].mxu0
        %v6343 = vpop.f32.mrb[0].mxu0
        %v6344 = vadd.f32 %v5725, %v6343
        %v6345 = vpop.f32.mrb[0].mxu0
        %6346 = vmatprep.mubr.bf16.mxu0 0
        %6347 = vmatmul.mubr.bf16.gmra.mrb[0].mxu0 %v6061
        %v6348 = vpop.f32.mrb[0].mxu0
        %v6349 = vadd.f32 %v5730, %v6348
        %v6350 = vpop.f32.mrb[0].mxu0
        %v6351 = vpop.f32.mrb[0].mxu0
        %v6352 = vadd.f32 %v5735, %v6351
        %v6353 = vpop.f32.mrb[0].mxu0
        %6354 = vmatprep.mubr.bf16.mxu0 0
        %6355 = vmatmul.mubr.bf16.gmra.mrb[0].mxu0 %v6064
        %v6356 = vpop.f32.mrb[0].mxu0
        %v6357 = vadd.f32 %v5740, %v6356
        %v6358 = vpop.f32.mrb[0].mxu0
        %v6359 = vpop.f32.mrb[0].mxu0
        %v6360 = vadd.f32 %v5745, %v6359
        %v6361 = vpop.f32.mrb[0].mxu0
        %6362 = vmatprep.mubr.bf16.mxu0 0
        %6363 = vmatmul.mubr.bf16.gmra.mrb[0].mxu0 %v6067
        %v6364 = vpop.f32.mrb[0].mxu0
        %v6365 = vadd.f32 %v5750, %v6364
        %v6366 = vpop.f32.mrb[0].mxu0
        %v6367 = vpop.f32.mrb[0].mxu0
        %v6368 = vadd.f32 %v5755, %v6367
        %v6369 = vpop.f32.mrb[0].mxu0
        %6370 = vmatprep.mubr.bf16.mxu0 0
        %6371 = vmatmul.mubr.bf16.gmra.mrb[0].mxu0 %v6070
        %v6372 = vpop.f32.mrb[0].mxu0
        %v6373 = vadd.f32 %v5760, %v6372
        %v6374 = vpop.f32.mrb[0].mxu0
        %v6375 = vpop.f32.mrb[0].mxu0
        %v6376 = vadd.f32 %v5765, %v6375
        %v6377 = vpop.f32.mrb[0].mxu0
        %6378 = vmatprep.mubr.bf16.mxu0 0
        %6379 = vmatmul.mubr.bf16.gmra.mrb[0].mxu0 %v6073
        %v6380 = vpop.f32.mrb[0].mxu0
        %v6381 = vadd.f32 %v5770, %v6380
        %v6382 = vpop.f32.mrb[0].mxu0
        %v6383 = vpop.f32.mrb[0].mxu0
        %v6384 = vadd.f32 %v5775, %v6383
        %v6385 = vpop.f32.mrb[0].mxu0
        %6386 = vmatprep.mubr.bf16.mxu0 0
        %6387 = vmatmul.mubr.bf16.gmra.mrb[0].mxu0 %v6076
        %v6388 = vpop.f32.mrb[0].mxu0
        %v6389 = vadd.f32 %v5780, %v6388
        %v6390 = vpop.f32.mrb[0].mxu0
        %v6391 = vpop.f32.mrb[0].mxu0
        %v6392 = vadd.f32 %v5785, %v6391
        %v6393 = vpop.f32.mrb[0].mxu0
        %6394 = vmatprep.mubr.bf16.mxu0 0
        %6395 = vmatmul.mubr.bf16.gmra.mrb[0].mxu0 %v6079
        %v6396 = vpop.f32.mrb[0].mxu0
        %v6397 = vadd.f32 %v5790, %v6396
        %v6398 = vpop.f32.mrb[0].mxu0
        %v6399 = vpop.f32.mrb[0].mxu0
        %v6400 = vadd.f32 %v5795, %v6399
        %v6401 = vpop.f32.mrb[0].mxu0
        %6402 = vmatprep.mubr.bf16.mxu0 0
        %6403 = vmatmul.mubr.bf16.gmra.mrb[0].mxu0 %v6082
        %v6404 = vpop.f32.mrb[0].mxu0
        %v6405 = vadd.f32 %v5800, %v6404
        %v6406 = vpop.f32.mrb[0].mxu0
        %v6407 = vpop.f32.mrb[0].mxu0
        %v6408 = vadd.f32 %v5805, %v6407
        %v6409 = vpop.f32.mrb[0].mxu0
        %6410 = vmatprep.mubr.bf16.mxu0 0
        %6411 = vmatmul.mubr.bf16.gmra.mrb[0].mxu0 %v6085
        %v6412 = vpop.f32.mrb[0].mxu0
        %v6413 = vadd.f32 %v5810, %v6412
        %v6414 = vpop.f32.mrb[0].mxu0
        %v6415 = vpop.f32.mrb[0].mxu0
        %v6416 = vadd.f32 %v5815, %v6415
        %v6417 = vpop.f32.mrb[0].mxu0
        %6418 = vmatprep.mubr.bf16.mxu0 0
        %6419 = vmatmul.mubr.bf16.gmra.mrb[0].mxu0 %v6088
        %v6420 = vpop.f32.mrb[0].mxu0
        %v6421 = vadd.f32 %v5820, %v6420
        %v6422 = vpop.f32.mrb[0].mxu0
        %v6423 = vpop.f32.mrb[0].mxu0
        %v6424 = vadd.f32 %v5825, %v6423
        %v6425 = vpop.f32.mrb[0].mxu0
        %6426 = vmatprep.mubr.bf16.mxu0 0
        %6427 = vmatmul.mubr.bf16.gmra.mrb[0].mxu0 %v6091
        %v6428 = vpop.f32.mrb[0].mxu0
        %v6429 = vadd.f32 %v5830, %v6428
        %v6430 = vpop.f32.mrb[0].mxu0
        %v6431 = vpop.f32.mrb[0].mxu0
        %v6432 = vadd.f32 %v5835, %v6431
        %v6433 = vpop.f32.mrb[0].mxu0
        %6434 = vmatprep.mubr.bf16.mxu0 0
        %6435 = vmatmul.mubr.bf16.gmra.mrb[0].mxu0 %v6094
        %v6436 = vpop.f32.mrb[0].mxu0
        %v6437 = vadd.f32 %v5840, %v6436
        %v6438 = vpop.f32.mrb[0].mxu0
        %v6439 = vpop.f32.mrb[0].mxu0
        %v6440 = vadd.f32 %v5845, %v6439
        %v6441 = vpop.f32.mrb[0].mxu0
        %6442 = vmatprep.mubr.bf16.mxu0 0
        %6443 = vmatmul.mubr.bf16.gmra.mrb[0].mxu0 %v6097
        %v6444 = vpop.f32.mrb[0].mxu0
        %v6445 = vadd.f32 %v5850, %v6444
        %v6446 = vpop.f32.mrb[0].mxu0
        %v6447 = vpop.f32.mrb[0].mxu0
        %v6448 = vadd.f32 %v5855, %v6447
        %v6449 = vpop.f32.mrb[0].mxu0
        %6450 = vmatprep.mubr.bf16.mxu0 0
        %6451 = vmatmul.mubr.bf16.gmra.mrb[0].mxu0 %v6100
        %v6452 = vpop.f32.mrb[0].mxu0
        %v6453 = vadd.f32 %v5860, %v6452
        %v6454 = vpop.f32.mrb[0].mxu0
        %v6455 = vpop.f32.mrb[0].mxu0
        %v6456 = vadd.f32 %v5865, %v6455
        %v6457 = vpop.f32.mrb[0].mxu0
        %6458 = vmatprep.mubr.bf16.mxu0 0
        %6459 = vmatmul.mubr.bf16.gmra.mrb[0].mxu0 %v6103
        %v6460 = vpop.f32.mrb[0].mxu0
        %v6461 = vadd.f32 %v5870, %v6460
        %v6462 = vpop.f32.mrb[0].mxu0
        %v6463 = vpop.f32.mrb[0].mxu0
        %v6464 = vadd.f32 %v5875, %v6463
        %v6465 = vpop.f32.mrb[0].mxu0
        %6466 = vmatprep.mubr.bf16.mxu0 0
        %6467 = vmatmul.mubr.bf16.gmra.mrb[0].mxu0 %v6106
        %v6468 = vpop.f32.mrb[0].mxu0
        %v6469 = vadd.f32 %v5880, %v6468
        %v6470 = vpop.f32.mrb[0].mxu0
        %v6471 = vpop.f32.mrb[0].mxu0
        %v6472 = vadd.f32 %v5885, %v6471
        %v6473 = vpop.f32.mrb[0].mxu0
        %6474 = vmatprep.mubr.bf16.mxu0 0
        %6475 = vmatmul.mubr.bf16.gmra.mrb[0].mxu0 %v6109
        %v6476 = vpop.f32.mrb[0].mxu0
        %v6477 = vadd.f32 %v5890, %v6476
        %v6478 = vpop.f32.mrb[0].mxu0
        %v6479 = vpop.f32.mrb[0].mxu0
        %v6480 = vadd.f32 %v5895, %v6479
        %v6481 = vpop.f32.mrb[0].mxu0
        %6482 = vmatprep.mubr.bf16.mxu0 0
        %6483 = vmatmul.mubr.bf16.gmra.mrb[0].mxu0 %v6112
        %v6484 = vpop.f32.mrb[0].mxu0
        %v6485 = vadd.f32 %v5900, %v6484
        %v6486 = vpop.f32.mrb[0].mxu0
        %v6487 = vpop.f32.mrb[0].mxu0
        %v6488 = vadd.f32 %v5905, %v6487
        %v6489 = vpop.f32.mrb[0].mxu0
        %6490 = vmatprep.mubr.bf16.mxu0 0
        %6491 = vmatmul.mubr.bf16.gmra.mrb[0].mxu0 %v6115
        %v6492 = vpop.f32.mrb[0].mxu0
        %v6493 = vadd.f32 %v5910, %v6492
        %v6494 = vpop.f32.mrb[0].mxu0
        %v6495 = vpop.f32.mrb[0].mxu0
        %v6496 = vadd.f32 %v5915, %v6495
        %v6497 = vpop.f32.mrb[0].mxu0
        %6498 = vmatprep.mubr.bf16.mxu0 0
        %6499 = vmatmul.mubr.bf16.gmra.mrb[0].mxu0 %v6118
        %v6500 = vpop.f32.mrb[0].mxu0
        %v6501 = vadd.f32 %v5920, %v6500
        %v6502 = vpop.f32.mrb[0].mxu0
        %v6503 = vpop.f32.mrb[0].mxu0
        %v6504 = vadd.f32 %v5925, %v6503
        %v6505 = vpop.f32.mrb[0].mxu0
        %6506 = vmatprep.mubr.bf16.mxu0 0
        %6507 = vmatmul.mubr.bf16.gmra.mrb[0].mxu0 %v6121
        %v6508 = vpop.f32.mrb[0].mxu0
        %v6509 = vadd.f32 %v5930, %v6508
        %v6510 = vpop.f32.mrb[0].mxu0
        %v6511 = vpop.f32.mrb[0].mxu0
        %v6512 = vadd.f32 %v5935, %v6511
        %v6513 = vpop.f32.mrb[0].mxu0
        %6514 = vmatprep.mubr.bf16.mxu0 0
        %6515 = vmatmul.mubr.bf16.gmra.mrb[0].mxu0 %v6124
        %v6516 = vpop.f32.mrb[0].mxu0
        %v6517 = vadd.f32 %v5940, %v6516
        %v6518 = vpop.f32.mrb[0].mxu0
        %v6519 = vpop.f32.mrb[0].mxu0
        %v6520 = vadd.f32 %v5945, %v6519
        %v6521 = vpop.f32.mrb[0].mxu0
        %6522 = vmatprep.mubr.bf16.mxu0 0
        %6523 = vmatmul.mubr.bf16.gmra.mrb[0].mxu0 %v6127
        %v6524 = vpop.f32.mrb[0].mxu0
        %v6525 = vadd.f32 %v5950, %v6524
        %v6526 = vpop.f32.mrb[0].mxu0
        %v6527 = vpop.f32.mrb[0].mxu0
        %v6528 = vadd.f32 %v5955, %v6527
        %v6529 = vpop.f32.mrb[0].mxu0
        %6530 = vmatprep.mubr.bf16.mxu0 0
        %6531 = vmatmul.mubr.bf16.gmra.mrb[0].mxu0 %v6130
        %v6532 = vpop.f32.mrb[0].mxu0
        %v6533 = vadd.f32 %v5960, %v6532
        %v6534 = vpop.f32.mrb[0].mxu0
        %v6535 = vpop.f32.mrb[0].mxu0
        %v6536 = vadd.f32 %v5965, %v6535
        %v6537 = vpop.f32.mrb[0].mxu0
        %6538 = vmatprep.mubr.bf16.mxu0 0
        %6539 = vmatmul.mubr.bf16.gmra.mrb[0].mxu0 %v6133
        %v6540 = vpop.f32.mrb[0].mxu0
        %v6541 = vadd.f32 %v5970, %v6540
        %v6542 = vpop.f32.mrb[0].mxu0
        %v6543 = vpop.f32.mrb[0].mxu0
        %v6544 = vadd.f32 %v5975, %v6543
        %v6545 = vpop.f32.mrb[0].mxu0
        %6546 = vmatprep.mubr.bf16.mxu0 0
        %6547 = vmatmul.mubr.bf16.gmra.mrb[0].mxu0 %v6136
        %v6548 = vpop.f32.mrb[0].mxu0
        %v6549 = vadd.f32 %v5980, %v6548
        %v6550 = vpop.f32.mrb[0].mxu0
        %v6551 = vpop.f32.mrb[0].mxu0
        %v6552 = vadd.f32 %v5985, %v6551
        %v6553 = vpop.f32.mrb[0].mxu0
        %6554 = vdwg.mxu0
        %vm6555 = vcmp.gt.f32.partialorder %v676, 0.0
        %vm6556 = vcmp.gt.f32.partialorder %v677, 0.0
        %vm6557 = vcmp.gt.f32.partialorder %v678, 0.0
        %vm6558 = vcmp.gt.f32.partialorder %v679, 0.0
        %vm6559 = vcmp.gt.f32.partialorder %v680, 0.0
        %vm6560 = vcmp.gt.f32.partialorder %v681, 0.0
        %vm6561 = vcmp.gt.f32.partialorder %v682, 0.0
        %vm6562 = vcmp.gt.f32.partialorder %v683, 0.0
        %vm6563 = vcmp.gt.f32.partialorder %v684, 0.0
        %vm6564 = vcmp.gt.f32.partialorder %v685, 0.0
        %vm6565 = vcmp.gt.f32.partialorder %v686, 0.0
        %vm6566 = vcmp.gt.f32.partialorder %v687, 0.0
        %vm6567 = vcmp.gt.f32.partialorder %v688, 0.0
        %vm6568 = vcmp.gt.f32.partialorder %v689, 0.0
        %vm6569 = vcmp.gt.f32.partialorder %v690, 0.0
        %vm6570 = vcmp.gt.f32.partialorder %v691, 0.0
        %vm6571 = vcmp.gt.f32.partialorder %v692, 0.0
        %vm6572 = vcmp.gt.f32.partialorder %v693, 0.0
        %vm6573 = vcmp.gt.f32.partialorder %v694, 0.0
        %vm6574 = vcmp.gt.f32.partialorder %v695, 0.0
        %vm6575 = vcmp.gt.f32.partialorder %v696, 0.0
        %vm6576 = vcmp.gt.f32.partialorder %v697, 0.0
        %vm6577 = vcmp.gt.f32.partialorder %v698, 0.0
        %vm6578 = vcmp.gt.f32.partialorder %v699, 0.0
        %vm6579 = vcmp.gt.f32.partialorder %v700, 0.0
        %vm6580 = vcmp.gt.f32.partialorder %v701, 0.0
        %vm6581 = vcmp.gt.f32.partialorder %v702, 0.0
        %vm6582 = vcmp.gt.f32.partialorder %v703, 0.0
        %vm6583 = vcmp.gt.f32.partialorder %v704, 0.0
        %vm6584 = vcmp.gt.f32.partialorder %v705, 0.0
        %vm6585 = vcmp.gt.f32.partialorder %v706, 0.0
        %vm6586 = vcmp.gt.f32.partialorder %v707, 0.0
        %vm6587 = vcmp.gt.f32.partialorder %v708, 0.0
        %vm6588 = vcmp.gt.f32.partialorder %v709, 0.0
        %vm6589 = vcmp.gt.f32.partialorder %v710, 0.0
        %vm6590 = vcmp.gt.f32.partialorder %v711, 0.0
        %vm6591 = vcmp.gt.f32.partialorder %v712, 0.0
        %vm6592 = vcmp.gt.f32.partialorder %v713, 0.0
        %vm6593 = vcmp.gt.f32.partialorder %v714, 0.0
        %vm6594 = vcmp.gt.f32.partialorder %v715, 0.0
        %vm6595 = vcmp.gt.f32.partialorder %v716, 0.0
        %vm6596 = vcmp.gt.f32.partialorder %v717, 0.0
        %vm6597 = vcmp.gt.f32.partialorder %v718, 0.0
        %vm6598 = vcmp.gt.f32.partialorder %v719, 0.0
        %vm6599 = vcmp.gt.f32.partialorder %v720, 0.0
        %vm6600 = vcmp.gt.f32.partialorder %v721, 0.0
        %vm6601 = vcmp.gt.f32.partialorder %v722, 0.0
        %vm6602 = vcmp.gt.f32.partialorder %v723, 0.0
        %vm6603 = vcmp.gt.f32.partialorder %v724, 0.0
        %vm6604 = vcmp.gt.f32.partialorder %v725, 0.0
        %vm6605 = vcmp.gt.f32.partialorder %v726, 0.0
        %vm6606 = vcmp.gt.f32.partialorder %v727, 0.0
        %vm6607 = vcmp.gt.f32.partialorder %v728, 0.0
        %vm6608 = vcmp.gt.f32.partialorder %v729, 0.0
        %vm6609 = vcmp.gt.f32.partialorder %v730, 0.0
        %vm6610 = vcmp.gt.f32.partialorder %v731, 0.0
        %vm6611 = vcmp.gt.f32.partialorder %v732, 0.0
        %vm6612 = vcmp.gt.f32.partialorder %v733, 0.0
        %vm6613 = vcmp.gt.f32.partialorder %v734, 0.0
        %vm6614 = vcmp.gt.f32.partialorder %v735, 0.0
        %vm6615 = vcmp.gt.f32.partialorder %v736, 0.0
        %vm6616 = vcmp.gt.f32.partialorder %v737, 0.0
        %vm6617 = vcmp.gt.f32.partialorder %v738, 0.0
        %vm6618 = vcmp.gt.f32.partialorder %v739, 0.0
        %vm6619 = vcmp.gt.f32.partialorder %v740, 0.0
        %vm6620 = vcmp.gt.f32.partialorder %v741, 0.0
        %vm6621 = vcmp.gt.f32.partialorder %v742, 0.0
        %vm6622 = vcmp.gt.f32.partialorder %v743, 0.0
        %vm6623 = vcmp.gt.f32.partialorder %v744, 0.0
        %vm6624 = vcmp.gt.f32.partialorder %v745, 0.0
        %vm6625 = vcmp.gt.f32.partialorder %v746, 0.0
        %vm6626 = vcmp.gt.f32.partialorder %v747, 0.0
        %vm6627 = vcmp.gt.f32.partialorder %v748, 0.0
        %vm6628 = vcmp.gt.f32.partialorder %v749, 0.0
        %vm6629 = vcmp.gt.f32.partialorder %v750, 0.0
        %vm6630 = vcmp.gt.f32.partialorder %v751, 0.0
        %vm6631 = vcmp.gt.f32.partialorder %v752, 0.0
        %vm6632 = vcmp.gt.f32.partialorder %v753, 0.0
        %vm6633 = vcmp.gt.f32.partialorder %v754, 0.0
        %vm6634 = vcmp.gt.f32.partialorder %v755, 0.0
        %vm6635 = vcmp.gt.f32.partialorder %v756, 0.0
        %vm6636 = vcmp.gt.f32.partialorder %v757, 0.0
        %vm6637 = vcmp.gt.f32.partialorder %v758, 0.0
        %vm6638 = vcmp.gt.f32.partialorder %v759, 0.0
        %vm6639 = vcmp.gt.f32.partialorder %v760, 0.0
        %vm6640 = vcmp.gt.f32.partialorder %v761, 0.0
        %vm6641 = vcmp.gt.f32.partialorder %v762, 0.0
        %vm6642 = vcmp.gt.f32.partialorder %v763, 0.0
        %vm6643 = vcmp.gt.f32.partialorder %v764, 0.0
        %vm6644 = vcmp.gt.f32.partialorder %v765, 0.0
        %vm6645 = vcmp.gt.f32.partialorder %v766, 0.0
        %vm6646 = vcmp.gt.f32.partialorder %v767, 0.0
        %vm6647 = vcmp.gt.f32.partialorder %v768, 0.0
        %vm6648 = vcmp.gt.f32.partialorder %v769, 0.0
        %vm6649 = vcmp.gt.f32.partialorder %v770, 0.0
        %vm6650 = vcmp.gt.f32.partialorder %v771, 0.0
        %v6651 = vsel %vm6555, 1, 0
        %v6652 = vsel %vm6556, 1, 0
        %v6653 = vsel %vm6557, 1, 0
        %v6654 = vsel %vm6558, 1, 0
        %v6655 = vsel %vm6559, 1, 0
        %v6656 = vsel %vm6560, 1, 0
        %v6657 = vsel %vm6561, 1, 0
        %v6658 = vsel %vm6562, 1, 0
        %v6659 = vsel %vm6563, 1, 0
        %v6660 = vsel %vm6564, 1, 0
        %v6661 = vsel %vm6565, 1, 0
        %v6662 = vsel %vm6566, 1, 0
        %v6663 = vsel %vm6567, 1, 0
        %v6664 = vsel %vm6568, 1, 0
        %v6665 = vsel %vm6569, 1, 0
        %v6666 = vsel %vm6570, 1, 0
        %v6667 = vsel %vm6571, 1, 0
        %v6668 = vsel %vm6572, 1, 0
        %v6669 = vsel %vm6573, 1, 0
        %v6670 = vsel %vm6574, 1, 0
        %v6671 = vsel %vm6575, 1, 0
        %v6672 = vsel %vm6576, 1, 0
        %v6673 = vsel %vm6577, 1, 0
        %v6674 = vsel %vm6578, 1, 0
        %v6675 = vsel %vm6579, 1, 0
        %v6676 = vsel %vm6580, 1, 0
        %v6677 = vsel %vm6581, 1, 0
        %v6678 = vsel %vm6582, 1, 0
        %v6679 = vsel %vm6583, 1, 0
        %v6680 = vsel %vm6584, 1, 0
        %v6681 = vsel %vm6585, 1, 0
        %v6682 = vsel %vm6586, 1, 0
        %v6683 = vsel %vm6587, 1, 0
        %v6684 = vsel %vm6588, 1, 0
        %v6685 = vsel %vm6589, 1, 0
        %v6686 = vsel %vm6590, 1, 0
        %v6687 = vsel %vm6591, 1, 0
        %v6688 = vsel %vm6592, 1, 0
        %v6689 = vsel %vm6593, 1, 0
        %v6690 = vsel %vm6594, 1, 0
        %v6691 = vsel %vm6595, 1, 0
        %v6692 = vsel %vm6596, 1, 0
        %v6693 = vsel %vm6597, 1, 0
        %v6694 = vsel %vm6598, 1, 0
        %v6695 = vsel %vm6599, 1, 0
        %v6696 = vsel %vm6600, 1, 0
        %v6697 = vsel %vm6601, 1, 0
        %v6698 = vsel %vm6602, 1, 0
        %v6699 = vsel %vm6603, 1, 0
        %v6700 = vsel %vm6604, 1, 0
        %v6701 = vsel %vm6605, 1, 0
        %v6702 = vsel %vm6606, 1, 0
        %v6703 = vsel %vm6607, 1, 0
        %v6704 = vsel %vm6608, 1, 0
        %v6705 = vsel %vm6609, 1, 0
        %v6706 = vsel %vm6610, 1, 0
        %v6707 = vsel %vm6611, 1, 0
        %v6708 = vsel %vm6612, 1, 0
        %v6709 = vsel %vm6613, 1, 0
        %v6710 = vsel %vm6614, 1, 0
        %v6711 = vsel %vm6615, 1, 0
        %v6712 = vsel %vm6616, 1, 0
        %v6713 = vsel %vm6617, 1, 0
        %v6714 = vsel %vm6618, 1, 0
        %v6715 = vsel %vm6619, 1, 0
        %v6716 = vsel %vm6620, 1, 0
        %v6717 = vsel %vm6621, 1, 0
        %v6718 = vsel %vm6622, 1, 0
        %v6719 = vsel %vm6623, 1, 0
        %v6720 = vsel %vm6624, 1, 0
        %v6721 = vsel %vm6625, 1, 0
        %v6722 = vsel %vm6626, 1, 0
        %v6723 = vsel %vm6627, 1, 0
        %v6724 = vsel %vm6628, 1, 0
        %v6725 = vsel %vm6629, 1, 0
        %v6726 = vsel %vm6630, 1, 0
        %v6727 = vsel %vm6631, 1, 0
        %v6728 = vsel %vm6632, 1, 0
        %v6729 = vsel %vm6633, 1, 0
        %v6730 = vsel %vm6634, 1, 0
        %v6731 = vsel %vm6635, 1, 0
        %v6732 = vsel %vm6636, 1, 0
        %v6733 = vsel %vm6637, 1, 0
        %v6734 = vsel %vm6638, 1, 0
        %v6735 = vsel %vm6639, 1, 0
        %v6736 = vsel %vm6640, 1, 0
        %v6737 = vsel %vm6641, 1, 0
        %v6738 = vsel %vm6642, 1, 0
        %v6739 = vsel %vm6643, 1, 0
        %v6740 = vsel %vm6644, 1, 0
        %v6741 = vsel %vm6645, 1, 0
        %v6742 = vsel %vm6646, 1, 0
        %v6743 = vsel %vm6647, 1, 0
        %v6744 = vsel %vm6648, 1, 0
        %v6745 = vsel %vm6649, 1, 0
        %v6746 = vsel %vm6650, 1, 0
        %6747 = vset.pattern.permute.xlu0 2
        %6748 = vperm.xlu0 %6747, %v6651
        %v6749 = vpop.permute.xlu0 %6748
        %6750 = vset.pattern.permute.xlu0 2
        %6751 = vperm.xlu0 %6750, %v6652
        %v6752 = vpop.permute.xlu0 %6751
        %6753 = vset.pattern.permute.xlu0 2
        %6754 = vperm.xlu0 %6753, %v6653
        %v6755 = vpop.permute.xlu0 %6754
        %6756 = vset.pattern.permute.xlu0 2
        %6757 = vperm.xlu0 %6756, %v6654
        %v6758 = vpop.permute.xlu0 %6757
        %6759 = vset.pattern.permute.xlu0 2
        %6760 = vperm.xlu0 %6759, %v6655
        %v6761 = vpop.permute.xlu0 %6760
        %6762 = vset.pattern.permute.xlu0 2
        %6763 = vperm.xlu0 %6762, %v6656
        %v6764 = vpop.permute.xlu0 %6763
        %6765 = vset.pattern.permute.xlu0 2
        %6766 = vperm.xlu0 %6765, %v6657
        %v6767 = vpop.permute.xlu0 %6766
        %6768 = vset.pattern.permute.xlu0 2
        %6769 = vperm.xlu0 %6768, %v6658
        %v6770 = vpop.permute.xlu0 %6769
        %6771 = vset.pattern.permute.xlu0 2
        %6772 = vperm.xlu0 %6771, %v6659
        %v6773 = vpop.permute.xlu0 %6772
        %6774 = vset.pattern.permute.xlu0 2
        %6775 = vperm.xlu0 %6774, %v6660
        %v6776 = vpop.permute.xlu0 %6775
        %6777 = vset.pattern.permute.xlu0 2
        %6778 = vperm.xlu0 %6777, %v6661
        %v6779 = vpop.permute.xlu0 %6778
        %6780 = vset.pattern.permute.xlu0 2
        %6781 = vperm.xlu0 %6780, %v6662
        %v6782 = vpop.permute.xlu0 %6781
        %6783 = vset.pattern.permute.xlu0 2
        %6784 = vperm.xlu0 %6783, %v6663
        %v6785 = vpop.permute.xlu0 %6784
        %6786 = vset.pattern.permute.xlu0 2
        %6787 = vperm.xlu0 %6786, %v6664
        %v6788 = vpop.permute.xlu0 %6787
        %6789 = vset.pattern.permute.xlu0 2
        %6790 = vperm.xlu0 %6789, %v6665
        %v6791 = vpop.permute.xlu0 %6790
        %6792 = vset.pattern.permute.xlu0 2
        %6793 = vperm.xlu0 %6792, %v6666
        %v6794 = vpop.permute.xlu0 %6793
        %6795 = vset.pattern.permute.xlu0 2
        %6796 = vperm.xlu0 %6795, %v6667
        %v6797 = vpop.permute.xlu0 %6796
        %6798 = vset.pattern.permute.xlu0 2
        %6799 = vperm.xlu0 %6798, %v6668
        %v6800 = vpop.permute.xlu0 %6799
        %6801 = vset.pattern.permute.xlu0 2
        %6802 = vperm.xlu0 %6801, %v6669
        %v6803 = vpop.permute.xlu0 %6802
        %6804 = vset.pattern.permute.xlu0 2
        %6805 = vperm.xlu0 %6804, %v6670
        %v6806 = vpop.permute.xlu0 %6805
        %6807 = vset.pattern.permute.xlu0 2
        %6808 = vperm.xlu0 %6807, %v6671
        %v6809 = vpop.permute.xlu0 %6808
        %6810 = vset.pattern.permute.xlu0 2
        %6811 = vperm.xlu0 %6810, %v6672
        %v6812 = vpop.permute.xlu0 %6811
        %6813 = vset.pattern.permute.xlu0 2
        %6814 = vperm.xlu0 %6813, %v6673
        %v6815 = vpop.permute.xlu0 %6814
        %6816 = vset.pattern.permute.xlu0 2
        %6817 = vperm.xlu0 %6816, %v6674
        %v6818 = vpop.permute.xlu0 %6817
        %6819 = vset.pattern.permute.xlu0 2
        %6820 = vperm.xlu0 %6819, %v6675
        %v6821 = vpop.permute.xlu0 %6820
        %6822 = vset.pattern.permute.xlu0 2
        %6823 = vperm.xlu0 %6822, %v6676
        %v6824 = vpop.permute.xlu0 %6823
        %6825 = vset.pattern.permute.xlu0 2
        %6826 = vperm.xlu0 %6825, %v6677
        %v6827 = vpop.permute.xlu0 %6826
        %6828 = vset.pattern.permute.xlu0 2
        %6829 = vperm.xlu0 %6828, %v6678
        %v6830 = vpop.permute.xlu0 %6829
        %6831 = vset.pattern.permute.xlu0 2
        %6832 = vperm.xlu0 %6831, %v6679
        %v6833 = vpop.permute.xlu0 %6832
        %6834 = vset.pattern.permute.xlu0 2
        %6835 = vperm.xlu0 %6834, %v6680
        %v6836 = vpop.permute.xlu0 %6835
        %6837 = vset.pattern.permute.xlu0 2
        %6838 = vperm.xlu0 %6837, %v6681
        %v6839 = vpop.permute.xlu0 %6838
        %6840 = vset.pattern.permute.xlu0 2
        %6841 = vperm.xlu0 %6840, %v6682
        %v6842 = vpop.permute.xlu0 %6841
        %6843 = vset.pattern.permute.xlu0 2
        %6844 = vperm.xlu0 %6843, %v6683
        %v6845 = vpop.permute.xlu0 %6844
        %6846 = vset.pattern.permute.xlu0 2
        %6847 = vperm.xlu0 %6846, %v6684
        %v6848 = vpop.permute.xlu0 %6847
        %6849 = vset.pattern.permute.xlu0 2
        %6850 = vperm.xlu0 %6849, %v6685
        %v6851 = vpop.permute.xlu0 %6850
        %6852 = vset.pattern.permute.xlu0 2
        %6853 = vperm.xlu0 %6852, %v6686
        %v6854 = vpop.permute.xlu0 %6853
        %6855 = vset.pattern.permute.xlu0 2
        %6856 = vperm.xlu0 %6855, %v6687
        %v6857 = vpop.permute.xlu0 %6856
        %6858 = vset.pattern.permute.xlu0 2
        %6859 = vperm.xlu0 %6858, %v6688
        %v6860 = vpop.permute.xlu0 %6859
        %6861 = vset.pattern.permute.xlu0 2
        %6862 = vperm.xlu0 %6861, %v6689
        %v6863 = vpop.permute.xlu0 %6862
        %6864 = vset.pattern.permute.xlu0 2
        %6865 = vperm.xlu0 %6864, %v6690
        %v6866 = vpop.permute.xlu0 %6865
        %6867 = vset.pattern.permute.xlu0 2
        %6868 = vperm.xlu0 %6867, %v6691
        %v6869 = vpop.permute.xlu0 %6868
        %6870 = vset.pattern.permute.xlu0 2
        %6871 = vperm.xlu0 %6870, %v6692
        %v6872 = vpop.permute.xlu0 %6871
        %6873 = vset.pattern.permute.xlu0 2
        %6874 = vperm.xlu0 %6873, %v6693
        %v6875 = vpop.permute.xlu0 %6874
        %6876 = vset.pattern.permute.xlu0 2
        %6877 = vperm.xlu0 %6876, %v6694
        %v6878 = vpop.permute.xlu0 %6877
        %6879 = vset.pattern.permute.xlu0 2
        %6880 = vperm.xlu0 %6879, %v6695
        %v6881 = vpop.permute.xlu0 %6880
        %6882 = vset.pattern.permute.xlu0 2
        %6883 = vperm.xlu0 %6882, %v6696
        %v6884 = vpop.permute.xlu0 %6883
        %6885 = vset.pattern.permute.xlu0 2
        %6886 = vperm.xlu0 %6885, %v6697
        %v6887 = vpop.permute.xlu0 %6886
        %6888 = vset.pattern.permute.xlu0 2
        %6889 = vperm.xlu0 %6888, %v6698
        %v6890 = vpop.permute.xlu0 %6889
        %6891 = vset.pattern.permute.xlu0 2
        %6892 = vperm.xlu0 %6891, %v6699
        %v6893 = vpop.permute.xlu0 %6892
        %6894 = vset.pattern.permute.xlu0 2
        %6895 = vperm.xlu0 %6894, %v6700
        %v6896 = vpop.permute.xlu0 %6895
        %6897 = vset.pattern.permute.xlu0 2
        %6898 = vperm.xlu0 %6897, %v6701
        %v6899 = vpop.permute.xlu0 %6898
        %6900 = vset.pattern.permute.xlu0 2
        %6901 = vperm.xlu0 %6900, %v6702
        %v6902 = vpop.permute.xlu0 %6901
        %6903 = vset.pattern.permute.xlu0 2
        %6904 = vperm.xlu0 %6903, %v6703
        %v6905 = vpop.permute.xlu0 %6904
        %6906 = vset.pattern.permute.xlu0 2
        %6907 = vperm.xlu0 %6906, %v6704
        %v6908 = vpop.permute.xlu0 %6907
        %6909 = vset.pattern.permute.xlu0 2
        %6910 = vperm.xlu0 %6909, %v6705
        %v6911 = vpop.permute.xlu0 %6910
        %6912 = vset.pattern.permute.xlu0 2
        %6913 = vperm.xlu0 %6912, %v6706
        %v6914 = vpop.permute.xlu0 %6913
        %6915 = vset.pattern.permute.xlu0 2
        %6916 = vperm.xlu0 %6915, %v6707
        %v6917 = vpop.permute.xlu0 %6916
        %6918 = vset.pattern.permute.xlu0 2
        %6919 = vperm.xlu0 %6918, %v6708
        %v6920 = vpop.permute.xlu0 %6919
        %6921 = vset.pattern.permute.xlu0 2
        %6922 = vperm.xlu0 %6921, %v6709
        %v6923 = vpop.permute.xlu0 %6922
        %6924 = vset.pattern.permute.xlu0 2
        %6925 = vperm.xlu0 %6924, %v6710
        %v6926 = vpop.permute.xlu0 %6925
        %6927 = vset.pattern.permute.xlu0 2
        %6928 = vperm.xlu0 %6927, %v6711
        %v6929 = vpop.permute.xlu0 %6928
        %6930 = vset.pattern.permute.xlu0 2
        %6931 = vperm.xlu0 %6930, %v6712
        %v6932 = vpop.permute.xlu0 %6931
        %6933 = vset.pattern.permute.xlu0 2
        %6934 = vperm.xlu0 %6933, %v6713
        %v6935 = vpop.permute.xlu0 %6934
        %6936 = vset.pattern.permute.xlu0 2
        %6937 = vperm.xlu0 %6936, %v6714
        %v6938 = vpop.permute.xlu0 %6937
        %6939 = vset.pattern.permute.xlu0 2
        %6940 = vperm.xlu0 %6939, %v6715
        %v6941 = vpop.permute.xlu0 %6940
        %6942 = vset.pattern.permute.xlu0 2
        %6943 = vperm.xlu0 %6942, %v6716
        %v6944 = vpop.permute.xlu0 %6943
        %6945 = vset.pattern.permute.xlu0 2
        %6946 = vperm.xlu0 %6945, %v6717
        %v6947 = vpop.permute.xlu0 %6946
        %6948 = vset.pattern.permute.xlu0 2
        %6949 = vperm.xlu0 %6948, %v6718
        %v6950 = vpop.permute.xlu0 %6949
        %6951 = vset.pattern.permute.xlu0 2
        %6952 = vperm.xlu0 %6951, %v6719
        %v6953 = vpop.permute.xlu0 %6952
        %6954 = vset.pattern.permute.xlu0 2
        %6955 = vperm.xlu0 %6954, %v6720
        %v6956 = vpop.permute.xlu0 %6955
        %6957 = vset.pattern.permute.xlu0 2
        %6958 = vperm.xlu0 %6957, %v6721
        %v6959 = vpop.permute.xlu0 %6958
        %6960 = vset.pattern.permute.xlu0 2
        %6961 = vperm.xlu0 %6960, %v6722
        %v6962 = vpop.permute.xlu0 %6961
        %6963 = vset.pattern.permute.xlu0 2
        %6964 = vperm.xlu0 %6963, %v6723
        %v6965 = vpop.permute.xlu0 %6964
        %6966 = vset.pattern.permute.xlu0 2
        %6967 = vperm.xlu0 %6966, %v6724
        %v6968 = vpop.permute.xlu0 %6967
        %6969 = vset.pattern.permute.xlu0 2
        %6970 = vperm.xlu0 %6969, %v6725
        %v6971 = vpop.permute.xlu0 %6970
        %6972 = vset.pattern.permute.xlu0 2
        %6973 = vperm.xlu0 %6972, %v6726
        %v6974 = vpop.permute.xlu0 %6973
        %6975 = vset.pattern.permute.xlu0 2
        %6976 = vperm.xlu0 %6975, %v6727
        %v6977 = vpop.permute.xlu0 %6976
        %6978 = vset.pattern.permute.xlu0 2
        %6979 = vperm.xlu0 %6978, %v6728
        %v6980 = vpop.permute.xlu0 %6979
        %6981 = vset.pattern.permute.xlu0 2
        %6982 = vperm.xlu0 %6981, %v6729
        %v6983 = vpop.permute.xlu0 %6982
        %6984 = vset.pattern.permute.xlu0 2
        %6985 = vperm.xlu0 %6984, %v6730
        %v6986 = vpop.permute.xlu0 %6985
        %6987 = vset.pattern.permute.xlu0 2
        %6988 = vperm.xlu0 %6987, %v6731
        %v6989 = vpop.permute.xlu0 %6988
        %6990 = vset.pattern.permute.xlu0 2
        %6991 = vperm.xlu0 %6990, %v6732
        %v6992 = vpop.permute.xlu0 %6991
        %6993 = vset.pattern.permute.xlu0 2
        %6994 = vperm.xlu0 %6993, %v6733
        %v6995 = vpop.permute.xlu0 %6994
        %6996 = vset.pattern.permute.xlu0 2
        %6997 = vperm.xlu0 %6996, %v6734
        %v6998 = vpop.permute.xlu0 %6997
        %6999 = vset.pattern.permute.xlu0 2
        %7000 = vperm.xlu0 %6999, %v6735
        %v7001 = vpop.permute.xlu0 %7000
        %7002 = vset.pattern.permute.xlu0 2
        %7003 = vperm.xlu0 %7002, %v6736
        %v7004 = vpop.permute.xlu0 %7003
        %7005 = vset.pattern.permute.xlu0 2
        %7006 = vperm.xlu0 %7005, %v6737
        %v7007 = vpop.permute.xlu0 %7006
        %7008 = vset.pattern.permute.xlu0 2
        %7009 = vperm.xlu0 %7008, %v6738
        %v7010 = vpop.permute.xlu0 %7009
        %7011 = vset.pattern.permute.xlu0 2
        %7012 = vperm.xlu0 %7011, %v6739
        %v7013 = vpop.permute.xlu0 %7012
        %7014 = vset.pattern.permute.xlu0 2
        %7015 = vperm.xlu0 %7014, %v6740
        %v7016 = vpop.permute.xlu0 %7015
        %7017 = vset.pattern.permute.xlu0 2
        %7018 = vperm.xlu0 %7017, %v6741
        %v7019 = vpop.permute.xlu0 %7018
        %7020 = vset.pattern.permute.xlu0 2
        %7021 = vperm.xlu0 %7020, %v6742
        %v7022 = vpop.permute.xlu0 %7021
        %7023 = vset.pattern.permute.xlu0 2
        %7024 = vperm.xlu0 %7023, %v6743
        %v7025 = vpop.permute.xlu0 %7024
        %7026 = vset.pattern.permute.xlu0 2
        %7027 = vperm.xlu0 %7026, %v6744
        %v7028 = vpop.permute.xlu0 %7027
        %7029 = vset.pattern.permute.xlu0 2
        %7030 = vperm.xlu0 %7029, %v6745
        %v7031 = vpop.permute.xlu0 %7030
        %7032 = vset.pattern.permute.xlu0 2
        %7033 = vperm.xlu0 %7032, %v6746
        %v7034 = vpop.permute.xlu0 %7033
        %vm7035 = vcmp.eq.s32.totalorder %v6749, 1
        %vm7036 = vcmp.eq.s32.totalorder %v6752, 1
        %vm7037 = vcmp.eq.s32.totalorder %v6755, 1
        %vm7038 = vcmp.eq.s32.totalorder %v6758, 1
        %vm7039 = vcmp.eq.s32.totalorder %v6761, 1
        %vm7040 = vcmp.eq.s32.totalorder %v6764, 1
        %vm7041 = vcmp.eq.s32.totalorder %v6767, 1
        %vm7042 = vcmp.eq.s32.totalorder %v6770, 1
        %vm7043 = vcmp.eq.s32.totalorder %v6773, 1
        %vm7044 = vcmp.eq.s32.totalorder %v6776, 1
        %vm7045 = vcmp.eq.s32.totalorder %v6779, 1
        %vm7046 = vcmp.eq.s32.totalorder %v6782, 1
        %vm7047 = vcmp.eq.s32.totalorder %v6785, 1
        %vm7048 = vcmp.eq.s32.totalorder %v6788, 1
        %vm7049 = vcmp.eq.s32.totalorder %v6791, 1
        %vm7050 = vcmp.eq.s32.totalorder %v6794, 1
        %vm7051 = vcmp.eq.s32.totalorder %v6797, 1
        %vm7052 = vcmp.eq.s32.totalorder %v6800, 1
        %vm7053 = vcmp.eq.s32.totalorder %v6803, 1
        %vm7054 = vcmp.eq.s32.totalorder %v6806, 1
        %vm7055 = vcmp.eq.s32.totalorder %v6809, 1
        %vm7056 = vcmp.eq.s32.totalorder %v6812, 1
        %vm7057 = vcmp.eq.s32.totalorder %v6815, 1
        %vm7058 = vcmp.eq.s32.totalorder %v6818, 1
        %vm7059 = vcmp.eq.s32.totalorder %v6821, 1
        %vm7060 = vcmp.eq.s32.totalorder %v6824, 1
        %vm7061 = vcmp.eq.s32.totalorder %v6827, 1
        %vm7062 = vcmp.eq.s32.totalorder %v6830, 1
        %vm7063 = vcmp.eq.s32.totalorder %v6833, 1
        %vm7064 = vcmp.eq.s32.totalorder %v6836, 1
        %vm7065 = vcmp.eq.s32.totalorder %v6839, 1
        %vm7066 = vcmp.eq.s32.totalorder %v6842, 1
        %vm7067 = vcmp.eq.s32.totalorder %v6845, 1
        %vm7068 = vcmp.eq.s32.totalorder %v6848, 1
        %vm7069 = vcmp.eq.s32.totalorder %v6851, 1
        %vm7070 = vcmp.eq.s32.totalorder %v6854, 1
        %vm7071 = vcmp.eq.s32.totalorder %v6857, 1
        %vm7072 = vcmp.eq.s32.totalorder %v6860, 1
        %vm7073 = vcmp.eq.s32.totalorder %v6863, 1
        %vm7074 = vcmp.eq.s32.totalorder %v6866, 1
        %vm7075 = vcmp.eq.s32.totalorder %v6869, 1
        %vm7076 = vcmp.eq.s32.totalorder %v6872, 1
        %vm7077 = vcmp.eq.s32.totalorder %v6875, 1
        %vm7078 = vcmp.eq.s32.totalorder %v6878, 1
        %vm7079 = vcmp.eq.s32.totalorder %v6881, 1
        %vm7080 = vcmp.eq.s32.totalorder %v6884, 1
        %vm7081 = vcmp.eq.s32.totalorder %v6887, 1
        %vm7082 = vcmp.eq.s32.totalorder %v6890, 1
        %vm7083 = vcmp.eq.s32.totalorder %v6893, 1
        %vm7084 = vcmp.eq.s32.totalorder %v6896, 1
        %vm7085 = vcmp.eq.s32.totalorder %v6899, 1
        %vm7086 = vcmp.eq.s32.totalorder %v6902, 1
        %vm7087 = vcmp.eq.s32.totalorder %v6905, 1
        %vm7088 = vcmp.eq.s32.totalorder %v6908, 1
        %vm7089 = vcmp.eq.s32.totalorder %v6911, 1
        %vm7090 = vcmp.eq.s32.totalorder %v6914, 1
        %vm7091 = vcmp.eq.s32.totalorder %v6917, 1
        %vm7092 = vcmp.eq.s32.totalorder %v6920, 1
        %vm7093 = vcmp.eq.s32.totalorder %v6923, 1
        %vm7094 = vcmp.eq.s32.totalorder %v6926, 1
        %vm7095 = vcmp.eq.s32.totalorder %v6929, 1
        %vm7096 = vcmp.eq.s32.totalorder %v6932, 1
        %vm7097 = vcmp.eq.s32.totalorder %v6935, 1
        %vm7098 = vcmp.eq.s32.totalorder %v6938, 1
        %vm7099 = vcmp.eq.s32.totalorder %v6941, 1
        %vm7100 = vcmp.eq.s32.totalorder %v6944, 1
        %vm7101 = vcmp.eq.s32.totalorder %v6947, 1
        %vm7102 = vcmp.eq.s32.totalorder %v6950, 1
        %vm7103 = vcmp.eq.s32.totalorder %v6953, 1
        %vm7104 = vcmp.eq.s32.totalorder %v6956, 1
        %vm7105 = vcmp.eq.s32.totalorder %v6959, 1
        %vm7106 = vcmp.eq.s32.totalorder %v6962, 1
        %vm7107 = vcmp.eq.s32.totalorder %v6965, 1
        %vm7108 = vcmp.eq.s32.totalorder %v6968, 1
        %vm7109 = vcmp.eq.s32.totalorder %v6971, 1
        %vm7110 = vcmp.eq.s32.totalorder %v6974, 1
        %vm7111 = vcmp.eq.s32.totalorder %v6977, 1
        %vm7112 = vcmp.eq.s32.totalorder %v6980, 1
        %vm7113 = vcmp.eq.s32.totalorder %v6983, 1
        %vm7114 = vcmp.eq.s32.totalorder %v6986, 1
        %vm7115 = vcmp.eq.s32.totalorder %v6989, 1
        %vm7116 = vcmp.eq.s32.totalorder %v6992, 1
        %vm7117 = vcmp.eq.s32.totalorder %v6995, 1
        %vm7118 = vcmp.eq.s32.totalorder %v6998, 1
        %vm7119 = vcmp.eq.s32.totalorder %v7001, 1
        %vm7120 = vcmp.eq.s32.totalorder %v7004, 1
        %vm7121 = vcmp.eq.s32.totalorder %v7007, 1
        %vm7122 = vcmp.eq.s32.totalorder %v7010, 1
        %vm7123 = vcmp.eq.s32.totalorder %v7013, 1
        %vm7124 = vcmp.eq.s32.totalorder %v7016, 1
        %vm7125 = vcmp.eq.s32.totalorder %v7019, 1
        %vm7126 = vcmp.eq.s32.totalorder %v7022, 1
        %vm7127 = vcmp.eq.s32.totalorder %v7025, 1
        %vm7128 = vcmp.eq.s32.totalorder %v7028, 1
        %vm7129 = vcmp.eq.s32.totalorder %v7031, 1
        %vm7130 = vcmp.eq.s32.totalorder %v7034, 1
        %v7131 = vsel %vm7035, %v6173, -1e+30
        %v7132 = vsel %vm7036, %v6176, -1e+30
        %v7133 = vsel %vm7037, %v6181, -1e+30
        %v7134 = vsel %vm7038, %v6184, -1e+30
        %v7135 = vsel %vm7039, %v6189, -1e+30
        %v7136 = vsel %vm7040, %v6192, -1e+30
        %v7137 = vsel %vm7041, %v6197, -1e+30
        %v7138 = vsel %vm7042, %v6200, -1e+30
        %v7139 = vsel %vm7043, %v6205, -1e+30
        %v7140 = vsel %vm7044, %v6208, -1e+30
        %v7141 = vsel %vm7045, %v6213, -1e+30
        %v7142 = vsel %vm7046, %v6216, -1e+30
        %v7143 = vsel %vm7047, %v6221, -1e+30
        %v7144 = vsel %vm7048, %v6224, -1e+30
        %v7145 = vsel %vm7049, %v6229, -1e+30
        %v7146 = vsel %vm7050, %v6232, -1e+30
        %v7147 = vsel %vm7051, %v6237, -1e+30
        %v7148 = vsel %vm7052, %v6240, -1e+30
        %v7149 = vsel %vm7053, %v6245, -1e+30
        %v7150 = vsel %vm7054, %v6248, -1e+30
        %v7151 = vsel %vm7055, %v6253, -1e+30
        %v7152 = vsel %vm7056, %v6256, -1e+30
        %v7153 = vsel %vm7057, %v6261, -1e+30
        %v7154 = vsel %vm7058, %v6264, -1e+30
        %v7155 = vsel %vm7059, %v6269, -1e+30
        %v7156 = vsel %vm7060, %v6272, -1e+30
        %v7157 = vsel %vm7061, %v6277, -1e+30
        %v7158 = vsel %vm7062, %v6280, -1e+30
        %v7159 = vsel %vm7063, %v6285, -1e+30
        %v7160 = vsel %vm7064, %v6288, -1e+30
        %v7161 = vsel %vm7065, %v6293, -1e+30
        %v7162 = vsel %vm7066, %v6296, -1e+30
        %v7163 = vsel %vm7067, %v6301, -1e+30
        %v7164 = vsel %vm7068, %v6304, -1e+30
        %v7165 = vsel %vm7069, %v6309, -1e+30
        %v7166 = vsel %vm7070, %v6312, -1e+30
        %v7167 = vsel %vm7071, %v6317, -1e+30
        %v7168 = vsel %vm7072, %v6320, -1e+30
        %v7169 = vsel %vm7073, %v6325, -1e+30
        %v7170 = vsel %vm7074, %v6328, -1e+30
        %v7171 = vsel %vm7075, %v6333, -1e+30
        %v7172 = vsel %vm7076, %v6336, -1e+30
        %v7173 = vsel %vm7077, %v6341, -1e+30
        %v7174 = vsel %vm7078, %v6344, -1e+30
        %v7175 = vsel %vm7079, %v6349, -1e+30
        %v7176 = vsel %vm7080, %v6352, -1e+30
        %v7177 = vsel %vm7081, %v6357, -1e+30
        %v7178 = vsel %vm7082, %v6360, -1e+30
        %v7179 = vsel %vm7083, %v6365, -1e+30
        %v7180 = vsel %vm7084, %v6368, -1e+30
        %v7181 = vsel %vm7085, %v6373, -1e+30
        %v7182 = vsel %vm7086, %v6376, -1e+30
        %v7183 = vsel %vm7087, %v6381, -1e+30
        %v7184 = vsel %vm7088, %v6384, -1e+30
        %v7185 = vsel %vm7089, %v6389, -1e+30
        %v7186 = vsel %vm7090, %v6392, -1e+30
        %v7187 = vsel %vm7091, %v6397, -1e+30
        %v7188 = vsel %vm7092, %v6400, -1e+30
        %v7189 = vsel %vm7093, %v6405, -1e+30
        %v7190 = vsel %vm7094, %v6408, -1e+30
        %v7191 = vsel %vm7095, %v6413, -1e+30
        %v7192 = vsel %vm7096, %v6416, -1e+30
        %v7193 = vsel %vm7097, %v6421, -1e+30
        %v7194 = vsel %vm7098, %v6424, -1e+30
        %v7195 = vsel %vm7099, %v6429, -1e+30
        %v7196 = vsel %vm7100, %v6432, -1e+30
        %v7197 = vsel %vm7101, %v6437, -1e+30
        %v7198 = vsel %vm7102, %v6440, -1e+30
        %v7199 = vsel %vm7103, %v6445, -1e+30
        %v7200 = vsel %vm7104, %v6448, -1e+30
        %v7201 = vsel %vm7105, %v6453, -1e+30
        %v7202 = vsel %vm7106, %v6456, -1e+30
        %v7203 = vsel %vm7107, %v6461, -1e+30
        %v7204 = vsel %vm7108, %v6464, -1e+30
        %v7205 = vsel %vm7109, %v6469, -1e+30
        %v7206 = vsel %vm7110, %v6472, -1e+30
        %v7207 = vsel %vm7111, %v6477, -1e+30
        %v7208 = vsel %vm7112, %v6480, -1e+30
        %v7209 = vsel %vm7113, %v6485, -1e+30
        %v7210 = vsel %vm7114, %v6488, -1e+30
        %v7211 = vsel %vm7115, %v6493, -1e+30
        %v7212 = vsel %vm7116, %v6496, -1e+30
        %v7213 = vsel %vm7117, %v6501, -1e+30
        %v7214 = vsel %vm7118, %v6504, -1e+30
        %v7215 = vsel %vm7119, %v6509, -1e+30
        %v7216 = vsel %vm7120, %v6512, -1e+30
        %v7217 = vsel %vm7121, %v6517, -1e+30
        %v7218 = vsel %vm7122, %v6520, -1e+30
        %v7219 = vsel %vm7123, %v6525, -1e+30
        %v7220 = vsel %vm7124, %v6528, -1e+30
        %v7221 = vsel %vm7125, %v6533, -1e+30
        %v7222 = vsel %vm7126, %v6536, -1e+30
        %v7223 = vsel %vm7127, %v6541, -1e+30
        %v7224 = vsel %vm7128, %v6544, -1e+30
        %v7225 = vsel %vm7129, %v6549, -1e+30
        %v7226 = vsel %vm7130, %v6552, -1e+30
        %v7227 = vsel %vm774, %v7131, -inf
        %v7228 = vsel %vm774, %v7132, -inf
        %v7229 = vmax.f32 %v7227, %v7228
        %v7230 = vrot.slane %v7229, 4
        %v7231 = vmax.f32 %v7229, %v7230
        %v7232 = vrot.slane %v7231, 2
        %v7233 = vmax.f32 %v7231, %v7232
        %v7234 = vrot.slane %v7233, 1
        %v7235 = vmax.f32 %v7233, %v7234
        %v7236 = vsel %vm774, %v7133, -inf
        %v7237 = vsel %vm774, %v7134, -inf
        %v7238 = vmax.f32 %v7236, %v7237
        %v7239 = vrot.slane %v7238, 4
        %v7240 = vmax.f32 %v7238, %v7239
        %v7241 = vrot.slane %v7240, 2
        %v7242 = vmax.f32 %v7240, %v7241
        %v7243 = vrot.slane %v7242, 1
        %v7244 = vmax.f32 %v7242, %v7243
        %v7245 = vsel %vm774, %v7135, -inf
        %v7246 = vsel %vm774, %v7136, -inf
        %v7247 = vmax.f32 %v7245, %v7246
        %v7248 = vrot.slane %v7247, 4
        %v7249 = vmax.f32 %v7247, %v7248
        %v7250 = vrot.slane %v7249, 2
        %v7251 = vmax.f32 %v7249, %v7250
        %v7252 = vrot.slane %v7251, 1
        %v7253 = vmax.f32 %v7251, %v7252
        %v7254 = vsel %vm774, %v7137, -inf
        %v7255 = vsel %vm774, %v7138, -inf
        %v7256 = vmax.f32 %v7254, %v7255
        %v7257 = vrot.slane %v7256, 4
        %v7258 = vmax.f32 %v7256, %v7257
        %v7259 = vrot.slane %v7258, 2
        %v7260 = vmax.f32 %v7258, %v7259
        %v7261 = vrot.slane %v7260, 1
        %v7262 = vmax.f32 %v7260, %v7261
        %v7263 = vsel %vm774, %v7139, -inf
        %v7264 = vsel %vm774, %v7140, -inf
        %v7265 = vmax.f32 %v7263, %v7264
        %v7266 = vrot.slane %v7265, 4
        %v7267 = vmax.f32 %v7265, %v7266
        %v7268 = vrot.slane %v7267, 2
        %v7269 = vmax.f32 %v7267, %v7268
        %v7270 = vrot.slane %v7269, 1
        %v7271 = vmax.f32 %v7269, %v7270
        %v7272 = vsel %vm774, %v7141, -inf
        %v7273 = vsel %vm774, %v7142, -inf
        %v7274 = vmax.f32 %v7272, %v7273
        %v7275 = vrot.slane %v7274, 4
        %v7276 = vmax.f32 %v7274, %v7275
        %v7277 = vrot.slane %v7276, 2
        %v7278 = vmax.f32 %v7276, %v7277
        %v7279 = vrot.slane %v7278, 1
        %v7280 = vmax.f32 %v7278, %v7279
        %v7281 = vsel %vm774, %v7143, -inf
        %v7282 = vsel %vm774, %v7144, -inf
        %v7283 = vmax.f32 %v7281, %v7282
        %v7284 = vrot.slane %v7283, 4
        %v7285 = vmax.f32 %v7283, %v7284
        %v7286 = vrot.slane %v7285, 2
        %v7287 = vmax.f32 %v7285, %v7286
        %v7288 = vrot.slane %v7287, 1
        %v7289 = vmax.f32 %v7287, %v7288
        %v7290 = vsel %vm774, %v7145, -inf
        %v7291 = vsel %vm774, %v7146, -inf
        %v7292 = vmax.f32 %v7290, %v7291
        %v7293 = vrot.slane %v7292, 4
        %v7294 = vmax.f32 %v7292, %v7293
        %v7295 = vrot.slane %v7294, 2
        %v7296 = vmax.f32 %v7294, %v7295
        %v7297 = vrot.slane %v7296, 1
        %v7298 = vmax.f32 %v7296, %v7297
        %v7299 = vsel %vm774, %v7147, -inf
        %v7300 = vsel %vm774, %v7148, -inf
        %v7301 = vmax.f32 %v7299, %v7300
        %v7302 = vrot.slane %v7301, 4
        %v7303 = vmax.f32 %v7301, %v7302
        %v7304 = vrot.slane %v7303, 2
        %v7305 = vmax.f32 %v7303, %v7304
        %v7306 = vrot.slane %v7305, 1
        %v7307 = vmax.f32 %v7305, %v7306
        %v7308 = vsel %vm774, %v7149, -inf
        %v7309 = vsel %vm774, %v7150, -inf
        %v7310 = vmax.f32 %v7308, %v7309
        %v7311 = vrot.slane %v7310, 4
        %v7312 = vmax.f32 %v7310, %v7311
        %v7313 = vrot.slane %v7312, 2
        %v7314 = vmax.f32 %v7312, %v7313
        %v7315 = vrot.slane %v7314, 1
        %v7316 = vmax.f32 %v7314, %v7315
        %v7317 = vsel %vm774, %v7151, -inf
        %v7318 = vsel %vm774, %v7152, -inf
        %v7319 = vmax.f32 %v7317, %v7318
        %v7320 = vrot.slane %v7319, 4
        %v7321 = vmax.f32 %v7319, %v7320
        %v7322 = vrot.slane %v7321, 2
        %v7323 = vmax.f32 %v7321, %v7322
        %v7324 = vrot.slane %v7323, 1
        %v7325 = vmax.f32 %v7323, %v7324
        %v7326 = vsel %vm774, %v7153, -inf
        %v7327 = vsel %vm774, %v7154, -inf
        %v7328 = vmax.f32 %v7326, %v7327
        %v7329 = vrot.slane %v7328, 4
        %v7330 = vmax.f32 %v7328, %v7329
        %v7331 = vrot.slane %v7330, 2
        %v7332 = vmax.f32 %v7330, %v7331
        %v7333 = vrot.slane %v7332, 1
        %v7334 = vmax.f32 %v7332, %v7333
        %v7335 = vsel %vm774, %v7155, -inf
        %v7336 = vsel %vm774, %v7156, -inf
        %v7337 = vmax.f32 %v7335, %v7336
        %v7338 = vrot.slane %v7337, 4
        %v7339 = vmax.f32 %v7337, %v7338
        %v7340 = vrot.slane %v7339, 2
        %v7341 = vmax.f32 %v7339, %v7340
        %v7342 = vrot.slane %v7341, 1
        %v7343 = vmax.f32 %v7341, %v7342
        %v7344 = vsel %vm774, %v7157, -inf
        %v7345 = vsel %vm774, %v7158, -inf
        %v7346 = vmax.f32 %v7344, %v7345
        %v7347 = vrot.slane %v7346, 4
        %v7348 = vmax.f32 %v7346, %v7347
        %v7349 = vrot.slane %v7348, 2
        %v7350 = vmax.f32 %v7348, %v7349
        %v7351 = vrot.slane %v7350, 1
        %v7352 = vmax.f32 %v7350, %v7351
        %v7353 = vsel %vm774, %v7159, -inf
        %v7354 = vsel %vm774, %v7160, -inf
        %v7355 = vmax.f32 %v7353, %v7354
        %v7356 = vrot.slane %v7355, 4
        %v7357 = vmax.f32 %v7355, %v7356
        %v7358 = vrot.slane %v7357, 2
        %v7359 = vmax.f32 %v7357, %v7358
        %v7360 = vrot.slane %v7359, 1
        %v7361 = vmax.f32 %v7359, %v7360
        %v7362 = vsel %vm774, %v7161, -inf
        %v7363 = vsel %vm774, %v7162, -inf
        %v7364 = vmax.f32 %v7362, %v7363
        %v7365 = vrot.slane %v7364, 4
        %v7366 = vmax.f32 %v7364, %v7365
        %v7367 = vrot.slane %v7366, 2
        %v7368 = vmax.f32 %v7366, %v7367
        %v7369 = vrot.slane %v7368, 1
        %v7370 = vmax.f32 %v7368, %v7369
        %v7371 = vsel %vm774, %v7163, -inf
        %v7372 = vsel %vm774, %v7164, -inf
        %v7373 = vmax.f32 %v7371, %v7372
        %v7374 = vrot.slane %v7373, 4
        %v7375 = vmax.f32 %v7373, %v7374
        %v7376 = vrot.slane %v7375, 2
        %v7377 = vmax.f32 %v7375, %v7376
        %v7378 = vrot.slane %v7377, 1
        %v7379 = vmax.f32 %v7377, %v7378
        %v7380 = vsel %vm774, %v7165, -inf
        %v7381 = vsel %vm774, %v7166, -inf
        %v7382 = vmax.f32 %v7380, %v7381
        %v7383 = vrot.slane %v7382, 4
        %v7384 = vmax.f32 %v7382, %v7383
        %v7385 = vrot.slane %v7384, 2
        %v7386 = vmax.f32 %v7384, %v7385
        %v7387 = vrot.slane %v7386, 1
        %v7388 = vmax.f32 %v7386, %v7387
        %v7389 = vsel %vm774, %v7167, -inf
        %v7390 = vsel %vm774, %v7168, -inf
        %v7391 = vmax.f32 %v7389, %v7390
        %v7392 = vrot.slane %v7391, 4
        %v7393 = vmax.f32 %v7391, %v7392
        %v7394 = vrot.slane %v7393, 2
        %v7395 = vmax.f32 %v7393, %v7394
        %v7396 = vrot.slane %v7395, 1
        %v7397 = vmax.f32 %v7395, %v7396
        %v7398 = vsel %vm774, %v7169, -inf
        %v7399 = vsel %vm774, %v7170, -inf
        %v7400 = vmax.f32 %v7398, %v7399
        %v7401 = vrot.slane %v7400, 4
        %v7402 = vmax.f32 %v7400, %v7401
        %v7403 = vrot.slane %v7402, 2
        %v7404 = vmax.f32 %v7402, %v7403
        %v7405 = vrot.slane %v7404, 1
        %v7406 = vmax.f32 %v7404, %v7405
        %v7407 = vsel %vm774, %v7171, -inf
        %v7408 = vsel %vm774, %v7172, -inf
        %v7409 = vmax.f32 %v7407, %v7408
        %v7410 = vrot.slane %v7409, 4
        %v7411 = vmax.f32 %v7409, %v7410
        %v7412 = vrot.slane %v7411, 2
        %v7413 = vmax.f32 %v7411, %v7412
        %v7414 = vrot.slane %v7413, 1
        %v7415 = vmax.f32 %v7413, %v7414
        %v7416 = vsel %vm774, %v7173, -inf
        %v7417 = vsel %vm774, %v7174, -inf
        %v7418 = vmax.f32 %v7416, %v7417
        %v7419 = vrot.slane %v7418, 4
        %v7420 = vmax.f32 %v7418, %v7419
        %v7421 = vrot.slane %v7420, 2
        %v7422 = vmax.f32 %v7420, %v7421
        %v7423 = vrot.slane %v7422, 1
        %v7424 = vmax.f32 %v7422, %v7423
        %v7425 = vsel %vm774, %v7175, -inf
        %v7426 = vsel %vm774, %v7176, -inf
        %v7427 = vmax.f32 %v7425, %v7426
        %v7428 = vrot.slane %v7427, 4
        %v7429 = vmax.f32 %v7427, %v7428
        %v7430 = vrot.slane %v7429, 2
        %v7431 = vmax.f32 %v7429, %v7430
        %v7432 = vrot.slane %v7431, 1
        %v7433 = vmax.f32 %v7431, %v7432
        %v7434 = vsel %vm774, %v7177, -inf
        %v7435 = vsel %vm774, %v7178, -inf
        %v7436 = vmax.f32 %v7434, %v7435
        %v7437 = vrot.slane %v7436, 4
        %v7438 = vmax.f32 %v7436, %v7437
        %v7439 = vrot.slane %v7438, 2
        %v7440 = vmax.f32 %v7438, %v7439
        %v7441 = vrot.slane %v7440, 1
        %v7442 = vmax.f32 %v7440, %v7441
        %v7443 = vsel %vm774, %v7179, -inf
        %v7444 = vsel %vm774, %v7180, -inf
        %v7445 = vmax.f32 %v7443, %v7444
        %v7446 = vrot.slane %v7445, 4
        %v7447 = vmax.f32 %v7445, %v7446
        %v7448 = vrot.slane %v7447, 2
        %v7449 = vmax.f32 %v7447, %v7448
        %v7450 = vrot.slane %v7449, 1
        %v7451 = vmax.f32 %v7449, %v7450
        %v7452 = vsel %vm774, %v7181, -inf
        %v7453 = vsel %vm774, %v7182, -inf
        %v7454 = vmax.f32 %v7452, %v7453
        %v7455 = vrot.slane %v7454, 4
        %v7456 = vmax.f32 %v7454, %v7455
        %v7457 = vrot.slane %v7456, 2
        %v7458 = vmax.f32 %v7456, %v7457
        %v7459 = vrot.slane %v7458, 1
        %v7460 = vmax.f32 %v7458, %v7459
        %v7461 = vsel %vm774, %v7183, -inf
        %v7462 = vsel %vm774, %v7184, -inf
        %v7463 = vmax.f32 %v7461, %v7462
        %v7464 = vrot.slane %v7463, 4
        %v7465 = vmax.f32 %v7463, %v7464
        %v7466 = vrot.slane %v7465, 2
        %v7467 = vmax.f32 %v7465, %v7466
        %v7468 = vrot.slane %v7467, 1
        %v7469 = vmax.f32 %v7467, %v7468
        %v7470 = vsel %vm774, %v7185, -inf
        %v7471 = vsel %vm774, %v7186, -inf
        %v7472 = vmax.f32 %v7470, %v7471
        %v7473 = vrot.slane %v7472, 4
        %v7474 = vmax.f32 %v7472, %v7473
        %v7475 = vrot.slane %v7474, 2
        %v7476 = vmax.f32 %v7474, %v7475
        %v7477 = vrot.slane %v7476, 1
        %v7478 = vmax.f32 %v7476, %v7477
        %v7479 = vsel %vm774, %v7187, -inf
        %v7480 = vsel %vm774, %v7188, -inf
        %v7481 = vmax.f32 %v7479, %v7480
        %v7482 = vrot.slane %v7481, 4
        %v7483 = vmax.f32 %v7481, %v7482
        %v7484 = vrot.slane %v7483, 2
        %v7485 = vmax.f32 %v7483, %v7484
        %v7486 = vrot.slane %v7485, 1
        %v7487 = vmax.f32 %v7485, %v7486
        %v7488 = vsel %vm774, %v7189, -inf
        %v7489 = vsel %vm774, %v7190, -inf
        %v7490 = vmax.f32 %v7488, %v7489
        %v7491 = vrot.slane %v7490, 4
        %v7492 = vmax.f32 %v7490, %v7491
        %v7493 = vrot.slane %v7492, 2
        %v7494 = vmax.f32 %v7492, %v7493
        %v7495 = vrot.slane %v7494, 1
        %v7496 = vmax.f32 %v7494, %v7495
        %v7497 = vsel %vm774, %v7191, -inf
        %v7498 = vsel %vm774, %v7192, -inf
        %v7499 = vmax.f32 %v7497, %v7498
        %v7500 = vrot.slane %v7499, 4
        %v7501 = vmax.f32 %v7499, %v7500
        %v7502 = vrot.slane %v7501, 2
        %v7503 = vmax.f32 %v7501, %v7502
        %v7504 = vrot.slane %v7503, 1
        %v7505 = vmax.f32 %v7503, %v7504
        %v7506 = vsel %vm774, %v7193, -inf
        %v7507 = vsel %vm774, %v7194, -inf
        %v7508 = vmax.f32 %v7506, %v7507
        %v7509 = vrot.slane %v7508, 4
        %v7510 = vmax.f32 %v7508, %v7509
        %v7511 = vrot.slane %v7510, 2
        %v7512 = vmax.f32 %v7510, %v7511
        %v7513 = vrot.slane %v7512, 1
        %v7514 = vmax.f32 %v7512, %v7513
        %v7515 = vsel %vm774, %v7195, -inf
        %v7516 = vsel %vm774, %v7196, -inf
        %v7517 = vmax.f32 %v7515, %v7516
        %v7518 = vrot.slane %v7517, 4
        %v7519 = vmax.f32 %v7517, %v7518
        %v7520 = vrot.slane %v7519, 2
        %v7521 = vmax.f32 %v7519, %v7520
        %v7522 = vrot.slane %v7521, 1
        %v7523 = vmax.f32 %v7521, %v7522
        %v7524 = vsel %vm774, %v7197, -inf
        %v7525 = vsel %vm774, %v7198, -inf
        %v7526 = vmax.f32 %v7524, %v7525
        %v7527 = vrot.slane %v7526, 4
        %v7528 = vmax.f32 %v7526, %v7527
        %v7529 = vrot.slane %v7528, 2
        %v7530 = vmax.f32 %v7528, %v7529
        %v7531 = vrot.slane %v7530, 1
        %v7532 = vmax.f32 %v7530, %v7531
        %v7533 = vsel %vm774, %v7199, -inf
        %v7534 = vsel %vm774, %v7200, -inf
        %v7535 = vmax.f32 %v7533, %v7534
        %v7536 = vrot.slane %v7535, 4
        %v7537 = vmax.f32 %v7535, %v7536
        %v7538 = vrot.slane %v7537, 2
        %v7539 = vmax.f32 %v7537, %v7538
        %v7540 = vrot.slane %v7539, 1
        %v7541 = vmax.f32 %v7539, %v7540
        %v7542 = vsel %vm774, %v7201, -inf
        %v7543 = vsel %vm774, %v7202, -inf
        %v7544 = vmax.f32 %v7542, %v7543
        %v7545 = vrot.slane %v7544, 4
        %v7546 = vmax.f32 %v7544, %v7545
        %v7547 = vrot.slane %v7546, 2
        %v7548 = vmax.f32 %v7546, %v7547
        %v7549 = vrot.slane %v7548, 1
        %v7550 = vmax.f32 %v7548, %v7549
        %v7551 = vsel %vm774, %v7203, -inf
        %v7552 = vsel %vm774, %v7204, -inf
        %v7553 = vmax.f32 %v7551, %v7552
        %v7554 = vrot.slane %v7553, 4
        %v7555 = vmax.f32 %v7553, %v7554
        %v7556 = vrot.slane %v7555, 2
        %v7557 = vmax.f32 %v7555, %v7556
        %v7558 = vrot.slane %v7557, 1
        %v7559 = vmax.f32 %v7557, %v7558
        %v7560 = vsel %vm774, %v7205, -inf
        %v7561 = vsel %vm774, %v7206, -inf
        %v7562 = vmax.f32 %v7560, %v7561
        %v7563 = vrot.slane %v7562, 4
        %v7564 = vmax.f32 %v7562, %v7563
        %v7565 = vrot.slane %v7564, 2
        %v7566 = vmax.f32 %v7564, %v7565
        %v7567 = vrot.slane %v7566, 1
        %v7568 = vmax.f32 %v7566, %v7567
        %v7569 = vsel %vm774, %v7207, -inf
        %v7570 = vsel %vm774, %v7208, -inf
        %v7571 = vmax.f32 %v7569, %v7570
        %v7572 = vrot.slane %v7571, 4
        %v7573 = vmax.f32 %v7571, %v7572
        %v7574 = vrot.slane %v7573, 2
        %v7575 = vmax.f32 %v7573, %v7574
        %v7576 = vrot.slane %v7575, 1
        %v7577 = vmax.f32 %v7575, %v7576
        %v7578 = vsel %vm774, %v7209, -inf
        %v7579 = vsel %vm774, %v7210, -inf
        %v7580 = vmax.f32 %v7578, %v7579
        %v7581 = vrot.slane %v7580, 4
        %v7582 = vmax.f32 %v7580, %v7581
        %v7583 = vrot.slane %v7582, 2
        %v7584 = vmax.f32 %v7582, %v7583
        %v7585 = vrot.slane %v7584, 1
        %v7586 = vmax.f32 %v7584, %v7585
        %v7587 = vsel %vm774, %v7211, -inf
        %v7588 = vsel %vm774, %v7212, -inf
        %v7589 = vmax.f32 %v7587, %v7588
        %v7590 = vrot.slane %v7589, 4
        %v7591 = vmax.f32 %v7589, %v7590
        %v7592 = vrot.slane %v7591, 2
        %v7593 = vmax.f32 %v7591, %v7592
        %v7594 = vrot.slane %v7593, 1
        %v7595 = vmax.f32 %v7593, %v7594
        %v7596 = vsel %vm774, %v7213, -inf
        %v7597 = vsel %vm774, %v7214, -inf
        %v7598 = vmax.f32 %v7596, %v7597
        %v7599 = vrot.slane %v7598, 4
        %v7600 = vmax.f32 %v7598, %v7599
        %v7601 = vrot.slane %v7600, 2
        %v7602 = vmax.f32 %v7600, %v7601
        %v7603 = vrot.slane %v7602, 1
        %v7604 = vmax.f32 %v7602, %v7603
        %v7605 = vsel %vm774, %v7215, -inf
        %v7606 = vsel %vm774, %v7216, -inf
        %v7607 = vmax.f32 %v7605, %v7606
        %v7608 = vrot.slane %v7607, 4
        %v7609 = vmax.f32 %v7607, %v7608
        %v7610 = vrot.slane %v7609, 2
        %v7611 = vmax.f32 %v7609, %v7610
        %v7612 = vrot.slane %v7611, 1
        %v7613 = vmax.f32 %v7611, %v7612
        %v7614 = vsel %vm774, %v7217, -inf
        %v7615 = vsel %vm774, %v7218, -inf
        %v7616 = vmax.f32 %v7614, %v7615
        %v7617 = vrot.slane %v7616, 4
        %v7618 = vmax.f32 %v7616, %v7617
        %v7619 = vrot.slane %v7618, 2
        %v7620 = vmax.f32 %v7618, %v7619
        %v7621 = vrot.slane %v7620, 1
        %v7622 = vmax.f32 %v7620, %v7621
        %v7623 = vsel %vm774, %v7219, -inf
        %v7624 = vsel %vm774, %v7220, -inf
        %v7625 = vmax.f32 %v7623, %v7624
        %v7626 = vrot.slane %v7625, 4
        %v7627 = vmax.f32 %v7625, %v7626
        %v7628 = vrot.slane %v7627, 2
        %v7629 = vmax.f32 %v7627, %v7628
        %v7630 = vrot.slane %v7629, 1
        %v7631 = vmax.f32 %v7629, %v7630
        %v7632 = vsel %vm774, %v7221, -inf
        %v7633 = vsel %vm774, %v7222, -inf
        %v7634 = vmax.f32 %v7632, %v7633
        %v7635 = vrot.slane %v7634, 4
        %v7636 = vmax.f32 %v7634, %v7635
        %v7637 = vrot.slane %v7636, 2
        %v7638 = vmax.f32 %v7636, %v7637
        %v7639 = vrot.slane %v7638, 1
        %v7640 = vmax.f32 %v7638, %v7639
        %v7641 = vsel %vm774, %v7223, -inf
        %v7642 = vsel %vm774, %v7224, -inf
        %v7643 = vmax.f32 %v7641, %v7642
        %v7644 = vrot.slane %v7643, 4
        %v7645 = vmax.f32 %v7643, %v7644
        %v7646 = vrot.slane %v7645, 2
        %v7647 = vmax.f32 %v7645, %v7646
        %v7648 = vrot.slane %v7647, 1
        %v7649 = vmax.f32 %v7647, %v7648
        %v7650 = vsel %vm774, %v7225, -inf
        %v7651 = vsel %vm774, %v7226, -inf
        %v7652 = vmax.f32 %v7650, %v7651
        %v7653 = vrot.slane %v7652, 4
        %v7654 = vmax.f32 %v7652, %v7653
        %v7655 = vrot.slane %v7654, 2
        %v7656 = vmax.f32 %v7654, %v7655
        %v7657 = vrot.slane %v7656, 1
        %v7658 = vmax.f32 %v7656, %v7657
        %v7659 = vsub.f32 %v7131, %v7235
        %v7660 = vsub.f32 %v7132, %v7235
        %v7661 = vsub.f32 %v7133, %v7244
        %v7662 = vsub.f32 %v7134, %v7244
        %v7663 = vsub.f32 %v7135, %v7253
        %v7664 = vsub.f32 %v7136, %v7253
        %v7665 = vsub.f32 %v7137, %v7262
        %v7666 = vsub.f32 %v7138, %v7262
        %v7667 = vsub.f32 %v7139, %v7271
        %v7668 = vsub.f32 %v7140, %v7271
        %v7669 = vsub.f32 %v7141, %v7280
        %v7670 = vsub.f32 %v7142, %v7280
        %v7671 = vsub.f32 %v7143, %v7289
        %v7672 = vsub.f32 %v7144, %v7289
        %v7673 = vsub.f32 %v7145, %v7298
        %v7674 = vsub.f32 %v7146, %v7298
        %v7675 = vsub.f32 %v7147, %v7307
        %v7676 = vsub.f32 %v7148, %v7307
        %v7677 = vsub.f32 %v7149, %v7316
        %v7678 = vsub.f32 %v7150, %v7316
        %v7679 = vsub.f32 %v7151, %v7325
        %v7680 = vsub.f32 %v7152, %v7325
        %v7681 = vsub.f32 %v7153, %v7334
        %v7682 = vsub.f32 %v7154, %v7334
        %v7683 = vsub.f32 %v7155, %v7343
        %v7684 = vsub.f32 %v7156, %v7343
        %v7685 = vsub.f32 %v7157, %v7352
        %v7686 = vsub.f32 %v7158, %v7352
        %v7687 = vsub.f32 %v7159, %v7361
        %v7688 = vsub.f32 %v7160, %v7361
        %v7689 = vsub.f32 %v7161, %v7370
        %v7690 = vsub.f32 %v7162, %v7370
        %v7691 = vsub.f32 %v7163, %v7379
        %v7692 = vsub.f32 %v7164, %v7379
        %v7693 = vsub.f32 %v7165, %v7388
        %v7694 = vsub.f32 %v7166, %v7388
        %v7695 = vsub.f32 %v7167, %v7397
        %v7696 = vsub.f32 %v7168, %v7397
        %v7697 = vsub.f32 %v7169, %v7406
        %v7698 = vsub.f32 %v7170, %v7406
        %v7699 = vsub.f32 %v7171, %v7415
        %v7700 = vsub.f32 %v7172, %v7415
        %v7701 = vsub.f32 %v7173, %v7424
        %v7702 = vsub.f32 %v7174, %v7424
        %v7703 = vsub.f32 %v7175, %v7433
        %v7704 = vsub.f32 %v7176, %v7433
        %v7705 = vsub.f32 %v7177, %v7442
        %v7706 = vsub.f32 %v7178, %v7442
        %v7707 = vsub.f32 %v7179, %v7451
        %v7708 = vsub.f32 %v7180, %v7451
        %v7709 = vsub.f32 %v7181, %v7460
        %v7710 = vsub.f32 %v7182, %v7460
        %v7711 = vsub.f32 %v7183, %v7469
        %v7712 = vsub.f32 %v7184, %v7469
        %v7713 = vsub.f32 %v7185, %v7478
        %v7714 = vsub.f32 %v7186, %v7478
        %v7715 = vsub.f32 %v7187, %v7487
        %v7716 = vsub.f32 %v7188, %v7487
        %v7717 = vsub.f32 %v7189, %v7496
        %v7718 = vsub.f32 %v7190, %v7496
        %v7719 = vsub.f32 %v7191, %v7505
        %v7720 = vsub.f32 %v7192, %v7505
        %v7721 = vsub.f32 %v7193, %v7514
        %v7722 = vsub.f32 %v7194, %v7514
        %v7723 = vsub.f32 %v7195, %v7523
        %v7724 = vsub.f32 %v7196, %v7523
        %v7725 = vsub.f32 %v7197, %v7532
        %v7726 = vsub.f32 %v7198, %v7532
        %v7727 = vsub.f32 %v7199, %v7541
        %v7728 = vsub.f32 %v7200, %v7541
        %v7729 = vsub.f32 %v7201, %v7550
        %v7730 = vsub.f32 %v7202, %v7550
        %v7731 = vsub.f32 %v7203, %v7559
        %v7732 = vsub.f32 %v7204, %v7559
        %v7733 = vsub.f32 %v7205, %v7568
        %v7734 = vsub.f32 %v7206, %v7568
        %v7735 = vsub.f32 %v7207, %v7577
        %v7736 = vsub.f32 %v7208, %v7577
        %v7737 = vsub.f32 %v7209, %v7586
        %v7738 = vsub.f32 %v7210, %v7586
        %v7739 = vsub.f32 %v7211, %v7595
        %v7740 = vsub.f32 %v7212, %v7595
        %v7741 = vsub.f32 %v7213, %v7604
        %v7742 = vsub.f32 %v7214, %v7604
        %v7743 = vsub.f32 %v7215, %v7613
        %v7744 = vsub.f32 %v7216, %v7613
        %v7745 = vsub.f32 %v7217, %v7622
        %v7746 = vsub.f32 %v7218, %v7622
        %v7747 = vsub.f32 %v7219, %v7631
        %v7748 = vsub.f32 %v7220, %v7631
        %v7749 = vsub.f32 %v7221, %v7640
        %v7750 = vsub.f32 %v7222, %v7640
        %v7751 = vsub.f32 %v7223, %v7649
        %v7752 = vsub.f32 %v7224, %v7649
        %v7753 = vsub.f32 %v7225, %v7658
        %v7754 = vsub.f32 %v7226, %v7658
        %v7755 = vmul.f32 %v7659, 1.442695
        %v7756 = vpow.pop %v7755
        %v7757 = vmul.f32 %v7660, 1.442695
        %v7758 = vpow.pop %v7757
        %v7759 = vmul.f32 %v7661, 1.442695
        %v7760 = vpow.pop %v7759
        %v7761 = vmul.f32 %v7662, 1.442695
        %v7762 = vpow.pop %v7761
        %v7763 = vmul.f32 %v7663, 1.442695
        %v7764 = vpow.pop %v7763
        %v7765 = vmul.f32 %v7664, 1.442695
        %v7766 = vpow.pop %v7765
        %v7767 = vmul.f32 %v7665, 1.442695
        %v7768 = vpow.pop %v7767
        %v7769 = vmul.f32 %v7666, 1.442695
        %v7770 = vpow.pop %v7769
        %v7771 = vmul.f32 %v7667, 1.442695
        %v7772 = vpow.pop %v7771
        %v7773 = vmul.f32 %v7668, 1.442695
        %v7774 = vpow.pop %v7773
        %v7775 = vmul.f32 %v7669, 1.442695
        %v7776 = vpow.pop %v7775
        %v7777 = vmul.f32 %v7670, 1.442695
        %v7778 = vpow.pop %v7777
        %v7779 = vmul.f32 %v7671, 1.442695
        %v7780 = vpow.pop %v7779
        %v7781 = vmul.f32 %v7672, 1.442695
        %v7782 = vpow.pop %v7781
        %v7783 = vmul.f32 %v7673, 1.442695
        %v7784 = vpow.pop %v7783
        %v7785 = vmul.f32 %v7674, 1.442695
        %v7786 = vpow.pop %v7785
        %v7787 = vmul.f32 %v7675, 1.442695
        %v7788 = vpow.pop %v7787
        %v7789 = vmul.f32 %v7676, 1.442695
        %v7790 = vpow.pop %v7789
        %v7791 = vmul.f32 %v7677, 1.442695
        %v7792 = vpow.pop %v7791
        %v7793 = vmul.f32 %v7678, 1.442695
        %v7794 = vpow.pop %v7793
        %v7795 = vmul.f32 %v7679, 1.442695
        %v7796 = vpow.pop %v7795
        %v7797 = vmul.f32 %v7680, 1.442695
        %v7798 = vpow.pop %v7797
        %v7799 = vmul.f32 %v7681, 1.442695
        %v7800 = vpow.pop %v7799
        %v7801 = vmul.f32 %v7682, 1.442695
        %v7802 = vpow.pop %v7801
        %v7803 = vmul.f32 %v7683, 1.442695
        %v7804 = vpow.pop %v7803
        %v7805 = vmul.f32 %v7684, 1.442695
        %v7806 = vpow.pop %v7805
        %v7807 = vmul.f32 %v7685, 1.442695
        %v7808 = vpow.pop %v7807
        %v7809 = vmul.f32 %v7686, 1.442695
        %v7810 = vpow.pop %v7809
        %v7811 = vmul.f32 %v7687, 1.442695
        %v7812 = vpow.pop %v7811
        %v7813 = vmul.f32 %v7688, 1.442695
        %v7814 = vpow.pop %v7813
        %v7815 = vmul.f32 %v7689, 1.442695
        %v7816 = vpow.pop %v7815
        %v7817 = vmul.f32 %v7690, 1.442695
        %v7818 = vpow.pop %v7817
        %v7819 = vmul.f32 %v7691, 1.442695
        %v7820 = vpow.pop %v7819
        %v7821 = vmul.f32 %v7692, 1.442695
        %v7822 = vpow.pop %v7821
        %v7823 = vmul.f32 %v7693, 1.442695
        %v7824 = vpow.pop %v7823
        %v7825 = vmul.f32 %v7694, 1.442695
        %v7826 = vpow.pop %v7825
        %v7827 = vmul.f32 %v7695, 1.442695
        %v7828 = vpow.pop %v7827
        %v7829 = vmul.f32 %v7696, 1.442695
        %v7830 = vpow.pop %v7829
        %v7831 = vmul.f32 %v7697, 1.442695
        %v7832 = vpow.pop %v7831
        %v7833 = vmul.f32 %v7698, 1.442695
        %v7834 = vpow.pop %v7833
        %v7835 = vmul.f32 %v7699, 1.442695
        %v7836 = vpow.pop %v7835
        %v7837 = vmul.f32 %v7700, 1.442695
        %v7838 = vpow.pop %v7837
        %v7839 = vmul.f32 %v7701, 1.442695
        %v7840 = vpow.pop %v7839
        %v7841 = vmul.f32 %v7702, 1.442695
        %v7842 = vpow.pop %v7841
        %v7843 = vmul.f32 %v7703, 1.442695
        %v7844 = vpow.pop %v7843
        %v7845 = vmul.f32 %v7704, 1.442695
        %v7846 = vpow.pop %v7845
        %v7847 = vmul.f32 %v7705, 1.442695
        %v7848 = vpow.pop %v7847
        %v7849 = vmul.f32 %v7706, 1.442695
        %v7850 = vpow.pop %v7849
        %v7851 = vmul.f32 %v7707, 1.442695
        %v7852 = vpow.pop %v7851
        %v7853 = vmul.f32 %v7708, 1.442695
        %v7854 = vpow.pop %v7853
        %v7855 = vmul.f32 %v7709, 1.442695
        %v7856 = vpow.pop %v7855
        %v7857 = vmul.f32 %v7710, 1.442695
        %v7858 = vpow.pop %v7857
        %v7859 = vmul.f32 %v7711, 1.442695
        %v7860 = vpow.pop %v7859
        %v7861 = vmul.f32 %v7712, 1.442695
        %v7862 = vpow.pop %v7861
        %v7863 = vmul.f32 %v7713, 1.442695
        %v7864 = vpow.pop %v7863
        %v7865 = vmul.f32 %v7714, 1.442695
        %v7866 = vpow.pop %v7865
        %v7867 = vmul.f32 %v7715, 1.442695
        %v7868 = vpow.pop %v7867
        %v7869 = vmul.f32 %v7716, 1.442695
        %v7870 = vpow.pop %v7869
        %v7871 = vmul.f32 %v7717, 1.442695
        %v7872 = vpow.pop %v7871
        %v7873 = vmul.f32 %v7718, 1.442695
        %v7874 = vpow.pop %v7873
        %v7875 = vmul.f32 %v7719, 1.442695
        %v7876 = vpow.pop %v7875
        %v7877 = vmul.f32 %v7720, 1.442695
        %v7878 = vpow.pop %v7877
        %v7879 = vmul.f32 %v7721, 1.442695
        %v7880 = vpow.pop %v7879
        %v7881 = vmul.f32 %v7722, 1.442695
        %v7882 = vpow.pop %v7881
        %v7883 = vmul.f32 %v7723, 1.442695
        %v7884 = vpow.pop %v7883
        %v7885 = vmul.f32 %v7724, 1.442695
        %v7886 = vpow.pop %v7885
        %v7887 = vmul.f32 %v7725, 1.442695
        %v7888 = vpow.pop %v7887
        %v7889 = vmul.f32 %v7726, 1.442695
        %v7890 = vpow.pop %v7889
        %v7891 = vmul.f32 %v7727, 1.442695
        %v7892 = vpow.pop %v7891
        %v7893 = vmul.f32 %v7728, 1.442695
        %v7894 = vpow.pop %v7893
        %v7895 = vmul.f32 %v7729, 1.442695
        %v7896 = vpow.pop %v7895
        %v7897 = vmul.f32 %v7730, 1.442695
        %v7898 = vpow.pop %v7897
        %v7899 = vmul.f32 %v7731, 1.442695
        %v7900 = vpow.pop %v7899
        %v7901 = vmul.f32 %v7732, 1.442695
        %v7902 = vpow.pop %v7901
        %v7903 = vmul.f32 %v7733, 1.442695
        %v7904 = vpow.pop %v7903
        %v7905 = vmul.f32 %v7734, 1.442695
        %v7906 = vpow.pop %v7905
        %v7907 = vmul.f32 %v7735, 1.442695
        %v7908 = vpow.pop %v7907
        %v7909 = vmul.f32 %v7736, 1.442695
        %v7910 = vpow.pop %v7909
        %v7911 = vmul.f32 %v7737, 1.442695
        %v7912 = vpow.pop %v7911
        %v7913 = vmul.f32 %v7738, 1.442695
        %v7914 = vpow.pop %v7913
        %v7915 = vmul.f32 %v7739, 1.442695
        %v7916 = vpow.pop %v7915
        %v7917 = vmul.f32 %v7740, 1.442695
        %v7918 = vpow.pop %v7917
        %v7919 = vmul.f32 %v7741, 1.442695
        %v7920 = vpow.pop %v7919
        %v7921 = vmul.f32 %v7742, 1.442695
        %v7922 = vpow.pop %v7921
        %v7923 = vmul.f32 %v7743, 1.442695
        %v7924 = vpow.pop %v7923
        %v7925 = vmul.f32 %v7744, 1.442695
        %v7926 = vpow.pop %v7925
        %v7927 = vmul.f32 %v7745, 1.442695
        %v7928 = vpow.pop %v7927
        %v7929 = vmul.f32 %v7746, 1.442695
        %v7930 = vpow.pop %v7929
        %v7931 = vmul.f32 %v7747, 1.442695
        %v7932 = vpow.pop %v7931
        %v7933 = vmul.f32 %v7748, 1.442695
        %v7934 = vpow.pop %v7933
        %v7935 = vmul.f32 %v7749, 1.442695
        %v7936 = vpow.pop %v7935
        %v7937 = vmul.f32 %v7750, 1.442695
        %v7938 = vpow.pop %v7937
        %v7939 = vmul.f32 %v7751, 1.442695
        %v7940 = vpow.pop %v7939
        %v7941 = vmul.f32 %v7752, 1.442695
        %v7942 = vpow.pop %v7941
        %v7943 = vmul.f32 %v7753, 1.442695
        %v7944 = vpow.pop %v7943
        %v7945 = vmul.f32 %v7754, 1.442695
        %v7946 = vpow.pop %v7945
        %v7947 = vsel %vm774, %v7756, 0.0
        %v7948 = vsel %vm774, %v7758, 0.0
        %v7949 = vadd.f32 %v7947, %v7948
        %v7950 = vrot.slane %v7949, 4
        %v7951 = vadd.f32 %v7949, %v7950
        %v7952 = vrot.slane %v7951, 2
        %v7953 = vadd.f32 %v7951, %v7952
        %v7954 = vrot.slane %v7953, 1
        %v7955 = vadd.f32 %v7953, %v7954
        %v7956 = vsel %vm774, %v7760, 0.0
        %v7957 = vsel %vm774, %v7762, 0.0
        %v7958 = vadd.f32 %v7956, %v7957
        %v7959 = vrot.slane %v7958, 4
        %v7960 = vadd.f32 %v7958, %v7959
        %v7961 = vrot.slane %v7960, 2
        %v7962 = vadd.f32 %v7960, %v7961
        %v7963 = vrot.slane %v7962, 1
        %v7964 = vadd.f32 %v7962, %v7963
        %v7965 = vsel %vm774, %v7764, 0.0
        %v7966 = vsel %vm774, %v7766, 0.0
        %v7967 = vadd.f32 %v7965, %v7966
        %v7968 = vrot.slane %v7967, 4
        %v7969 = vadd.f32 %v7967, %v7968
        %v7970 = vrot.slane %v7969, 2
        %v7971 = vadd.f32 %v7969, %v7970
        %v7972 = vrot.slane %v7971, 1
        %v7973 = vadd.f32 %v7971, %v7972
        %v7974 = vsel %vm774, %v7768, 0.0
        %v7975 = vsel %vm774, %v7770, 0.0
        %v7976 = vadd.f32 %v7974, %v7975
        %v7977 = vrot.slane %v7976, 4
        %v7978 = vadd.f32 %v7976, %v7977
        %v7979 = vrot.slane %v7978, 2
        %v7980 = vadd.f32 %v7978, %v7979
        %v7981 = vrot.slane %v7980, 1
        %v7982 = vadd.f32 %v7980, %v7981
        %v7983 = vsel %vm774, %v7772, 0.0
        %v7984 = vsel %vm774, %v7774, 0.0
        %v7985 = vadd.f32 %v7983, %v7984
        %v7986 = vrot.slane %v7985, 4
        %v7987 = vadd.f32 %v7985, %v7986
        %v7988 = vrot.slane %v7987, 2
        %v7989 = vadd.f32 %v7987, %v7988
        %v7990 = vrot.slane %v7989, 1
        %v7991 = vadd.f32 %v7989, %v7990
        %v7992 = vsel %vm774, %v7776, 0.0
        %v7993 = vsel %vm774, %v7778, 0.0
        %v7994 = vadd.f32 %v7992, %v7993
        %v7995 = vrot.slane %v7994, 4
        %v7996 = vadd.f32 %v7994, %v7995
        %v7997 = vrot.slane %v7996, 2
        %v7998 = vadd.f32 %v7996, %v7997
        %v7999 = vrot.slane %v7998, 1
        %v8000 = vadd.f32 %v7998, %v7999
        %v8001 = vsel %vm774, %v7780, 0.0
        %v8002 = vsel %vm774, %v7782, 0.0
        %v8003 = vadd.f32 %v8001, %v8002
        %v8004 = vrot.slane %v8003, 4
        %v8005 = vadd.f32 %v8003, %v8004
        %v8006 = vrot.slane %v8005, 2
        %v8007 = vadd.f32 %v8005, %v8006
        %v8008 = vrot.slane %v8007, 1
        %v8009 = vadd.f32 %v8007, %v8008
        %v8010 = vsel %vm774, %v7784, 0.0
        %v8011 = vsel %vm774, %v7786, 0.0
        %v8012 = vadd.f32 %v8010, %v8011
        %v8013 = vrot.slane %v8012, 4
        %v8014 = vadd.f32 %v8012, %v8013
        %v8015 = vrot.slane %v8014, 2
        %v8016 = vadd.f32 %v8014, %v8015
        %v8017 = vrot.slane %v8016, 1
        %v8018 = vadd.f32 %v8016, %v8017
        %v8019 = vsel %vm774, %v7788, 0.0
        %v8020 = vsel %vm774, %v7790, 0.0
        %v8021 = vadd.f32 %v8019, %v8020
        %v8022 = vrot.slane %v8021, 4
        %v8023 = vadd.f32 %v8021, %v8022
        %v8024 = vrot.slane %v8023, 2
        %v8025 = vadd.f32 %v8023, %v8024
        %v8026 = vrot.slane %v8025, 1
        %v8027 = vadd.f32 %v8025, %v8026
        %v8028 = vsel %vm774, %v7792, 0.0
        %v8029 = vsel %vm774, %v7794, 0.0
        %v8030 = vadd.f32 %v8028, %v8029
        %v8031 = vrot.slane %v8030, 4
        %v8032 = vadd.f32 %v8030, %v8031
        %v8033 = vrot.slane %v8032, 2
        %v8034 = vadd.f32 %v8032, %v8033
        %v8035 = vrot.slane %v8034, 1
        %v8036 = vadd.f32 %v8034, %v8035
        %v8037 = vsel %vm774, %v7796, 0.0
        %v8038 = vsel %vm774, %v7798, 0.0
        %v8039 = vadd.f32 %v8037, %v8038
        %v8040 = vrot.slane %v8039, 4
        %v8041 = vadd.f32 %v8039, %v8040
        %v8042 = vrot.slane %v8041, 2
        %v8043 = vadd.f32 %v8041, %v8042
        %v8044 = vrot.slane %v8043, 1
        %v8045 = vadd.f32 %v8043, %v8044
        %v8046 = vsel %vm774, %v7800, 0.0
        %v8047 = vsel %vm774, %v7802, 0.0
        %v8048 = vadd.f32 %v8046, %v8047
        %v8049 = vrot.slane %v8048, 4
        %v8050 = vadd.f32 %v8048, %v8049
        %v8051 = vrot.slane %v8050, 2
        %v8052 = vadd.f32 %v8050, %v8051
        %v8053 = vrot.slane %v8052, 1
        %v8054 = vadd.f32 %v8052, %v8053
        %v8055 = vsel %vm774, %v7804, 0.0
        %v8056 = vsel %vm774, %v7806, 0.0
        %v8057 = vadd.f32 %v8055, %v8056
        %v8058 = vrot.slane %v8057, 4
        %v8059 = vadd.f32 %v8057, %v8058
        %v8060 = vrot.slane %v8059, 2
        %v8061 = vadd.f32 %v8059, %v8060
        %v8062 = vrot.slane %v8061, 1
        %v8063 = vadd.f32 %v8061, %v8062
        %v8064 = vsel %vm774, %v7808, 0.0
        %v8065 = vsel %vm774, %v7810, 0.0
        %v8066 = vadd.f32 %v8064, %v8065
        %v8067 = vrot.slane %v8066, 4
        %v8068 = vadd.f32 %v8066, %v8067
        %v8069 = vrot.slane %v8068, 2
        %v8070 = vadd.f32 %v8068, %v8069
        %v8071 = vrot.slane %v8070, 1
        %v8072 = vadd.f32 %v8070, %v8071
        %v8073 = vsel %vm774, %v7812, 0.0
        %v8074 = vsel %vm774, %v7814, 0.0
        %v8075 = vadd.f32 %v8073, %v8074
        %v8076 = vrot.slane %v8075, 4
        %v8077 = vadd.f32 %v8075, %v8076
        %v8078 = vrot.slane %v8077, 2
        %v8079 = vadd.f32 %v8077, %v8078
        %v8080 = vrot.slane %v8079, 1
        %v8081 = vadd.f32 %v8079, %v8080
        %v8082 = vsel %vm774, %v7816, 0.0
        %v8083 = vsel %vm774, %v7818, 0.0
        %v8084 = vadd.f32 %v8082, %v8083
        %v8085 = vrot.slane %v8084, 4
        %v8086 = vadd.f32 %v8084, %v8085
        %v8087 = vrot.slane %v8086, 2
        %v8088 = vadd.f32 %v8086, %v8087
        %v8089 = vrot.slane %v8088, 1
        %v8090 = vadd.f32 %v8088, %v8089
        %v8091 = vsel %vm774, %v7820, 0.0
        %v8092 = vsel %vm774, %v7822, 0.0
        %v8093 = vadd.f32 %v8091, %v8092
        %v8094 = vrot.slane %v8093, 4
        %v8095 = vadd.f32 %v8093, %v8094
        %v8096 = vrot.slane %v8095, 2
        %v8097 = vadd.f32 %v8095, %v8096
        %v8098 = vrot.slane %v8097, 1
        %v8099 = vadd.f32 %v8097, %v8098
        %v8100 = vsel %vm774, %v7824, 0.0
        %v8101 = vsel %vm774, %v7826, 0.0
        %v8102 = vadd.f32 %v8100, %v8101
        %v8103 = vrot.slane %v8102, 4
        %v8104 = vadd.f32 %v8102, %v8103
        %v8105 = vrot.slane %v8104, 2
        %v8106 = vadd.f32 %v8104, %v8105
        %v8107 = vrot.slane %v8106, 1
        %v8108 = vadd.f32 %v8106, %v8107
        %v8109 = vsel %vm774, %v7828, 0.0
        %v8110 = vsel %vm774, %v7830, 0.0
        %v8111 = vadd.f32 %v8109, %v8110
        %v8112 = vrot.slane %v8111, 4
        %v8113 = vadd.f32 %v8111, %v8112
        %v8114 = vrot.slane %v8113, 2
        %v8115 = vadd.f32 %v8113, %v8114
        %v8116 = vrot.slane %v8115, 1
        %v8117 = vadd.f32 %v8115, %v8116
        %v8118 = vsel %vm774, %v7832, 0.0
        %v8119 = vsel %vm774, %v7834, 0.0
        %v8120 = vadd.f32 %v8118, %v8119
        %v8121 = vrot.slane %v8120, 4
        %v8122 = vadd.f32 %v8120, %v8121
        %v8123 = vrot.slane %v8122, 2
        %v8124 = vadd.f32 %v8122, %v8123
        %v8125 = vrot.slane %v8124, 1
        %v8126 = vadd.f32 %v8124, %v8125
        %v8127 = vsel %vm774, %v7836, 0.0
        %v8128 = vsel %vm774, %v7838, 0.0
        %v8129 = vadd.f32 %v8127, %v8128
        %v8130 = vrot.slane %v8129, 4
        %v8131 = vadd.f32 %v8129, %v8130
        %v8132 = vrot.slane %v8131, 2
        %v8133 = vadd.f32 %v8131, %v8132
        %v8134 = vrot.slane %v8133, 1
        %v8135 = vadd.f32 %v8133, %v8134
        %v8136 = vsel %vm774, %v7840, 0.0
        %v8137 = vsel %vm774, %v7842, 0.0
        %v8138 = vadd.f32 %v8136, %v8137
        %v8139 = vrot.slane %v8138, 4
        %v8140 = vadd.f32 %v8138, %v8139
        %v8141 = vrot.slane %v8140, 2
        %v8142 = vadd.f32 %v8140, %v8141
        %v8143 = vrot.slane %v8142, 1
        %v8144 = vadd.f32 %v8142, %v8143
        %v8145 = vsel %vm774, %v7844, 0.0
        %v8146 = vsel %vm774, %v7846, 0.0
        %v8147 = vadd.f32 %v8145, %v8146
        %v8148 = vrot.slane %v8147, 4
        %v8149 = vadd.f32 %v8147, %v8148
        %v8150 = vrot.slane %v8149, 2
        %v8151 = vadd.f32 %v8149, %v8150
        %v8152 = vrot.slane %v8151, 1
        %v8153 = vadd.f32 %v8151, %v8152
        %v8154 = vsel %vm774, %v7848, 0.0
        %v8155 = vsel %vm774, %v7850, 0.0
        %v8156 = vadd.f32 %v8154, %v8155
        %v8157 = vrot.slane %v8156, 4
        %v8158 = vadd.f32 %v8156, %v8157
        %v8159 = vrot.slane %v8158, 2
        %v8160 = vadd.f32 %v8158, %v8159
        %v8161 = vrot.slane %v8160, 1
        %v8162 = vadd.f32 %v8160, %v8161
        %v8163 = vsel %vm774, %v7852, 0.0
        %v8164 = vsel %vm774, %v7854, 0.0
        %v8165 = vadd.f32 %v8163, %v8164
        %v8166 = vrot.slane %v8165, 4
        %v8167 = vadd.f32 %v8165, %v8166
        %v8168 = vrot.slane %v8167, 2
        %v8169 = vadd.f32 %v8167, %v8168
        %v8170 = vrot.slane %v8169, 1
        %v8171 = vadd.f32 %v8169, %v8170
        %v8172 = vsel %vm774, %v7856, 0.0
        %v8173 = vsel %vm774, %v7858, 0.0
        %v8174 = vadd.f32 %v8172, %v8173
        %v8175 = vrot.slane %v8174, 4
        %v8176 = vadd.f32 %v8174, %v8175
        %v8177 = vrot.slane %v8176, 2
        %v8178 = vadd.f32 %v8176, %v8177
        %v8179 = vrot.slane %v8178, 1
        %v8180 = vadd.f32 %v8178, %v8179
        %v8181 = vsel %vm774, %v7860, 0.0
        %v8182 = vsel %vm774, %v7862, 0.0
        %v8183 = vadd.f32 %v8181, %v8182
        %v8184 = vrot.slane %v8183, 4
        %v8185 = vadd.f32 %v8183, %v8184
        %v8186 = vrot.slane %v8185, 2
        %v8187 = vadd.f32 %v8185, %v8186
        %v8188 = vrot.slane %v8187, 1
        %v8189 = vadd.f32 %v8187, %v8188
        %v8190 = vsel %vm774, %v7864, 0.0
        %v8191 = vsel %vm774, %v7866, 0.0
        %v8192 = vadd.f32 %v8190, %v8191
        %v8193 = vrot.slane %v8192, 4
        %v8194 = vadd.f32 %v8192, %v8193
        %v8195 = vrot.slane %v8194, 2
        %v8196 = vadd.f32 %v8194, %v8195
        %v8197 = vrot.slane %v8196, 1
        %v8198 = vadd.f32 %v8196, %v8197
        %v8199 = vsel %vm774, %v7868, 0.0
        %v8200 = vsel %vm774, %v7870, 0.0
        %v8201 = vadd.f32 %v8199, %v8200
        %v8202 = vrot.slane %v8201, 4
        %v8203 = vadd.f32 %v8201, %v8202
        %v8204 = vrot.slane %v8203, 2
        %v8205 = vadd.f32 %v8203, %v8204
        %v8206 = vrot.slane %v8205, 1
        %v8207 = vadd.f32 %v8205, %v8206
        %v8208 = vsel %vm774, %v7872, 0.0
        %v8209 = vsel %vm774, %v7874, 0.0
        %v8210 = vadd.f32 %v8208, %v8209
        %v8211 = vrot.slane %v8210, 4
        %v8212 = vadd.f32 %v8210, %v8211
        %v8213 = vrot.slane %v8212, 2
        %v8214 = vadd.f32 %v8212, %v8213
        %v8215 = vrot.slane %v8214, 1
        %v8216 = vadd.f32 %v8214, %v8215
        %v8217 = vsel %vm774, %v7876, 0.0
        %v8218 = vsel %vm774, %v7878, 0.0
        %v8219 = vadd.f32 %v8217, %v8218
        %v8220 = vrot.slane %v8219, 4
        %v8221 = vadd.f32 %v8219, %v8220
        %v8222 = vrot.slane %v8221, 2
        %v8223 = vadd.f32 %v8221, %v8222
        %v8224 = vrot.slane %v8223, 1
        %v8225 = vadd.f32 %v8223, %v8224
        %v8226 = vsel %vm774, %v7880, 0.0
        %v8227 = vsel %vm774, %v7882, 0.0
        %v8228 = vadd.f32 %v8226, %v8227
        %v8229 = vrot.slane %v8228, 4
        %v8230 = vadd.f32 %v8228, %v8229
        %v8231 = vrot.slane %v8230, 2
        %v8232 = vadd.f32 %v8230, %v8231
        %v8233 = vrot.slane %v8232, 1
        %v8234 = vadd.f32 %v8232, %v8233
        %v8235 = vsel %vm774, %v7884, 0.0
        %v8236 = vsel %vm774, %v7886, 0.0
        %v8237 = vadd.f32 %v8235, %v8236
        %v8238 = vrot.slane %v8237, 4
        %v8239 = vadd.f32 %v8237, %v8238
        %v8240 = vrot.slane %v8239, 2
        %v8241 = vadd.f32 %v8239, %v8240
        %v8242 = vrot.slane %v8241, 1
        %v8243 = vadd.f32 %v8241, %v8242
        %v8244 = vsel %vm774, %v7888, 0.0
        %v8245 = vsel %vm774, %v7890, 0.0
        %v8246 = vadd.f32 %v8244, %v8245
        %v8247 = vrot.slane %v8246, 4
        %v8248 = vadd.f32 %v8246, %v8247
        %v8249 = vrot.slane %v8248, 2
        %v8250 = vadd.f32 %v8248, %v8249
        %v8251 = vrot.slane %v8250, 1
        %v8252 = vadd.f32 %v8250, %v8251
        %v8253 = vsel %vm774, %v7892, 0.0
        %v8254 = vsel %vm774, %v7894, 0.0
        %v8255 = vadd.f32 %v8253, %v8254
        %v8256 = vrot.slane %v8255, 4
        %v8257 = vadd.f32 %v8255, %v8256
        %v8258 = vrot.slane %v8257, 2
        %v8259 = vadd.f32 %v8257, %v8258
        %v8260 = vrot.slane %v8259, 1
        %v8261 = vadd.f32 %v8259, %v8260
        %v8262 = vsel %vm774, %v7896, 0.0
        %v8263 = vsel %vm774, %v7898, 0.0
        %v8264 = vadd.f32 %v8262, %v8263
        %v8265 = vrot.slane %v8264, 4
        %v8266 = vadd.f32 %v8264, %v8265
        %v8267 = vrot.slane %v8266, 2
        %v8268 = vadd.f32 %v8266, %v8267
        %v8269 = vrot.slane %v8268, 1
        %v8270 = vadd.f32 %v8268, %v8269
        %v8271 = vsel %vm774, %v7900, 0.0
        %v8272 = vsel %vm774, %v7902, 0.0
        %v8273 = vadd.f32 %v8271, %v8272
        %v8274 = vrot.slane %v8273, 4
        %v8275 = vadd.f32 %v8273, %v8274
        %v8276 = vrot.slane %v8275, 2
        %v8277 = vadd.f32 %v8275, %v8276
        %v8278 = vrot.slane %v8277, 1
        %v8279 = vadd.f32 %v8277, %v8278
        %v8280 = vsel %vm774, %v7904, 0.0
        %v8281 = vsel %vm774, %v7906, 0.0
        %v8282 = vadd.f32 %v8280, %v8281
        %v8283 = vrot.slane %v8282, 4
        %v8284 = vadd.f32 %v8282, %v8283
        %v8285 = vrot.slane %v8284, 2
        %v8286 = vadd.f32 %v8284, %v8285
        %v8287 = vrot.slane %v8286, 1
        %v8288 = vadd.f32 %v8286, %v8287
        %v8289 = vsel %vm774, %v7908, 0.0
        %v8290 = vsel %vm774, %v7910, 0.0
        %v8291 = vadd.f32 %v8289, %v8290
        %v8292 = vrot.slane %v8291, 4
        %v8293 = vadd.f32 %v8291, %v8292
        %v8294 = vrot.slane %v8293, 2
        %v8295 = vadd.f32 %v8293, %v8294
        %v8296 = vrot.slane %v8295, 1
        %v8297 = vadd.f32 %v8295, %v8296
        %v8298 = vsel %vm774, %v7912, 0.0
        %v8299 = vsel %vm774, %v7914, 0.0
        %v8300 = vadd.f32 %v8298, %v8299
        %v8301 = vrot.slane %v8300, 4
        %v8302 = vadd.f32 %v8300, %v8301
        %v8303 = vrot.slane %v8302, 2
        %v8304 = vadd.f32 %v8302, %v8303
        %v8305 = vrot.slane %v8304, 1
        %v8306 = vadd.f32 %v8304, %v8305
        %v8307 = vsel %vm774, %v7916, 0.0
        %v8308 = vsel %vm774, %v7918, 0.0
        %v8309 = vadd.f32 %v8307, %v8308
        %v8310 = vrot.slane %v8309, 4
        %v8311 = vadd.f32 %v8309, %v8310
        %v8312 = vrot.slane %v8311, 2
        %v8313 = vadd.f32 %v8311, %v8312
        %v8314 = vrot.slane %v8313, 1
        %v8315 = vadd.f32 %v8313, %v8314
        %v8316 = vsel %vm774, %v7920, 0.0
        %v8317 = vsel %vm774, %v7922, 0.0
        %v8318 = vadd.f32 %v8316, %v8317
        %v8319 = vrot.slane %v8318, 4
        %v8320 = vadd.f32 %v8318, %v8319
        %v8321 = vrot.slane %v8320, 2
        %v8322 = vadd.f32 %v8320, %v8321
        %v8323 = vrot.slane %v8322, 1
        %v8324 = vadd.f32 %v8322, %v8323
        %v8325 = vsel %vm774, %v7924, 0.0
        %v8326 = vsel %vm774, %v7926, 0.0
        %v8327 = vadd.f32 %v8325, %v8326
        %v8328 = vrot.slane %v8327, 4
        %v8329 = vadd.f32 %v8327, %v8328
        %v8330 = vrot.slane %v8329, 2
        %v8331 = vadd.f32 %v8329, %v8330
        %v8332 = vrot.slane %v8331, 1
        %v8333 = vadd.f32 %v8331, %v8332
        %v8334 = vsel %vm774, %v7928, 0.0
        %v8335 = vsel %vm774, %v7930, 0.0
        %v8336 = vadd.f32 %v8334, %v8335
        %v8337 = vrot.slane %v8336, 4
        %v8338 = vadd.f32 %v8336, %v8337
        %v8339 = vrot.slane %v8338, 2
        %v8340 = vadd.f32 %v8338, %v8339
        %v8341 = vrot.slane %v8340, 1
        %v8342 = vadd.f32 %v8340, %v8341
        %v8343 = vsel %vm774, %v7932, 0.0
        %v8344 = vsel %vm774, %v7934, 0.0
        %v8345 = vadd.f32 %v8343, %v8344
        %v8346 = vrot.slane %v8345, 4
        %v8347 = vadd.f32 %v8345, %v8346
        %v8348 = vrot.slane %v8347, 2
        %v8349 = vadd.f32 %v8347, %v8348
        %v8350 = vrot.slane %v8349, 1
        %v8351 = vadd.f32 %v8349, %v8350
        %v8352 = vsel %vm774, %v7936, 0.0
        %v8353 = vsel %vm774, %v7938, 0.0
        %v8354 = vadd.f32 %v8352, %v8353
        %v8355 = vrot.slane %v8354, 4
        %v8356 = vadd.f32 %v8354, %v8355
        %v8357 = vrot.slane %v8356, 2
        %v8358 = vadd.f32 %v8356, %v8357
        %v8359 = vrot.slane %v8358, 1
        %v8360 = vadd.f32 %v8358, %v8359
        %v8361 = vsel %vm774, %v7940, 0.0
        %v8362 = vsel %vm774, %v7942, 0.0
        %v8363 = vadd.f32 %v8361, %v8362
        %v8364 = vrot.slane %v8363, 4
        %v8365 = vadd.f32 %v8363, %v8364
        %v8366 = vrot.slane %v8365, 2
        %v8367 = vadd.f32 %v8365, %v8366
        %v8368 = vrot.slane %v8367, 1
        %v8369 = vadd.f32 %v8367, %v8368
        %v8370 = vsel %vm774, %v7944, 0.0
        %v8371 = vsel %vm774, %v7946, 0.0
        %v8372 = vadd.f32 %v8370, %v8371
        %v8373 = vrot.slane %v8372, 4
        %v8374 = vadd.f32 %v8372, %v8373
        %v8375 = vrot.slane %v8374, 2
        %v8376 = vadd.f32 %v8374, %v8375
        %v8377 = vrot.slane %v8376, 1
        %v8378 = vadd.f32 %v8376, %v8377
        %v8379 = vrcp.pop %v7955
        %v8380 = vrcp.pop %v7964
        %v8381 = vrcp.pop %v7973
        %v8382 = vrcp.pop %v7982
        %v8383 = vrcp.pop %v7991
        %v8384 = vrcp.pop %v8000
        %v8385 = vrcp.pop %v8009
        %v8386 = vrcp.pop %v8018
        %v8387 = vrcp.pop %v8027
        %v8388 = vrcp.pop %v8036
        %v8389 = vrcp.pop %v8045
        %v8390 = vrcp.pop %v8054
        %v8391 = vrcp.pop %v8063
        %v8392 = vrcp.pop %v8072
        %v8393 = vrcp.pop %v8081
        %v8394 = vrcp.pop %v8090
        %v8395 = vrcp.pop %v8099
        %v8396 = vrcp.pop %v8108
        %v8397 = vrcp.pop %v8117
        %v8398 = vrcp.pop %v8126
        %v8399 = vrcp.pop %v8135
        %v8400 = vrcp.pop %v8144
        %v8401 = vrcp.pop %v8153
        %v8402 = vrcp.pop %v8162
        %v8403 = vrcp.pop %v8171
        %v8404 = vrcp.pop %v8180
        %v8405 = vrcp.pop %v8189
        %v8406 = vrcp.pop %v8198
        %v8407 = vrcp.pop %v8207
        %v8408 = vrcp.pop %v8216
        %v8409 = vrcp.pop %v8225
        %v8410 = vrcp.pop %v8234
        %v8411 = vrcp.pop %v8243
        %v8412 = vrcp.pop %v8252
        %v8413 = vrcp.pop %v8261
        %v8414 = vrcp.pop %v8270
        %v8415 = vrcp.pop %v8279
        %v8416 = vrcp.pop %v8288
        %v8417 = vrcp.pop %v8297
        %v8418 = vrcp.pop %v8306
        %v8419 = vrcp.pop %v8315
        %v8420 = vrcp.pop %v8324
        %v8421 = vrcp.pop %v8333
        %v8422 = vrcp.pop %v8342
        %v8423 = vrcp.pop %v8351
        %v8424 = vrcp.pop %v8360
        %v8425 = vrcp.pop %v8369
        %v8426 = vrcp.pop %v8378
        %v8427 = vmul.f32 %v7756, %v8379
        %v8428 = vmul.f32 %v7758, %v8379
        %v8429 = vmul.f32 %v7760, %v8380
        %v8430 = vmul.f32 %v7762, %v8380
        %v8431 = vmul.f32 %v7764, %v8381
        %v8432 = vmul.f32 %v7766, %v8381
        %v8433 = vmul.f32 %v7768, %v8382
        %v8434 = vmul.f32 %v7770, %v8382
        %v8435 = vmul.f32 %v7772, %v8383
        %v8436 = vmul.f32 %v7774, %v8383
        %v8437 = vmul.f32 %v7776, %v8384
        %v8438 = vmul.f32 %v7778, %v8384
        %v8439 = vmul.f32 %v7780, %v8385
        %v8440 = vmul.f32 %v7782, %v8385
        %v8441 = vmul.f32 %v7784, %v8386
        %v8442 = vmul.f32 %v7786, %v8386
        %v8443 = vmul.f32 %v7788, %v8387
        %v8444 = vmul.f32 %v7790, %v8387
        %v8445 = vmul.f32 %v7792, %v8388
        %v8446 = vmul.f32 %v7794, %v8388
        %v8447 = vmul.f32 %v7796, %v8389
        %v8448 = vmul.f32 %v7798, %v8389
        %v8449 = vmul.f32 %v7800, %v8390
        %v8450 = vmul.f32 %v7802, %v8390
        %v8451 = vmul.f32 %v7804, %v8391
        %v8452 = vmul.f32 %v7806, %v8391
        %v8453 = vmul.f32 %v7808, %v8392
        %v8454 = vmul.f32 %v7810, %v8392
        %v8455 = vmul.f32 %v7812, %v8393
        %v8456 = vmul.f32 %v7814, %v8393
        %v8457 = vmul.f32 %v7816, %v8394
        %v8458 = vmul.f32 %v7818, %v8394
        %v8459 = vmul.f32 %v7820, %v8395
        %v8460 = vmul.f32 %v7822, %v8395
        %v8461 = vmul.f32 %v7824, %v8396
        %v8462 = vmul.f32 %v7826, %v8396
        %v8463 = vmul.f32 %v7828, %v8397
        %v8464 = vmul.f32 %v7830, %v8397
        %v8465 = vmul.f32 %v7832, %v8398
        %v8466 = vmul.f32 %v7834, %v8398
        %v8467 = vmul.f32 %v7836, %v8399
        %v8468 = vmul.f32 %v7838, %v8399
        %v8469 = vmul.f32 %v7840, %v8400
        %v8470 = vmul.f32 %v7842, %v8400
        %v8471 = vmul.f32 %v7844, %v8401
        %v8472 = vmul.f32 %v7846, %v8401
        %v8473 = vmul.f32 %v7848, %v8402
        %v8474 = vmul.f32 %v7850, %v8402
        %v8475 = vmul.f32 %v7852, %v8403
        %v8476 = vmul.f32 %v7854, %v8403
        %v8477 = vmul.f32 %v7856, %v8404
        %v8478 = vmul.f32 %v7858, %v8404
        %v8479 = vmul.f32 %v7860, %v8405
        %v8480 = vmul.f32 %v7862, %v8405
        %v8481 = vmul.f32 %v7864, %v8406
        %v8482 = vmul.f32 %v7866, %v8406
        %v8483 = vmul.f32 %v7868, %v8407
        %v8484 = vmul.f32 %v7870, %v8407
        %v8485 = vmul.f32 %v7872, %v8408
        %v8486 = vmul.f32 %v7874, %v8408
        %v8487 = vmul.f32 %v7876, %v8409
        %v8488 = vmul.f32 %v7878, %v8409
        %v8489 = vmul.f32 %v7880, %v8410
        %v8490 = vmul.f32 %v7882, %v8410
        %v8491 = vmul.f32 %v7884, %v8411
        %v8492 = vmul.f32 %v7886, %v8411
        %v8493 = vmul.f32 %v7888, %v8412
        %v8494 = vmul.f32 %v7890, %v8412
        %v8495 = vmul.f32 %v7892, %v8413
        %v8496 = vmul.f32 %v7894, %v8413
        %v8497 = vmul.f32 %v7896, %v8414
        %v8498 = vmul.f32 %v7898, %v8414
        %v8499 = vmul.f32 %v7900, %v8415
        %v8500 = vmul.f32 %v7902, %v8415
        %v8501 = vmul.f32 %v7904, %v8416
        %v8502 = vmul.f32 %v7906, %v8416
        %v8503 = vmul.f32 %v7908, %v8417
        %v8504 = vmul.f32 %v7910, %v8417
        %v8505 = vmul.f32 %v7912, %v8418
        %v8506 = vmul.f32 %v7914, %v8418
        %v8507 = vmul.f32 %v7916, %v8419
        %v8508 = vmul.f32 %v7918, %v8419
        %v8509 = vmul.f32 %v7920, %v8420
        %v8510 = vmul.f32 %v7922, %v8420
        %v8511 = vmul.f32 %v7924, %v8421
        %v8512 = vmul.f32 %v7926, %v8421
        %v8513 = vmul.f32 %v7928, %v8422
        %v8514 = vmul.f32 %v7930, %v8422
        %v8515 = vmul.f32 %v7932, %v8423
        %v8516 = vmul.f32 %v7934, %v8423
        %v8517 = vmul.f32 %v7936, %v8424
        %v8518 = vmul.f32 %v7938, %v8424
        %v8519 = vmul.f32 %v7940, %v8425
        %v8520 = vmul.f32 %v7942, %v8425
        %v8521 = vmul.f32 %v7944, %v8426
        %v8522 = vmul.f32 %v7946, %v8426
        %v8523 = vmul.f32 %v8427, %v1807
        %v8524 = vmul.f32 %v8428, %v1810
        %v8525 = vmul.f32 %v8429, %v1815
        %v8526 = vmul.f32 %v8430, %v1818
        %v8527 = vmul.f32 %v8431, %v1823
        %v8528 = vmul.f32 %v8432, %v1826
        %v8529 = vmul.f32 %v8433, %v1831
        %v8530 = vmul.f32 %v8434, %v1834
        %v8531 = vmul.f32 %v8435, %v1839
        %v8532 = vmul.f32 %v8436, %v1842
        %v8533 = vmul.f32 %v8437, %v1847
        %v8534 = vmul.f32 %v8438, %v1850
        %v8535 = vmul.f32 %v8439, %v1855
        %v8536 = vmul.f32 %v8440, %v1858
        %v8537 = vmul.f32 %v8441, %v1863
        %v8538 = vmul.f32 %v8442, %v1866
        %v8539 = vmul.f32 %v8443, %v1871
        %v8540 = vmul.f32 %v8444, %v1874
        %v8541 = vmul.f32 %v8445, %v1879
        %v8542 = vmul.f32 %v8446, %v1882
        %v8543 = vmul.f32 %v8447, %v1887
        %v8544 = vmul.f32 %v8448, %v1890
        %v8545 = vmul.f32 %v8449, %v1895
        %v8546 = vmul.f32 %v8450, %v1898
        %v8547 = vmul.f32 %v8451, %v1903
        %v8548 = vmul.f32 %v8452, %v1906
        %v8549 = vmul.f32 %v8453, %v1911
        %v8550 = vmul.f32 %v8454, %v1914
        %v8551 = vmul.f32 %v8455, %v1919
        %v8552 = vmul.f32 %v8456, %v1922
        %v8553 = vmul.f32 %v8457, %v1927
        %v8554 = vmul.f32 %v8458, %v1930
        %v8555 = vmul.f32 %v8459, %v1935
        %v8556 = vmul.f32 %v8460, %v1938
        %v8557 = vmul.f32 %v8461, %v1943
        %v8558 = vmul.f32 %v8462, %v1946
        %v8559 = vmul.f32 %v8463, %v1951
        %v8560 = vmul.f32 %v8464, %v1954
        %v8561 = vmul.f32 %v8465, %v1959
        %v8562 = vmul.f32 %v8466, %v1962
        %v8563 = vmul.f32 %v8467, %v1967
        %v8564 = vmul.f32 %v8468, %v1970
        %v8565 = vmul.f32 %v8469, %v1975
        %v8566 = vmul.f32 %v8470, %v1978
        %v8567 = vmul.f32 %v8471, %v1983
        %v8568 = vmul.f32 %v8472, %v1986
        %v8569 = vmul.f32 %v8473, %v1991
        %v8570 = vmul.f32 %v8474, %v1994
        %v8571 = vmul.f32 %v8475, %v1999
        %v8572 = vmul.f32 %v8476, %v2002
        %v8573 = vmul.f32 %v8477, %v2007
        %v8574 = vmul.f32 %v8478, %v2010
        %v8575 = vmul.f32 %v8479, %v2015
        %v8576 = vmul.f32 %v8480, %v2018
        %v8577 = vmul.f32 %v8481, %v2023
        %v8578 = vmul.f32 %v8482, %v2026
        %v8579 = vmul.f32 %v8483, %v2031
        %v8580 = vmul.f32 %v8484, %v2034
        %v8581 = vmul.f32 %v8485, %v2039
        %v8582 = vmul.f32 %v8486, %v2042
        %v8583 = vmul.f32 %v8487, %v2047
        %v8584 = vmul.f32 %v8488, %v2050
        %v8585 = vmul.f32 %v8489, %v2055
        %v8586 = vmul.f32 %v8490, %v2058
        %v8587 = vmul.f32 %v8491, %v2063
        %v8588 = vmul.f32 %v8492, %v2066
        %v8589 = vmul.f32 %v8493, %v2071
        %v8590 = vmul.f32 %v8494, %v2074
        %v8591 = vmul.f32 %v8495, %v2079
        %v8592 = vmul.f32 %v8496, %v2082
        %v8593 = vmul.f32 %v8497, %v2087
        %v8594 = vmul.f32 %v8498, %v2090
        %v8595 = vmul.f32 %v8499, %v2095
        %v8596 = vmul.f32 %v8500, %v2098
        %v8597 = vmul.f32 %v8501, %v2103
        %v8598 = vmul.f32 %v8502, %v2106
        %v8599 = vmul.f32 %v8503, %v2111
        %v8600 = vmul.f32 %v8504, %v2114
        %v8601 = vmul.f32 %v8505, %v2119
        %v8602 = vmul.f32 %v8506, %v2122
        %v8603 = vmul.f32 %v8507, %v2127
        %v8604 = vmul.f32 %v8508, %v2130
        %v8605 = vmul.f32 %v8509, %v2135
        %v8606 = vmul.f32 %v8510, %v2138
        %v8607 = vmul.f32 %v8511, %v2143
        %v8608 = vmul.f32 %v8512, %v2146
        %v8609 = vmul.f32 %v8513, %v2151
        %v8610 = vmul.f32 %v8514, %v2154
        %v8611 = vmul.f32 %v8515, %v2159
        %v8612 = vmul.f32 %v8516, %v2162
        %v8613 = vmul.f32 %v8517, %v2167
        %v8614 = vmul.f32 %v8518, %v2170
        %v8615 = vmul.f32 %v8519, %v2175
        %v8616 = vmul.f32 %v8520, %v2178
        %v8617 = vmul.f32 %v8521, %v2183
        %v8618 = vmul.f32 %v8522, %v2186
        %v8619 = vsel %vm774, %v8523, 0.0
        %v8620 = vsel %vm774, %v8524, 0.0
        %v8621 = vadd.f32 %v8619, %v8620
        %v8622 = vrot.slane %v8621, 4
        %v8623 = vadd.f32 %v8621, %v8622
        %v8624 = vrot.slane %v8623, 2
        %v8625 = vadd.f32 %v8623, %v8624
        %v8626 = vrot.slane %v8625, 1
        %v8627 = vadd.f32 %v8625, %v8626
        %v8628 = vsel %vm774, %v8525, 0.0
        %v8629 = vsel %vm774, %v8526, 0.0
        %v8630 = vadd.f32 %v8628, %v8629
        %v8631 = vrot.slane %v8630, 4
        %v8632 = vadd.f32 %v8630, %v8631
        %v8633 = vrot.slane %v8632, 2
        %v8634 = vadd.f32 %v8632, %v8633
        %v8635 = vrot.slane %v8634, 1
        %v8636 = vadd.f32 %v8634, %v8635
        %v8637 = vsel %vm774, %v8527, 0.0
        %v8638 = vsel %vm774, %v8528, 0.0
        %v8639 = vadd.f32 %v8637, %v8638
        %v8640 = vrot.slane %v8639, 4
        %v8641 = vadd.f32 %v8639, %v8640
        %v8642 = vrot.slane %v8641, 2
        %v8643 = vadd.f32 %v8641, %v8642
        %v8644 = vrot.slane %v8643, 1
        %v8645 = vadd.f32 %v8643, %v8644
        %v8646 = vsel %vm774, %v8529, 0.0
        %v8647 = vsel %vm774, %v8530, 0.0
        %v8648 = vadd.f32 %v8646, %v8647
        %v8649 = vrot.slane %v8648, 4
        %v8650 = vadd.f32 %v8648, %v8649
        %v8651 = vrot.slane %v8650, 2
        %v8652 = vadd.f32 %v8650, %v8651
        %v8653 = vrot.slane %v8652, 1
        %v8654 = vadd.f32 %v8652, %v8653
        %v8655 = vsel %vm774, %v8531, 0.0
        %v8656 = vsel %vm774, %v8532, 0.0
        %v8657 = vadd.f32 %v8655, %v8656
        %v8658 = vrot.slane %v8657, 4
        %v8659 = vadd.f32 %v8657, %v8658
        %v8660 = vrot.slane %v8659, 2
        %v8661 = vadd.f32 %v8659, %v8660
        %v8662 = vrot.slane %v8661, 1
        %v8663 = vadd.f32 %v8661, %v8662
        %v8664 = vsel %vm774, %v8533, 0.0
        %v8665 = vsel %vm774, %v8534, 0.0
        %v8666 = vadd.f32 %v8664, %v8665
        %v8667 = vrot.slane %v8666, 4
        %v8668 = vadd.f32 %v8666, %v8667
        %v8669 = vrot.slane %v8668, 2
        %v8670 = vadd.f32 %v8668, %v8669
        %v8671 = vrot.slane %v8670, 1
        %v8672 = vadd.f32 %v8670, %v8671
        %v8673 = vsel %vm774, %v8535, 0.0
        %v8674 = vsel %vm774, %v8536, 0.0
        %v8675 = vadd.f32 %v8673, %v8674
        %v8676 = vrot.slane %v8675, 4
        %v8677 = vadd.f32 %v8675, %v8676
        %v8678 = vrot.slane %v8677, 2
        %v8679 = vadd.f32 %v8677, %v8678
        %v8680 = vrot.slane %v8679, 1
        %v8681 = vadd.f32 %v8679, %v8680
        %v8682 = vsel %vm774, %v8537, 0.0
        %v8683 = vsel %vm774, %v8538, 0.0
        %v8684 = vadd.f32 %v8682, %v8683
        %v8685 = vrot.slane %v8684, 4
        %v8686 = vadd.f32 %v8684, %v8685
        %v8687 = vrot.slane %v8686, 2
        %v8688 = vadd.f32 %v8686, %v8687
        %v8689 = vrot.slane %v8688, 1
        %v8690 = vadd.f32 %v8688, %v8689
        %v8691 = vsel %vm774, %v8539, 0.0
        %v8692 = vsel %vm774, %v8540, 0.0
        %v8693 = vadd.f32 %v8691, %v8692
        %v8694 = vrot.slane %v8693, 4
        %v8695 = vadd.f32 %v8693, %v8694
        %v8696 = vrot.slane %v8695, 2
        %v8697 = vadd.f32 %v8695, %v8696
        %v8698 = vrot.slane %v8697, 1
        %v8699 = vadd.f32 %v8697, %v8698
        %v8700 = vsel %vm774, %v8541, 0.0
        %v8701 = vsel %vm774, %v8542, 0.0
        %v8702 = vadd.f32 %v8700, %v8701
        %v8703 = vrot.slane %v8702, 4
        %v8704 = vadd.f32 %v8702, %v8703
        %v8705 = vrot.slane %v8704, 2
        %v8706 = vadd.f32 %v8704, %v8705
        %v8707 = vrot.slane %v8706, 1
        %v8708 = vadd.f32 %v8706, %v8707
        %v8709 = vsel %vm774, %v8543, 0.0
        %v8710 = vsel %vm774, %v8544, 0.0
        %v8711 = vadd.f32 %v8709, %v8710
        %v8712 = vrot.slane %v8711, 4
        %v8713 = vadd.f32 %v8711, %v8712
        %v8714 = vrot.slane %v8713, 2
        %v8715 = vadd.f32 %v8713, %v8714
        %v8716 = vrot.slane %v8715, 1
        %v8717 = vadd.f32 %v8715, %v8716
        %v8718 = vsel %vm774, %v8545, 0.0
        %v8719 = vsel %vm774, %v8546, 0.0
        %v8720 = vadd.f32 %v8718, %v8719
        %v8721 = vrot.slane %v8720, 4
        %v8722 = vadd.f32 %v8720, %v8721
        %v8723 = vrot.slane %v8722, 2
        %v8724 = vadd.f32 %v8722, %v8723
        %v8725 = vrot.slane %v8724, 1
        %v8726 = vadd.f32 %v8724, %v8725
        %v8727 = vsel %vm774, %v8547, 0.0
        %v8728 = vsel %vm774, %v8548, 0.0
        %v8729 = vadd.f32 %v8727, %v8728
        %v8730 = vrot.slane %v8729, 4
        %v8731 = vadd.f32 %v8729, %v8730
        %v8732 = vrot.slane %v8731, 2
        %v8733 = vadd.f32 %v8731, %v8732
        %v8734 = vrot.slane %v8733, 1
        %v8735 = vadd.f32 %v8733, %v8734
        %v8736 = vsel %vm774, %v8549, 0.0
        %v8737 = vsel %vm774, %v8550, 0.0
        %v8738 = vadd.f32 %v8736, %v8737
        %v8739 = vrot.slane %v8738, 4
        %v8740 = vadd.f32 %v8738, %v8739
        %v8741 = vrot.slane %v8740, 2
        %v8742 = vadd.f32 %v8740, %v8741
        %v8743 = vrot.slane %v8742, 1
        %v8744 = vadd.f32 %v8742, %v8743
        %v8745 = vsel %vm774, %v8551, 0.0
        %v8746 = vsel %vm774, %v8552, 0.0
        %v8747 = vadd.f32 %v8745, %v8746
        %v8748 = vrot.slane %v8747, 4
        %v8749 = vadd.f32 %v8747, %v8748
        %v8750 = vrot.slane %v8749, 2
        %v8751 = vadd.f32 %v8749, %v8750
        %v8752 = vrot.slane %v8751, 1
        %v8753 = vadd.f32 %v8751, %v8752
        %v8754 = vsel %vm774, %v8553, 0.0
        %v8755 = vsel %vm774, %v8554, 0.0
        %v8756 = vadd.f32 %v8754, %v8755
        %v8757 = vrot.slane %v8756, 4
        %v8758 = vadd.f32 %v8756, %v8757
        %v8759 = vrot.slane %v8758, 2
        %v8760 = vadd.f32 %v8758, %v8759
        %v8761 = vrot.slane %v8760, 1
        %v8762 = vadd.f32 %v8760, %v8761
        %v8763 = vsel %vm774, %v8555, 0.0
        %v8764 = vsel %vm774, %v8556, 0.0
        %v8765 = vadd.f32 %v8763, %v8764
        %v8766 = vrot.slane %v8765, 4
        %v8767 = vadd.f32 %v8765, %v8766
        %v8768 = vrot.slane %v8767, 2
        %v8769 = vadd.f32 %v8767, %v8768
        %v8770 = vrot.slane %v8769, 1
        %v8771 = vadd.f32 %v8769, %v8770
        %v8772 = vsel %vm774, %v8557, 0.0
        %v8773 = vsel %vm774, %v8558, 0.0
        %v8774 = vadd.f32 %v8772, %v8773
        %v8775 = vrot.slane %v8774, 4
        %v8776 = vadd.f32 %v8774, %v8775
        %v8777 = vrot.slane %v8776, 2
        %v8778 = vadd.f32 %v8776, %v8777
        %v8779 = vrot.slane %v8778, 1
        %v8780 = vadd.f32 %v8778, %v8779
        %v8781 = vsel %vm774, %v8559, 0.0
        %v8782 = vsel %vm774, %v8560, 0.0
        %v8783 = vadd.f32 %v8781, %v8782
        %v8784 = vrot.slane %v8783, 4
        %v8785 = vadd.f32 %v8783, %v8784
        %v8786 = vrot.slane %v8785, 2
        %v8787 = vadd.f32 %v8785, %v8786
        %v8788 = vrot.slane %v8787, 1
        %v8789 = vadd.f32 %v8787, %v8788
        %v8790 = vsel %vm774, %v8561, 0.0
        %v8791 = vsel %vm774, %v8562, 0.0
        %v8792 = vadd.f32 %v8790, %v8791
        %v8793 = vrot.slane %v8792, 4
        %v8794 = vadd.f32 %v8792, %v8793
        %v8795 = vrot.slane %v8794, 2
        %v8796 = vadd.f32 %v8794, %v8795
        %v8797 = vrot.slane %v8796, 1
        %v8798 = vadd.f32 %v8796, %v8797
        %v8799 = vsel %vm774, %v8563, 0.0
        %v8800 = vsel %vm774, %v8564, 0.0
        %v8801 = vadd.f32 %v8799, %v8800
        %v8802 = vrot.slane %v8801, 4
        %v8803 = vadd.f32 %v8801, %v8802
        %v8804 = vrot.slane %v8803, 2
        %v8805 = vadd.f32 %v8803, %v8804
        %v8806 = vrot.slane %v8805, 1
        %v8807 = vadd.f32 %v8805, %v8806
        %v8808 = vsel %vm774, %v8565, 0.0
        %v8809 = vsel %vm774, %v8566, 0.0
        %v8810 = vadd.f32 %v8808, %v8809
        %v8811 = vrot.slane %v8810, 4
        %v8812 = vadd.f32 %v8810, %v8811
        %v8813 = vrot.slane %v8812, 2
        %v8814 = vadd.f32 %v8812, %v8813
        %v8815 = vrot.slane %v8814, 1
        %v8816 = vadd.f32 %v8814, %v8815
        %v8817 = vsel %vm774, %v8567, 0.0
        %v8818 = vsel %vm774, %v8568, 0.0
        %v8819 = vadd.f32 %v8817, %v8818
        %v8820 = vrot.slane %v8819, 4
        %v8821 = vadd.f32 %v8819, %v8820
        %v8822 = vrot.slane %v8821, 2
        %v8823 = vadd.f32 %v8821, %v8822
        %v8824 = vrot.slane %v8823, 1
        %v8825 = vadd.f32 %v8823, %v8824
        %v8826 = vsel %vm774, %v8569, 0.0
        %v8827 = vsel %vm774, %v8570, 0.0
        %v8828 = vadd.f32 %v8826, %v8827
        %v8829 = vrot.slane %v8828, 4
        %v8830 = vadd.f32 %v8828, %v8829
        %v8831 = vrot.slane %v8830, 2
        %v8832 = vadd.f32 %v8830, %v8831
        %v8833 = vrot.slane %v8832, 1
        %v8834 = vadd.f32 %v8832, %v8833
        %v8835 = vsel %vm774, %v8571, 0.0
        %v8836 = vsel %vm774, %v8572, 0.0
        %v8837 = vadd.f32 %v8835, %v8836
        %v8838 = vrot.slane %v8837, 4
        %v8839 = vadd.f32 %v8837, %v8838
        %v8840 = vrot.slane %v8839, 2
        %v8841 = vadd.f32 %v8839, %v8840
        %v8842 = vrot.slane %v8841, 1
        %v8843 = vadd.f32 %v8841, %v8842
        %v8844 = vsel %vm774, %v8573, 0.0
        %v8845 = vsel %vm774, %v8574, 0.0
        %v8846 = vadd.f32 %v8844, %v8845
        %v8847 = vrot.slane %v8846, 4
        %v8848 = vadd.f32 %v8846, %v8847
        %v8849 = vrot.slane %v8848, 2
        %v8850 = vadd.f32 %v8848, %v8849
        %v8851 = vrot.slane %v8850, 1
        %v8852 = vadd.f32 %v8850, %v8851
        %v8853 = vsel %vm774, %v8575, 0.0
        %v8854 = vsel %vm774, %v8576, 0.0
        %v8855 = vadd.f32 %v8853, %v8854
        %v8856 = vrot.slane %v8855, 4
        %v8857 = vadd.f32 %v8855, %v8856
        %v8858 = vrot.slane %v8857, 2
        %v8859 = vadd.f32 %v8857, %v8858
        %v8860 = vrot.slane %v8859, 1
        %v8861 = vadd.f32 %v8859, %v8860
        %v8862 = vsel %vm774, %v8577, 0.0
        %v8863 = vsel %vm774, %v8578, 0.0
        %v8864 = vadd.f32 %v8862, %v8863
        %v8865 = vrot.slane %v8864, 4
        %v8866 = vadd.f32 %v8864, %v8865
        %v8867 = vrot.slane %v8866, 2
        %v8868 = vadd.f32 %v8866, %v8867
        %v8869 = vrot.slane %v8868, 1
        %v8870 = vadd.f32 %v8868, %v8869
        %v8871 = vsel %vm774, %v8579, 0.0
        %v8872 = vsel %vm774, %v8580, 0.0
        %v8873 = vadd.f32 %v8871, %v8872
        %v8874 = vrot.slane %v8873, 4
        %v8875 = vadd.f32 %v8873, %v8874
        %v8876 = vrot.slane %v8875, 2
        %v8877 = vadd.f32 %v8875, %v8876
        %v8878 = vrot.slane %v8877, 1
        %v8879 = vadd.f32 %v8877, %v8878
        %v8880 = vsel %vm774, %v8581, 0.0
        %v8881 = vsel %vm774, %v8582, 0.0
        %v8882 = vadd.f32 %v8880, %v8881
        %v8883 = vrot.slane %v8882, 4
        %v8884 = vadd.f32 %v8882, %v8883
        %v8885 = vrot.slane %v8884, 2
        %v8886 = vadd.f32 %v8884, %v8885
        %v8887 = vrot.slane %v8886, 1
        %v8888 = vadd.f32 %v8886, %v8887
        %v8889 = vsel %vm774, %v8583, 0.0
        %v8890 = vsel %vm774, %v8584, 0.0
        %v8891 = vadd.f32 %v8889, %v8890
        %v8892 = vrot.slane %v8891, 4
        %v8893 = vadd.f32 %v8891, %v8892
        %v8894 = vrot.slane %v8893, 2
        %v8895 = vadd.f32 %v8893, %v8894
        %v8896 = vrot.slane %v8895, 1
        %v8897 = vadd.f32 %v8895, %v8896
        %v8898 = vsel %vm774, %v8585, 0.0
        %v8899 = vsel %vm774, %v8586, 0.0
        %v8900 = vadd.f32 %v8898, %v8899
        %v8901 = vrot.slane %v8900, 4
        %v8902 = vadd.f32 %v8900, %v8901
        %v8903 = vrot.slane %v8902, 2
        %v8904 = vadd.f32 %v8902, %v8903
        %v8905 = vrot.slane %v8904, 1
        %v8906 = vadd.f32 %v8904, %v8905
        %v8907 = vsel %vm774, %v8587, 0.0
        %v8908 = vsel %vm774, %v8588, 0.0
        %v8909 = vadd.f32 %v8907, %v8908
        %v8910 = vrot.slane %v8909, 4
        %v8911 = vadd.f32 %v8909, %v8910
        %v8912 = vrot.slane %v8911, 2
        %v8913 = vadd.f32 %v8911, %v8912
        %v8914 = vrot.slane %v8913, 1
        %v8915 = vadd.f32 %v8913, %v8914
        %v8916 = vsel %vm774, %v8589, 0.0
        %v8917 = vsel %vm774, %v8590, 0.0
        %v8918 = vadd.f32 %v8916, %v8917
        %v8919 = vrot.slane %v8918, 4
        %v8920 = vadd.f32 %v8918, %v8919
        %v8921 = vrot.slane %v8920, 2
        %v8922 = vadd.f32 %v8920, %v8921
        %v8923 = vrot.slane %v8922, 1
        %v8924 = vadd.f32 %v8922, %v8923
        %v8925 = vsel %vm774, %v8591, 0.0
        %v8926 = vsel %vm774, %v8592, 0.0
        %v8927 = vadd.f32 %v8925, %v8926
        %v8928 = vrot.slane %v8927, 4
        %v8929 = vadd.f32 %v8927, %v8928
        %v8930 = vrot.slane %v8929, 2
        %v8931 = vadd.f32 %v8929, %v8930
        %v8932 = vrot.slane %v8931, 1
        %v8933 = vadd.f32 %v8931, %v8932
        %v8934 = vsel %vm774, %v8593, 0.0
        %v8935 = vsel %vm774, %v8594, 0.0
        %v8936 = vadd.f32 %v8934, %v8935
        %v8937 = vrot.slane %v8936, 4
        %v8938 = vadd.f32 %v8936, %v8937
        %v8939 = vrot.slane %v8938, 2
        %v8940 = vadd.f32 %v8938, %v8939
        %v8941 = vrot.slane %v8940, 1
        %v8942 = vadd.f32 %v8940, %v8941
        %v8943 = vsel %vm774, %v8595, 0.0
        %v8944 = vsel %vm774, %v8596, 0.0
        %v8945 = vadd.f32 %v8943, %v8944
        %v8946 = vrot.slane %v8945, 4
        %v8947 = vadd.f32 %v8945, %v8946
        %v8948 = vrot.slane %v8947, 2
        %v8949 = vadd.f32 %v8947, %v8948
        %v8950 = vrot.slane %v8949, 1
        %v8951 = vadd.f32 %v8949, %v8950
        %v8952 = vsel %vm774, %v8597, 0.0
        %v8953 = vsel %vm774, %v8598, 0.0
        %v8954 = vadd.f32 %v8952, %v8953
        %v8955 = vrot.slane %v8954, 4
        %v8956 = vadd.f32 %v8954, %v8955
        %v8957 = vrot.slane %v8956, 2
        %v8958 = vadd.f32 %v8956, %v8957
        %v8959 = vrot.slane %v8958, 1
        %v8960 = vadd.f32 %v8958, %v8959
        %v8961 = vsel %vm774, %v8599, 0.0
        %v8962 = vsel %vm774, %v8600, 0.0
        %v8963 = vadd.f32 %v8961, %v8962
        %v8964 = vrot.slane %v8963, 4
        %v8965 = vadd.f32 %v8963, %v8964
        %v8966 = vrot.slane %v8965, 2
        %v8967 = vadd.f32 %v8965, %v8966
        %v8968 = vrot.slane %v8967, 1
        %v8969 = vadd.f32 %v8967, %v8968
        %v8970 = vsel %vm774, %v8601, 0.0
        %v8971 = vsel %vm774, %v8602, 0.0
        %v8972 = vadd.f32 %v8970, %v8971
        %v8973 = vrot.slane %v8972, 4
        %v8974 = vadd.f32 %v8972, %v8973
        %v8975 = vrot.slane %v8974, 2
        %v8976 = vadd.f32 %v8974, %v8975
        %v8977 = vrot.slane %v8976, 1
        %v8978 = vadd.f32 %v8976, %v8977
        %v8979 = vsel %vm774, %v8603, 0.0
        %v8980 = vsel %vm774, %v8604, 0.0
        %v8981 = vadd.f32 %v8979, %v8980
        %v8982 = vrot.slane %v8981, 4
        %v8983 = vadd.f32 %v8981, %v8982
        %v8984 = vrot.slane %v8983, 2
        %v8985 = vadd.f32 %v8983, %v8984
        %v8986 = vrot.slane %v8985, 1
        %v8987 = vadd.f32 %v8985, %v8986
        %v8988 = vsel %vm774, %v8605, 0.0
        %v8989 = vsel %vm774, %v8606, 0.0
        %v8990 = vadd.f32 %v8988, %v8989
        %v8991 = vrot.slane %v8990, 4
        %v8992 = vadd.f32 %v8990, %v8991
        %v8993 = vrot.slane %v8992, 2
        %v8994 = vadd.f32 %v8992, %v8993
        %v8995 = vrot.slane %v8994, 1
        %v8996 = vadd.f32 %v8994, %v8995
        %v8997 = vsel %vm774, %v8607, 0.0
        %v8998 = vsel %vm774, %v8608, 0.0
        %v8999 = vadd.f32 %v8997, %v8998
        %v9000 = vrot.slane %v8999, 4
        %v9001 = vadd.f32 %v8999, %v9000
        %v9002 = vrot.slane %v9001, 2
        %v9003 = vadd.f32 %v9001, %v9002
        %v9004 = vrot.slane %v9003, 1
        %v9005 = vadd.f32 %v9003, %v9004
        %v9006 = vsel %vm774, %v8609, 0.0
        %v9007 = vsel %vm774, %v8610, 0.0
        %v9008 = vadd.f32 %v9006, %v9007
        %v9009 = vrot.slane %v9008, 4
        %v9010 = vadd.f32 %v9008, %v9009
        %v9011 = vrot.slane %v9010, 2
        %v9012 = vadd.f32 %v9010, %v9011
        %v9013 = vrot.slane %v9012, 1
        %v9014 = vadd.f32 %v9012, %v9013
        %v9015 = vsel %vm774, %v8611, 0.0
        %v9016 = vsel %vm774, %v8612, 0.0
        %v9017 = vadd.f32 %v9015, %v9016
        %v9018 = vrot.slane %v9017, 4
        %v9019 = vadd.f32 %v9017, %v9018
        %v9020 = vrot.slane %v9019, 2
        %v9021 = vadd.f32 %v9019, %v9020
        %v9022 = vrot.slane %v9021, 1
        %v9023 = vadd.f32 %v9021, %v9022
        %v9024 = vsel %vm774, %v8613, 0.0
        %v9025 = vsel %vm774, %v8614, 0.0
        %v9026 = vadd.f32 %v9024, %v9025
        %v9027 = vrot.slane %v9026, 4
        %v9028 = vadd.f32 %v9026, %v9027
        %v9029 = vrot.slane %v9028, 2
        %v9030 = vadd.f32 %v9028, %v9029
        %v9031 = vrot.slane %v9030, 1
        %v9032 = vadd.f32 %v9030, %v9031
        %v9033 = vsel %vm774, %v8615, 0.0
        %v9034 = vsel %vm774, %v8616, 0.0
        %v9035 = vadd.f32 %v9033, %v9034
        %v9036 = vrot.slane %v9035, 4
        %v9037 = vadd.f32 %v9035, %v9036
        %v9038 = vrot.slane %v9037, 2
        %v9039 = vadd.f32 %v9037, %v9038
        %v9040 = vrot.slane %v9039, 1
        %v9041 = vadd.f32 %v9039, %v9040
        %v9042 = vsel %vm774, %v8617, 0.0
        %v9043 = vsel %vm774, %v8618, 0.0
        %v9044 = vadd.f32 %v9042, %v9043
        %v9045 = vrot.slane %v9044, 4
        %v9046 = vadd.f32 %v9044, %v9045
        %v9047 = vrot.slane %v9046, 2
        %v9048 = vadd.f32 %v9046, %v9047
        %v9049 = vrot.slane %v9048, 1
        %v9050 = vadd.f32 %v9048, %v9049
        %v9051 = vpack.c.bf16 %v8627, %v8627
        %v9052 = vpack.c.bf16 %v8636, %v8636
        %v9053 = vpack.c.bf16 %v8645, %v8645
        %v9054 = vpack.c.bf16 %v8654, %v8654
        %v9055 = vpack.c.bf16 %v8663, %v8663
        %v9056 = vpack.c.bf16 %v8672, %v8672
        %v9057 = vpack.c.bf16 %v8681, %v8681
        %v9058 = vpack.c.bf16 %v8690, %v8690
        %v9059 = vpack.c.bf16 %v8699, %v8699
        %v9060 = vpack.c.bf16 %v8708, %v8708
        %v9061 = vpack.c.bf16 %v8717, %v8717
        %v9062 = vpack.c.bf16 %v8726, %v8726
        %v9063 = vpack.c.bf16 %v8735, %v8735
        %v9064 = vpack.c.bf16 %v8744, %v8744
        %v9065 = vpack.c.bf16 %v8753, %v8753
        %v9066 = vpack.c.bf16 %v8762, %v8762
        %v9067 = vpack.c.bf16 %v8771, %v8771
        %v9068 = vpack.c.bf16 %v8780, %v8780
        %v9069 = vpack.c.bf16 %v8789, %v8789
        %v9070 = vpack.c.bf16 %v8798, %v8798
        %v9071 = vpack.c.bf16 %v8807, %v8807
        %v9072 = vpack.c.bf16 %v8816, %v8816
        %v9073 = vpack.c.bf16 %v8825, %v8825
        %v9074 = vpack.c.bf16 %v8834, %v8834
        %v9075 = vpack.c.bf16 %v8843, %v8843
        %v9076 = vpack.c.bf16 %v8852, %v8852
        %v9077 = vpack.c.bf16 %v8861, %v8861
        %v9078 = vpack.c.bf16 %v8870, %v8870
        %v9079 = vpack.c.bf16 %v8879, %v8879
        %v9080 = vpack.c.bf16 %v8888, %v8888
        %v9081 = vpack.c.bf16 %v8897, %v8897
        %v9082 = vpack.c.bf16 %v8906, %v8906
        %v9083 = vpack.c.bf16 %v8915, %v8915
        %v9084 = vpack.c.bf16 %v8924, %v8924
        %v9085 = vpack.c.bf16 %v8933, %v8933
        %v9086 = vpack.c.bf16 %v8942, %v8942
        %v9087 = vpack.c.bf16 %v8951, %v8951
        %v9088 = vpack.c.bf16 %v8960, %v8960
        %v9089 = vpack.c.bf16 %v8969, %v8969
        %v9090 = vpack.c.bf16 %v8978, %v8978
        %v9091 = vpack.c.bf16 %v8987, %v8987
        %v9092 = vpack.c.bf16 %v8996, %v8996
        %v9093 = vpack.c.bf16 %v9005, %v9005
        %v9094 = vpack.c.bf16 %v9014, %v9014
        %v9095 = vpack.c.bf16 %v9023, %v9023
        %v9096 = vpack.c.bf16 %v9032, %v9032
        %v9097 = vpack.c.bf16 %v9041, %v9041
        %v9098 = vpack.c.bf16 %v9050, %v9050
        %v9099 = vld [vmem:[%s6] sm:$0xf]
        %v9100 = vld [vmem:[%s6 + $0x4] sm:$0xf]
        %v9149 = vunpack.c.l.b16 %v9051
        %v9150 = vunpack.c.l.b16 %v9052
        %v9151 = vunpack.c.l.b16 %v9053
        %v9152 = vunpack.c.l.b16 %v9054
        %v9153 = vunpack.c.l.b16 %v9055
        %v9154 = vunpack.c.l.b16 %v9056
        %v9155 = vunpack.c.l.b16 %v9057
        %v9156 = vunpack.c.l.b16 %v9058
        %v9157 = vunpack.c.l.b16 %v9059
        %v9158 = vunpack.c.l.b16 %v9060
        %v9159 = vunpack.c.l.b16 %v9061
        %v9160 = vunpack.c.l.b16 %v9062
        %v9161 = vunpack.c.l.b16 %v9063
        %v9162 = vunpack.c.l.b16 %v9064
        %v9163 = vunpack.c.l.b16 %v9065
        %v9164 = vunpack.c.l.b16 %v9066
        %v9165 = vunpack.c.l.b16 %v9067
        %v9166 = vunpack.c.l.b16 %v9068
        %v9167 = vunpack.c.l.b16 %v9069
        %v9168 = vunpack.c.l.b16 %v9070
        %v9169 = vunpack.c.l.b16 %v9071
        %v9170 = vunpack.c.l.b16 %v9072
        %v9171 = vunpack.c.l.b16 %v9073
        %v9172 = vunpack.c.l.b16 %v9074
        %v9173 = vunpack.c.l.b16 %v9075
        %v9174 = vunpack.c.l.b16 %v9076
        %v9175 = vunpack.c.l.b16 %v9077
        %v9176 = vunpack.c.l.b16 %v9078
        %v9177 = vunpack.c.l.b16 %v9079
        %v9178 = vunpack.c.l.b16 %v9080
        %v9179 = vunpack.c.l.b16 %v9081
        %v9180 = vunpack.c.l.b16 %v9082
        %v9181 = vunpack.c.l.b16 %v9083
        %v9182 = vunpack.c.l.b16 %v9084
        %v9183 = vunpack.c.l.b16 %v9085
        %v9184 = vunpack.c.l.b16 %v9086
        %v9185 = vunpack.c.l.b16 %v9087
        %v9186 = vunpack.c.l.b16 %v9088
        %v9187 = vunpack.c.l.b16 %v9089
        %v9188 = vunpack.c.l.b16 %v9090
        %v9189 = vunpack.c.l.b16 %v9091
        %v9190 = vunpack.c.l.b16 %v9092
        %v9191 = vunpack.c.l.b16 %v9093
        %v9192 = vunpack.c.l.b16 %v9094
        %v9193 = vunpack.c.l.b16 %v9095
        %v9194 = vunpack.c.l.b16 %v9096
        %v9195 = vunpack.c.l.b16 %v9097
        %v9196 = vunpack.c.l.b16 %v9098
        %vm9197 = vcmask 1041409
        %v9198 = vsel %vm9197, %v9150, %v9149
        %vm9199 = vcmask 1042434
        %v9200 = vsel %vm9199, %v9151, %v9198
        %vm9201 = vcmask 1043459
        %v9202 = vsel %vm9201, %v9152, %v9200
        %vm9203 = vcmask 1044484
        %v9204 = vsel %vm9203, %v9153, %v9202
        %vm9205 = vcmask 1045509
        %v9206 = vsel %vm9205, %v9154, %v9204
        %vm9207 = vcmask 1046534
        %v9208 = vsel %vm9207, %v9155, %v9206
        %vm9209 = vcmask 1047559
        %v9210 = vsel %vm9209, %v9156, %v9208
        %v9211 = vsel %vm9197, %v9158, %v9157
        %v9212 = vsel %vm9199, %v9159, %v9211
        %v9213 = vsel %vm9201, %v9160, %v9212
        %v9214 = vsel %vm9203, %v9161, %v9213
        %v9215 = vsel %vm9205, %v9162, %v9214
        %v9216 = vsel %vm9207, %v9163, %v9215
        %v9217 = vsel %vm9209, %v9164, %v9216
        %v9218 = vsel %vm9197, %v9166, %v9165
        %v9219 = vsel %vm9199, %v9167, %v9218
        %v9220 = vsel %vm9201, %v9168, %v9219
        %v9221 = vsel %vm9203, %v9169, %v9220
        %v9222 = vsel %vm9205, %v9170, %v9221
        %v9223 = vsel %vm9207, %v9171, %v9222
        %v9224 = vsel %vm9209, %v9172, %v9223
        %v9225 = vsel %vm9197, %v9174, %v9173
        %v9226 = vsel %vm9199, %v9175, %v9225
        %v9227 = vsel %vm9201, %v9176, %v9226
        %v9228 = vsel %vm9203, %v9177, %v9227
        %v9229 = vsel %vm9205, %v9178, %v9228
        %v9230 = vsel %vm9207, %v9179, %v9229
        %v9231 = vsel %vm9209, %v9180, %v9230
        %v9232 = vsel %vm9197, %v9182, %v9181
        %v9233 = vsel %vm9199, %v9183, %v9232
        %v9234 = vsel %vm9201, %v9184, %v9233
        %v9235 = vsel %vm9203, %v9185, %v9234
        %v9236 = vsel %vm9205, %v9186, %v9235
        %v9237 = vsel %vm9207, %v9187, %v9236
        %v9238 = vsel %vm9209, %v9188, %v9237
        %v9239 = vsel %vm9197, %v9190, %v9189
        %v9240 = vsel %vm9199, %v9191, %v9239
        %v9241 = vsel %vm9201, %v9192, %v9240
        %v9242 = vsel %vm9203, %v9193, %v9241
        %v9243 = vsel %vm9205, %v9194, %v9242
        %v9244 = vsel %vm9207, %v9195, %v9243
        %v9245 = vsel %vm9209, %v9196, %v9244
        %v9246 = vpack.c.b16 %v9217, %v9210
        %v9247 = vpack.c.b16 %v9231, %v9224
        %v9248 = vpack.c.b16 %v9245, %v9238
        %v9251 = vunpack.c.l.b16 %v9099
        %v9252 = vunpack.c.l.b16 %v9100
        %v9253 = vpack.c.b16 %v9252, %v9251
        %v9256 = vsel %vm774, %v9246, 0
        %v9259 = vsel %vm774, %v9247, 0
        %v9262 = vsel %vm774, %v9248, 0
        %9264 = vmatprep.subr.bf16.mxu0 0
        %9265 = vmatpush1.bf16.msra.mxu0 %v9253
        %9266 = vmatprep.subr.bf16.mxu0 0
        %9267 = vmatpush1.bf16.msra.mxu0 0
        %9268 = vmatprep.subr.bf16.mxu0 0
        %9269 = vmatpush1.bf16.msra.mxu0 0
        %9270 = vmatprep.subr.bf16.mxu0 0
        %9271 = vmatpush1.bf16.msra.mxu0 0
        %9272 = vmatprep.subr.bf16.mxu0 0
        %9273 = vmatpush1.bf16.msra.mxu0 0
        %9274 = vmatprep.subr.bf16.mxu0 0
        %9275 = vmatpush1.bf16.msra.mxu0 0
        %9276 = vmatprep.subr.bf16.mxu0 0
        %9277 = vmatpush1.bf16.msra.mxu0 0
        %9278 = vmatprep.subr.bf16.mxu0 0
        %9279 = vmatpush1.bf16.msra.mxu0 0
        %9280 = vmatprep.subr.bf16.mxu0 0
        %9281 = vmatpush1.bf16.msra.mxu0 0
        %9282 = vmatprep.subr.bf16.mxu0 0
        %9283 = vmatpush1.bf16.msra.mxu0 0
        %9284 = vmatprep.subr.bf16.mxu0 0
        %9285 = vmatpush1.bf16.msra.mxu0 0
        %9286 = vmatprep.subr.bf16.mxu0 0
        %9287 = vmatpush1.bf16.msra.mxu0 0
        %9288 = vmatprep.subr.bf16.mxu0 0
        %9289 = vmatpush1.bf16.msra.mxu0 0
        %9290 = vmatprep.subr.bf16.mxu0 0
        %9291 = vmatpush1.bf16.msra.mxu0 0
        %9292 = vmatprep.subr.bf16.mxu0 0
        %9293 = vmatpush1.bf16.msra.mxu0 0
        %9294 = vmatprep.subr.bf16.mxu0 0
        %9295 = vmatpush1.bf16.msra.mxu0 0
        %9296 = vmatprep.mubr.bf16.mxu0 0
        %9297 = vmatmul.mubr.bf16.gmra.mrb[0].mxu0 %v9256
        %v9298 = vpop.f32.mrb[0].mxu0
        %v9299 = vadd.f32 0.0, %v9298
        %v9300 = vpop.f32.mrb[0].mxu0
        %v9301 = vpop.f32.mrb[0].mxu0
        %v9302 = vadd.f32 0.0, %v9301
        %v9303 = vpop.f32.mrb[0].mxu0
        %9304 = vmatprep.mubr.bf16.mxu0 0
        %9305 = vmatmul.mubr.bf16.gmra.mrb[0].mxu0 %v9259
        %v9306 = vpop.f32.mrb[0].mxu0
        %v9307 = vadd.f32 0.0, %v9306
        %v9308 = vpop.f32.mrb[0].mxu0
        %v9309 = vpop.f32.mrb[0].mxu0
        %v9310 = vadd.f32 0.0, %v9309
        %v9311 = vpop.f32.mrb[0].mxu0
        %9312 = vmatprep.mubr.bf16.mxu0 0
        %9313 = vmatmul.mubr.bf16.gmra.mrb[0].mxu0 %v9262
        %v9314 = vpop.f32.mrb[0].mxu0
        %v9315 = vadd.f32 0.0, %v9314
        %v9316 = vpop.f32.mrb[0].mxu0
        %v9317 = vpop.f32.mrb[0].mxu0
        %v9318 = vadd.f32 0.0, %v9317
        %v9319 = vpop.f32.mrb[0].mxu0
        %9320 = vdwg.mxu0
        %v9321 = vadd.f32 %v574, %v9299
        %v9322 = vadd.f32 %v575, %v9302
        %v9323 = vadd.f32 %v576, %v9307
        %v9324 = vadd.f32 %v577, %v9310
        %v9325 = vadd.f32 %v578, %v9315
        %v9326 = vadd.f32 %v579, %v9318
        %v9327 = vld [vmem:[%s12] sm:$0x1]
        %v9328 = vld [vmem:[%s13] sm:$0x1]
        %v9329 = vsel %vm774, %v9321, 0.0
        %9330 = vadd.xlane.f32.xlu0 %v9329
        %v9331 = vpop.xlane.xlu0 %9330
        %v9332 = vsel %vm774, %v9322, 0.0
        %9333 = vadd.xlane.f32.xlu0 %v9332
        %v9334 = vpop.xlane.xlu0 %9333
        %v9335 = vsel %vm774, %v9323, 0.0
        %9336 = vadd.xlane.f32.xlu0 %v9335
        %v9337 = vpop.xlane.xlu0 %9336
        %v9338 = vsel %vm774, %v9324, 0.0
        %9339 = vadd.xlane.f32.xlu0 %v9338
        %v9340 = vpop.xlane.xlu0 %9339
        %v9341 = vsel %vm774, %v9325, 0.0
        %9342 = vadd.xlane.f32.xlu0 %v9341
        %v9343 = vpop.xlane.xlu0 %9342
        %v9344 = vsel %vm774, %v9326, 0.0
        %9345 = vadd.xlane.f32.xlu0 %v9344
        %v9346 = vpop.xlane.xlu0 %9345
        %v9347 = vmul.f32 %v9331, %v793
        %v9348 = vmul.f32 %v9334, %v793
        %v9349 = vmul.f32 %v9337, %v793
        %v9350 = vmul.f32 %v9340, %v793
        %v9351 = vmul.f32 %v9343, %v793
        %v9352 = vmul.f32 %v9346, %v793
        %v9353 = vsub.f32 %v9321, %v9347
        %v9354 = vsub.f32 %v9322, %v9348
        %v9355 = vsub.f32 %v9323, %v9349
        %v9356 = vsub.f32 %v9324, %v9350
        %v9357 = vsub.f32 %v9325, %v9351
        %v9358 = vsub.f32 %v9326, %v9352
        %v9359 = vmul.f32 %v9353, %v9353
        %v9360 = vmul.f32 %v9354, %v9354
        %v9361 = vmul.f32 %v9355, %v9355
        %v9362 = vmul.f32 %v9356, %v9356
        %v9363 = vmul.f32 %v9357, %v9357
        %v9364 = vmul.f32 %v9358, %v9358
        %v9365 = vsel %vm774, %v9359, 0.0
        %9366 = vadd.xlane.f32.xlu0 %v9365
        %v9367 = vpop.xlane.xlu0 %9366
        %v9368 = vsel %vm774, %v9360, 0.0
        %9369 = vadd.xlane.f32.xlu0 %v9368
        %v9370 = vpop.xlane.xlu0 %9369
        %v9371 = vsel %vm774, %v9361, 0.0
        %9372 = vadd.xlane.f32.xlu0 %v9371
        %v9373 = vpop.xlane.xlu0 %9372
        %v9374 = vsel %vm774, %v9362, 0.0
        %9375 = vadd.xlane.f32.xlu0 %v9374
        %v9376 = vpop.xlane.xlu0 %9375
        %v9377 = vsel %vm774, %v9363, 0.0
        %9378 = vadd.xlane.f32.xlu0 %v9377
        %v9379 = vpop.xlane.xlu0 %9378
        %v9380 = vsel %vm774, %v9364, 0.0
        %9381 = vadd.xlane.f32.xlu0 %v9380
        %v9382 = vpop.xlane.xlu0 %9381
        %v9383 = vmul.f32 %v9367, %v793
        %v9384 = vmul.f32 %v9370, %v793
        %v9385 = vmul.f32 %v9373, %v793
        %v9386 = vmul.f32 %v9376, %v793
        %v9387 = vmul.f32 %v9379, %v793
        %v9388 = vmul.f32 %v9382, %v793
        %v9389 = vadd.f32 %v9383, 1e-05
        %v9390 = vadd.f32 %v9384, 1e-05
        %v9391 = vadd.f32 %v9385, 1e-05
        %v9392 = vadd.f32 %v9386, 1e-05
        %v9393 = vadd.f32 %v9387, 1e-05
        %v9394 = vadd.f32 %v9388, 1e-05
        %v9395 = vrsqrt.pop %v9389
        %v9396 = vrsqrt.pop %v9390
        %v9397 = vrsqrt.pop %v9391
        %v9398 = vrsqrt.pop %v9392
        %v9399 = vrsqrt.pop %v9393
        %v9400 = vrsqrt.pop %v9394
        %v9401 = vmul.f32 %v9353, %v9395
        %v9402 = vmul.f32 %v9354, %v9396
        %v9403 = vmul.f32 %v9355, %v9397
        %v9404 = vmul.f32 %v9356, %v9398
        %v9405 = vmul.f32 %v9357, %v9399
        %v9406 = vmul.f32 %v9358, %v9400
        %v9408 = vlaneseq
        %v9409 = vshrl.u32 %v9408, 7
        %v9410 = vsub.s32 0, %v9409
        %v9411 = vrot.slane %v9327, %v9410
        %v9413 = vmul.f32 %v9401, %v9411
        %v9414 = vmul.f32 %v9402, %v9411
        %v9415 = vmul.f32 %v9403, %v9411
        %v9416 = vmul.f32 %v9404, %v9411
        %v9417 = vmul.f32 %v9405, %v9411
        %v9418 = vmul.f32 %v9406, %v9411
        %v9420 = vlaneseq
        %v9421 = vshrl.u32 %v9420, 7
        %v9422 = vsub.s32 0, %v9421
        %v9423 = vrot.slane %v9328, %v9422
        %v9425 = vadd.f32 %v9413, %v9423
        %v9426 = vadd.f32 %v9414, %v9423
        %v9427 = vadd.f32 %v9415, %v9423
        %v9428 = vadd.f32 %v9416, %v9423
        %v9429 = vadd.f32 %v9417, %v9423
        %v9430 = vadd.f32 %v9418, %v9423
        %v9431 = vpack.c.bf16 %v9426, %v9425
        %v9432 = vpack.c.bf16 %v9428, %v9427
        %v9433 = vpack.c.bf16 %v9430, %v9429
        %v9434 = vld [vmem:[%s14] sm:$0xf]
        %v9435 = vld [vmem:[%s14 + $0x4] sm:$0xf]
        %v9438 = vunpack.c.l.b16 %v9434
        %v9439 = vunpack.c.l.b16 %v9435
        %v9440 = vpack.c.b16 %v9439, %v9438
        %v9443 = vsel %vm774, %v9431, 0
        %v9446 = vsel %vm774, %v9432, 0
        %v9449 = vsel %vm774, %v9433, 0
        %9451 = vmatprep.subr.bf16.mxu0 0
        %9452 = vmatpush1.bf16.msra.mxu0 %v9440
        %9453 = vmatprep.subr.bf16.mxu0 0
        %9454 = vmatpush1.bf16.msra.mxu0 0
        %9455 = vmatprep.subr.bf16.mxu0 0
        %9456 = vmatpush1.bf16.msra.mxu0 0
        %9457 = vmatprep.subr.bf16.mxu0 0
        %9458 = vmatpush1.bf16.msra.mxu0 0
        %9459 = vmatprep.subr.bf16.mxu0 0
        %9460 = vmatpush1.bf16.msra.mxu0 0
        %9461 = vmatprep.subr.bf16.mxu0 0
        %9462 = vmatpush1.bf16.msra.mxu0 0
        %9463 = vmatprep.subr.bf16.mxu0 0
        %9464 = vmatpush1.bf16.msra.mxu0 0
        %9465 = vmatprep.subr.bf16.mxu0 0
        %9466 = vmatpush1.bf16.msra.mxu0 0
        %9467 = vmatprep.subr.bf16.mxu0 0
        %9468 = vmatpush1.bf16.msra.mxu0 0
        %9469 = vmatprep.subr.bf16.mxu0 0
        %9470 = vmatpush1.bf16.msra.mxu0 0
        %9471 = vmatprep.subr.bf16.mxu0 0
        %9472 = vmatpush1.bf16.msra.mxu0 0
        %9473 = vmatprep.subr.bf16.mxu0 0
        %9474 = vmatpush1.bf16.msra.mxu0 0
        %9475 = vmatprep.subr.bf16.mxu0 0
        %9476 = vmatpush1.bf16.msra.mxu0 0
        %9477 = vmatprep.subr.bf16.mxu0 0
        %9478 = vmatpush1.bf16.msra.mxu0 0
        %9479 = vmatprep.subr.bf16.mxu0 0
        %9480 = vmatpush1.bf16.msra.mxu0 0
        %9481 = vmatprep.subr.bf16.mxu0 0
        %9482 = vmatpush1.bf16.msra.mxu0 0
        %9483 = vmatprep.mubr.bf16.mxu0 0
        %9484 = vmatmul.mubr.bf16.gmra.mrb[0].mxu0 %v9443
        %v9485 = vpop.f32.mrb[0].mxu0
        %v9486 = vadd.f32 0.0, %v9485
        %v9487 = vpop.f32.mrb[0].mxu0
        %v9488 = vpop.f32.mrb[0].mxu0
        %v9489 = vadd.f32 0.0, %v9488
        %v9490 = vpop.f32.mrb[0].mxu0
        %9491 = vmatprep.mubr.bf16.mxu0 0
        %9492 = vmatmul.mubr.bf16.gmra.mrb[0].mxu0 %v9446
        %v9493 = vpop.f32.mrb[0].mxu0
        %v9494 = vadd.f32 0.0, %v9493
        %v9495 = vpop.f32.mrb[0].mxu0
        %v9496 = vpop.f32.mrb[0].mxu0
        %v9497 = vadd.f32 0.0, %v9496
        %v9498 = vpop.f32.mrb[0].mxu0
        %9499 = vmatprep.mubr.bf16.mxu0 0
        %9500 = vmatmul.mubr.bf16.gmra.mrb[0].mxu0 %v9449
        %v9501 = vpop.f32.mrb[0].mxu0
        %v9502 = vadd.f32 0.0, %v9501
        %v9503 = vpop.f32.mrb[0].mxu0
        %v9504 = vpop.f32.mrb[0].mxu0
        %v9505 = vadd.f32 0.0, %v9504
        %v9506 = vpop.f32.mrb[0].mxu0
        %9507 = vdwg.mxu0
        %v9508 = vmul.f32 %v9486, %v9486
        %v9509 = vmul.f32 %v9489, %v9489
        %v9510 = vmul.f32 %v9494, %v9494
        %v9511 = vmul.f32 %v9497, %v9497
        %v9512 = vmul.f32 %v9502, %v9502
        %v9513 = vmul.f32 %v9505, %v9505
        %v9514 = vmul.f32 %v9486, %v9508
        %v9515 = vmul.f32 %v9489, %v9509
        %v9516 = vmul.f32 %v9494, %v9510
        %v9517 = vmul.f32 %v9497, %v9511
        %v9518 = vmul.f32 %v9502, %v9512
        %v9519 = vmul.f32 %v9505, %v9513
        %v9520 = vmul.f32 %v9514, 0.044715
        %v9521 = vmul.f32 %v9515, 0.044715
        %v9522 = vmul.f32 %v9516, 0.044715
        %v9523 = vmul.f32 %v9517, 0.044715
        %v9524 = vmul.f32 %v9518, 0.044715
        %v9525 = vmul.f32 %v9519, 0.044715
        %v9526 = vadd.f32 %v9486, %v9520
        %v9527 = vadd.f32 %v9489, %v9521
        %v9528 = vadd.f32 %v9494, %v9522
        %v9529 = vadd.f32 %v9497, %v9523
        %v9530 = vadd.f32 %v9502, %v9524
        %v9531 = vadd.f32 %v9505, %v9525
        %v9532 = vmul.f32 %v9526, 0.7978846
        %v9533 = vmul.f32 %v9527, 0.7978846
        %v9534 = vmul.f32 %v9528, 0.7978846
        %v9535 = vmul.f32 %v9529, 0.7978846
        %v9536 = vmul.f32 %v9530, 0.7978846
        %v9537 = vmul.f32 %v9531, 0.7978846
        %v9538 = vtanh.pop %v9532
        %v9539 = vtanh.pop %v9533
        %v9540 = vtanh.pop %v9534
        %v9541 = vtanh.pop %v9535
        %v9542 = vtanh.pop %v9536
        %v9543 = vtanh.pop %v9537
        %v9544 = vadd.f32 %v9538, 1.0
        %v9545 = vadd.f32 %v9539, 1.0
        %v9546 = vadd.f32 %v9540, 1.0
        %v9547 = vadd.f32 %v9541, 1.0
        %v9548 = vadd.f32 %v9542, 1.0
        %v9549 = vadd.f32 %v9543, 1.0
        %v9550 = vmul.f32 %v9544, 0.5
        %v9551 = vmul.f32 %v9545, 0.5
        %v9552 = vmul.f32 %v9546, 0.5
        %v9553 = vmul.f32 %v9547, 0.5
        %v9554 = vmul.f32 %v9548, 0.5
        %v9555 = vmul.f32 %v9549, 0.5
        %v9556 = vmul.f32 %v9486, %v9550
        %v9557 = vmul.f32 %v9489, %v9551
        %v9558 = vmul.f32 %v9494, %v9552
        %v9559 = vmul.f32 %v9497, %v9553
        %v9560 = vmul.f32 %v9502, %v9554
        %v9561 = vmul.f32 %v9505, %v9555
        %v9562 = vpack.c.bf16 %v9557, %v9556
        %v9563 = vpack.c.bf16 %v9559, %v9558
        %v9564 = vpack.c.bf16 %v9561, %v9560
        %v9565 = vld [vmem:[%s15] sm:$0xf]
        %v9566 = vld [vmem:[%s15 + $0x4] sm:$0xf]
        %v9567 = vld [vmem:[%s15 + $0x8] sm:$0xf]
        %v9568 = vld [vmem:[%s15 + $0xc] sm:$0xf]
        %v9573 = vunpack.c.l.b16 %v9565
        %v9574 = vunpack.c.l.b16 %v9566
        %v9575 = vunpack.c.l.b16 %v9567
        %v9576 = vunpack.c.l.b16 %v9568
        %v9577 = vpack.c.b16 %v9574, %v9573
        %v9578 = vpack.c.b16 %v9576, %v9575
        %vm9581 = vcmask 261120
        %v9583 = vsel %vm9581, %v9562, 0
        %v9586 = vsel %vm9581, %v9563, 0
        %v9589 = vsel %vm9581, %v9564, 0
        %9591 = vmatprep.subr.bf16.mxu0 0
        %9592 = vmatpush1.bf16.msra.mxu0 %v9577
        %9593 = vmatprep.subr.bf16.mxu0 0
        %9594 = vmatpush1.bf16.msra.mxu0 %v9578
        %9595 = vmatprep.subr.bf16.mxu0 0
        %9596 = vmatpush1.bf16.msra.mxu0 0
        %9597 = vmatprep.subr.bf16.mxu0 0
        %9598 = vmatpush1.bf16.msra.mxu0 0
        %9599 = vmatprep.subr.bf16.mxu0 0
        %9600 = vmatpush1.bf16.msra.mxu0 0
        %9601 = vmatprep.subr.bf16.mxu0 0
        %9602 = vmatpush1.bf16.msra.mxu0 0
        %9603 = vmatprep.subr.bf16.mxu0 0
        %9604 = vmatpush1.bf16.msra.mxu0 0
        %9605 = vmatprep.subr.bf16.mxu0 0
        %9606 = vmatpush1.bf16.msra.mxu0 0
        %9607 = vmatprep.subr.bf16.mxu0 0
        %9608 = vmatpush1.bf16.msra.mxu0 0
        %9609 = vmatprep.subr.bf16.mxu0 0
        %9610 = vmatpush1.bf16.msra.mxu0 0
        %9611 = vmatprep.subr.bf16.mxu0 0
        %9612 = vmatpush1.bf16.msra.mxu0 0
        %9613 = vmatprep.subr.bf16.mxu0 0
        %9614 = vmatpush1.bf16.msra.mxu0 0
        %9615 = vmatprep.subr.bf16.mxu0 0
        %9616 = vmatpush1.bf16.msra.mxu0 0
        %9617 = vmatprep.subr.bf16.mxu0 0
        %9618 = vmatpush1.bf16.msra.mxu0 0
        %9619 = vmatprep.subr.bf16.mxu0 0
        %9620 = vmatpush1.bf16.msra.mxu0 0
        %9621 = vmatprep.subr.bf16.mxu0 0
        %9622 = vmatpush1.bf16.msra.mxu0 0
        %9623 = vmatprep.mubr.bf16.mxu0 0
        %9624 = vmatmul.mubr.bf16.gmra.mrb[0].mxu0 %v9583
        %v9625 = vpop.f32.mrb[0].mxu0
        %v9626 = vadd.f32 0.0, %v9625
        %v9627 = vpop.f32.mrb[0].mxu0
        %v9628 = vpop.f32.mrb[0].mxu0
        %v9629 = vadd.f32 0.0, %v9628
        %v9630 = vpop.f32.mrb[0].mxu0
        %9631 = vmatprep.mubr.bf16.mxu0 0
        %9632 = vmatmul.mubr.bf16.gmra.mrb[0].mxu0 %v9586
        %v9633 = vpop.f32.mrb[0].mxu0
        %v9634 = vadd.f32 0.0, %v9633
        %v9635 = vpop.f32.mrb[0].mxu0
        %v9636 = vpop.f32.mrb[0].mxu0
        %v9637 = vadd.f32 0.0, %v9636
        %v9638 = vpop.f32.mrb[0].mxu0
        %9639 = vmatprep.mubr.bf16.mxu0 0
        %9640 = vmatmul.mubr.bf16.gmra.mrb[0].mxu0 %v9589
        %v9641 = vpop.f32.mrb[0].mxu0
        %v9642 = vadd.f32 0.0, %v9641
        %v9643 = vpop.f32.mrb[0].mxu0
        %v9644 = vpop.f32.mrb[0].mxu0
        %v9645 = vadd.f32 0.0, %v9644
        %v9646 = vpop.f32.mrb[0].mxu0
        %9647 = vdwg.mxu0
        %v9648 = vadd.f32 %v9321, %v9626
        %v9649 = vadd.f32 %v9322, %v9629
        %v9650 = vadd.f32 %v9323, %v9634
        %v9651 = vadd.f32 %v9324, %v9637
        %v9652 = vadd.f32 %v9325, %v9642
        %v9653 = vadd.f32 %v9326, %v9645
        %v9654 = vsel %vm774, %v8427, 0.0
        %9655 = vadd.xlane.f32.xlu0 %v9654
        %v9656 = vpop.xlane.xlu0 %9655
        %v9657 = vsel %vm774, %v8428, 0.0
        %9658 = vadd.xlane.f32.xlu0 %v9657
        %v9659 = vpop.xlane.xlu0 %9658
        %v9660 = vsel %vm774, %v8429, 0.0
        %9661 = vadd.xlane.f32.xlu0 %v9660
        %v9662 = vpop.xlane.xlu0 %9661
        %v9663 = vsel %vm774, %v8430, 0.0
        %9664 = vadd.xlane.f32.xlu0 %v9663
        %v9665 = vpop.xlane.xlu0 %9664
        %v9666 = vsel %vm774, %v8431, 0.0
        %9667 = vadd.xlane.f32.xlu0 %v9666
        %v9668 = vpop.xlane.xlu0 %9667
        %v9669 = vsel %vm774, %v8432, 0.0
        %9670 = vadd.xlane.f32.xlu0 %v9669
        %v9671 = vpop.xlane.xlu0 %9670
        %v9672 = vsel %vm774, %v8433, 0.0
        %9673 = vadd.xlane.f32.xlu0 %v9672
        %v9674 = vpop.xlane.xlu0 %9673
        %v9675 = vsel %vm774, %v8434, 0.0
        %9676 = vadd.xlane.f32.xlu0 %v9675
        %v9677 = vpop.xlane.xlu0 %9676
        %v9678 = vsel %vm774, %v8435, 0.0
        %9679 = vadd.xlane.f32.xlu0 %v9678
        %v9680 = vpop.xlane.xlu0 %9679
        %v9681 = vsel %vm774, %v8436, 0.0
        %9682 = vadd.xlane.f32.xlu0 %v9681
        %v9683 = vpop.xlane.xlu0 %9682
        %v9684 = vsel %vm774, %v8437, 0.0
        %9685 = vadd.xlane.f32.xlu0 %v9684
        %v9686 = vpop.xlane.xlu0 %9685
        %v9687 = vsel %vm774, %v8438, 0.0
        %9688 = vadd.xlane.f32.xlu0 %v9687
        %v9689 = vpop.xlane.xlu0 %9688
        %v9690 = vsel %vm774, %v8439, 0.0
        %9691 = vadd.xlane.f32.xlu0 %v9690
        %v9692 = vpop.xlane.xlu0 %9691
        %v9693 = vsel %vm774, %v8440, 0.0
        %9694 = vadd.xlane.f32.xlu0 %v9693
        %v9695 = vpop.xlane.xlu0 %9694
        %v9696 = vsel %vm774, %v8441, 0.0
        %9697 = vadd.xlane.f32.xlu0 %v9696
        %v9698 = vpop.xlane.xlu0 %9697
        %v9699 = vsel %vm774, %v8442, 0.0
        %9700 = vadd.xlane.f32.xlu0 %v9699
        %v9701 = vpop.xlane.xlu0 %9700
        %v9702 = vsel %vm774, %v8443, 0.0
        %9703 = vadd.xlane.f32.xlu0 %v9702
        %v9704 = vpop.xlane.xlu0 %9703
        %v9705 = vsel %vm774, %v8444, 0.0
        %9706 = vadd.xlane.f32.xlu0 %v9705
        %v9707 = vpop.xlane.xlu0 %9706
        %v9708 = vsel %vm774, %v8445, 0.0
        %9709 = vadd.xlane.f32.xlu0 %v9708
        %v9710 = vpop.xlane.xlu0 %9709
        %v9711 = vsel %vm774, %v8446, 0.0
        %9712 = vadd.xlane.f32.xlu0 %v9711
        %v9713 = vpop.xlane.xlu0 %9712
        %v9714 = vsel %vm774, %v8447, 0.0
        %9715 = vadd.xlane.f32.xlu0 %v9714
        %v9716 = vpop.xlane.xlu0 %9715
        %v9717 = vsel %vm774, %v8448, 0.0
        %9718 = vadd.xlane.f32.xlu0 %v9717
        %v9719 = vpop.xlane.xlu0 %9718
        %v9720 = vsel %vm774, %v8449, 0.0
        %9721 = vadd.xlane.f32.xlu0 %v9720
        %v9722 = vpop.xlane.xlu0 %9721
        %v9723 = vsel %vm774, %v8450, 0.0
        %9724 = vadd.xlane.f32.xlu0 %v9723
        %v9725 = vpop.xlane.xlu0 %9724
        %v9726 = vsel %vm774, %v8451, 0.0
        %9727 = vadd.xlane.f32.xlu0 %v9726
        %v9728 = vpop.xlane.xlu0 %9727
        %v9729 = vsel %vm774, %v8452, 0.0
        %9730 = vadd.xlane.f32.xlu0 %v9729
        %v9731 = vpop.xlane.xlu0 %9730
        %v9732 = vsel %vm774, %v8453, 0.0
        %9733 = vadd.xlane.f32.xlu0 %v9732
        %v9734 = vpop.xlane.xlu0 %9733
        %v9735 = vsel %vm774, %v8454, 0.0
        %9736 = vadd.xlane.f32.xlu0 %v9735
        %v9737 = vpop.xlane.xlu0 %9736
        %v9738 = vsel %vm774, %v8455, 0.0
        %9739 = vadd.xlane.f32.xlu0 %v9738
        %v9740 = vpop.xlane.xlu0 %9739
        %v9741 = vsel %vm774, %v8456, 0.0
        %9742 = vadd.xlane.f32.xlu0 %v9741
        %v9743 = vpop.xlane.xlu0 %9742
        %v9744 = vsel %vm774, %v8457, 0.0
        %9745 = vadd.xlane.f32.xlu0 %v9744
        %v9746 = vpop.xlane.xlu0 %9745
        %v9747 = vsel %vm774, %v8458, 0.0
        %9748 = vadd.xlane.f32.xlu0 %v9747
        %v9749 = vpop.xlane.xlu0 %9748
        %v9750 = vsel %vm774, %v8459, 0.0
        %9751 = vadd.xlane.f32.xlu0 %v9750
        %v9752 = vpop.xlane.xlu0 %9751
        %v9753 = vsel %vm774, %v8460, 0.0
        %9754 = vadd.xlane.f32.xlu0 %v9753
        %v9755 = vpop.xlane.xlu0 %9754
        %v9756 = vsel %vm774, %v8461, 0.0
        %9757 = vadd.xlane.f32.xlu0 %v9756
        %v9758 = vpop.xlane.xlu0 %9757
        %v9759 = vsel %vm774, %v8462, 0.0
        %9760 = vadd.xlane.f32.xlu0 %v9759
        %v9761 = vpop.xlane.xlu0 %9760
        %v9762 = vsel %vm774, %v8463, 0.0
        %9763 = vadd.xlane.f32.xlu0 %v9762
        %v9764 = vpop.xlane.xlu0 %9763
        %v9765 = vsel %vm774, %v8464, 0.0
        %9766 = vadd.xlane.f32.xlu0 %v9765
        %v9767 = vpop.xlane.xlu0 %9766
        %v9768 = vsel %vm774, %v8465, 0.0
        %9769 = vadd.xlane.f32.xlu0 %v9768
        %v9770 = vpop.xlane.xlu0 %9769
        %v9771 = vsel %vm774, %v8466, 0.0
        %9772 = vadd.xlane.f32.xlu0 %v9771
        %v9773 = vpop.xlane.xlu0 %9772
        %v9774 = vsel %vm774, %v8467, 0.0
        %9775 = vadd.xlane.f32.xlu0 %v9774
        %v9776 = vpop.xlane.xlu0 %9775
        %v9777 = vsel %vm774, %v8468, 0.0
        %9778 = vadd.xlane.f32.xlu0 %v9777
        %v9779 = vpop.xlane.xlu0 %9778
        %v9780 = vsel %vm774, %v8469, 0.0
        %9781 = vadd.xlane.f32.xlu0 %v9780
        %v9782 = vpop.xlane.xlu0 %9781
        %v9783 = vsel %vm774, %v8470, 0.0
        %9784 = vadd.xlane.f32.xlu0 %v9783
        %v9785 = vpop.xlane.xlu0 %9784
        %v9786 = vsel %vm774, %v8471, 0.0
        %9787 = vadd.xlane.f32.xlu0 %v9786
        %v9788 = vpop.xlane.xlu0 %9787
        %v9789 = vsel %vm774, %v8472, 0.0
        %9790 = vadd.xlane.f32.xlu0 %v9789
        %v9791 = vpop.xlane.xlu0 %9790
        %v9792 = vsel %vm774, %v8473, 0.0
        %9793 = vadd.xlane.f32.xlu0 %v9792
        %v9794 = vpop.xlane.xlu0 %9793
        %v9795 = vsel %vm774, %v8474, 0.0
        %9796 = vadd.xlane.f32.xlu0 %v9795
        %v9797 = vpop.xlane.xlu0 %9796
        %v9798 = vsel %vm774, %v8475, 0.0
        %9799 = vadd.xlane.f32.xlu0 %v9798
        %v9800 = vpop.xlane.xlu0 %9799
        %v9801 = vsel %vm774, %v8476, 0.0
        %9802 = vadd.xlane.f32.xlu0 %v9801
        %v9803 = vpop.xlane.xlu0 %9802
        %v9804 = vsel %vm774, %v8477, 0.0
        %9805 = vadd.xlane.f32.xlu0 %v9804
        %v9806 = vpop.xlane.xlu0 %9805
        %v9807 = vsel %vm774, %v8478, 0.0
        %9808 = vadd.xlane.f32.xlu0 %v9807
        %v9809 = vpop.xlane.xlu0 %9808
        %v9810 = vsel %vm774, %v8479, 0.0
        %9811 = vadd.xlane.f32.xlu0 %v9810
        %v9812 = vpop.xlane.xlu0 %9811
        %v9813 = vsel %vm774, %v8480, 0.0
        %9814 = vadd.xlane.f32.xlu0 %v9813
        %v9815 = vpop.xlane.xlu0 %9814
        %v9816 = vsel %vm774, %v8481, 0.0
        %9817 = vadd.xlane.f32.xlu0 %v9816
        %v9818 = vpop.xlane.xlu0 %9817
        %v9819 = vsel %vm774, %v8482, 0.0
        %9820 = vadd.xlane.f32.xlu0 %v9819
        %v9821 = vpop.xlane.xlu0 %9820
        %v9822 = vsel %vm774, %v8483, 0.0
        %9823 = vadd.xlane.f32.xlu0 %v9822
        %v9824 = vpop.xlane.xlu0 %9823
        %v9825 = vsel %vm774, %v8484, 0.0
        %9826 = vadd.xlane.f32.xlu0 %v9825
        %v9827 = vpop.xlane.xlu0 %9826
        %v9828 = vsel %vm774, %v8485, 0.0
        %9829 = vadd.xlane.f32.xlu0 %v9828
        %v9830 = vpop.xlane.xlu0 %9829
        %v9831 = vsel %vm774, %v8486, 0.0
        %9832 = vadd.xlane.f32.xlu0 %v9831
        %v9833 = vpop.xlane.xlu0 %9832
        %v9834 = vsel %vm774, %v8487, 0.0
        %9835 = vadd.xlane.f32.xlu0 %v9834
        %v9836 = vpop.xlane.xlu0 %9835
        %v9837 = vsel %vm774, %v8488, 0.0
        %9838 = vadd.xlane.f32.xlu0 %v9837
        %v9839 = vpop.xlane.xlu0 %9838
        %v9840 = vsel %vm774, %v8489, 0.0
        %9841 = vadd.xlane.f32.xlu0 %v9840
        %v9842 = vpop.xlane.xlu0 %9841
        %v9843 = vsel %vm774, %v8490, 0.0
        %9844 = vadd.xlane.f32.xlu0 %v9843
        %v9845 = vpop.xlane.xlu0 %9844
        %v9846 = vsel %vm774, %v8491, 0.0
        %9847 = vadd.xlane.f32.xlu0 %v9846
        %v9848 = vpop.xlane.xlu0 %9847
        %v9849 = vsel %vm774, %v8492, 0.0
        %9850 = vadd.xlane.f32.xlu0 %v9849
        %v9851 = vpop.xlane.xlu0 %9850
        %v9852 = vsel %vm774, %v8493, 0.0
        %9853 = vadd.xlane.f32.xlu0 %v9852
        %v9854 = vpop.xlane.xlu0 %9853
        %v9855 = vsel %vm774, %v8494, 0.0
        %9856 = vadd.xlane.f32.xlu0 %v9855
        %v9857 = vpop.xlane.xlu0 %9856
        %v9858 = vsel %vm774, %v8495, 0.0
        %9859 = vadd.xlane.f32.xlu0 %v9858
        %v9860 = vpop.xlane.xlu0 %9859
        %v9861 = vsel %vm774, %v8496, 0.0
        %9862 = vadd.xlane.f32.xlu0 %v9861
        %v9863 = vpop.xlane.xlu0 %9862
        %v9864 = vsel %vm774, %v8497, 0.0
        %9865 = vadd.xlane.f32.xlu0 %v9864
        %v9866 = vpop.xlane.xlu0 %9865
        %v9867 = vsel %vm774, %v8498, 0.0
        %9868 = vadd.xlane.f32.xlu0 %v9867
        %v9869 = vpop.xlane.xlu0 %9868
        %v9870 = vsel %vm774, %v8499, 0.0
        %9871 = vadd.xlane.f32.xlu0 %v9870
        %v9872 = vpop.xlane.xlu0 %9871
        %v9873 = vsel %vm774, %v8500, 0.0
        %9874 = vadd.xlane.f32.xlu0 %v9873
        %v9875 = vpop.xlane.xlu0 %9874
        %v9876 = vsel %vm774, %v8501, 0.0
        %9877 = vadd.xlane.f32.xlu0 %v9876
        %v9878 = vpop.xlane.xlu0 %9877
        %v9879 = vsel %vm774, %v8502, 0.0
        %9880 = vadd.xlane.f32.xlu0 %v9879
        %v9881 = vpop.xlane.xlu0 %9880
        %v9882 = vsel %vm774, %v8503, 0.0
        %9883 = vadd.xlane.f32.xlu0 %v9882
        %v9884 = vpop.xlane.xlu0 %9883
        %v9885 = vsel %vm774, %v8504, 0.0
        %9886 = vadd.xlane.f32.xlu0 %v9885
        %v9887 = vpop.xlane.xlu0 %9886
        %v9888 = vsel %vm774, %v8505, 0.0
        %9889 = vadd.xlane.f32.xlu0 %v9888
        %v9890 = vpop.xlane.xlu0 %9889
        %v9891 = vsel %vm774, %v8506, 0.0
        %9892 = vadd.xlane.f32.xlu0 %v9891
        %v9893 = vpop.xlane.xlu0 %9892
        %v9894 = vsel %vm774, %v8507, 0.0
        %9895 = vadd.xlane.f32.xlu0 %v9894
        %v9896 = vpop.xlane.xlu0 %9895
        %v9897 = vsel %vm774, %v8508, 0.0
        %9898 = vadd.xlane.f32.xlu0 %v9897
        %v9899 = vpop.xlane.xlu0 %9898
        %v9900 = vsel %vm774, %v8509, 0.0
        %9901 = vadd.xlane.f32.xlu0 %v9900
        %v9902 = vpop.xlane.xlu0 %9901
        %v9903 = vsel %vm774, %v8510, 0.0
        %9904 = vadd.xlane.f32.xlu0 %v9903
        %v9905 = vpop.xlane.xlu0 %9904
        %v9906 = vsel %vm774, %v8511, 0.0
        %9907 = vadd.xlane.f32.xlu0 %v9906
        %v9908 = vpop.xlane.xlu0 %9907
        %v9909 = vsel %vm774, %v8512, 0.0
        %9910 = vadd.xlane.f32.xlu0 %v9909
        %v9911 = vpop.xlane.xlu0 %9910
        %v9912 = vsel %vm774, %v8513, 0.0
        %9913 = vadd.xlane.f32.xlu0 %v9912
        %v9914 = vpop.xlane.xlu0 %9913
        %v9915 = vsel %vm774, %v8514, 0.0
        %9916 = vadd.xlane.f32.xlu0 %v9915
        %v9917 = vpop.xlane.xlu0 %9916
        %v9918 = vsel %vm774, %v8515, 0.0
        %9919 = vadd.xlane.f32.xlu0 %v9918
        %v9920 = vpop.xlane.xlu0 %9919
        %v9921 = vsel %vm774, %v8516, 0.0
        %9922 = vadd.xlane.f32.xlu0 %v9921
        %v9923 = vpop.xlane.xlu0 %9922
        %v9924 = vsel %vm774, %v8517, 0.0
        %9925 = vadd.xlane.f32.xlu0 %v9924
        %v9926 = vpop.xlane.xlu0 %9925
        %v9927 = vsel %vm774, %v8518, 0.0
        %9928 = vadd.xlane.f32.xlu0 %v9927
        %v9929 = vpop.xlane.xlu0 %9928
        %v9930 = vsel %vm774, %v8519, 0.0
        %9931 = vadd.xlane.f32.xlu0 %v9930
        %v9932 = vpop.xlane.xlu0 %9931
        %v9933 = vsel %vm774, %v8520, 0.0
        %9934 = vadd.xlane.f32.xlu0 %v9933
        %v9935 = vpop.xlane.xlu0 %9934
        %v9936 = vsel %vm774, %v8521, 0.0
        %9937 = vadd.xlane.f32.xlu0 %v9936
        %v9938 = vpop.xlane.xlu0 %9937
        %v9939 = vsel %vm774, %v8522, 0.0
        %9940 = vadd.xlane.f32.xlu0 %v9939
        %v9941 = vpop.xlane.xlu0 %9940
        %v9942 = vmul.f32 %v9656, %v793
        %v9943 = vmul.f32 %v9659, %v793
        %v9944 = vmul.f32 %v9662, %v793
        %v9945 = vmul.f32 %v9665, %v793
        %v9946 = vmul.f32 %v9668, %v793
        %v9947 = vmul.f32 %v9671, %v793
        %v9948 = vmul.f32 %v9674, %v793
        %v9949 = vmul.f32 %v9677, %v793
        %v9950 = vmul.f32 %v9680, %v793
        %v9951 = vmul.f32 %v9683, %v793
        %v9952 = vmul.f32 %v9686, %v793
        %v9953 = vmul.f32 %v9689, %v793
        %v9954 = vmul.f32 %v9692, %v793
        %v9955 = vmul.f32 %v9695, %v793
        %v9956 = vmul.f32 %v9698, %v793
        %v9957 = vmul.f32 %v9701, %v793
        %v9958 = vmul.f32 %v9704, %v793
        %v9959 = vmul.f32 %v9707, %v793
        %v9960 = vmul.f32 %v9710, %v793
        %v9961 = vmul.f32 %v9713, %v793
        %v9962 = vmul.f32 %v9716, %v793
        %v9963 = vmul.f32 %v9719, %v793
        %v9964 = vmul.f32 %v9722, %v793
        %v9965 = vmul.f32 %v9725, %v793
        %v9966 = vmul.f32 %v9728, %v793
        %v9967 = vmul.f32 %v9731, %v793
        %v9968 = vmul.f32 %v9734, %v793
        %v9969 = vmul.f32 %v9737, %v793
        %v9970 = vmul.f32 %v9740, %v793
        %v9971 = vmul.f32 %v9743, %v793
        %v9972 = vmul.f32 %v9746, %v793
        %v9973 = vmul.f32 %v9749, %v793
        %v9974 = vmul.f32 %v9752, %v793
        %v9975 = vmul.f32 %v9755, %v793
        %v9976 = vmul.f32 %v9758, %v793
        %v9977 = vmul.f32 %v9761, %v793
        %v9978 = vmul.f32 %v9764, %v793
        %v9979 = vmul.f32 %v9767, %v793
        %v9980 = vmul.f32 %v9770, %v793
        %v9981 = vmul.f32 %v9773, %v793
        %v9982 = vmul.f32 %v9776, %v793
        %v9983 = vmul.f32 %v9779, %v793
        %v9984 = vmul.f32 %v9782, %v793
        %v9985 = vmul.f32 %v9785, %v793
        %v9986 = vmul.f32 %v9788, %v793
        %v9987 = vmul.f32 %v9791, %v793
        %v9988 = vmul.f32 %v9794, %v793
        %v9989 = vmul.f32 %v9797, %v793
        %v9990 = vmul.f32 %v9800, %v793
        %v9991 = vmul.f32 %v9803, %v793
        %v9992 = vmul.f32 %v9806, %v793
        %v9993 = vmul.f32 %v9809, %v793
        %v9994 = vmul.f32 %v9812, %v793
        %v9995 = vmul.f32 %v9815, %v793
        %v9996 = vmul.f32 %v9818, %v793
        %v9997 = vmul.f32 %v9821, %v793
        %v9998 = vmul.f32 %v9824, %v793
        %v9999 = vmul.f32 %v9827, %v793
        %v10000 = vmul.f32 %v9830, %v793
        %v10001 = vmul.f32 %v9833, %v793
        %v10002 = vmul.f32 %v9836, %v793
        %v10003 = vmul.f32 %v9839, %v793
        %v10004 = vmul.f32 %v9842, %v793
        %v10005 = vmul.f32 %v9845, %v793
        %v10006 = vmul.f32 %v9848, %v793
        %v10007 = vmul.f32 %v9851, %v793
        %v10008 = vmul.f32 %v9854, %v793
        %v10009 = vmul.f32 %v9857, %v793
        %v10010 = vmul.f32 %v9860, %v793
        %v10011 = vmul.f32 %v9863, %v793
        %v10012 = vmul.f32 %v9866, %v793
        %v10013 = vmul.f32 %v9869, %v793
        %v10014 = vmul.f32 %v9872, %v793
        %v10015 = vmul.f32 %v9875, %v793
        %v10016 = vmul.f32 %v9878, %v793
        %v10017 = vmul.f32 %v9881, %v793
        %v10018 = vmul.f32 %v9884, %v793
        %v10019 = vmul.f32 %v9887, %v793
        %v10020 = vmul.f32 %v9890, %v793
        %v10021 = vmul.f32 %v9893, %v793
        %v10022 = vmul.f32 %v9896, %v793
        %v10023 = vmul.f32 %v9899, %v793
        %v10024 = vmul.f32 %v9902, %v793
        %v10025 = vmul.f32 %v9905, %v793
        %v10026 = vmul.f32 %v9908, %v793
        %v10027 = vmul.f32 %v9911, %v793
        %v10028 = vmul.f32 %v9914, %v793
        %v10029 = vmul.f32 %v9917, %v793
        %v10030 = vmul.f32 %v9920, %v793
        %v10031 = vmul.f32 %v9923, %v793
        %v10032 = vmul.f32 %v9926, %v793
        %v10033 = vmul.f32 %v9929, %v793
        %v10034 = vmul.f32 %v9932, %v793
        %v10035 = vmul.f32 %v9935, %v793
        %v10036 = vmul.f32 %v9938, %v793
        %v10037 = vmul.f32 %v9941, %v793
        %10038 = vrot.lane.b32.xlu0 %v2492, 112
        %v10039 = vpop.permute.xlu0 %10038
        %10040 = vrot.lane.b32.xlu0 %v2496, 112
        %v10041 = vpop.permute.xlu0 %10040
        %10042 = vrot.lane.b32.xlu0 %v2500, 112
        %v10043 = vpop.permute.xlu0 %10042
        %10044 = vrot.lane.b32.xlu0 %v2504, 112
        %v10045 = vpop.permute.xlu0 %10044
        %10046 = vrot.lane.b32.xlu0 %v2508, 112
        %v10047 = vpop.permute.xlu0 %10046
        %10048 = vrot.lane.b32.xlu0 %v2512, 112
        %v10049 = vpop.permute.xlu0 %10048
        %10050 = vrot.lane.b32.xlu0 %v2516, 112
        %v10051 = vpop.permute.xlu0 %10050
        %10052 = vrot.lane.b32.xlu0 %v2520, 112
        %v10053 = vpop.permute.xlu0 %10052
        %10054 = vrot.lane.b32.xlu0 %v2524, 112
        %v10055 = vpop.permute.xlu0 %10054
        %10056 = vrot.lane.b32.xlu0 %v2528, 112
        %v10057 = vpop.permute.xlu0 %10056
        %10058 = vrot.lane.b32.xlu0 %v2532, 112
        %v10059 = vpop.permute.xlu0 %10058
        %10060 = vrot.lane.b32.xlu0 %v2536, 112
        %v10061 = vpop.permute.xlu0 %10060
        %10062 = vrot.lane.b32.xlu0 %v2540, 112
        %v10063 = vpop.permute.xlu0 %10062
        %10064 = vrot.lane.b32.xlu0 %v2544, 112
        %v10065 = vpop.permute.xlu0 %10064
        %10066 = vrot.lane.b32.xlu0 %v2548, 112
        %v10067 = vpop.permute.xlu0 %10066
        %10068 = vrot.lane.b32.xlu0 %v2552, 112
        %v10069 = vpop.permute.xlu0 %10068
        %10070 = vrot.lane.b32.xlu0 %v2556, 112
        %v10071 = vpop.permute.xlu0 %10070
        %10072 = vrot.lane.b32.xlu0 %v2560, 112
        %v10073 = vpop.permute.xlu0 %10072
        %10074 = vrot.lane.b32.xlu0 %v2564, 112
        %v10075 = vpop.permute.xlu0 %10074
        %10076 = vrot.lane.b32.xlu0 %v2568, 112
        %v10077 = vpop.permute.xlu0 %10076
        %10078 = vrot.lane.b32.xlu0 %v2572, 112
        %v10079 = vpop.permute.xlu0 %10078
        %10080 = vrot.lane.b32.xlu0 %v2576, 112
        %v10081 = vpop.permute.xlu0 %10080
        %10082 = vrot.lane.b32.xlu0 %v2580, 112
        %v10083 = vpop.permute.xlu0 %10082
        %10084 = vrot.lane.b32.xlu0 %v2584, 112
        %v10085 = vpop.permute.xlu0 %10084
        %10086 = vrot.lane.b32.xlu0 %v2588, 112
        %v10087 = vpop.permute.xlu0 %10086
        %10088 = vrot.lane.b32.xlu0 %v2592, 112
        %v10089 = vpop.permute.xlu0 %10088
        %10090 = vrot.lane.b32.xlu0 %v2596, 112
        %v10091 = vpop.permute.xlu0 %10090
        %10092 = vrot.lane.b32.xlu0 %v2600, 112
        %v10093 = vpop.permute.xlu0 %10092
        %10094 = vrot.lane.b32.xlu0 %v2604, 112
        %v10095 = vpop.permute.xlu0 %10094
        %10096 = vrot.lane.b32.xlu0 %v2608, 112
        %v10097 = vpop.permute.xlu0 %10096
        %10098 = vrot.lane.b32.xlu0 %v2612, 112
        %v10099 = vpop.permute.xlu0 %10098
        %10100 = vrot.lane.b32.xlu0 %v2616, 112
        %v10101 = vpop.permute.xlu0 %10100
        %10102 = vrot.lane.b32.xlu0 %v2620, 112
        %v10103 = vpop.permute.xlu0 %10102
        %10104 = vrot.lane.b32.xlu0 %v2624, 112
        %v10105 = vpop.permute.xlu0 %10104
        %10106 = vrot.lane.b32.xlu0 %v2628, 112
        %v10107 = vpop.permute.xlu0 %10106
        %10108 = vrot.lane.b32.xlu0 %v2632, 112
        %v10109 = vpop.permute.xlu0 %10108
        %10110 = vrot.lane.b32.xlu0 %v2636, 112
        %v10111 = vpop.permute.xlu0 %10110
        %10112 = vrot.lane.b32.xlu0 %v2640, 112
        %v10113 = vpop.permute.xlu0 %10112
        %10114 = vrot.lane.b32.xlu0 %v2644, 112
        %v10115 = vpop.permute.xlu0 %10114
        %10116 = vrot.lane.b32.xlu0 %v2648, 112
        %v10117 = vpop.permute.xlu0 %10116
        %10118 = vrot.lane.b32.xlu0 %v2652, 112
        %v10119 = vpop.permute.xlu0 %10118
        %10120 = vrot.lane.b32.xlu0 %v2656, 112
        %v10121 = vpop.permute.xlu0 %10120
        %10122 = vrot.lane.b32.xlu0 %v2660, 112
        %v10123 = vpop.permute.xlu0 %10122
        %10124 = vrot.lane.b32.xlu0 %v2664, 112
        %v10125 = vpop.permute.xlu0 %10124
        %10126 = vrot.lane.b32.xlu0 %v2668, 112
        %v10127 = vpop.permute.xlu0 %10126
        %10128 = vrot.lane.b32.xlu0 %v2672, 112
        %v10129 = vpop.permute.xlu0 %10128
        %10130 = vrot.lane.b32.xlu0 %v2676, 112
        %v10131 = vpop.permute.xlu0 %10130
        %10132 = vrot.lane.b32.xlu0 %v2680, 112
        %v10133 = vpop.permute.xlu0 %10132
        %v10182 = vsub.f32 %v676, %v10039
        %v10183 = vsub.f32 %v677, %v10039
        %v10184 = vsub.f32 %v678, %v10041
        %v10185 = vsub.f32 %v679, %v10041
        %v10186 = vsub.f32 %v680, %v10043
        %v10187 = vsub.f32 %v681, %v10043
        %v10188 = vsub.f32 %v682, %v10045
        %v10189 = vsub.f32 %v683, %v10045
        %v10190 = vsub.f32 %v684, %v10047
        %v10191 = vsub.f32 %v685, %v10047
        %v10192 = vsub.f32 %v686, %v10049
        %v10193 = vsub.f32 %v687, %v10049
        %v10194 = vsub.f32 %v688, %v10051
        %v10195 = vsub.f32 %v689, %v10051
        %v10196 = vsub.f32 %v690, %v10053
        %v10197 = vsub.f32 %v691, %v10053
        %v10198 = vsub.f32 %v692, %v10055
        %v10199 = vsub.f32 %v693, %v10055
        %v10200 = vsub.f32 %v694, %v10057
        %v10201 = vsub.f32 %v695, %v10057
        %v10202 = vsub.f32 %v696, %v10059
        %v10203 = vsub.f32 %v697, %v10059
        %v10204 = vsub.f32 %v698, %v10061
        %v10205 = vsub.f32 %v699, %v10061
        %v10206 = vsub.f32 %v700, %v10063
        %v10207 = vsub.f32 %v701, %v10063
        %v10208 = vsub.f32 %v702, %v10065
        %v10209 = vsub.f32 %v703, %v10065
        %v10210 = vsub.f32 %v704, %v10067
        %v10211 = vsub.f32 %v705, %v10067
        %v10212 = vsub.f32 %v706, %v10069
        %v10213 = vsub.f32 %v707, %v10069
        %v10214 = vsub.f32 %v708, %v10071
        %v10215 = vsub.f32 %v709, %v10071
        %v10216 = vsub.f32 %v710, %v10073
        %v10217 = vsub.f32 %v711, %v10073
        %v10218 = vsub.f32 %v712, %v10075
        %v10219 = vsub.f32 %v713, %v10075
        %v10220 = vsub.f32 %v714, %v10077
        %v10221 = vsub.f32 %v715, %v10077
        %v10222 = vsub.f32 %v716, %v10079
        %v10223 = vsub.f32 %v717, %v10079
        %v10224 = vsub.f32 %v718, %v10081
        %v10225 = vsub.f32 %v719, %v10081
        %v10226 = vsub.f32 %v720, %v10083
        %v10227 = vsub.f32 %v721, %v10083
        %v10228 = vsub.f32 %v722, %v10085
        %v10229 = vsub.f32 %v723, %v10085
        %v10230 = vsub.f32 %v724, %v10087
        %v10231 = vsub.f32 %v725, %v10087
        %v10232 = vsub.f32 %v726, %v10089
        %v10233 = vsub.f32 %v727, %v10089
        %v10234 = vsub.f32 %v728, %v10091
        %v10235 = vsub.f32 %v729, %v10091
        %v10236 = vsub.f32 %v730, %v10093
        %v10237 = vsub.f32 %v731, %v10093
        %v10238 = vsub.f32 %v732, %v10095
        %v10239 = vsub.f32 %v733, %v10095
        %v10240 = vsub.f32 %v734, %v10097
        %v10241 = vsub.f32 %v735, %v10097
        %v10242 = vsub.f32 %v736, %v10099
        %v10243 = vsub.f32 %v737, %v10099
        %v10244 = vsub.f32 %v738, %v10101
        %v10245 = vsub.f32 %v739, %v10101
        %v10246 = vsub.f32 %v740, %v10103
        %v10247 = vsub.f32 %v741, %v10103
        %v10248 = vsub.f32 %v742, %v10105
        %v10249 = vsub.f32 %v743, %v10105
        %v10250 = vsub.f32 %v744, %v10107
        %v10251 = vsub.f32 %v745, %v10107
        %v10252 = vsub.f32 %v746, %v10109
        %v10253 = vsub.f32 %v747, %v10109
        %v10254 = vsub.f32 %v748, %v10111
        %v10255 = vsub.f32 %v749, %v10111
        %v10256 = vsub.f32 %v750, %v10113
        %v10257 = vsub.f32 %v751, %v10113
        %v10258 = vsub.f32 %v752, %v10115
        %v10259 = vsub.f32 %v753, %v10115
        %v10260 = vsub.f32 %v754, %v10117
        %v10261 = vsub.f32 %v755, %v10117
        %v10262 = vsub.f32 %v756, %v10119
        %v10263 = vsub.f32 %v757, %v10119
        %v10264 = vsub.f32 %v758, %v10121
        %v10265 = vsub.f32 %v759, %v10121
        %v10266 = vsub.f32 %v760, %v10123
        %v10267 = vsub.f32 %v761, %v10123
        %v10268 = vsub.f32 %v762, %v10125
        %v10269 = vsub.f32 %v763, %v10125
        %v10270 = vsub.f32 %v764, %v10127
        %v10271 = vsub.f32 %v765, %v10127
        %v10272 = vsub.f32 %v766, %v10129
        %v10273 = vsub.f32 %v767, %v10129
        %v10274 = vsub.f32 %v768, %v10131
        %v10275 = vsub.f32 %v769, %v10131
        %v10276 = vsub.f32 %v770, %v10133
        %v10277 = vsub.f32 %v771, %v10133
        %10278 = vset.pattern.permute.xlu0 2
        %10279 = vperm.xlu0 %10278, %v676
        %v10280 = vpop.permute.xlu0 %10279
        %10282 = vset.pattern.permute.xlu0 2
        %10283 = vperm.xlu0 %10282, %v677
        %v10284 = vpop.permute.xlu0 %10283
        %10286 = vset.pattern.permute.xlu0 2
        %10287 = vperm.xlu0 %10286, %v678
        %v10288 = vpop.permute.xlu0 %10287
        %10290 = vset.pattern.permute.xlu0 2
        %10291 = vperm.xlu0 %10290, %v679
        %v10292 = vpop.permute.xlu0 %10291
        %10294 = vset.pattern.permute.xlu0 2
        %10295 = vperm.xlu0 %10294, %v680
        %v10296 = vpop.permute.xlu0 %10295
        %10298 = vset.pattern.permute.xlu0 2
        %10299 = vperm.xlu0 %10298, %v681
        %v10300 = vpop.permute.xlu0 %10299
        %10302 = vset.pattern.permute.xlu0 2
        %10303 = vperm.xlu0 %10302, %v682
        %v10304 = vpop.permute.xlu0 %10303
        %10306 = vset.pattern.permute.xlu0 2
        %10307 = vperm.xlu0 %10306, %v683
        %v10308 = vpop.permute.xlu0 %10307
        %10310 = vset.pattern.permute.xlu0 2
        %10311 = vperm.xlu0 %10310, %v684
        %v10312 = vpop.permute.xlu0 %10311
        %10314 = vset.pattern.permute.xlu0 2
        %10315 = vperm.xlu0 %10314, %v685
        %v10316 = vpop.permute.xlu0 %10315
        %10318 = vset.pattern.permute.xlu0 2
        %10319 = vperm.xlu0 %10318, %v686
        %v10320 = vpop.permute.xlu0 %10319
        %10322 = vset.pattern.permute.xlu0 2
        %10323 = vperm.xlu0 %10322, %v687
        %v10324 = vpop.permute.xlu0 %10323
        %10326 = vset.pattern.permute.xlu0 2
        %10327 = vperm.xlu0 %10326, %v688
        %v10328 = vpop.permute.xlu0 %10327
        %10330 = vset.pattern.permute.xlu0 2
        %10331 = vperm.xlu0 %10330, %v689
        %v10332 = vpop.permute.xlu0 %10331
        %10334 = vset.pattern.permute.xlu0 2
        %10335 = vperm.xlu0 %10334, %v690
        %v10336 = vpop.permute.xlu0 %10335
        %10338 = vset.pattern.permute.xlu0 2
        %10339 = vperm.xlu0 %10338, %v691
        %v10340 = vpop.permute.xlu0 %10339
        %10342 = vset.pattern.permute.xlu0 2
        %10343 = vperm.xlu0 %10342, %v692
        %v10344 = vpop.permute.xlu0 %10343
        %10346 = vset.pattern.permute.xlu0 2
        %10347 = vperm.xlu0 %10346, %v693
        %v10348 = vpop.permute.xlu0 %10347
        %10350 = vset.pattern.permute.xlu0 2
        %10351 = vperm.xlu0 %10350, %v694
        %v10352 = vpop.permute.xlu0 %10351
        %10354 = vset.pattern.permute.xlu0 2
        %10355 = vperm.xlu0 %10354, %v695
        %v10356 = vpop.permute.xlu0 %10355
        %10358 = vset.pattern.permute.xlu0 2
        %10359 = vperm.xlu0 %10358, %v696
        %v10360 = vpop.permute.xlu0 %10359
        %10362 = vset.pattern.permute.xlu0 2
        %10363 = vperm.xlu0 %10362, %v697
        %v10364 = vpop.permute.xlu0 %10363
        %10366 = vset.pattern.permute.xlu0 2
        %10367 = vperm.xlu0 %10366, %v698
        %v10368 = vpop.permute.xlu0 %10367
        %10370 = vset.pattern.permute.xlu0 2
        %10371 = vperm.xlu0 %10370, %v699
        %v10372 = vpop.permute.xlu0 %10371
        %10374 = vset.pattern.permute.xlu0 2
        %10375 = vperm.xlu0 %10374, %v700
        %v10376 = vpop.permute.xlu0 %10375
        %10378 = vset.pattern.permute.xlu0 2
        %10379 = vperm.xlu0 %10378, %v701
        %v10380 = vpop.permute.xlu0 %10379
        %10382 = vset.pattern.permute.xlu0 2
        %10383 = vperm.xlu0 %10382, %v702
        %v10384 = vpop.permute.xlu0 %10383
        %10386 = vset.pattern.permute.xlu0 2
        %10387 = vperm.xlu0 %10386, %v703
        %v10388 = vpop.permute.xlu0 %10387
        %10390 = vset.pattern.permute.xlu0 2
        %10391 = vperm.xlu0 %10390, %v704
        %v10392 = vpop.permute.xlu0 %10391
        %10394 = vset.pattern.permute.xlu0 2
        %10395 = vperm.xlu0 %10394, %v705
        %v10396 = vpop.permute.xlu0 %10395
        %10398 = vset.pattern.permute.xlu0 2
        %10399 = vperm.xlu0 %10398, %v706
        %v10400 = vpop.permute.xlu0 %10399
        %10402 = vset.pattern.permute.xlu0 2
        %10403 = vperm.xlu0 %10402, %v707
        %v10404 = vpop.permute.xlu0 %10403
        %10406 = vset.pattern.permute.xlu0 2
        %10407 = vperm.xlu0 %10406, %v708
        %v10408 = vpop.permute.xlu0 %10407
        %10410 = vset.pattern.permute.xlu0 2
        %10411 = vperm.xlu0 %10410, %v709
        %v10412 = vpop.permute.xlu0 %10411
        %10414 = vset.pattern.permute.xlu0 2
        %10415 = vperm.xlu0 %10414, %v710
        %v10416 = vpop.permute.xlu0 %10415
        %10418 = vset.pattern.permute.xlu0 2
        %10419 = vperm.xlu0 %10418, %v711
        %v10420 = vpop.permute.xlu0 %10419
        %10422 = vset.pattern.permute.xlu0 2
        %10423 = vperm.xlu0 %10422, %v712
        %v10424 = vpop.permute.xlu0 %10423
        %10426 = vset.pattern.permute.xlu0 2
        %10427 = vperm.xlu0 %10426, %v713
        %v10428 = vpop.permute.xlu0 %10427
        %10430 = vset.pattern.permute.xlu0 2
        %10431 = vperm.xlu0 %10430, %v714
        %v10432 = vpop.permute.xlu0 %10431
        %10434 = vset.pattern.permute.xlu0 2
        %10435 = vperm.xlu0 %10434, %v715
        %v10436 = vpop.permute.xlu0 %10435
        %10438 = vset.pattern.permute.xlu0 2
        %10439 = vperm.xlu0 %10438, %v716
        %v10440 = vpop.permute.xlu0 %10439
        %10442 = vset.pattern.permute.xlu0 2
        %10443 = vperm.xlu0 %10442, %v717
        %v10444 = vpop.permute.xlu0 %10443
        %10446 = vset.pattern.permute.xlu0 2
        %10447 = vperm.xlu0 %10446, %v718
        %v10448 = vpop.permute.xlu0 %10447
        %10450 = vset.pattern.permute.xlu0 2
        %10451 = vperm.xlu0 %10450, %v719
        %v10452 = vpop.permute.xlu0 %10451
        %10454 = vset.pattern.permute.xlu0 2
        %10455 = vperm.xlu0 %10454, %v720
        %v10456 = vpop.permute.xlu0 %10455
        %10458 = vset.pattern.permute.xlu0 2
        %10459 = vperm.xlu0 %10458, %v721
        %v10460 = vpop.permute.xlu0 %10459
        %10462 = vset.pattern.permute.xlu0 2
        %10463 = vperm.xlu0 %10462, %v722
        %v10464 = vpop.permute.xlu0 %10463
        %10466 = vset.pattern.permute.xlu0 2
        %10467 = vperm.xlu0 %10466, %v723
        %v10468 = vpop.permute.xlu0 %10467
        %10470 = vset.pattern.permute.xlu0 2
        %10471 = vperm.xlu0 %10470, %v724
        %v10472 = vpop.permute.xlu0 %10471
        %10474 = vset.pattern.permute.xlu0 2
        %10475 = vperm.xlu0 %10474, %v725
        %v10476 = vpop.permute.xlu0 %10475
        %10478 = vset.pattern.permute.xlu0 2
        %10479 = vperm.xlu0 %10478, %v726
        %v10480 = vpop.permute.xlu0 %10479
        %10482 = vset.pattern.permute.xlu0 2
        %10483 = vperm.xlu0 %10482, %v727
        %v10484 = vpop.permute.xlu0 %10483
        %10486 = vset.pattern.permute.xlu0 2
        %10487 = vperm.xlu0 %10486, %v728
        %v10488 = vpop.permute.xlu0 %10487
        %10490 = vset.pattern.permute.xlu0 2
        %10491 = vperm.xlu0 %10490, %v729
        %v10492 = vpop.permute.xlu0 %10491
        %10494 = vset.pattern.permute.xlu0 2
        %10495 = vperm.xlu0 %10494, %v730
        %v10496 = vpop.permute.xlu0 %10495
        %10498 = vset.pattern.permute.xlu0 2
        %10499 = vperm.xlu0 %10498, %v731
        %v10500 = vpop.permute.xlu0 %10499
        %10502 = vset.pattern.permute.xlu0 2
        %10503 = vperm.xlu0 %10502, %v732
        %v10504 = vpop.permute.xlu0 %10503
        %10506 = vset.pattern.permute.xlu0 2
        %10507 = vperm.xlu0 %10506, %v733
        %v10508 = vpop.permute.xlu0 %10507
        %10510 = vset.pattern.permute.xlu0 2
        %10511 = vperm.xlu0 %10510, %v734
        %v10512 = vpop.permute.xlu0 %10511
        %10514 = vset.pattern.permute.xlu0 2
        %10515 = vperm.xlu0 %10514, %v735
        %v10516 = vpop.permute.xlu0 %10515
        %10518 = vset.pattern.permute.xlu0 2
        %10519 = vperm.xlu0 %10518, %v736
        %v10520 = vpop.permute.xlu0 %10519
        %10522 = vset.pattern.permute.xlu0 2
        %10523 = vperm.xlu0 %10522, %v737
        %v10524 = vpop.permute.xlu0 %10523
        %10526 = vset.pattern.permute.xlu0 2
        %10527 = vperm.xlu0 %10526, %v738
        %v10528 = vpop.permute.xlu0 %10527
        %10530 = vset.pattern.permute.xlu0 2
        %10531 = vperm.xlu0 %10530, %v739
        %v10532 = vpop.permute.xlu0 %10531
        %10534 = vset.pattern.permute.xlu0 2
        %10535 = vperm.xlu0 %10534, %v740
        %v10536 = vpop.permute.xlu0 %10535
        %10538 = vset.pattern.permute.xlu0 2
        %10539 = vperm.xlu0 %10538, %v741
        %v10540 = vpop.permute.xlu0 %10539
        %10542 = vset.pattern.permute.xlu0 2
        %10543 = vperm.xlu0 %10542, %v742
        %v10544 = vpop.permute.xlu0 %10543
        %10546 = vset.pattern.permute.xlu0 2
        %10547 = vperm.xlu0 %10546, %v743
        %v10548 = vpop.permute.xlu0 %10547
        %10550 = vset.pattern.permute.xlu0 2
        %10551 = vperm.xlu0 %10550, %v744
        %v10552 = vpop.permute.xlu0 %10551
        %10554 = vset.pattern.permute.xlu0 2
        %10555 = vperm.xlu0 %10554, %v745
        %v10556 = vpop.permute.xlu0 %10555
        %10558 = vset.pattern.permute.xlu0 2
        %10559 = vperm.xlu0 %10558, %v746
        %v10560 = vpop.permute.xlu0 %10559
        %10562 = vset.pattern.permute.xlu0 2
        %10563 = vperm.xlu0 %10562, %v747
        %v10564 = vpop.permute.xlu0 %10563
        %10566 = vset.pattern.permute.xlu0 2
        %10567 = vperm.xlu0 %10566, %v748
        %v10568 = vpop.permute.xlu0 %10567
        %10570 = vset.pattern.permute.xlu0 2
        %10571 = vperm.xlu0 %10570, %v749
        %v10572 = vpop.permute.xlu0 %10571
        %10574 = vset.pattern.permute.xlu0 2
        %10575 = vperm.xlu0 %10574, %v750
        %v10576 = vpop.permute.xlu0 %10575
        %10578 = vset.pattern.permute.xlu0 2
        %10579 = vperm.xlu0 %10578, %v751
        %v10580 = vpop.permute.xlu0 %10579
        %10582 = vset.pattern.permute.xlu0 2
        %10583 = vperm.xlu0 %10582, %v752
        %v10584 = vpop.permute.xlu0 %10583
        %10586 = vset.pattern.permute.xlu0 2
        %10587 = vperm.xlu0 %10586, %v753
        %v10588 = vpop.permute.xlu0 %10587
        %10590 = vset.pattern.permute.xlu0 2
        %10591 = vperm.xlu0 %10590, %v754
        %v10592 = vpop.permute.xlu0 %10591
        %10594 = vset.pattern.permute.xlu0 2
        %10595 = vperm.xlu0 %10594, %v755
        %v10596 = vpop.permute.xlu0 %10595
        %10598 = vset.pattern.permute.xlu0 2
        %10599 = vperm.xlu0 %10598, %v756
        %v10600 = vpop.permute.xlu0 %10599
        %10602 = vset.pattern.permute.xlu0 2
        %10603 = vperm.xlu0 %10602, %v757
        %v10604 = vpop.permute.xlu0 %10603
        %10606 = vset.pattern.permute.xlu0 2
        %10607 = vperm.xlu0 %10606, %v758
        %v10608 = vpop.permute.xlu0 %10607
        %10610 = vset.pattern.permute.xlu0 2
        %10611 = vperm.xlu0 %10610, %v759
        %v10612 = vpop.permute.xlu0 %10611
        %10614 = vset.pattern.permute.xlu0 2
        %10615 = vperm.xlu0 %10614, %v760
        %v10616 = vpop.permute.xlu0 %10615
        %10618 = vset.pattern.permute.xlu0 2
        %10619 = vperm.xlu0 %10618, %v761
        %v10620 = vpop.permute.xlu0 %10619
        %10622 = vset.pattern.permute.xlu0 2
        %10623 = vperm.xlu0 %10622, %v762
        %v10624 = vpop.permute.xlu0 %10623
        %10626 = vset.pattern.permute.xlu0 2
        %10627 = vperm.xlu0 %10626, %v763
        %v10628 = vpop.permute.xlu0 %10627
        %10630 = vset.pattern.permute.xlu0 2
        %10631 = vperm.xlu0 %10630, %v764
        %v10632 = vpop.permute.xlu0 %10631
        %10634 = vset.pattern.permute.xlu0 2
        %10635 = vperm.xlu0 %10634, %v765
        %v10636 = vpop.permute.xlu0 %10635
        %10638 = vset.pattern.permute.xlu0 2
        %10639 = vperm.xlu0 %10638, %v766
        %v10640 = vpop.permute.xlu0 %10639
        %10642 = vset.pattern.permute.xlu0 2
        %10643 = vperm.xlu0 %10642, %v767
        %v10644 = vpop.permute.xlu0 %10643
        %10646 = vset.pattern.permute.xlu0 2
        %10647 = vperm.xlu0 %10646, %v768
        %v10648 = vpop.permute.xlu0 %10647
        %10650 = vset.pattern.permute.xlu0 2
        %10651 = vperm.xlu0 %10650, %v769
        %v10652 = vpop.permute.xlu0 %10651
        %10654 = vset.pattern.permute.xlu0 2
        %10655 = vperm.xlu0 %10654, %v770
        %v10656 = vpop.permute.xlu0 %10655
        %10658 = vset.pattern.permute.xlu0 2
        %10659 = vperm.xlu0 %10658, %v771
        %v10660 = vpop.permute.xlu0 %10659
        %v10662 = vmul.f32 %v10182, %v10280
        %v10663 = vmul.f32 %v10183, %v10284
        %v10664 = vmul.f32 %v10184, %v10288
        %v10665 = vmul.f32 %v10185, %v10292
        %v10666 = vmul.f32 %v10186, %v10296
        %v10667 = vmul.f32 %v10187, %v10300
        %v10668 = vmul.f32 %v10188, %v10304
        %v10669 = vmul.f32 %v10189, %v10308
        %v10670 = vmul.f32 %v10190, %v10312
        %v10671 = vmul.f32 %v10191, %v10316
        %v10672 = vmul.f32 %v10192, %v10320
        %v10673 = vmul.f32 %v10193, %v10324
        %v10674 = vmul.f32 %v10194, %v10328
        %v10675 = vmul.f32 %v10195, %v10332
        %v10676 = vmul.f32 %v10196, %v10336
        %v10677 = vmul.f32 %v10197, %v10340
        %v10678 = vmul.f32 %v10198, %v10344
        %v10679 = vmul.f32 %v10199, %v10348
        %v10680 = vmul.f32 %v10200, %v10352
        %v10681 = vmul.f32 %v10201, %v10356
        %v10682 = vmul.f32 %v10202, %v10360
        %v10683 = vmul.f32 %v10203, %v10364
        %v10684 = vmul.f32 %v10204, %v10368
        %v10685 = vmul.f32 %v10205, %v10372
        %v10686 = vmul.f32 %v10206, %v10376
        %v10687 = vmul.f32 %v10207, %v10380
        %v10688 = vmul.f32 %v10208, %v10384
        %v10689 = vmul.f32 %v10209, %v10388
        %v10690 = vmul.f32 %v10210, %v10392
        %v10691 = vmul.f32 %v10211, %v10396
        %v10692 = vmul.f32 %v10212, %v10400
        %v10693 = vmul.f32 %v10213, %v10404
        %v10694 = vmul.f32 %v10214, %v10408
        %v10695 = vmul.f32 %v10215, %v10412
        %v10696 = vmul.f32 %v10216, %v10416
        %v10697 = vmul.f32 %v10217, %v10420
        %v10698 = vmul.f32 %v10218, %v10424
        %v10699 = vmul.f32 %v10219, %v10428
        %v10700 = vmul.f32 %v10220, %v10432
        %v10701 = vmul.f32 %v10221, %v10436
        %v10702 = vmul.f32 %v10222, %v10440
        %v10703 = vmul.f32 %v10223, %v10444
        %v10704 = vmul.f32 %v10224, %v10448
        %v10705 = vmul.f32 %v10225, %v10452
        %v10706 = vmul.f32 %v10226, %v10456
        %v10707 = vmul.f32 %v10227, %v10460
        %v10708 = vmul.f32 %v10228, %v10464
        %v10709 = vmul.f32 %v10229, %v10468
        %v10710 = vmul.f32 %v10230, %v10472
        %v10711 = vmul.f32 %v10231, %v10476
        %v10712 = vmul.f32 %v10232, %v10480
        %v10713 = vmul.f32 %v10233, %v10484
        %v10714 = vmul.f32 %v10234, %v10488
        %v10715 = vmul.f32 %v10235, %v10492
        %v10716 = vmul.f32 %v10236, %v10496
        %v10717 = vmul.f32 %v10237, %v10500
        %v10718 = vmul.f32 %v10238, %v10504
        %v10719 = vmul.f32 %v10239, %v10508
        %v10720 = vmul.f32 %v10240, %v10512
        %v10721 = vmul.f32 %v10241, %v10516
        %v10722 = vmul.f32 %v10242, %v10520
        %v10723 = vmul.f32 %v10243, %v10524
        %v10724 = vmul.f32 %v10244, %v10528
        %v10725 = vmul.f32 %v10245, %v10532
        %v10726 = vmul.f32 %v10246, %v10536
        %v10727 = vmul.f32 %v10247, %v10540
        %v10728 = vmul.f32 %v10248, %v10544
        %v10729 = vmul.f32 %v10249, %v10548
        %v10730 = vmul.f32 %v10250, %v10552
        %v10731 = vmul.f32 %v10251, %v10556
        %v10732 = vmul.f32 %v10252, %v10560
        %v10733 = vmul.f32 %v10253, %v10564
        %v10734 = vmul.f32 %v10254, %v10568
        %v10735 = vmul.f32 %v10255, %v10572
        %v10736 = vmul.f32 %v10256, %v10576
        %v10737 = vmul.f32 %v10257, %v10580
        %v10738 = vmul.f32 %v10258, %v10584
        %v10739 = vmul.f32 %v10259, %v10588
        %v10740 = vmul.f32 %v10260, %v10592
        %v10741 = vmul.f32 %v10261, %v10596
        %v10742 = vmul.f32 %v10262, %v10600
        %v10743 = vmul.f32 %v10263, %v10604
        %v10744 = vmul.f32 %v10264, %v10608
        %v10745 = vmul.f32 %v10265, %v10612
        %v10746 = vmul.f32 %v10266, %v10616
        %v10747 = vmul.f32 %v10267, %v10620
        %v10748 = vmul.f32 %v10268, %v10624
        %v10749 = vmul.f32 %v10269, %v10628
        %v10750 = vmul.f32 %v10270, %v10632
        %v10751 = vmul.f32 %v10271, %v10636
        %v10752 = vmul.f32 %v10272, %v10640
        %v10753 = vmul.f32 %v10273, %v10644
        %v10754 = vmul.f32 %v10274, %v10648
        %v10755 = vmul.f32 %v10275, %v10652
        %v10756 = vmul.f32 %v10276, %v10656
        %v10757 = vmul.f32 %v10277, %v10660
        %v10758 = vmul.f32 %v9942, %v10662
        %v10759 = vmul.f32 %v9943, %v10663
        %v10760 = vmul.f32 %v9944, %v10664
        %v10761 = vmul.f32 %v9945, %v10665
        %v10762 = vmul.f32 %v9946, %v10666
        %v10763 = vmul.f32 %v9947, %v10667
        %v10764 = vmul.f32 %v9948, %v10668
        %v10765 = vmul.f32 %v9949, %v10669
        %v10766 = vmul.f32 %v9950, %v10670
        %v10767 = vmul.f32 %v9951, %v10671
        %v10768 = vmul.f32 %v9952, %v10672
        %v10769 = vmul.f32 %v9953, %v10673
        %v10770 = vmul.f32 %v9954, %v10674
        %v10771 = vmul.f32 %v9955, %v10675
        %v10772 = vmul.f32 %v9956, %v10676
        %v10773 = vmul.f32 %v9957, %v10677
        %v10774 = vmul.f32 %v9958, %v10678
        %v10775 = vmul.f32 %v9959, %v10679
        %v10776 = vmul.f32 %v9960, %v10680
        %v10777 = vmul.f32 %v9961, %v10681
        %v10778 = vmul.f32 %v9962, %v10682
        %v10779 = vmul.f32 %v9963, %v10683
        %v10780 = vmul.f32 %v9964, %v10684
        %v10781 = vmul.f32 %v9965, %v10685
        %v10782 = vmul.f32 %v9966, %v10686
        %v10783 = vmul.f32 %v9967, %v10687
        %v10784 = vmul.f32 %v9968, %v10688
        %v10785 = vmul.f32 %v9969, %v10689
        %v10786 = vmul.f32 %v9970, %v10690
        %v10787 = vmul.f32 %v9971, %v10691
        %v10788 = vmul.f32 %v9972, %v10692
        %v10789 = vmul.f32 %v9973, %v10693
        %v10790 = vmul.f32 %v9974, %v10694
        %v10791 = vmul.f32 %v9975, %v10695
        %v10792 = vmul.f32 %v9976, %v10696
        %v10793 = vmul.f32 %v9977, %v10697
        %v10794 = vmul.f32 %v9978, %v10698
        %v10795 = vmul.f32 %v9979, %v10699
        %v10796 = vmul.f32 %v9980, %v10700
        %v10797 = vmul.f32 %v9981, %v10701
        %v10798 = vmul.f32 %v9982, %v10702
        %v10799 = vmul.f32 %v9983, %v10703
        %v10800 = vmul.f32 %v9984, %v10704
        %v10801 = vmul.f32 %v9985, %v10705
        %v10802 = vmul.f32 %v9986, %v10706
        %v10803 = vmul.f32 %v9987, %v10707
        %v10804 = vmul.f32 %v9988, %v10708
        %v10805 = vmul.f32 %v9989, %v10709
        %v10806 = vmul.f32 %v9990, %v10710
        %v10807 = vmul.f32 %v9991, %v10711
        %v10808 = vmul.f32 %v9992, %v10712
        %v10809 = vmul.f32 %v9993, %v10713
        %v10810 = vmul.f32 %v9994, %v10714
        %v10811 = vmul.f32 %v9995, %v10715
        %v10812 = vmul.f32 %v9996, %v10716
        %v10813 = vmul.f32 %v9997, %v10717
        %v10814 = vmul.f32 %v9998, %v10718
        %v10815 = vmul.f32 %v9999, %v10719
        %v10816 = vmul.f32 %v10000, %v10720
        %v10817 = vmul.f32 %v10001, %v10721
        %v10818 = vmul.f32 %v10002, %v10722
        %v10819 = vmul.f32 %v10003, %v10723
        %v10820 = vmul.f32 %v10004, %v10724
        %v10821 = vmul.f32 %v10005, %v10725
        %v10822 = vmul.f32 %v10006, %v10726
        %v10823 = vmul.f32 %v10007, %v10727
        %v10824 = vmul.f32 %v10008, %v10728
        %v10825 = vmul.f32 %v10009, %v10729
        %v10826 = vmul.f32 %v10010, %v10730
        %v10827 = vmul.f32 %v10011, %v10731
        %v10828 = vmul.f32 %v10012, %v10732
        %v10829 = vmul.f32 %v10013, %v10733
        %v10830 = vmul.f32 %v10014, %v10734
        %v10831 = vmul.f32 %v10015, %v10735
        %v10832 = vmul.f32 %v10016, %v10736
        %v10833 = vmul.f32 %v10017, %v10737
        %v10834 = vmul.f32 %v10018, %v10738
        %v10835 = vmul.f32 %v10019, %v10739
        %v10836 = vmul.f32 %v10020, %v10740
        %v10837 = vmul.f32 %v10021, %v10741
        %v10838 = vmul.f32 %v10022, %v10742
        %v10839 = vmul.f32 %v10023, %v10743
        %v10840 = vmul.f32 %v10024, %v10744
        %v10841 = vmul.f32 %v10025, %v10745
        %v10842 = vmul.f32 %v10026, %v10746
        %v10843 = vmul.f32 %v10027, %v10747
        %v10844 = vmul.f32 %v10028, %v10748
        %v10845 = vmul.f32 %v10029, %v10749
        %v10846 = vmul.f32 %v10030, %v10750
        %v10847 = vmul.f32 %v10031, %v10751
        %v10848 = vmul.f32 %v10032, %v10752
        %v10849 = vmul.f32 %v10033, %v10753
        %v10850 = vmul.f32 %v10034, %v10754
        %v10851 = vmul.f32 %v10035, %v10755
        %v10852 = vmul.f32 %v10036, %v10756
        %v10853 = vmul.f32 %v10037, %v10757
        %vm10854 = vcmask 15360
        %v10855 = vsel %vm10854, %v10758, 0.0
        %v10856 = vsel %vm10854, %v10759, 0.0
        %v10857 = vadd.f32 %v10855, %v10856
        %v10858 = vrot.slane %v10857, 4
        %v10859 = vadd.f32 %v10857, %v10858
        %v10860 = vrot.slane %v10859, 2
        %v10861 = vadd.f32 %v10859, %v10860
        %v10862 = vrot.slane %v10861, 1
        %v10863 = vadd.f32 %v10861, %v10862
        %v10864 = vsel %vm10854, %v10760, 0.0
        %v10865 = vsel %vm10854, %v10761, 0.0
        %v10866 = vadd.f32 %v10864, %v10865
        %v10867 = vrot.slane %v10866, 4
        %v10868 = vadd.f32 %v10866, %v10867
        %v10869 = vrot.slane %v10868, 2
        %v10870 = vadd.f32 %v10868, %v10869
        %v10871 = vrot.slane %v10870, 1
        %v10872 = vadd.f32 %v10870, %v10871
        %v10873 = vsel %vm10854, %v10762, 0.0
        %v10874 = vsel %vm10854, %v10763, 0.0
        %v10875 = vadd.f32 %v10873, %v10874
        %v10876 = vrot.slane %v10875, 4
        %v10877 = vadd.f32 %v10875, %v10876
        %v10878 = vrot.slane %v10877, 2
        %v10879 = vadd.f32 %v10877, %v10878
        %v10880 = vrot.slane %v10879, 1
        %v10881 = vadd.f32 %v10879, %v10880
        %v10882 = vsel %vm10854, %v10764, 0.0
        %v10883 = vsel %vm10854, %v10765, 0.0
        %v10884 = vadd.f32 %v10882, %v10883
        %v10885 = vrot.slane %v10884, 4
        %v10886 = vadd.f32 %v10884, %v10885
        %v10887 = vrot.slane %v10886, 2
        %v10888 = vadd.f32 %v10886, %v10887
        %v10889 = vrot.slane %v10888, 1
        %v10890 = vadd.f32 %v10888, %v10889
        %v10891 = vsel %vm10854, %v10766, 0.0
        %v10892 = vsel %vm10854, %v10767, 0.0
        %v10893 = vadd.f32 %v10891, %v10892
        %v10894 = vrot.slane %v10893, 4
        %v10895 = vadd.f32 %v10893, %v10894
        %v10896 = vrot.slane %v10895, 2
        %v10897 = vadd.f32 %v10895, %v10896
        %v10898 = vrot.slane %v10897, 1
        %v10899 = vadd.f32 %v10897, %v10898
        %v10900 = vsel %vm10854, %v10768, 0.0
        %v10901 = vsel %vm10854, %v10769, 0.0
        %v10902 = vadd.f32 %v10900, %v10901
        %v10903 = vrot.slane %v10902, 4
        %v10904 = vadd.f32 %v10902, %v10903
        %v10905 = vrot.slane %v10904, 2
        %v10906 = vadd.f32 %v10904, %v10905
        %v10907 = vrot.slane %v10906, 1
        %v10908 = vadd.f32 %v10906, %v10907
        %v10909 = vsel %vm10854, %v10770, 0.0
        %v10910 = vsel %vm10854, %v10771, 0.0
        %v10911 = vadd.f32 %v10909, %v10910
        %v10912 = vrot.slane %v10911, 4
        %v10913 = vadd.f32 %v10911, %v10912
        %v10914 = vrot.slane %v10913, 2
        %v10915 = vadd.f32 %v10913, %v10914
        %v10916 = vrot.slane %v10915, 1
        %v10917 = vadd.f32 %v10915, %v10916
        %v10918 = vsel %vm10854, %v10772, 0.0
        %v10919 = vsel %vm10854, %v10773, 0.0
        %v10920 = vadd.f32 %v10918, %v10919
        %v10921 = vrot.slane %v10920, 4
        %v10922 = vadd.f32 %v10920, %v10921
        %v10923 = vrot.slane %v10922, 2
        %v10924 = vadd.f32 %v10922, %v10923
        %v10925 = vrot.slane %v10924, 1
        %v10926 = vadd.f32 %v10924, %v10925
        %v10927 = vsel %vm10854, %v10774, 0.0
        %v10928 = vsel %vm10854, %v10775, 0.0
        %v10929 = vadd.f32 %v10927, %v10928
        %v10930 = vrot.slane %v10929, 4
        %v10931 = vadd.f32 %v10929, %v10930
        %v10932 = vrot.slane %v10931, 2
        %v10933 = vadd.f32 %v10931, %v10932
        %v10934 = vrot.slane %v10933, 1
        %v10935 = vadd.f32 %v10933, %v10934
        %v10936 = vsel %vm10854, %v10776, 0.0
        %v10937 = vsel %vm10854, %v10777, 0.0
        %v10938 = vadd.f32 %v10936, %v10937
        %v10939 = vrot.slane %v10938, 4
        %v10940 = vadd.f32 %v10938, %v10939
        %v10941 = vrot.slane %v10940, 2
        %v10942 = vadd.f32 %v10940, %v10941
        %v10943 = vrot.slane %v10942, 1
        %v10944 = vadd.f32 %v10942, %v10943
        %v10945 = vsel %vm10854, %v10778, 0.0
        %v10946 = vsel %vm10854, %v10779, 0.0
        %v10947 = vadd.f32 %v10945, %v10946
        %v10948 = vrot.slane %v10947, 4
        %v10949 = vadd.f32 %v10947, %v10948
        %v10950 = vrot.slane %v10949, 2
        %v10951 = vadd.f32 %v10949, %v10950
        %v10952 = vrot.slane %v10951, 1
        %v10953 = vadd.f32 %v10951, %v10952
        %v10954 = vsel %vm10854, %v10780, 0.0
        %v10955 = vsel %vm10854, %v10781, 0.0
        %v10956 = vadd.f32 %v10954, %v10955
        %v10957 = vrot.slane %v10956, 4
        %v10958 = vadd.f32 %v10956, %v10957
        %v10959 = vrot.slane %v10958, 2
        %v10960 = vadd.f32 %v10958, %v10959
        %v10961 = vrot.slane %v10960, 1
        %v10962 = vadd.f32 %v10960, %v10961
        %v10963 = vsel %vm10854, %v10782, 0.0
        %v10964 = vsel %vm10854, %v10783, 0.0
        %v10965 = vadd.f32 %v10963, %v10964
        %v10966 = vrot.slane %v10965, 4
        %v10967 = vadd.f32 %v10965, %v10966
        %v10968 = vrot.slane %v10967, 2
        %v10969 = vadd.f32 %v10967, %v10968
        %v10970 = vrot.slane %v10969, 1
        %v10971 = vadd.f32 %v10969, %v10970
        %v10972 = vsel %vm10854, %v10784, 0.0
        %v10973 = vsel %vm10854, %v10785, 0.0
        %v10974 = vadd.f32 %v10972, %v10973
        %v10975 = vrot.slane %v10974, 4
        %v10976 = vadd.f32 %v10974, %v10975
        %v10977 = vrot.slane %v10976, 2
        %v10978 = vadd.f32 %v10976, %v10977
        %v10979 = vrot.slane %v10978, 1
        %v10980 = vadd.f32 %v10978, %v10979
        %v10981 = vsel %vm10854, %v10786, 0.0
        %v10982 = vsel %vm10854, %v10787, 0.0
        %v10983 = vadd.f32 %v10981, %v10982
        %v10984 = vrot.slane %v10983, 4
        %v10985 = vadd.f32 %v10983, %v10984
        %v10986 = vrot.slane %v10985, 2
        %v10987 = vadd.f32 %v10985, %v10986
        %v10988 = vrot.slane %v10987, 1
        %v10989 = vadd.f32 %v10987, %v10988
        %v10990 = vsel %vm10854, %v10788, 0.0
        %v10991 = vsel %vm10854, %v10789, 0.0
        %v10992 = vadd.f32 %v10990, %v10991
        %v10993 = vrot.slane %v10992, 4
        %v10994 = vadd.f32 %v10992, %v10993
        %v10995 = vrot.slane %v10994, 2
        %v10996 = vadd.f32 %v10994, %v10995
        %v10997 = vrot.slane %v10996, 1
        %v10998 = vadd.f32 %v10996, %v10997
        %v10999 = vsel %vm10854, %v10790, 0.0
        %v11000 = vsel %vm10854, %v10791, 0.0
        %v11001 = vadd.f32 %v10999, %v11000
        %v11002 = vrot.slane %v11001, 4
        %v11003 = vadd.f32 %v11001, %v11002
        %v11004 = vrot.slane %v11003, 2
        %v11005 = vadd.f32 %v11003, %v11004
        %v11006 = vrot.slane %v11005, 1
        %v11007 = vadd.f32 %v11005, %v11006
        %v11008 = vsel %vm10854, %v10792, 0.0
        %v11009 = vsel %vm10854, %v10793, 0.0
        %v11010 = vadd.f32 %v11008, %v11009
        %v11011 = vrot.slane %v11010, 4
        %v11012 = vadd.f32 %v11010, %v11011
        %v11013 = vrot.slane %v11012, 2
        %v11014 = vadd.f32 %v11012, %v11013
        %v11015 = vrot.slane %v11014, 1
        %v11016 = vadd.f32 %v11014, %v11015
        %v11017 = vsel %vm10854, %v10794, 0.0
        %v11018 = vsel %vm10854, %v10795, 0.0
        %v11019 = vadd.f32 %v11017, %v11018
        %v11020 = vrot.slane %v11019, 4
        %v11021 = vadd.f32 %v11019, %v11020
        %v11022 = vrot.slane %v11021, 2
        %v11023 = vadd.f32 %v11021, %v11022
        %v11024 = vrot.slane %v11023, 1
        %v11025 = vadd.f32 %v11023, %v11024
        %v11026 = vsel %vm10854, %v10796, 0.0
        %v11027 = vsel %vm10854, %v10797, 0.0
        %v11028 = vadd.f32 %v11026, %v11027
        %v11029 = vrot.slane %v11028, 4
        %v11030 = vadd.f32 %v11028, %v11029
        %v11031 = vrot.slane %v11030, 2
        %v11032 = vadd.f32 %v11030, %v11031
        %v11033 = vrot.slane %v11032, 1
        %v11034 = vadd.f32 %v11032, %v11033
        %v11035 = vsel %vm10854, %v10798, 0.0
        %v11036 = vsel %vm10854, %v10799, 0.0
        %v11037 = vadd.f32 %v11035, %v11036
        %v11038 = vrot.slane %v11037, 4
        %v11039 = vadd.f32 %v11037, %v11038
        %v11040 = vrot.slane %v11039, 2
        %v11041 = vadd.f32 %v11039, %v11040
        %v11042 = vrot.slane %v11041, 1
        %v11043 = vadd.f32 %v11041, %v11042
        %v11044 = vsel %vm10854, %v10800, 0.0
        %v11045 = vsel %vm10854, %v10801, 0.0
        %v11046 = vadd.f32 %v11044, %v11045
        %v11047 = vrot.slane %v11046, 4
        %v11048 = vadd.f32 %v11046, %v11047
        %v11049 = vrot.slane %v11048, 2
        %v11050 = vadd.f32 %v11048, %v11049
        %v11051 = vrot.slane %v11050, 1
        %v11052 = vadd.f32 %v11050, %v11051
        %v11053 = vsel %vm10854, %v10802, 0.0
        %v11054 = vsel %vm10854, %v10803, 0.0
        %v11055 = vadd.f32 %v11053, %v11054
        %v11056 = vrot.slane %v11055, 4
        %v11057 = vadd.f32 %v11055, %v11056
        %v11058 = vrot.slane %v11057, 2
        %v11059 = vadd.f32 %v11057, %v11058
        %v11060 = vrot.slane %v11059, 1
        %v11061 = vadd.f32 %v11059, %v11060
        %v11062 = vsel %vm10854, %v10804, 0.0
        %v11063 = vsel %vm10854, %v10805, 0.0
        %v11064 = vadd.f32 %v11062, %v11063
        %v11065 = vrot.slane %v11064, 4
        %v11066 = vadd.f32 %v11064, %v11065
        %v11067 = vrot.slane %v11066, 2
        %v11068 = vadd.f32 %v11066, %v11067
        %v11069 = vrot.slane %v11068, 1
        %v11070 = vadd.f32 %v11068, %v11069
        %v11071 = vsel %vm10854, %v10806, 0.0
        %v11072 = vsel %vm10854, %v10807, 0.0
        %v11073 = vadd.f32 %v11071, %v11072
        %v11074 = vrot.slane %v11073, 4
        %v11075 = vadd.f32 %v11073, %v11074
        %v11076 = vrot.slane %v11075, 2
        %v11077 = vadd.f32 %v11075, %v11076
        %v11078 = vrot.slane %v11077, 1
        %v11079 = vadd.f32 %v11077, %v11078
        %v11080 = vsel %vm10854, %v10808, 0.0
        %v11081 = vsel %vm10854, %v10809, 0.0
        %v11082 = vadd.f32 %v11080, %v11081
        %v11083 = vrot.slane %v11082, 4
        %v11084 = vadd.f32 %v11082, %v11083
        %v11085 = vrot.slane %v11084, 2
        %v11086 = vadd.f32 %v11084, %v11085
        %v11087 = vrot.slane %v11086, 1
        %v11088 = vadd.f32 %v11086, %v11087
        %v11089 = vsel %vm10854, %v10810, 0.0
        %v11090 = vsel %vm10854, %v10811, 0.0
        %v11091 = vadd.f32 %v11089, %v11090
        %v11092 = vrot.slane %v11091, 4
        %v11093 = vadd.f32 %v11091, %v11092
        %v11094 = vrot.slane %v11093, 2
        %v11095 = vadd.f32 %v11093, %v11094
        %v11096 = vrot.slane %v11095, 1
        %v11097 = vadd.f32 %v11095, %v11096
        %v11098 = vsel %vm10854, %v10812, 0.0
        %v11099 = vsel %vm10854, %v10813, 0.0
        %v11100 = vadd.f32 %v11098, %v11099
        %v11101 = vrot.slane %v11100, 4
        %v11102 = vadd.f32 %v11100, %v11101
        %v11103 = vrot.slane %v11102, 2
        %v11104 = vadd.f32 %v11102, %v11103
        %v11105 = vrot.slane %v11104, 1
        %v11106 = vadd.f32 %v11104, %v11105
        %v11107 = vsel %vm10854, %v10814, 0.0
        %v11108 = vsel %vm10854, %v10815, 0.0
        %v11109 = vadd.f32 %v11107, %v11108
        %v11110 = vrot.slane %v11109, 4
        %v11111 = vadd.f32 %v11109, %v11110
        %v11112 = vrot.slane %v11111, 2
        %v11113 = vadd.f32 %v11111, %v11112
        %v11114 = vrot.slane %v11113, 1
        %v11115 = vadd.f32 %v11113, %v11114
        %v11116 = vsel %vm10854, %v10816, 0.0
        %v11117 = vsel %vm10854, %v10817, 0.0
        %v11118 = vadd.f32 %v11116, %v11117
        %v11119 = vrot.slane %v11118, 4
        %v11120 = vadd.f32 %v11118, %v11119
        %v11121 = vrot.slane %v11120, 2
        %v11122 = vadd.f32 %v11120, %v11121
        %v11123 = vrot.slane %v11122, 1
        %v11124 = vadd.f32 %v11122, %v11123
        %v11125 = vsel %vm10854, %v10818, 0.0
        %v11126 = vsel %vm10854, %v10819, 0.0
        %v11127 = vadd.f32 %v11125, %v11126
        %v11128 = vrot.slane %v11127, 4
        %v11129 = vadd.f32 %v11127, %v11128
        %v11130 = vrot.slane %v11129, 2
        %v11131 = vadd.f32 %v11129, %v11130
        %v11132 = vrot.slane %v11131, 1
        %v11133 = vadd.f32 %v11131, %v11132
        %v11134 = vsel %vm10854, %v10820, 0.0
        %v11135 = vsel %vm10854, %v10821, 0.0
        %v11136 = vadd.f32 %v11134, %v11135
        %v11137 = vrot.slane %v11136, 4
        %v11138 = vadd.f32 %v11136, %v11137
        %v11139 = vrot.slane %v11138, 2
        %v11140 = vadd.f32 %v11138, %v11139
        %v11141 = vrot.slane %v11140, 1
        %v11142 = vadd.f32 %v11140, %v11141
        %v11143 = vsel %vm10854, %v10822, 0.0
        %v11144 = vsel %vm10854, %v10823, 0.0
        %v11145 = vadd.f32 %v11143, %v11144
        %v11146 = vrot.slane %v11145, 4
        %v11147 = vadd.f32 %v11145, %v11146
        %v11148 = vrot.slane %v11147, 2
        %v11149 = vadd.f32 %v11147, %v11148
        %v11150 = vrot.slane %v11149, 1
        %v11151 = vadd.f32 %v11149, %v11150
        %v11152 = vsel %vm10854, %v10824, 0.0
        %v11153 = vsel %vm10854, %v10825, 0.0
        %v11154 = vadd.f32 %v11152, %v11153
        %v11155 = vrot.slane %v11154, 4
        %v11156 = vadd.f32 %v11154, %v11155
        %v11157 = vrot.slane %v11156, 2
        %v11158 = vadd.f32 %v11156, %v11157
        %v11159 = vrot.slane %v11158, 1
        %v11160 = vadd.f32 %v11158, %v11159
        %v11161 = vsel %vm10854, %v10826, 0.0
        %v11162 = vsel %vm10854, %v10827, 0.0
        %v11163 = vadd.f32 %v11161, %v11162
        %v11164 = vrot.slane %v11163, 4
        %v11165 = vadd.f32 %v11163, %v11164
        %v11166 = vrot.slane %v11165, 2
        %v11167 = vadd.f32 %v11165, %v11166
        %v11168 = vrot.slane %v11167, 1
        %v11169 = vadd.f32 %v11167, %v11168
        %v11170 = vsel %vm10854, %v10828, 0.0
        %v11171 = vsel %vm10854, %v10829, 0.0
        %v11172 = vadd.f32 %v11170, %v11171
        %v11173 = vrot.slane %v11172, 4
        %v11174 = vadd.f32 %v11172, %v11173
        %v11175 = vrot.slane %v11174, 2
        %v11176 = vadd.f32 %v11174, %v11175
        %v11177 = vrot.slane %v11176, 1
        %v11178 = vadd.f32 %v11176, %v11177
        %v11179 = vsel %vm10854, %v10830, 0.0
        %v11180 = vsel %vm10854, %v10831, 0.0
        %v11181 = vadd.f32 %v11179, %v11180
        %v11182 = vrot.slane %v11181, 4
        %v11183 = vadd.f32 %v11181, %v11182
        %v11184 = vrot.slane %v11183, 2
        %v11185 = vadd.f32 %v11183, %v11184
        %v11186 = vrot.slane %v11185, 1
        %v11187 = vadd.f32 %v11185, %v11186
        %v11188 = vsel %vm10854, %v10832, 0.0
        %v11189 = vsel %vm10854, %v10833, 0.0
        %v11190 = vadd.f32 %v11188, %v11189
        %v11191 = vrot.slane %v11190, 4
        %v11192 = vadd.f32 %v11190, %v11191
        %v11193 = vrot.slane %v11192, 2
        %v11194 = vadd.f32 %v11192, %v11193
        %v11195 = vrot.slane %v11194, 1
        %v11196 = vadd.f32 %v11194, %v11195
        %v11197 = vsel %vm10854, %v10834, 0.0
        %v11198 = vsel %vm10854, %v10835, 0.0
        %v11199 = vadd.f32 %v11197, %v11198
        %v11200 = vrot.slane %v11199, 4
        %v11201 = vadd.f32 %v11199, %v11200
        %v11202 = vrot.slane %v11201, 2
        %v11203 = vadd.f32 %v11201, %v11202
        %v11204 = vrot.slane %v11203, 1
        %v11205 = vadd.f32 %v11203, %v11204
        %v11206 = vsel %vm10854, %v10836, 0.0
        %v11207 = vsel %vm10854, %v10837, 0.0
        %v11208 = vadd.f32 %v11206, %v11207
        %v11209 = vrot.slane %v11208, 4
        %v11210 = vadd.f32 %v11208, %v11209
        %v11211 = vrot.slane %v11210, 2
        %v11212 = vadd.f32 %v11210, %v11211
        %v11213 = vrot.slane %v11212, 1
        %v11214 = vadd.f32 %v11212, %v11213
        %v11215 = vsel %vm10854, %v10838, 0.0
        %v11216 = vsel %vm10854, %v10839, 0.0
        %v11217 = vadd.f32 %v11215, %v11216
        %v11218 = vrot.slane %v11217, 4
        %v11219 = vadd.f32 %v11217, %v11218
        %v11220 = vrot.slane %v11219, 2
        %v11221 = vadd.f32 %v11219, %v11220
        %v11222 = vrot.slane %v11221, 1
        %v11223 = vadd.f32 %v11221, %v11222
        %v11224 = vsel %vm10854, %v10840, 0.0
        %v11225 = vsel %vm10854, %v10841, 0.0
        %v11226 = vadd.f32 %v11224, %v11225
        %v11227 = vrot.slane %v11226, 4
        %v11228 = vadd.f32 %v11226, %v11227
        %v11229 = vrot.slane %v11228, 2
        %v11230 = vadd.f32 %v11228, %v11229
        %v11231 = vrot.slane %v11230, 1
        %v11232 = vadd.f32 %v11230, %v11231
        %v11233 = vsel %vm10854, %v10842, 0.0
        %v11234 = vsel %vm10854, %v10843, 0.0
        %v11235 = vadd.f32 %v11233, %v11234
        %v11236 = vrot.slane %v11235, 4
        %v11237 = vadd.f32 %v11235, %v11236
        %v11238 = vrot.slane %v11237, 2
        %v11239 = vadd.f32 %v11237, %v11238
        %v11240 = vrot.slane %v11239, 1
        %v11241 = vadd.f32 %v11239, %v11240
        %v11242 = vsel %vm10854, %v10844, 0.0
        %v11243 = vsel %vm10854, %v10845, 0.0
        %v11244 = vadd.f32 %v11242, %v11243
        %v11245 = vrot.slane %v11244, 4
        %v11246 = vadd.f32 %v11244, %v11245
        %v11247 = vrot.slane %v11246, 2
        %v11248 = vadd.f32 %v11246, %v11247
        %v11249 = vrot.slane %v11248, 1
        %v11250 = vadd.f32 %v11248, %v11249
        %v11251 = vsel %vm10854, %v10846, 0.0
        %v11252 = vsel %vm10854, %v10847, 0.0
        %v11253 = vadd.f32 %v11251, %v11252
        %v11254 = vrot.slane %v11253, 4
        %v11255 = vadd.f32 %v11253, %v11254
        %v11256 = vrot.slane %v11255, 2
        %v11257 = vadd.f32 %v11255, %v11256
        %v11258 = vrot.slane %v11257, 1
        %v11259 = vadd.f32 %v11257, %v11258
        %v11260 = vsel %vm10854, %v10848, 0.0
        %v11261 = vsel %vm10854, %v10849, 0.0
        %v11262 = vadd.f32 %v11260, %v11261
        %v11263 = vrot.slane %v11262, 4
        %v11264 = vadd.f32 %v11262, %v11263
        %v11265 = vrot.slane %v11264, 2
        %v11266 = vadd.f32 %v11264, %v11265
        %v11267 = vrot.slane %v11266, 1
        %v11268 = vadd.f32 %v11266, %v11267
        %v11269 = vsel %vm10854, %v10850, 0.0
        %v11270 = vsel %vm10854, %v10851, 0.0
        %v11271 = vadd.f32 %v11269, %v11270
        %v11272 = vrot.slane %v11271, 4
        %v11273 = vadd.f32 %v11271, %v11272
        %v11274 = vrot.slane %v11273, 2
        %v11275 = vadd.f32 %v11273, %v11274
        %v11276 = vrot.slane %v11275, 1
        %v11277 = vadd.f32 %v11275, %v11276
        %v11278 = vsel %vm10854, %v10852, 0.0
        %v11279 = vsel %vm10854, %v10853, 0.0
        %v11280 = vadd.f32 %v11278, %v11279
        %v11281 = vrot.slane %v11280, 4
        %v11282 = vadd.f32 %v11280, %v11281
        %v11283 = vrot.slane %v11282, 2
        %v11284 = vadd.f32 %v11282, %v11283
        %v11285 = vrot.slane %v11284, 1
        %v11286 = vadd.f32 %v11284, %v11285
        %v11335 = vsel %vm9197, %v10872, %v10863
        %v11336 = vsel %vm9199, %v10881, %v11335
        %v11337 = vsel %vm9201, %v10890, %v11336
        %v11338 = vsel %vm9203, %v10899, %v11337
        %v11339 = vsel %vm9205, %v10908, %v11338
        %v11340 = vsel %vm9207, %v10917, %v11339
        %v11341 = vsel %vm9209, %v10926, %v11340
        %v11342 = vsel %vm9197, %v10944, %v10935
        %v11343 = vsel %vm9199, %v10953, %v11342
        %v11344 = vsel %vm9201, %v10962, %v11343
        %v11345 = vsel %vm9203, %v10971, %v11344
        %v11346 = vsel %vm9205, %v10980, %v11345
        %v11347 = vsel %vm9207, %v10989, %v11346
        %v11348 = vsel %vm9209, %v10998, %v11347
        %v11349 = vsel %vm9197, %v11016, %v11007
        %v11350 = vsel %vm9199, %v11025, %v11349
        %v11351 = vsel %vm9201, %v11034, %v11350
        %v11352 = vsel %vm9203, %v11043, %v11351
        %v11353 = vsel %vm9205, %v11052, %v11352
        %v11354 = vsel %vm9207, %v11061, %v11353
        %v11355 = vsel %vm9209, %v11070, %v11354
        %v11356 = vsel %vm9197, %v11088, %v11079
        %v11357 = vsel %vm9199, %v11097, %v11356
        %v11358 = vsel %vm9201, %v11106, %v11357
        %v11359 = vsel %vm9203, %v11115, %v11358
        %v11360 = vsel %vm9205, %v11124, %v11359
        %v11361 = vsel %vm9207, %v11133, %v11360
        %v11362 = vsel %vm9209, %v11142, %v11361
        %v11363 = vsel %vm9197, %v11160, %v11151
        %v11364 = vsel %vm9199, %v11169, %v11363
        %v11365 = vsel %vm9201, %v11178, %v11364
        %v11366 = vsel %vm9203, %v11187, %v11365
        %v11367 = vsel %vm9205, %v11196, %v11366
        %v11368 = vsel %vm9207, %v11205, %v11367
        %v11369 = vsel %vm9209, %v11214, %v11368
        %v11370 = vsel %vm9197, %v11232, %v11223
        %v11371 = vsel %vm9199, %v11241, %v11370
        %v11372 = vsel %vm9201, %v11250, %v11371
        %v11373 = vsel %vm9203, %v11259, %v11372
        %v11374 = vsel %vm9205, %v11268, %v11373
        %v11375 = vsel %vm9207, %v11277, %v11374
        %v11376 = vsel %vm9209, %v11286, %v11375
        %11377 = vrot.lane.b32.xlu0 %v11341, 16
        %v11378 = vpop.permute.xlu0 %11377
        %11379 = vrot.lane.b32.xlu0 %v11348, 16
        %v11380 = vpop.permute.xlu0 %11379
        %11381 = vrot.lane.b32.xlu0 %v11355, 16
        %v11382 = vpop.permute.xlu0 %11381
        %11383 = vrot.lane.b32.xlu0 %v11362, 16
        %v11384 = vpop.permute.xlu0 %11383
        %11385 = vrot.lane.b32.xlu0 %v11369, 16
        %v11386 = vpop.permute.xlu0 %11385
        %11387 = vrot.lane.b32.xlu0 %v11376, 16
        %v11388 = vpop.permute.xlu0 %11387
        %v11395 = vadd.f32 %v574, %v11378
        %v11396 = vadd.f32 %v575, %v11380
        %v11397 = vadd.f32 %v576, %v11382
        %v11398 = vadd.f32 %v577, %v11384
        %v11399 = vadd.f32 %v578, %v11386
        %v11400 = vadd.f32 %v579, %v11388
        %v11401 = vsel %vm774, %v9648, %v11395
        %v11402 = vsel %vm774, %v9649, %v11396
        %v11403 = vsel %vm774, %v9650, %v11397
        %v11404 = vsel %vm774, %v9651, %v11398
        %v11405 = vsel %vm774, %v9652, %v11399
        %v11406 = vsel %vm774, %v9653, %v11400
        %vm11407 = vcmask 146432
        %v11408 = vsel %vm11407, %v11401, 0.0
        %v11409 = vsel %vm11407, %v11402, 0.0
        %v11410 = vsel %vm11407, %v11403, 0.0
        %v11411 = vsel %vm11407, %v11404, 0.0
        %v11412 = vsel %vm11407, %v11405, 0.0
        %v11413 = vsel %vm11407, %v11406, 0.0
        %11414 = vst [vmem:[%s551] sm:$0xff] %v11408
        %11415 = vst [vmem:[%s551 + $0x8] sm:$0xff] %v11409
        %11416 = vst [vmem:[%s551 + $0x10] sm:$0xff] %v11410
        %11417 = vst [vmem:[%s551 + $0x18] sm:$0xff] %v11411
        %11418 = vst [vmem:[%s551 + $0x20] sm:$0xff] %v11412
        %11419 = vst [vmem:[%s551 + $0x28] sm:$0xff] %v11413
        %s11420 = sand.u32 %s389, 1
        %s11421 = scalar_lea.sflag [#allocation3], %s11420
        %s11422 = sand.u32 %s389, 1
        %s11423 = smul.addr %s11422, 48
        %s11424 = scalar_lea.vmem [#allocation2], %s11423
        // Predicated region
        $region85: #{tpu_custom_call.1} parent=83 // pred_check
          %p11425 = pneg %p399
        $region86: #{tpu_custom_call.1} parent=83 // pred_check_branch
          %11427 = sbr.rel (%p11425) target = $region88
        $region87: #{tpu_custom_call.1} parent=83 // pred_region
          %s11428 = smul.u32 6, %s30
          %s11430 = ssub.s32 768, 768
          %11431 = vsyncadd %s11421, %s11430
          %s11432 = smul.addr %s11428, 128
          %s11433 = scalar_lea.hbm %s16, %s11432
          %s11434 = sshll.u32 %s11424, 4
          %s11435 = int_to_ptr.vmem [resolvable:$true] %s11434
          %11440 = dma.vmem_to_hbm [thread:$0]  %s11435, 768, %s11433, %s11421, 128, 128, 8
        $region88: #{tpu_custom_call.1} parent=83 // pred_fallthru
          _
      $region84: #{tpu_custom_call.1} parent=5 // pred_fallthru
        _
      %p11441 = scmp.le.s32.totalorder 2, %s25
      // Predicated region
      $region89: #{tpu_custom_call.1} parent=5 // pred_check
        %p11442 = pneg %p11441
      $region90: #{tpu_custom_call.1} parent=5 // pred_check_branch
        %11444 = sbr.rel (%p11442) target = $region92
      $region91: #{tpu_custom_call.1} parent=5 // pred_region
        %s11445 = ssub.s32 %s25, 2
        // Predicated region
        $region93: #{tpu_custom_call.1} parent=91 // pred_check
          %p11446 = pneg %p405
        $region94: #{tpu_custom_call.1} parent=91 // pred_check_branch
          %11448 = sbr.rel (%p11446) target = $region96
        $region95: #{tpu_custom_call.1} parent=91 // pred_region
          %s11449 = sand.u32 %s390, 1
          %s11450 = scalar_lea.sflag [#allocation3], %s11449
          %s11451 = sand.u32 %s390, 1
          %s11452 = smul.addr %s11451, 48
          %s11453 = scalar_lea.vmem [#allocation2], %s11452
          %11454 = dma.done %s11450, 768
        $region96: #{tpu_custom_call.1} parent=91 // pred_fallthru
          _
      $region92: #{tpu_custom_call.1} parent=5 // pred_fallthru
        _
    $region6: #{tpu_custom_call.1} parent=1 // loop_footer
      %s29 = sadd.s32 1, %s25
    $region7: #{tpu_custom_call.1} parent=1 // loop_footer_branch
      %24 = sbr.rel target = $region3
    $region8: #{tpu_custom_call.1} parent=1 // loop_exit
      _
    %11455 = vsyncpa [#allocation3], 1
    %s11456 = scalar_lea.sflag [#allocation3], 1
    %11457 = vsyncpa %s11456, 1

</llo_original>
